<compile_context>
chip_gen: v5e
topology: v5e:2x2
jax: 0.10.0
libtpu: 0.0.40
codegen_flags: <defaults>
</compile_context>

<pallas_src>
import functools
import math

import jax
import jax.numpy as jnp
from jax import lax
from jax.experimental import pallas as pl
from jax.experimental.pallas import tpu as pltpu


def _pick_tile(dim, target):
    """Largest tile <= target (halving from target) that divides dim; else dim."""
    t = target
    while t >= 8:
        if dim % t == 0:
            return t
        t //= 2
    return dim


def _pick_head_block(num_heads, dk):
    """Heads-per-block hb (divisor of num_heads) such that hb*dk is a multiple
    of 128 (lane-dense blocks), preferring a lane width near 256 (v6e/v7x MXU).
    Returns None if no divisor works (then caller falls back to full-width)."""
    best = None
    for hb in range(1, num_heads + 1):
        if num_heads % hb:
            continue
        lane = hb * dk
        if lane % 128:
            continue
        if best is None or abs(lane - 256) < abs(best * dk - 256):
            best = hb
    return best


# ----------------------------------------------------------------------------
# Tiled linear kernel:  y = x @ w_t + b   (w_t already transposed to (K, N))
# ----------------------------------------------------------------------------
def _linear_kernel(x_ref, wt_ref, b_ref, o_ref, acc_ref):
    k_i = pl.program_id(2)

    @pl.when(k_i == 0)
    def _():
        acc_ref[...] = jnp.zeros_like(acc_ref)

    # Plain (tm, tk) @ (tk, tn) MXU dot -- no in-kernel transpose/relayout.
    acc_ref[...] += jnp.dot(x_ref[...], wt_ref[...],
                            preferred_element_type=jnp.float32)

    @pl.when(k_i == pl.num_programs(2) - 1)
    def _():
        o_ref[...] = (acc_ref[...] + b_ref[...]).astype(o_ref.dtype)


def linear(x2d, w_t, b, *, out_dtype=jnp.float32, tm=512, tn=512, tk=1024):
    """y = x2d @ w_t + b.   x2d: (M, K), w_t: (K, N) pre-transposed, b: (N,)."""
    M, K = x2d.shape
    K2, N = w_t.shape
    assert K == K2
    tm = _pick_tile(M, tm)
    tn = _pick_tile(N, tn)
    tk = _pick_tile(K, tk)
    grid = (M // tm, N // tn, K // tk)

    cost = pl.CostEstimate(
        flops=2 * M * N * K,
        transcendentals=0,
        bytes_accessed=(M * K * x2d.dtype.itemsize
                        + K * N * w_t.dtype.itemsize
                        + N * 4
                        + M * N * jnp.dtype(out_dtype).itemsize),
    )

    return pl.pallas_call(
        _linear_kernel,
        out_shape=jax.ShapeDtypeStruct((M, N), out_dtype),
        grid_spec=pltpu.PrefetchScalarGridSpec(
            num_scalar_prefetch=0,
            grid=grid,
            in_specs=[
                pl.BlockSpec((tm, tk), lambda i, j, k: (i, k)),
                pl.BlockSpec((tk, tn), lambda i, j, k: (k, j)),
                pl.BlockSpec((1, tn), lambda i, j, k: (0, j)),
            ],
            out_specs=pl.BlockSpec((tm, tn), lambda i, j, k: (i, j)),
            scratch_shapes=[pltpu.VMEM((tm, tn), jnp.float32)],
        ),
        compiler_params=pltpu.CompilerParams(
            dimension_semantics=("parallel", "parallel", "arbitrary")
        ),
        cost_estimate=cost,
    )(x2d, w_t, b.reshape(1, N).astype(jnp.float32))


# ----------------------------------------------------------------------------
# Flash-style attention kernel: grid over (B, head_groups, q-tiles, kv-tiles)
# Blocks are lane-dense (hb heads packed -> last dim hb*dk, a multiple of 128
# or the full feature width).  Head split and K/V column split are done by the
# BlockSpec index maps directly on the (B, L, ...) activations.
# ----------------------------------------------------------------------------
def _flash_attn_kernel(q_ref, k_ref, v_ref, o_ref, m_sc, l_sc, acc_sc, *,
                       inv_scale, hb, dk):
    kv_i = pl.program_id(3)

    @pl.when(kv_i == 0)
    def _():
        m_sc[...] = jnp.full_like(m_sc, -jnp.inf)
        l_sc[...] = jnp.zeros_like(l_sc)
        acc_sc[...] = jnp.zeros_like(acc_sc)

    # Unrolled loop over the hb heads packed in this lane-dense block.
    for h in range(hb):
        sl = pl.ds(h * dk, dk)
        # Scale the small (tq, dk) q slice (not the (tq, tkv) score matrix).
        qh = q_ref[0, :, sl] * inv_scale           # (tq,  dk) bf16
        kh = k_ref[0, :, sl]                       # (tkv, dk) bf16
        vh = v_ref[0, :, sl]                       # (tkv, dk) bf16

        # Scores: contract dk of q with dk of k, accumulate in f32.
        s = lax.dot_general(
            qh, kh, dimension_numbers=(((1,), (1,)), ((), ())),
            preferred_element_type=jnp.float32)    # (tq, tkv)

        m_prev = m_sc[h]                           # (tq, 1)
        m_new = jnp.maximum(m_prev, jnp.max(s, axis=-1, keepdims=True))
        alpha = jnp.exp(m_prev - m_new)            # rescale old stats
        p = jnp.exp(s - m_new)                     # (tq, tkv) f32

        l_sc[h] = alpha * l_sc[h] + jnp.sum(p, axis=-1, keepdims=True)
        acc_sc[h] = alpha * acc_sc[h] + jnp.dot(
            p.astype(vh.dtype), vh, preferred_element_type=jnp.float32)
        m_sc[h] = m_new

    @pl.when(kv_i == pl.num_programs(3) - 1)
    def _():
        for h in range(hb):
            inv_l = pl.reciprocal(l_sc[h], approx=True)   # EUP slot (~free)
            o_ref[0, :, pl.ds(h * dk, dk)] = (
                acc_sc[h] * inv_l).astype(o_ref.dtype)


def flash_attention(q_arr, k_arr, v_arr, *, q_col, k_col, v_col, num_heads,
                    d_model, hb, scale, out_dtype, tq=512, tkv=1024):
    """softmax(Q K^T / scale) V per head, reading Q/K/V straight out of the
    projection activations via column offsets (no head transposes in JAX).

    q_arr: (B, Lq, >= q_col + d_model), k_arr/v_arr: (B, Lkv, ...).
    Returns (B, Lq, d_model) with heads already merged back (PyTorch order).
    """
    B, Lq, _ = q_arr.shape
    _, Lkv, _ = k_arr.shape
    dk = d_model // num_heads
    lane = hb * dk                       # lane width of every block
    groups = num_heads // hb
    assert q_col % lane == 0 and k_col % lane == 0 and v_col % lane == 0

    tq = _pick_tile(Lq, tq)
    tkv = _pick_tile(Lkv, tkv)
    grid = (B, groups, Lq // tq, Lkv // tkv)
    inv_scale = 1.0 / float(scale)

    qb = q_col // lane
    kb = k_col // lane
    vb = v_col // lane
    q_spec = pl.BlockSpec((1, tq, lane), lambda b, g, qi, ki: (b, qi, qb + g))
    k_spec = pl.BlockSpec((1, tkv, lane), lambda b, g, qi, ki: (b, ki, kb + g))
    v_spec = pl.BlockSpec((1, tkv, lane), lambda b, g, qi, ki: (b, ki, vb + g))
    o_spec = pl.BlockSpec((1, tq, lane), lambda b, g, qi, ki: (b, qi, g))

    itemsize = q_arr.dtype.itemsize
    cost = pl.CostEstimate(
        flops=4 * B * num_heads * Lq * Lkv * dk,
        transcendentals=2 * B * num_heads * Lq * Lkv,
        # q read + out write + K/V re-streamed once per q tile.
        bytes_accessed=(2 * B * Lq * d_model * itemsize
                        + 2 * B * Lkv * d_model * itemsize * (Lq // tq)),
    )

    return pl.pallas_call(
        functools.partial(_flash_attn_kernel, inv_scale=inv_scale, hb=hb, dk=dk),
        out_shape=jax.ShapeDtypeStruct((B, Lq, d_model), out_dtype),
        grid_spec=pltpu.PrefetchScalarGridSpec(
            num_scalar_prefetch=0,
            grid=grid,
            in_specs=[q_spec, k_spec, v_spec],
            out_specs=o_spec,
            scratch_shapes=[
                pltpu.VMEM((hb, tq, 1), jnp.float32),    # running max
                pltpu.VMEM((hb, tq, 1), jnp.float32),    # running sum
                pltpu.VMEM((hb, tq, dk), jnp.float32),   # output accumulator
            ],
        ),
        compiler_params=pltpu.CompilerParams(
            dimension_semantics=("parallel", "parallel", "parallel", "arbitrary")
        ),
        cost_estimate=cost,
    )(q_arr, k_arr, v_arr)


# ----------------------------------------------------------------------------
# MHA module (parameters + forward)
# ----------------------------------------------------------------------------
def init_mha_params(key, d_model, num_heads):
    """PyTorch nn.Linear layout: W (out_features, in_features), b (out,)."""
    ks = jax.random.split(key, 6)
    s = 0.02
    return {
        "qproj_w": s * jax.random.normal(ks[0], (d_model, d_model), jnp.float32),
        "qproj_b": s * jax.random.normal(ks[1], (d_model,), jnp.float32),
        "kvproj_w": s * jax.random.normal(ks[2], (2 * d_model, d_model), jnp.float32),
        "kvproj_b": s * jax.random.normal(ks[3], (2 * d_model,), jnp.float32),
        "finalproj_w": s * jax.random.normal(ks[4], (d_model, d_model), jnp.float32),
        "finalproj_b": s * jax.random.normal(ks[5], (d_model,), jnp.float32),
    }


def prepare_params(params, *, compute_dtype=jnp.bfloat16):
    """One-time prep: fuse q+kv projections, pre-transpose weights to (K, N)
    and pre-cast to the MXU compute dtype (no per-forward casts/transposes)."""
    w_qkv = jnp.concatenate([params["qproj_w"], params["kvproj_w"]], axis=0)
    b_qkv = jnp.concatenate([params["qproj_b"], params["kvproj_b"]], axis=0)
    return {
        "wqkv_t": jnp.asarray(w_qkv.T, dtype=compute_dtype),              # (d, 3d)
        "bqkv": b_qkv.astype(jnp.float32),                                # (3d,)
        "wo_t": jnp.asarray(params["finalproj_w"].T, dtype=compute_dtype),  # (d, d)
        "bo": params["finalproj_b"].astype(jnp.float32),                  # (d,)
    }


def mha_forward(prep, x, y=None, mask=None, *, num_heads,
                compute_dtype=jnp.bfloat16,
                mm_blocks=(512, 512, 1024), attn_blocks=(512, 1024)):
    if mask is not None:
        # TODO(synk): additive score mask not folded into the flash kernel
        # (would also need all-masked-row guarding in the online softmax).
        raise NotImplementedError("mask not supported in this Pallas port")

    B, L, d_model = x.shape
    H = num_heads
    assert d_model % H == 0
    dk = d_model // H
    scale = math.sqrt(float(dk))
    tm, tn, tk = mm_blocks
    tq, tkv = attn_blocks

    xc = x.astype(compute_dtype).reshape(B * L, d_model)
    hb = _pick_head_block(H, dk)

    if y is None:
        # Self-attention: fused QKV projection (x read from HBM once).
        qkv = linear(xc, prep["wqkv_t"], prep["bqkv"], out_dtype=compute_dtype,
                     tm=tm, tn=tn, tk=tk).reshape(B, L, 3 * d_model)
        if hb is not None:
            # Head and K/V-column selection entirely via BlockSpec index maps.
            q_src, q_col = qkv, 0
            k_src, k_col = qkv, d_model
            v_src, v_col = qkv, 2 * d_model
        else:
            # No lane-dense head packing possible (d_model too small / odd):
            # fall back to full-width (= d_model) blocks over separate slabs.
            hb = H
            q_src, q_col = qkv[:, :, :d_model], 0
            k_src, k_col = qkv[:, :, d_model:2 * d_model], 0
            v_src, v_col = qkv[:, :, 2 * d_model:], 0
    else:
        # Cross-attention: separate projections (API parity with the module).
        Lk = y.shape[1]
        yc = y.astype(compute_dtype).reshape(B * Lk, d_model)
        q = linear(xc, prep["wqkv_t"][:, :d_model], prep["bqkv"][:d_model],
                   out_dtype=compute_dtype, tm=tm, tn=tn, tk=tk
                   ).reshape(B, L, d_model)
        kv = linear(yc, prep["wqkv_t"][:, d_model:], prep["bqkv"][d_model:],
                    out_dtype=compute_dtype, tm=tm, tn=tn, tk=tk
                    ).reshape(B, Lk, 2 * d_model)
        if hb is not None:
            q_src, q_col = q, 0
            k_src, k_col = kv, 0
            v_src, v_col = kv, d_model
        else:
            hb = H
            q_src, q_col = q, 0
            k_src, k_col = kv[:, :, :d_model], 0
            v_src, v_col = kv[:, :, d_model:], 0

    attn = flash_attention(
        q_src, k_src, v_src, q_col=q_col, k_col=k_col, v_col=v_col,
        num_heads=H, d_model=d_model, hb=hb, scale=scale,
        out_dtype=compute_dtype, tq=tq, tkv=tkv)          # (B, L, d_model)

    out = linear(attn.reshape(B * L, d_model), prep["wo_t"], prep["bo"],
                 out_dtype=jnp.float32, tm=tm, tn=tn, tk=tk)
    return out.reshape(B, L, d_model)


# ----------------------------------------------------------------------------
# Pure-JAX f32 reference for correctness check
# ----------------------------------------------------------------------------
def mha_reference(params, x, *, num_heads):
    B, L, d_model = x.shape
    d_k = d_model // num_heads
    scale = math.sqrt(float(d_k))
    q = x @ params["qproj_w"].T + params["qproj_b"]
    kv = x @ params["kvproj_w"].T + params["kvproj_b"]
    k, v = kv[..., :d_model], kv[..., d_model:]

    def split_heads(t):
        return t.reshape(B, L, num_heads, d_k).transpose(0, 2, 1, 3)

    qh, kh, vh = split_heads(q), split_heads(k), split_heads(v)
    s = jnp.einsum("bhqd,bhkd->bhqk", qh, kh) / scale
    p = jax.nn.softmax(s, axis=-1)
    o = jnp.einsum("bhqk,bhkd->bhqd", p, vh)
    o = o.transpose(0, 2, 1, 3).reshape(B, L, d_model)
    return o @ params["finalproj_w"].T + params["finalproj_b"]


# ----------------------------------------------------------------------------
if __name__ == "__main__":
    # Module defaults (d_model=512, num_heads=8) at a small sequence length.
    B, L, d_model, num_heads = 2, 128, 512, 8

    key = jax.random.PRNGKey(0)
    pkey, xkey = jax.random.split(key)
    params = init_mha_params(pkey, d_model, num_heads)
    prep = prepare_params(params)            # one-time fuse / transpose / cast
    x = jax.random.normal(xkey, (B, L, d_model), jnp.float32)

    # Small blocks here so the test exercises multi-step K accumulation in the
    # linear kernel and the multi-step online-softmax kv loop; production
    # defaults are (512, 512, 1024) / (512, 1024).
    fwd = jax.jit(functools.partial(
        mha_forward, num_heads=num_heads,
        mm_blocks=(128, 256, 256), attn_blocks=(64, 64)))

    out = jax.block_until_ready(fwd(prep, x))
    ref = mha_reference(params, x, num_heads=num_heads)

    assert out.shape == (B, L, d_model)
    err = float(jnp.max(jnp.abs(out - ref)))
    # bf16 MXU operands with f32 accumulation vs f32 reference.
    assert err < 1e-2, f"mismatch vs reference: max abs err = {err}"

    print("KERNEL_OK")
</pallas_src>

<mosaic_0001>
module attributes {stable_mosaic.version = 11 : i64} {
  func.func @_linear_kernel(%arg0: i32, %arg1: i32, %arg2: i32, %arg3: memref<128x256xbf16, #tpu.memory_space<vmem>>, %arg4: memref<256x256xbf16, #tpu.memory_space<vmem>>, %arg5: memref<1x256xf32, #tpu.memory_space<vmem>>, %arg6: memref<128x256xbf16, #tpu.memory_space<vmem>>, %arg7: memref<128x256xf32, #tpu.memory_space<vmem>>) attributes {dimension_semantics = [#tpu.dimension_semantics<parallel>, #tpu.dimension_semantics<parallel>, #tpu.dimension_semantics<arbitrary>], iteration_bounds = array<i64: 2, 6, 2>, scalar_prefetch = 0 : i64, scratch_operands = 1 : i64, tpu.core_type = #tpu.core_type<tc>, window_params = [{transform_indices = @transform_0, window_bounds = array<i64: 128, 256>}, {transform_indices = @transform_1, window_bounds = array<i64: 256, 256>}, {transform_indices = @transform_2, window_bounds = array<i64: 1, 256>}, {transform_indices = @transform_3, window_bounds = array<i64: 128, 256>}]} {
    %c0_i32 = arith.constant 0 : i32
    %0 = arith.cmpi eq, %arg2, %c0_i32 : i32
    %1 = arith.extui %0 : i1 to i32
    %c0_i32_0 = arith.constant 0 : i32
    %2 = arith.cmpi ne, %1, %c0_i32_0 : i32
    scf.if %2 {
      %cst_9 = arith.constant 0.000000e+00 : f32
      %12 = vector.broadcast %cst_9 : f32 to vector<128x256xf32>
      %c0_10 = arith.constant 0 : index
      %c0_11 = arith.constant 0 : index
      %13 = vector.load %arg7[%c0_10, %c0_11] : memref<128x256xf32, #tpu.memory_space<vmem>>, vector<128x256xf32>
      tpu.vector_store %arg7[%c0_10, %c0_11], %12 {strides = array<i32>} : memref<128x256xf32, #tpu.memory_space<vmem>>, vector<128x256xf32>,
    } else {
    }
    %c0 = arith.constant 0 : index
    %c0_1 = arith.constant 0 : index
    %3 = vector.load %arg7[%c0, %c0_1] : memref<128x256xf32, #tpu.memory_space<vmem>>, vector<128x256xf32>
    %c0_2 = arith.constant 0 : index
    %c0_3 = arith.constant 0 : index
    %4 = vector.load %arg3[%c0_2, %c0_3] : memref<128x256xbf16, #tpu.memory_space<vmem>>, vector<128x256xbf16>
    %c0_4 = arith.constant 0 : index
    %c0_5 = arith.constant 0 : index
    %5 = vector.load %arg4[%c0_4, %c0_5] : memref<256x256xbf16, #tpu.memory_space<vmem>>, vector<256x256xbf16>
    %cst = arith.constant dense<0.000000e+00> : vector<128x256xf32>
    %6 = tpu.matmul %4, %5, %cst {dimension_numbers = #tpu.dot_dimension_numbers<[1], [0], [0], [1], [0, 0, 1, 1], [], []>} : vector<128x256xbf16>, vector<256x256xbf16>, vector<128x256xf32> -> vector<128x256xf32>
    %7 = arith.addf %3, %6 : vector<128x256xf32>
    %c0_6 = arith.constant 0 : index
    %c0_7 = arith.constant 0 : index
    %8 = vector.load %arg7[%c0_6, %c0_7] : memref<128x256xf32, #tpu.memory_space<vmem>>, vector<128x256xf32>
    tpu.vector_store %arg7[%c0_6, %c0_7], %7 {strides = array<i32>} : memref<128x256xf32, #tpu.memory_space<vmem>>, vector<128x256xf32>,
    %c1_i32 = arith.constant 1 : i32
    %9 = arith.cmpi eq, %arg2, %c1_i32 : i32
    %10 = arith.extui %9 : i1 to i32
    %c0_i32_8 = arith.constant 0 : i32
    %11 = arith.cmpi ne, %10, %c0_i32_8 : i32
    scf.if %11 {
      %c0_9 = arith.constant 0 : index
      %c0_10 = arith.constant 0 : index
      %12 = vector.load %arg7[%c0_9, %c0_10] : memref<128x256xf32, #tpu.memory_space<vmem>>, vector<128x256xf32>
      %c0_11 = arith.constant 0 : index
      %c0_12 = arith.constant 0 : index
      %13 = vector.load %arg5[%c0_11, %c0_12] : memref<1x256xf32, #tpu.memory_space<vmem>>, vector<1x256xf32>
      %14 = vector.broadcast %13 : vector<1x256xf32> to vector<128x256xf32>
      %15 = arith.addf %12, %14 : vector<128x256xf32>
      %16 = arith.truncf %15 : vector<128x256xf32> to vector<128x256xbf16>
      %c0_13 = arith.constant 0 : index
      %c0_14 = arith.constant 0 : index
      %17 = vector.load %arg6[%c0_13, %c0_14] : memref<128x256xbf16, #tpu.memory_space<vmem>>, vector<128x256xbf16>
      tpu.vector_store %arg6[%c0_13, %c0_14], %16 {strides = array<i32>} : memref<128x256xbf16, #tpu.memory_space<vmem>>, vector<128x256xbf16>,
    } else {
    }
    return
  }
  func.func @transform_0(%arg0: i32, %arg1: i32, %arg2: i32) -> (i32, i32) {
    %c0_i32 = arith.constant 0 : i32
    return %arg0, %arg2 : i32, i32
  }
  func.func @transform_1(%arg0: i32, %arg1: i32, %arg2: i32) -> (i32, i32) {
    %c0_i32 = arith.constant 0 : i32
    return %arg2, %arg1 : i32, i32
  }
  func.func @transform_2(%arg0: i32, %arg1: i32, %arg2: i32) -> (i32, i32) {
    %c0_i32 = arith.constant 0 : i32
    %c0_i32_0 = arith.constant 0 : i32
    return %c0_i32, %arg1 : i32, i32
  }
  func.func @transform_3(%arg0: i32, %arg1: i32, %arg2: i32) -> (i32, i32) {
    %c0_i32 = arith.constant 0 : i32
    return %arg0, %arg1 : i32, i32
  }
}

module attributes {stable_mosaic.version = 11 : i64} {
  func.func @_flash_attn_kernel(%arg0: i32, %arg1: i32, %arg2: i32, %arg3: i32, %arg4: memref<1x64x256xbf16, #tpu.memory_space<vmem>>, %arg5: memref<1x64x256xbf16, #tpu.memory_space<vmem>>, %arg6: memref<1x64x256xbf16, #tpu.memory_space<vmem>>, %arg7: memref<1x64x256xbf16, #tpu.memory_space<vmem>>, %arg8: memref<4x64x1xf32, #tpu.memory_space<vmem>>, %arg9: memref<4x64x1xf32, #tpu.memory_space<vmem>>, %arg10: memref<4x64x64xf32, #tpu.memory_space<vmem>>) attributes {dimension_semantics = [#tpu.dimension_semantics<parallel>, #tpu.dimension_semantics<parallel>, #tpu.dimension_semantics<parallel>, #tpu.dimension_semantics<arbitrary>], iteration_bounds = array<i64: 2, 2, 2, 2>, scalar_prefetch = 0 : i64, scratch_operands = 3 : i64, tpu.core_type = #tpu.core_type<tc>, window_params = [{transform_indices = @transform_0, window_bounds = array<i64: 1, 64, 256>}, {transform_indices = @transform_1, window_bounds = array<i64: 1, 64, 256>}, {transform_indices = @transform_2, window_bounds = array<i64: 1, 64, 256>}, {transform_indices = @transform_3, window_bounds = array<i64: 1, 64, 256>}]} {
    %c0_i32 = arith.constant 0 : i32
    %0 = arith.cmpi eq, %arg3, %c0_i32 : i32
    %1 = arith.extui %0 : i1 to i32
    %c0_i32_0 = arith.constant 0 : i32
    %2 = arith.cmpi ne, %1, %c0_i32_0 : i32
    scf.if %2 {
      %cst_122 = arith.constant 0xFF800000 : f32
      %170 = vector.broadcast %cst_122 : f32 to vector<4x64x1xf32>
      %c0_123 = arith.constant 0 : index
      %c0_124 = arith.constant 0 : index
      %c0_125 = arith.constant 0 : index
      %171 = vector.load %arg8[%c0_123, %c0_124, %c0_125] : memref<4x64x1xf32, #tpu.memory_space<vmem>>, vector<4x64x1xf32>
      tpu.vector_store %arg8[%c0_123, %c0_124, %c0_125], %170 {strides = array<i32>} : memref<4x64x1xf32, #tpu.memory_space<vmem>>, vector<4x64x1xf32>,
      %cst_126 = arith.constant 0.000000e+00 : f32
      %172 = vector.broadcast %cst_126 : f32 to vector<4x64x1xf32>
      %c0_127 = arith.constant 0 : index
      %c0_128 = arith.constant 0 : index
      %c0_129 = arith.constant 0 : index
      %173 = vector.load %arg9[%c0_127, %c0_128, %c0_129] : memref<4x64x1xf32, #tpu.memory_space<vmem>>, vector<4x64x1xf32>
      tpu.vector_store %arg9[%c0_127, %c0_128, %c0_129], %172 {strides = array<i32>} : memref<4x64x1xf32, #tpu.memory_space<vmem>>, vector<4x64x1xf32>,
      %cst_130 = arith.constant 0.000000e+00 : f32
      %174 = vector.broadcast %cst_130 : f32 to vector<4x64x64xf32>
      %c0_131 = arith.constant 0 : index
      %c0_132 = arith.constant 0 : index
      %c0_133 = arith.constant 0 : index
      %175 = vector.load %arg10[%c0_131, %c0_132, %c0_133] : memref<4x64x64xf32, #tpu.memory_space<vmem>>, vector<4x64x64xf32>
      tpu.vector_store %arg10[%c0_131, %c0_132, %c0_133], %174 {strides = array<i32>} : memref<4x64x64xf32, #tpu.memory_space<vmem>>, vector<4x64x64xf32>,
    } else {
    }
    %c0 = arith.constant 0 : index
    %c0_1 = arith.constant 0 : index
    %c0_2 = arith.constant 0 : index
    %3 = vector.load %arg4[%c0, %c0_1, %c0_2] : memref<1x64x256xbf16, #tpu.memory_space<vmem>>, vector<1x64x64xbf16>
    %4 = vector.shape_cast %3 : vector<1x64x64xbf16> to vector<64x64xbf16>
    %cst = arith.constant 1.250000e-01 : bf16
    %5 = vector.broadcast %cst : bf16 to vector<64x64xbf16>
    %6 = arith.mulf %4, %5 : vector<64x64xbf16>
    %c0_3 = arith.constant 0 : index
    %c0_4 = arith.constant 0 : index
    %c0_5 = arith.constant 0 : index
    %7 = vector.load %arg5[%c0_3, %c0_4, %c0_5] : memref<1x64x256xbf16, #tpu.memory_space<vmem>>, vector<1x64x64xbf16>
    %8 = vector.shape_cast %7 : vector<1x64x64xbf16> to vector<64x64xbf16>
    %c0_6 = arith.constant 0 : index
    %c0_7 = arith.constant 0 : index
    %c0_8 = arith.constant 0 : index
    %9 = vector.load %arg6[%c0_6, %c0_7, %c0_8] : memref<1x64x256xbf16, #tpu.memory_space<vmem>>, vector<1x64x64xbf16>
    %10 = vector.shape_cast %9 : vector<1x64x64xbf16> to vector<64x64xbf16>
    %cst_9 = arith.constant dense<0.000000e+00> : vector<64x64xf32>
    %11 = tpu.matmul %6, %8, %cst_9 {dimension_numbers = #tpu.dot_dimension_numbers<[1], [1], [0], [0], [0, 0, 1, 0], [], []>} : vector<64x64xbf16>, vector<64x64xbf16>, vector<64x64xf32> -> vector<64x64xf32>
    %c0_10 = arith.constant 0 : index
    %c0_11 = arith.constant 0 : index
    %c0_12 = arith.constant 0 : index
    %12 = vector.load %arg8[%c0_10, %c0_11, %c0_12] : memref<4x64x1xf32, #tpu.memory_space<vmem>>, vector<1x64x1xf32>
    %13 = vector.shape_cast %12 : vector<1x64x1xf32> to vector<64x1xf32>
    %cst_13 = arith.constant dense<0xFF800000> : vector<64xf32>
    %14 = vector.multi_reduction <maximumf>, %11, %cst_13 [1] : vector<64x64xf32> to vector<64xf32>
    %15 = vector.shape_cast %14 : vector<64xf32> to vector<64x1xf32>
    %16 = arith.maximumf %13, %15 : vector<64x1xf32>
    %17 = arith.subf %13, %16 : vector<64x1xf32>
    %18 = math.exp %17 : vector<64x1xf32>
    %19 = vector.broadcast %16 : vector<64x1xf32> to vector<64x64xf32>
    %20 = arith.subf %11, %19 : vector<64x64xf32>
    %21 = math.exp %20 : vector<64x64xf32>
    %c0_14 = arith.constant 0 : index
    %c0_15 = arith.constant 0 : index
    %c0_16 = arith.constant 0 : index
    %22 = vector.load %arg9[%c0_14, %c0_15, %c0_16] : memref<4x64x1xf32, #tpu.memory_space<vmem>>, vector<1x64x1xf32>
    %23 = vector.shape_cast %22 : vector<1x64x1xf32> to vector<64x1xf32>
    %24 = arith.mulf %18, %23 : vector<64x1xf32>
    %cst_17 = arith.constant dense<0.000000e+00> : vector<64xf32>
    %25 = vector.multi_reduction <add>, %21, %cst_17 [1] : vector<64x64xf32> to vector<64xf32>
    %26 = vector.shape_cast %25 : vector<64xf32> to vector<64x1xf32>
    %27 = arith.addf %24, %26 : vector<64x1xf32>
    %c0_18 = arith.constant 0 : index
    %c0_19 = arith.constant 0 : index
    %c0_20 = arith.constant 0 : index
    %28 = vector.load %arg9[%c0_18, %c0_19, %c0_20] : memref<4x64x1xf32, #tpu.memory_space<vmem>>, vector<1x64x1xf32>
    %29 = vector.shape_cast %28 : vector<1x64x1xf32> to vector<64x1xf32>
    %30 = vector.shape_cast %27 : vector<64x1xf32> to vector<1x64x1xf32>
    tpu.vector_store %arg9[%c0_18, %c0_19, %c0_20], %30 {strides = array<i32>} : memref<4x64x1xf32, #tpu.memory_space<vmem>>, vector<1x64x1xf32>,
    %c0_21 = arith.constant 0 : index
    %c0_22 = arith.constant 0 : index
    %c0_23 = arith.constant 0 : index
    %31 = vector.load %arg10[%c0_21, %c0_22, %c0_23] : memref<4x64x64xf32, #tpu.memory_space<vmem>>, vector<1x64x64xf32>
    %32 = vector.shape_cast %31 : vector<1x64x64xf32> to vector<64x64xf32>
    %33 = vector.broadcast %18 : vector<64x1xf32> to vector<64x64xf32>
    %34 = arith.mulf %33, %32 : vector<64x64xf32>
    %35 = arith.truncf %21 : vector<64x64xf32> to vector<64x64xbf16>
    %cst_24 = arith.constant dense<0.000000e+00> : vector<64x64xf32>
    %36 = tpu.matmul %35, %10, %cst_24 {dimension_numbers = #tpu.dot_dimension_numbers<[1], [0], [0], [1], [0, 0, 1, 1], [], []>} : vector<64x64xbf16>, vector<64x64xbf16>, vector<64x64xf32> -> vector<64x64xf32>
    %37 = arith.addf %34, %36 : vector<64x64xf32>
    %c0_25 = arith.constant 0 : index
    %c0_26 = arith.constant 0 : index
    %c0_27 = arith.constant 0 : index
    %38 = vector.load %arg10[%c0_25, %c0_26, %c0_27] : memref<4x64x64xf32, #tpu.memory_space<vmem>>, vector<1x64x64xf32>
    %39 = vector.shape_cast %38 : vector<1x64x64xf32> to vector<64x64xf32>
    %40 = vector.shape_cast %37 : vector<64x64xf32> to vector<1x64x64xf32>
    tpu.vector_store %arg10[%c0_25, %c0_26, %c0_27], %40 {strides = array<i32>} : memref<4x64x64xf32, #tpu.memory_space<vmem>>, vector<1x64x64xf32>,
    %c0_28 = arith.constant 0 : index
    %c0_29 = arith.constant 0 : index
    %c0_30 = arith.constant 0 : index
    %41 = vector.load %arg8[%c0_28, %c0_29, %c0_30] : memref<4x64x1xf32, #tpu.memory_space<vmem>>, vector<1x64x1xf32>
    %42 = vector.shape_cast %41 : vector<1x64x1xf32> to vector<64x1xf32>
    %43 = vector.shape_cast %16 : vector<64x1xf32> to vector<1x64x1xf32>
    tpu.vector_store %arg8[%c0_28, %c0_29, %c0_30], %43 {strides = array<i32>} : memref<4x64x1xf32, #tpu.memory_space<vmem>>, vector<1x64x1xf32>,
    %c0_31 = arith.constant 0 : index
    %c0_32 = arith.constant 0 : index
    %c64 = arith.constant 64 : index
    %44 = vector.load %arg4[%c0_31, %c0_32, %c64] : memref<1x64x256xbf16, #tpu.memory_space<vmem>>, vector<1x64x64xbf16>
    %45 = vector.shape_cast %44 : vector<1x64x64xbf16> to vector<64x64xbf16>
    %cst_33 = arith.constant 1.250000e-01 : bf16
    %46 = vector.broadcast %cst_33 : bf16 to vector<64x64xbf16>
    %47 = arith.mulf %45, %46 : vector<64x64xbf16>
    %c0_34 = arith.constant 0 : index
    %c0_35 = arith.constant 0 : index
    %c64_36 = arith.constant 64 : index
    %48 = vector.load %arg5[%c0_34, %c0_35, %c64_36] : memref<1x64x256xbf16, #tpu.memory_space<vmem>>, vector<1x64x64xbf16>
    %49 = vector.shape_cast %48 : vector<1x64x64xbf16> to vector<64x64xbf16>
    %c0_37 = arith.constant 0 : index
    %c0_38 = arith.constant 0 : index
    %c64_39 = arith.constant 64 : index
    %50 = vector.load %arg6[%c0_37, %c0_38, %c64_39] : memref<1x64x256xbf16, #tpu.memory_space<vmem>>, vector<1x64x64xbf16>
    %51 = vector.shape_cast %50 : vector<1x64x64xbf16> to vector<64x64xbf16>
    %cst_40 = arith.constant dense<0.000000e+00> : vector<64x64xf32>
    %52 = tpu.matmul %47, %49, %cst_40 {dimension_numbers = #tpu.dot_dimension_numbers<[1], [1], [0], [0], [0, 0, 1, 0], [], []>} : vector<64x64xbf16>, vector<64x64xbf16>, vector<64x64xf32> -> vector<64x64xf32>
    %c1 = arith.constant 1 : index
    %c0_41 = arith.constant 0 : index
    %c0_42 = arith.constant 0 : index
    %53 = vector.load %arg8[%c1, %c0_41, %c0_42] : memref<4x64x1xf32, #tpu.memory_space<vmem>>, vector<1x64x1xf32>
    %54 = vector.shape_cast %53 : vector<1x64x1xf32> to vector<64x1xf32>
    %cst_43 = arith.constant dense<0xFF800000> : vector<64xf32>
    %55 = vector.multi_reduction <maximumf>, %52, %cst_43 [1] : vector<64x64xf32> to vector<64xf32>
    %56 = vector.shape_cast %55 : vector<64xf32> to vector<64x1xf32>
    %57 = arith.maximumf %54, %56 : vector<64x1xf32>
    %58 = arith.subf %54, %57 : vector<64x1xf32>
    %59 = math.exp %58 : vector<64x1xf32>
    %60 = vector.broadcast %57 : vector<64x1xf32> to vector<64x64xf32>
    %61 = arith.subf %52, %60 : vector<64x64xf32>
    %62 = math.exp %61 : vector<64x64xf32>
    %c1_44 = arith.constant 1 : index
    %c0_45 = arith.constant 0 : index
    %c0_46 = arith.constant 0 : index
    %63 = vector.load %arg9[%c1_44, %c0_45, %c0_46] : memref<4x64x1xf32, #tpu.memory_space<vmem>>, vector<1x64x1xf32>
    %64 = vector.shape_cast %63 : vector<1x64x1xf32> to vector<64x1xf32>
    %65 = arith.mulf %59, %64 : vector<64x1xf32>
    %cst_47 = arith.constant dense<0.000000e+00> : vector<64xf32>
    %66 = vector.multi_reduction <add>, %62, %cst_47 [1] : vector<64x64xf32> to vector<64xf32>
    %67 = vector.shape_cast %66 : vector<64xf32> to vector<64x1xf32>
    %68 = arith.addf %65, %67 : vector<64x1xf32>
    %c1_48 = arith.constant 1 : index
    %c0_49 = arith.constant 0 : index
    %c0_50 = arith.constant 0 : index
    %69 = vector.load %arg9[%c1_48, %c0_49, %c0_50] : memref<4x64x1xf32, #tpu.memory_space<vmem>>, vector<1x64x1xf32>
    %70 = vector.shape_cast %69 : vector<1x64x1xf32> to vector<64x1xf32>
    %71 = vector.shape_cast %68 : vector<64x1xf32> to vector<1x64x1xf32>
    tpu.vector_store %arg9[%c1_48, %c0_49, %c0_50], %71 {strides = array<i32>} : memref<4x64x1xf32, #tpu.memory_space<vmem>>, vector<1x64x1xf32>,
    %c1_51 = arith.constant 1 : index
    %c0_52 = arith.constant 0 : index
    %c0_53 = arith.constant 0 : index
    %72 = vector.load %arg10[%c1_51, %c0_52, %c0_53] : memref<4x64x64xf32, #tpu.memory_space<vmem>>, vector<1x64x64xf32>
    %73 = vector.shape_cast %72 : vector<1x64x64xf32> to vector<64x64xf32>
    %74 = vector.broadcast %59 : vector<64x1xf32> to vector<64x64xf32>
    %75 = arith.mulf %74, %73 : vector<64x64xf32>
    %76 = arith.truncf %62 : vector<64x64xf32> to vector<64x64xbf16>
    %cst_54 = arith.constant dense<0.000000e+00> : vector<64x64xf32>
    %77 = tpu.matmul %76, %51, %cst_54 {dimension_numbers = #tpu.dot_dimension_numbers<[1], [0], [0], [1], [0, 0, 1, 1], [], []>} : vector<64x64xbf16>, vector<64x64xbf16>, vector<64x64xf32> -> vector<64x64xf32>
    %78 = arith.addf %75, %77 : vector<64x64xf32>
    %c1_55 = arith.constant 1 : index
    %c0_56 = arith.constant 0 : index
    %c0_57 = arith.constant 0 : index
    %79 = vector.load %arg10[%c1_55, %c0_56, %c0_57] : memref<4x64x64xf32, #tpu.memory_space<vmem>>, vector<1x64x64xf32>
    %80 = vector.shape_cast %79 : vector<1x64x64xf32> to vector<64x64xf32>
    %81 = vector.shape_cast %78 : vector<64x64xf32> to vector<1x64x64xf32>
    tpu.vector_store %arg10[%c1_55, %c0_56, %c0_57], %81 {strides = array<i32>} : memref<4x64x64xf32, #tpu.memory_space<vmem>>, vector<1x64x64xf32>,
    %c1_58 = arith.constant 1 : index
    %c0_59 = arith.constant 0 : index
    %c0_60 = arith.constant 0 : index
    %82 = vector.load %arg8[%c1_58, %c0_59, %c0_60] : memref<4x64x1xf32, #tpu.memory_space<vmem>>, vector<1x64x1xf32>
    %83 = vector.shape_cast %82 : vector<1x64x1xf32> to vector<64x1xf32>
    %84 = vector.shape_cast %57 : vector<64x1xf32> to vector<1x64x1xf32>
    tpu.vector_store %arg8[%c1_58, %c0_59, %c0_60], %84 {strides = array<i32>} : memref<4x64x1xf32, #tpu.memory_space<vmem>>, vector<1x64x1xf32>,
    %c0_61 = arith.constant 0 : index
    %c0_62 = arith.constant 0 : index
    %c128 = arith.constant 128 : index
    %85 = vector.load %arg4[%c0_61, %c0_62, %c128] : memref<1x64x256xbf16, #tpu.memory_space<vmem>>, vector<1x64x64xbf16>
    %86 = vector.shape_cast %85 : vector<1x64x64xbf16> to vector<64x64xbf16>
    %cst_63 = arith.constant 1.250000e-01 : bf16
    %87 = vector.broadcast %cst_63 : bf16 to vector<64x64xbf16>
    %88 = arith.mulf %86, %87 : vector<64x64xbf16>
    %c0_64 = arith.constant 0 : index
    %c0_65 = arith.constant 0 : index
    %c128_66 = arith.constant 128 : index
    %89 = vector.load %arg5[%c0_64, %c0_65, %c128_66] : memref<1x64x256xbf16, #tpu.memory_space<vmem>>, vector<1x64x64xbf16>
    %90 = vector.shape_cast %89 : vector<1x64x64xbf16> to vector<64x64xbf16>
    %c0_67 = arith.constant 0 : index
    %c0_68 = arith.constant 0 : index
    %c128_69 = arith.constant 128 : index
    %91 = vector.load %arg6[%c0_67, %c0_68, %c128_69] : memref<1x64x256xbf16, #tpu.memory_space<vmem>>, vector<1x64x64xbf16>
    %92 = vector.shape_cast %91 : vector<1x64x64xbf16> to vector<64x64xbf16>
    %cst_70 = arith.constant dense<0.000000e+00> : vector<64x64xf32>
    %93 = tpu.matmul %88, %90, %cst_70 {dimension_numbers = #tpu.dot_dimension_numbers<[1], [1], [0], [0], [0, 0, 1, 0], [], []>} : vector<64x64xbf16>, vector<64x64xbf16>, vector<64x64xf32> -> vector<64x64xf32>
    %c2 = arith.constant 2 : index
    %c0_71 = arith.constant 0 : index
    %c0_72 = arith.constant 0 : index
    %94 = vector.load %arg8[%c2, %c0_71, %c0_72] : memref<4x64x1xf32, #tpu.memory_space<vmem>>, vector<1x64x1xf32>
    %95 = vector.shape_cast %94 : vector<1x64x1xf32> to vector<64x1xf32>
    %cst_73 = arith.constant dense<0xFF800000> : vector<64xf32>
    %96 = vector.multi_reduction <maximumf>, %93, %cst_73 [1] : vector<64x64xf32> to vector<64xf32>
    %97 = vector.shape_cast %96 : vector<64xf32> to vector<64x1xf32>
    %98 = arith.maximumf %95, %97 : vector<64x1xf32>
    %99 = arith.subf %95, %98 : vector<64x1xf32>
    %100 = math.exp %99 : vector<64x1xf32>
    %101 = vector.broadcast %98 : vector<64x1xf32> to vector<64x64xf32>
    %102 = arith.subf %93, %101 : vector<64x64xf32>
    %103 = math.exp %102 : vector<64x64xf32>
    %c2_74 = arith.constant 2 : index
    %c0_75 = arith.constant 0 : index
    %c0_76 = arith.constant 0 : index
    %104 = vector.load %arg9[%c2_74, %c0_75, %c0_76] : memref<4x64x1xf32, #tpu.memory_space<vmem>>, vector<1x64x1xf32>
    %105 = vector.shape_cast %104 : vector<1x64x1xf32> to vector<64x1xf32>
    %106 = arith.mulf %100, %105 : vector<64x1xf32>
    %cst_77 = arith.constant dense<0.000000e+00> : vector<64xf32>
    %107 = vector.multi_reduction <add>, %103, %cst_77 [1] : vector<64x64xf32> to vector<64xf32>
    %108 = vector.shape_cast %107 : vector<64xf32> to vector<64x1xf32>
    %109 = arith.addf %106, %108 : vector<64x1xf32>
    %c2_78 = arith.constant 2 : index
    %c0_79 = arith.constant 0 : index
    %c0_80 = arith.constant 0 : index
    %110 = vector.load %arg9[%c2_78, %c0_79, %c0_80] : memref<4x64x1xf32, #tpu.memory_space<vmem>>, vector<1x64x1xf32>
    %111 = vector.shape_cast %110 : vector<1x64x1xf32> to vector<64x1xf32>
    %112 = vector.shape_cast %109 : vector<64x1xf32> to vector<1x64x1xf32>
    tpu.vector_store %arg9[%c2_78, %c0_79, %c0_80], %112 {strides = array<i32>} : memref<4x64x1xf32, #tpu.memory_space<vmem>>, vector<1x64x1xf32>,
    %c2_81 = arith.constant 2 : index
    %c0_82 = arith.constant 0 : index
    %c0_83 = arith.constant 0 : index
    %113 = vector.load %arg10[%c2_81, %c0_82, %c0_83] : memref<4x64x64xf32, #tpu.memory_space<vmem>>, vector<1x64x64xf32>
    %114 = vector.shape_cast %113 : vector<1x64x64xf32> to vector<64x64xf32>
    %115 = vector.broadcast %100 : vector<64x1xf32> to vector<64x64xf32>
    %116 = arith.mulf %115, %114 : vector<64x64xf32>
    %117 = arith.truncf %103 : vector<64x64xf32> to vector<64x64xbf16>
    %cst_84 = arith.constant dense<0.000000e+00> : vector<64x64xf32>
    %118 = tpu.matmul %117, %92, %cst_84 {dimension_numbers = #tpu.dot_dimension_numbers<[1], [0], [0], [1], [0, 0, 1, 1], [], []>} : vector<64x64xbf16>, vector<64x64xbf16>, vector<64x64xf32> -> vector<64x64xf32>
    %119 = arith.addf %116, %118 : vector<64x64xf32>
    %c2_85 = arith.constant 2 : index
    %c0_86 = arith.constant 0 : index
    %c0_87 = arith.constant 0 : index
    %120 = vector.load %arg10[%c2_85, %c0_86, %c0_87] : memref<4x64x64xf32, #tpu.memory_space<vmem>>, vector<1x64x64xf32>
    %121 = vector.shape_cast %120 : vector<1x64x64xf32> to vector<64x64xf32>
    %122 = vector.shape_cast %119 : vector<64x64xf32> to vector<1x64x64xf32>
    tpu.vector_store %arg10[%c2_85, %c0_86, %c0_87], %122 {strides = array<i32>} : memref<4x64x64xf32, #tpu.memory_space<vmem>>, vector<1x64x64xf32>,
    %c2_88 = arith.constant 2 : index
    %c0_89 = arith.constant 0 : index
    %c0_90 = arith.constant 0 : index
    %123 = vector.load %arg8[%c2_88, %c0_89, %c0_90] : memref<4x64x1xf32, #tpu.memory_space<vmem>>, vector<1x64x1xf32>
    %124 = vector.shape_cast %123 : vector<1x64x1xf32> to vector<64x1xf32>
    %125 = vector.shape_cast %98 : vector<64x1xf32> to vector<1x64x1xf32>
    tpu.vector_store %arg8[%c2_88, %c0_89, %c0_90], %125 {strides = array<i32>} : memref<4x64x1xf32, #tpu.memory_space<vmem>>, vector<1x64x1xf32>,
    %c0_91 = arith.constant 0 : index
    %c0_92 = arith.constant 0 : index
    %c192 = arith.constant 192 : index
    %126 = vector.load %arg4[%c0_91, %c0_92, %c192] : memref<1x64x256xbf16, #tpu.memory_space<vmem>>, vector<1x64x64xbf16>
    %127 = vector.shape_cast %126 : vector<1x64x64xbf16> to vector<64x64xbf16>
    %cst_93 = arith.constant 1.250000e-01 : bf16
    %128 = vector.broadcast %cst_93 : bf16 to vector<64x64xbf16>
    %129 = arith.mulf %127, %128 : vector<64x64xbf16>
    %c0_94 = arith.constant 0 : index
    %c0_95 = arith.constant 0 : index
    %c192_96 = arith.constant 192 : index
    %130 = vector.load %arg5[%c0_94, %c0_95, %c192_96] : memref<1x64x256xbf16, #tpu.memory_space<vmem>>, vector<1x64x64xbf16>
    %131 = vector.shape_cast %130 : vector<1x64x64xbf16> to vector<64x64xbf16>
    %c0_97 = arith.constant 0 : index
    %c0_98 = arith.constant 0 : index
    %c192_99 = arith.constant 192 : index
    %132 = vector.load %arg6[%c0_97, %c0_98, %c192_99] : memref<1x64x256xbf16, #tpu.memory_space<vmem>>, vector<1x64x64xbf16>
    %133 = vector.shape_cast %132 : vector<1x64x64xbf16> to vector<64x64xbf16>
    %cst_100 = arith.constant dense<0.000000e+00> : vector<64x64xf32>
    %134 = tpu.matmul %129, %131, %cst_100 {dimension_numbers = #tpu.dot_dimension_numbers<[1], [1], [0], [0], [0, 0, 1, 0], [], []>} : vector<64x64xbf16>, vector<64x64xbf16>, vector<64x64xf32> -> vector<64x64xf32>
    %c3 = arith.constant 3 : index
    %c0_101 = arith.constant 0 : index
    %c0_102 = arith.constant 0 : index
    %135 = vector.load %arg8[%c3, %c0_101, %c0_102] : memref<4x64x1xf32, #tpu.memory_space<vmem>>, vector<1x64x1xf32>
    %136 = vector.shape_cast %135 : vector<1x64x1xf32> to vector<64x1xf32>
    %cst_103 = arith.constant dense<0xFF800000> : vector<64xf32>
    %137 = vector.multi_reduction <maximumf>, %134, %cst_103 [1] : vector<64x64xf32> to vector<64xf32>
    %138 = vector.shape_cast %137 : vector<64xf32> to vector<64x1xf32>
    %139 = arith.maximumf %136, %138 : vector<64x1xf32>
    %140 = arith.subf %136, %139 : vector<64x1xf32>
    %141 = math.exp %140 : vector<64x1xf32>
    %142 = vector.broadcast %139 : vector<64x1xf32> to vector<64x64xf32>
    %143 = arith.subf %134, %142 : vector<64x64xf32>
    %144 = math.exp %143 : vector<64x64xf32>
    %c3_104 = arith.constant 3 : index
    %c0_105 = arith.constant 0 : index
    %c0_106 = arith.constant 0 : index
    %145 = vector.load %arg9[%c3_104, %c0_105, %c0_106] : memref<4x64x1xf32, #tpu.memory_space<vmem>>, vector<1x64x1xf32>
    %146 = vector.shape_cast %145 : vector<1x64x1xf32> to vector<64x1xf32>
    %147 = arith.mulf %141, %146 : vector<64x1xf32>
    %cst_107 = arith.constant dense<0.000000e+00> : vector<64xf32>
    %148 = vector.multi_reduction <add>, %144, %cst_107 [1] : vector<64x64xf32> to vector<64xf32>
    %149 = vector.shape_cast %148 : vector<64xf32> to vector<64x1xf32>
    %150 = arith.addf %147, %149 : vector<64x1xf32>
    %c3_108 = arith.constant 3 : index
    %c0_109 = arith.constant 0 : index
    %c0_110 = arith.constant 0 : index
    %151 = vector.load %arg9[%c3_108, %c0_109, %c0_110] : memref<4x64x1xf32, #tpu.memory_space<vmem>>, vector<1x64x1xf32>
    %152 = vector.shape_cast %151 : vector<1x64x1xf32> to vector<64x1xf32>
    %153 = vector.shape_cast %150 : vector<64x1xf32> to vector<1x64x1xf32>
    tpu.vector_store %arg9[%c3_108, %c0_109, %c0_110], %153 {strides = array<i32>} : memref<4x64x1xf32, #tpu.memory_space<vmem>>, vector<1x64x1xf32>,
    %c3_111 = arith.constant 3 : index
    %c0_112 = arith.constant 0 : index
    %c0_113 = arith.constant 0 : index
    %154 = vector.load %arg10[%c3_111, %c0_112, %c0_113] : memref<4x64x64xf32, #tpu.memory_space<vmem>>, vector<1x64x64xf32>
    %155 = vector.shape_cast %154 : vector<1x64x64xf32> to vector<64x64xf32>
    %156 = vector.broadcast %141 : vector<64x1xf32> to vector<64x64xf32>
    %157 = arith.mulf %156, %155 : vector<64x64xf32>
    %158 = arith.truncf %144 : vector<64x64xf32> to vector<64x64xbf16>
    %cst_114 = arith.constant dense<0.000000e+00> : vector<64x64xf32>
    %159 = tpu.matmul %158, %133, %cst_114 {dimension_numbers = #tpu.dot_dimension_numbers<[1], [0], [0], [1], [0, 0, 1, 1], [], []>} : vector<64x64xbf16>, vector<64x64xbf16>, vector<64x64xf32> -> vector<64x64xf32>
    %160 = arith.addf %157, %159 : vector<64x64xf32>
    %c3_115 = arith.constant 3 : index
    %c0_116 = arith.constant 0 : index
    %c0_117 = arith.constant 0 : index
    %161 = vector.load %arg10[%c3_115, %c0_116, %c0_117] : memref<4x64x64xf32, #tpu.memory_space<vmem>>, vector<1x64x64xf32>
    %162 = vector.shape_cast %161 : vector<1x64x64xf32> to vector<64x64xf32>
    %163 = vector.shape_cast %160 : vector<64x64xf32> to vector<1x64x64xf32>
    tpu.vector_store %arg10[%c3_115, %c0_116, %c0_117], %163 {strides = array<i32>} : memref<4x64x64xf32, #tpu.memory_space<vmem>>, vector<1x64x64xf32>,
    %c3_118 = arith.constant 3 : index
    %c0_119 = arith.constant 0 : index
    %c0_120 = arith.constant 0 : index
    %164 = vector.load %arg8[%c3_118, %c0_119, %c0_120] : memref<4x64x1xf32, #tpu.memory_space<vmem>>, vector<1x64x1xf32>
    %165 = vector.shape_cast %164 : vector<1x64x1xf32> to vector<64x1xf32>
    %166 = vector.shape_cast %139 : vector<64x1xf32> to vector<1x64x1xf32>
    tpu.vector_store %arg8[%c3_118, %c0_119, %c0_120], %166 {strides = array<i32>} : memref<4x64x1xf32, #tpu.memory_space<vmem>>, vector<1x64x1xf32>,
    %c1_i32 = arith.constant 1 : i32
    %167 = arith.cmpi eq, %arg3, %c1_i32 : i32
    %168 = arith.extui %167 : i1 to i32
    %c0_i32_121 = arith.constant 0 : i32
    %169 = arith.cmpi ne, %168, %c0_i32_121 : i32
    scf.if %169 {
      %c0_122 = arith.constant 0 : index
      %c0_123 = arith.constant 0 : index
      %c0_124 = arith.constant 0 : index
      %170 = vector.load %arg9[%c0_122, %c0_123, %c0_124] : memref<4x64x1xf32, #tpu.memory_space<vmem>>, vector<1x64x1xf32>
      %171 = vector.shape_cast %170 : vector<1x64x1xf32> to vector<64x1xf32>
      %172 = tpu.reciprocal %171 {approx = true} : vector<64x1xf32> -> vector<64x1xf32>
      %c0_125 = arith.constant 0 : index
      %c0_126 = arith.constant 0 : index
      %c0_127 = arith.constant 0 : index
      %173 = vector.load %arg10[%c0_125, %c0_126, %c0_127] : memref<4x64x64xf32, #tpu.memory_space<vmem>>, vector<1x64x64xf32>
      %174 = vector.shape_cast %173 : vector<1x64x64xf32> to vector<64x64xf32>
      %175 = vector.broadcast %172 : vector<64x1xf32> to vector<64x64xf32>
      %176 = arith.mulf %174, %175 : vector<64x64xf32>
      %177 = arith.truncf %176 : vector<64x64xf32> to vector<64x64xbf16>
      %c0_128 = arith.constant 0 : index
      %c0_129 = arith.constant 0 : index
      %c0_130 = arith.constant 0 : index
      %178 = vector.load %arg7[%c0_128, %c0_129, %c0_130] : memref<1x64x256xbf16, #tpu.memory_space<vmem>>, vector<1x64x64xbf16>
      %179 = vector.shape_cast %178 : vector<1x64x64xbf16> to vector<64x64xbf16>
      %180 = vector.shape_cast %177 : vector<64x64xbf16> to vector<1x64x64xbf16>
      tpu.vector_store %arg7[%c0_128, %c0_129, %c0_130], %180 {strides = array<i32>} : memref<1x64x256xbf16, #tpu.memory_space<vmem>>, vector<1x64x64xbf16>,
      %c1_131 = arith.constant 1 : index
      %c0_132 = arith.constant 0 : index
      %c0_133 = arith.constant 0 : index
      %181 = vector.load %arg9[%c1_131, %c0_132, %c0_133] : memref<4x64x1xf32, #tpu.memory_space<vmem>>, vector<1x64x1xf32>
      %182 = vector.shape_cast %181 : vector<1x64x1xf32> to vector<64x1xf32>
      %183 = tpu.reciprocal %182 {approx = true} : vector<64x1xf32> -> vector<64x1xf32>
      %c1_134 = arith.constant 1 : index
      %c0_135 = arith.constant 0 : index
      %c0_136 = arith.constant 0 : index
      %184 = vector.load %arg10[%c1_134, %c0_135, %c0_136] : memref<4x64x64xf32, #tpu.memory_space<vmem>>, vector<1x64x64xf32>
      %185 = vector.shape_cast %184 : vector<1x64x64xf32> to vector<64x64xf32>
      %186 = vector.broadcast %183 : vector<64x1xf32> to vector<64x64xf32>
      %187 = arith.mulf %185, %186 : vector<64x64xf32>
      %188 = arith.truncf %187 : vector<64x64xf32> to vector<64x64xbf16>
      %c0_137 = arith.constant 0 : index
      %c0_138 = arith.constant 0 : index
      %c64_139 = arith.constant 64 : index
      %189 = vector.load %arg7[%c0_137, %c0_138, %c64_139] : memref<1x64x256xbf16, #tpu.memory_space<vmem>>, vector<1x64x64xbf16>
      %190 = vector.shape_cast %189 : vector<1x64x64xbf16> to vector<64x64xbf16>
      %191 = vector.shape_cast %188 : vector<64x64xbf16> to vector<1x64x64xbf16>
      tpu.vector_store %arg7[%c0_137, %c0_138, %c64_139], %191 {strides = array<i32>} : memref<1x64x256xbf16, #tpu.memory_space<vmem>>, vector<1x64x64xbf16>,
      %c2_140 = arith.constant 2 : index
      %c0_141 = arith.constant 0 : index
      %c0_142 = arith.constant 0 : index
      %192 = vector.load %arg9[%c2_140, %c0_141, %c0_142] : memref<4x64x1xf32, #tpu.memory_space<vmem>>, vector<1x64x1xf32>
      %193 = vector.shape_cast %192 : vector<1x64x1xf32> to vector<64x1xf32>
      %194 = tpu.reciprocal %193 {approx = true} : vector<64x1xf32> -> vector<64x1xf32>
      %c2_143 = arith.constant 2 : index
      %c0_144 = arith.constant 0 : index
      %c0_145 = arith.constant 0 : index
      %195 = vector.load %arg10[%c2_143, %c0_144, %c0_145] : memref<4x64x64xf32, #tpu.memory_space<vmem>>, vector<1x64x64xf32>
      %196 = vector.shape_cast %195 : vector<1x64x64xf32> to vector<64x64xf32>
      %197 = vector.broadcast %194 : vector<64x1xf32> to vector<64x64xf32>
      %198 = arith.mulf %196, %197 : vector<64x64xf32>
      %199 = arith.truncf %198 : vector<64x64xf32> to vector<64x64xbf16>
      %c0_146 = arith.constant 0 : index
      %c0_147 = arith.constant 0 : index
      %c128_148 = arith.constant 128 : index
      %200 = vector.load %arg7[%c0_146, %c0_147, %c128_148] : memref<1x64x256xbf16, #tpu.memory_space<vmem>>, vector<1x64x64xbf16>
      %201 = vector.shape_cast %200 : vector<1x64x64xbf16> to vector<64x64xbf16>
      %202 = vector.shape_cast %199 : vector<64x64xbf16> to vector<1x64x64xbf16>
      tpu.vector_store %arg7[%c0_146, %c0_147, %c128_148], %202 {strides = array<i32>} : memref<1x64x256xbf16, #tpu.memory_space<vmem>>, vector<1x64x64xbf16>,
      %c3_149 = arith.constant 3 : index
      %c0_150 = arith.constant 0 : index
      %c0_151 = arith.constant 0 : index
      %203 = vector.load %arg9[%c3_149, %c0_150, %c0_151] : memref<4x64x1xf32, #tpu.memory_space<vmem>>, vector<1x64x1xf32>
      %204 = vector.shape_cast %203 : vector<1x64x1xf32> to vector<64x1xf32>
      %205 = tpu.reciprocal %204 {approx = true} : vector<64x1xf32> -> vector<64x1xf32>
      %c3_152 = arith.constant 3 : index
      %c0_153 = arith.constant 0 : index
      %c0_154 = arith.constant 0 : index
      %206 = vector.load %arg10[%c3_152, %c0_153, %c0_154] : memref<4x64x64xf32, #tpu.memory_space<vmem>>, vector<1x64x64xf32>
      %207 = vector.shape_cast %206 : vector<1x64x64xf32> to vector<64x64xf32>
      %208 = vector.broadcast %205 : vector<64x1xf32> to vector<64x64xf32>
      %209 = arith.mulf %207, %208 : vector<64x64xf32>
      %210 = arith.truncf %209 : vector<64x64xf32> to vector<64x64xbf16>
      %c0_155 = arith.constant 0 : index
      %c0_156 = arith.constant 0 : index
      %c192_157 = arith.constant 192 : index
      %211 = vector.load %arg7[%c0_155, %c0_156, %c192_157] : memref<1x64x256xbf16, #tpu.memory_space<vmem>>, vector<1x64x64xbf16>
      %212 = vector.shape_cast %211 : vector<1x64x64xbf16> to vector<64x64xbf16>
      %213 = vector.shape_cast %210 : vector<64x64xbf16> to vector<1x64x64xbf16>
      tpu.vector_store %arg7[%c0_155, %c0_156, %c192_157], %213 {strides = array<i32>} : memref<1x64x256xbf16, #tpu.memory_space<vmem>>, vector<1x64x64xbf16>,
    } else {
    }
    return
  }
  func.func @transform_0(%arg0: i32, %arg1: i32, %arg2: i32, %arg3: i32) -> (i32, i32, i32) {
    %c0_i32 = arith.constant 0 : i32
    %0 = arith.addi %c0_i32, %arg1 : i32
    %c0_i32_0 = arith.constant 0 : i32
    return %arg0, %arg2, %0 : i32, i32, i32
  }
  func.func @transform_1(%arg0: i32, %arg1: i32, %arg2: i32, %arg3: i32) -> (i32, i32, i32) {
    %c2_i32 = arith.constant 2 : i32
    %0 = arith.addi %c2_i32, %arg1 : i32
    %c0_i32 = arith.constant 0 : i32
    return %arg0, %arg3, %0 : i32, i32, i32
  }
  func.func @transform_2(%arg0: i32, %arg1: i32, %arg2: i32, %arg3: i32) -> (i32, i32, i32) {
    %c4_i32 = arith.constant 4 : i32
    %0 = arith.addi %c4_i32, %arg1 : i32
    %c0_i32 = arith.constant 0 : i32
    return %arg0, %arg3, %0 : i32, i32, i32
  }
  func.func @transform_3(%arg0: i32, %arg1: i32, %arg2: i32, %arg3: i32) -> (i32, i32, i32) {
    %c0_i32 = arith.constant 0 : i32
    return %arg0, %arg2, %arg1 : i32, i32, i32
  }
}

module attributes {stable_mosaic.version = 11 : i64} {
  func.func @_linear_kernel(%arg0: i32, %arg1: i32, %arg2: i32, %arg3: memref<128x256xbf16, #tpu.memory_space<vmem>>, %arg4: memref<256x256xbf16, #tpu.memory_space<vmem>>, %arg5: memref<1x256xf32, #tpu.memory_space<vmem>>, %arg6: memref<128x256xf32, #tpu.memory_space<vmem>>, %arg7: memref<128x256xf32, #tpu.memory_space<vmem>>) attributes {dimension_semantics = [#tpu.dimension_semantics<parallel>, #tpu.dimension_semantics<parallel>, #tpu.dimension_semantics<arbitrary>], iteration_bounds = array<i64: 2, 2, 2>, scalar_prefetch = 0 : i64, scratch_operands = 1 : i64, tpu.core_type = #tpu.core_type<tc>, window_params = [{transform_indices = @transform_0, window_bounds = array<i64: 128, 256>}, {transform_indices = @transform_1, window_bounds = array<i64: 256, 256>}, {transform_indices = @transform_2, window_bounds = array<i64: 1, 256>}, {transform_indices = @transform_3, window_bounds = array<i64: 128, 256>}]} {
    %c0_i32 = arith.constant 0 : i32
    %0 = arith.cmpi eq, %arg2, %c0_i32 : i32
    %1 = arith.extui %0 : i1 to i32
    %c0_i32_0 = arith.constant 0 : i32
    %2 = arith.cmpi ne, %1, %c0_i32_0 : i32
    scf.if %2 {
      %cst_9 = arith.constant 0.000000e+00 : f32
      %12 = vector.broadcast %cst_9 : f32 to vector<128x256xf32>
      %c0_10 = arith.constant 0 : index
      %c0_11 = arith.constant 0 : index
      %13 = vector.load %arg7[%c0_10, %c0_11] : memref<128x256xf32, #tpu.memory_space<vmem>>, vector<128x256xf32>
      tpu.vector_store %arg7[%c0_10, %c0_11], %12 {strides = array<i32>} : memref<128x256xf32, #tpu.memory_space<vmem>>, vector<128x256xf32>,
    } else {
    }
    %c0 = arith.constant 0 : index
    %c0_1 = arith.constant 0 : index
    %3 = vector.load %arg7[%c0, %c0_1] : memref<128x256xf32, #tpu.memory_space<vmem>>, vector<128x256xf32>
    %c0_2 = arith.constant 0 : index
    %c0_3 = arith.constant 0 : index
    %4 = vector.load %arg3[%c0_2, %c0_3] : memref<128x256xbf16, #tpu.memory_space<vmem>>, vector<128x256xbf16>
    %c0_4 = arith.constant 0 : index
    %c0_5 = arith.constant 0 : index
    %5 = vector.load %arg4[%c0_4, %c0_5] : memref<256x256xbf16, #tpu.memory_space<vmem>>, vector<256x256xbf16>
    %cst = arith.constant dense<0.000000e+00> : vector<128x256xf32>
    %6 = tpu.matmul %4, %5, %cst {dimension_numbers = #tpu.dot_dimension_numbers<[1], [0], [0], [1], [0, 0, 1, 1], [], []>} : vector<128x256xbf16>, vector<256x256xbf16>, vector<128x256xf32> -> vector<128x256xf32>
    %7 = arith.addf %3, %6 : vector<128x256xf32>
    %c0_6 = arith.constant 0 : index
    %c0_7 = arith.constant 0 : index
    %8 = vector.load %arg7[%c0_6, %c0_7] : memref<128x256xf32, #tpu.memory_space<vmem>>, vector<128x256xf32>
    tpu.vector_store %arg7[%c0_6, %c0_7], %7 {strides = array<i32>} : memref<128x256xf32, #tpu.memory_space<vmem>>, vector<128x256xf32>,
    %c1_i32 = arith.constant 1 : i32
    %9 = arith.cmpi eq, %arg2, %c1_i32 : i32
    %10 = arith.extui %9 : i1 to i32
    %c0_i32_8 = arith.constant 0 : i32
    %11 = arith.cmpi ne, %10, %c0_i32_8 : i32
    scf.if %11 {
      %c0_9 = arith.constant 0 : index
      %c0_10 = arith.constant 0 : index
      %12 = vector.load %arg7[%c0_9, %c0_10] : memref<128x256xf32, #tpu.memory_space<vmem>>, vector<128x256xf32>
      %c0_11 = arith.constant 0 : index
      %c0_12 = arith.constant 0 : index
      %13 = vector.load %arg5[%c0_11, %c0_12] : memref<1x256xf32, #tpu.memory_space<vmem>>, vector<1x256xf32>
      %14 = vector.broadcast %13 : vector<1x256xf32> to vector<128x256xf32>
      %15 = arith.addf %12, %14 : vector<128x256xf32>
      %c0_13 = arith.constant 0 : index
      %c0_14 = arith.constant 0 : index
      %16 = vector.load %arg6[%c0_13, %c0_14] : memref<128x256xf32, #tpu.memory_space<vmem>>, vector<128x256xf32>
      tpu.vector_store %arg6[%c0_13, %c0_14], %15 {strides = array<i32>} : memref<128x256xf32, #tpu.memory_space<vmem>>, vector<128x256xf32>,
    } else {
    }
    return
  }
  func.func @transform_0(%arg0: i32, %arg1: i32, %arg2: i32) -> (i32, i32) {
    %c0_i32 = arith.constant 0 : i32
    return %arg0, %arg2 : i32, i32
  }
  func.func @transform_1(%arg0: i32, %arg1: i32, %arg2: i32) -> (i32, i32) {
    %c0_i32 = arith.constant 0 : i32
    return %arg2, %arg1 : i32, i32
  }
  func.func @transform_2(%arg0: i32, %arg1: i32, %arg2: i32) -> (i32, i32) {
    %c0_i32 = arith.constant 0 : i32
    %c0_i32_0 = arith.constant 0 : i32
    return %c0_i32, %arg1 : i32, i32
  }
  func.func @transform_3(%arg0: i32, %arg1: i32, %arg2: i32) -> (i32, i32) {
    %c0_i32 = arith.constant 0 : i32
    return %arg0, %arg1 : i32, i32
  }
}

</mosaic_0001>

<llo_original>
// kernel: mha_forward.3
$region0: #{mha_forward.3}
  #allocation0 [shape = 'u32[]', space=smem, size = 0x4, offset = 0x4, fixed_abs, tag = 'smem constant byte address 0x4 - core index']
  #allocation1 [shape = 'u32[72,128]{1,0:T(1,128)}', space=vmem, size = 0x9000, scoped, tag = 'internal scratch']
  #allocation2 [shape = 'f32[128,256]{1,0:T(8,128)}', space=vmem, size = 0x20000, scoped, tag = 'scratch operand']
  %s0 = inlined_call_operand.vmem [shape: bf16[256,512], index: 0, kind: input, shape index: {}]
  %s1 = inlined_call_operand.hbm [shape: bf16[512,1536], index: 1, kind: input, shape index: {}]
  %s2 = inlined_call_operand.vmem [shape: f32[1,1536], index: 2, kind: input, shape index: {}]
  %s3 = inlined_call_operand.vmem [shape: bf16[256,1536], index: 3, kind: output, shape index: {}]
  %s4 = sld [smem:[#allocation0]]
  $region129: #{mha_forward.3} parent=0
    _
  %s6 = ssub.s32 1, %s4
  %s7 = scalar_select 0, %s6, %s4
  $region1: #{mha_forward.3} parent=0
    #allocation3 [shape = 'u8[131072]{0}', space=vmem, size = 0x20000, scoped, tag = 'input window, operand 0']
    #allocation4 [shape = 'u8[262144]{0}', space=vmem, size = 0x40000, scoped, tag = 'input window, operand 1']
    #allocation5 [shape = 's32[2]{0}', space=sflag, size = 0x8, scoped, tag = 'scoped memory for mha_forward.3']
    #allocation6 [shape = 'u8[131072]{0}', space=vmem, size = 0x20000, scoped, tag = 'output window, operand 0']
    %8 = vsyncpa [#allocation5], 0
    %s9 = scalar_lea.sflag [#allocation5], 1
    %10 = vsyncpa %s9, 0
    loop: start=0, step=1, limit=26
    $region2: #{mha_forward.3} parent=1 // loop_pre_header
      _
    $region3: #{mha_forward.3} parent=1 // loop_header
      %s12 = sphi 0, %s16
      %p13 = scmp.ge.s32.totalorder %s12, 26
      %s19 = sphi 0, %s38
      %s20 = sphi 0, %s34
      %s21 = sphi 0, %s30
      %s22 = sphi 0, %s19
      %s23 = sphi 0, %s20
      %s24 = sphi 0, %s21
      %s25 = sphi 0, %s22
      %s26 = sphi 0, %s23
      %s27 = sphi 0, %s24
      %s43 = sphi 0, %s45
      %s46 = sphi 0, %s43
      %s47 = sphi 0, %s46
      %s63 = sphi 0, %s47
      %s71 = sphi 0, %s73
      %s74 = sphi 0, %s71
      %s75 = sphi 0, %s74
      %s91 = sphi 0, %s75
      %s97 = sphi 0, %s99
      %s100 = sphi 0, %s97
      %s101 = sphi 0, %s100
      %s117 = sphi 0, %s101
      %s125 = sphi 0, %s127
      %s128 = sphi 0, %s125
      %s129 = sphi 0, %s128
      %s145 = sphi 0, %s129
    $region4: #{mha_forward.3} parent=1 // loop_header_branch
      %15 = sbr.rel (%p13) target = $region8
    $region5: #{mha_forward.3} parent=1 // loop_body
      %s17 = ssub.s32 %s12, 1
      %s18 = ssub.s32 %s12, 2
      %s28 = sadd.s32 1, %s21
      %p29 = scmp.ge.s32.totalorder %s28, 2
      %s30 = scalar_select %p29, 0, %s28
      %s31 = sadd.s32 1, %s20
      %s32 = scalar_select %p29, %s31, %s20
      %p33 = scmp.ge.s32.totalorder %s32, 6
      %s34 = scalar_select %p33, 0, %s32
      %s35 = sadd.s32 1, %s19
      %s36 = scalar_select %p33, %s35, %s19
      %p37 = scmp.ge.s32.totalorder %s36, 2
      %s38 = scalar_select %p37, 0, %s36
      %s39 = ssub.s32 %s19, %s38
      %s40 = ssub.s32 %s21, %s30
      %s41 = sor.u32 %s39, %s40
      %p42 = scmp.eq.s32.totalorder %s41, 0
      %s44 = sadd.s32 %s43, 1
      %s45 = scalar_select %p42, %s43, %s44
      %p48 = pneg %p42
      %p49 = scmp.eq.s32.totalorder %s12, 23
      %p50 = por %p48, %p49
      %p51 = scmp.ne.s32.totalorder %s43, %s46
      %p52 = scmp.eq.s32.totalorder %s12, 0
      %p53 = por %p51, %p52
      %p54 = scmp.ne.s32.totalorder %s43, %s46
      %p55 = scmp.eq.s32.totalorder %s17, 23
      %p56 = por %p54, %p55
      %p57 = scmp.ne.s32.totalorder %s46, %s47
      %p58 = scmp.eq.s32.totalorder %s17, 0
      %p59 = por %p57, %p58
      %p60 = scmp.ne.s32.totalorder %s46, %s47
      %p61 = scmp.eq.s32.totalorder %s18, 23
      %p62 = por %p60, %p61
      %p64 = scmp.ne.s32.totalorder %s47, %s63
      %p65 = scmp.eq.s32.totalorder %s18, 0
      %p66 = por %p64, %p65
      %s67 = ssub.s32 %s21, %s30
      %s68 = ssub.s32 %s20, %s34
      %s69 = sor.u32 %s67, %s68
      %p70 = scmp.eq.s32.totalorder %s69, 0
      %s72 = sadd.s32 %s71, 1
      %s73 = scalar_select %p70, %s71, %s72
      %p76 = pneg %p70
      %p77 = scmp.eq.s32.totalorder %s12, 23
      %p78 = por %p76, %p77
      %p79 = scmp.ne.s32.totalorder %s71, %s74
      %p80 = scmp.eq.s32.totalorder %s12, 0
      %p81 = por %p79, %p80
      %p82 = scmp.ne.s32.totalorder %s71, %s74
      %p83 = scmp.eq.s32.totalorder %s17, 23
      %p84 = por %p82, %p83
      %p85 = scmp.ne.s32.totalorder %s74, %s75
      %p86 = scmp.eq.s32.totalorder %s17, 0
      %p87 = por %p85, %p86
      %p88 = scmp.ne.s32.totalorder %s74, %s75
      %p89 = scmp.eq.s32.totalorder %s18, 23
      %p90 = por %p88, %p89
      %p92 = scmp.ne.s32.totalorder %s75, %s91
      %p93 = scmp.eq.s32.totalorder %s18, 0
      %p94 = por %p92, %p93
      %s95 = ssub.s32 %s20, %s34
      %p96 = scmp.eq.s32.totalorder %s95, 0
      %s98 = sadd.s32 %s97, 1
      %s99 = scalar_select %p96, %s97, %s98
      %p102 = pneg %p96
      %p103 = scmp.eq.s32.totalorder %s12, 23
      %p104 = por %p102, %p103
      %p105 = scmp.ne.s32.totalorder %s97, %s100
      %p106 = scmp.eq.s32.totalorder %s12, 0
      %p107 = por %p105, %p106
      %p108 = scmp.ne.s32.totalorder %s97, %s100
      %p109 = scmp.eq.s32.totalorder %s17, 23
      %p110 = por %p108, %p109
      %p111 = scmp.ne.s32.totalorder %s100, %s101
      %p112 = scmp.eq.s32.totalorder %s17, 0
      %p113 = por %p111, %p112
      %p114 = scmp.ne.s32.totalorder %s100, %s101
      %p115 = scmp.eq.s32.totalorder %s18, 23
      %p116 = por %p114, %p115
      %p118 = scmp.ne.s32.totalorder %s101, %s117
      %p119 = scmp.eq.s32.totalorder %s18, 0
      %p120 = por %p118, %p119
      %s121 = ssub.s32 %s19, %s38
      %s122 = ssub.s32 %s20, %s34
      %s123 = sor.u32 %s121, %s122
      %p124 = scmp.eq.s32.totalorder %s123, 0
      %s126 = sadd.s32 %s125, 1
      %s127 = scalar_select %p124, %s125, %s126
      %p130 = pneg %p124
      %p131 = scmp.eq.s32.totalorder %s12, 23
      %p132 = por %p130, %p131
      %p133 = scmp.ne.s32.totalorder %s125, %s128
      %p134 = scmp.eq.s32.totalorder %s12, 0
      %p135 = por %p133, %p134
      %p136 = scmp.ne.s32.totalorder %s125, %s128
      %p137 = scmp.eq.s32.totalorder %s17, 23
      %p138 = por %p136, %p137
      %p139 = scmp.ne.s32.totalorder %s128, %s129
      %p140 = scmp.eq.s32.totalorder %s17, 0
      %p141 = por %p139, %p140
      %p142 = scmp.ne.s32.totalorder %s128, %s129
      %p143 = scmp.eq.s32.totalorder %s18, 23
      %p144 = por %p142, %p143
      %p146 = scmp.ne.s32.totalorder %s129, %s145
      %p147 = scmp.eq.s32.totalorder %s18, 0
      %p148 = por %p146, %p147
      %p149 = scmp.le.s32.totalorder 1, %s12
      %p150 = scmp.lt.s32.totalorder %s12, 25
      %p151 = pnand %p149, %p150
      %p152 = pneg %p151
      // Predicated region
      $region9: #{mha_forward.3} parent=5 // pred_check
        _
      $region10: #{mha_forward.3} parent=5 // pred_check_branch
        %154 = sbr.rel (%p151) target = $region12
      $region11: #{mha_forward.3} parent=5 // pred_region
        %s155 = ssub.s32 %s12, 1
      $region12: #{mha_forward.3} parent=5 // pred_fallthru
        _
      %p156 = scmp.lt.s32.totalorder %s12, 24
      // Predicated region
      $region13: #{mha_forward.3} parent=5 // pred_check
        %p157 = pneg %p156
      $region14: #{mha_forward.3} parent=5 // pred_check_branch
        %159 = sbr.rel (%p157) target = $region16
      $region15: #{mha_forward.3} parent=5 // pred_region
        // Predicated region
        $region17: #{mha_forward.3} parent=15 // pred_check
          %p160 = pneg %p53
        $region18: #{mha_forward.3} parent=15 // pred_check_branch
          %162 = sbr.rel (%p160) target = $region20
        $region19: #{mha_forward.3} parent=15 // pred_region
          %s163 = sand.u32 %s43, 1
          %s164 = sand.u32 %s43, 1
          %s165 = smul.addr %s164, 128
          %s166 = scalar_lea.vmem [#allocation3], %s165
          %s167 = smul.u32 16, %s19
          %s168 = smul.u32 2, %s21
          %s169 = smul.addr %s167, 4
          %s170 = sadd.s32 %s168, %s169
          %s171 = smul.addr %s170, 4
          %s172 = scalar_lea.vmem %s0, %s171
          // Predicated region
          $region21: #{mha_forward.3} parent=19 // pred_check
            _
          $region22: #{mha_forward.3} parent=19 // pred_check_branch
            %174 = sbr.rel (0) target = $region24
          $region23: #{mha_forward.3} parent=19 // pred_region
            // Predicated region
            $region25: #{mha_forward.3} parent=23 // pred_check
              _
            $region26: #{mha_forward.3} parent=23 // pred_check_branch
              %176 = sbr.rel (0) target = $region28
            $region27: #{mha_forward.3} parent=23 // pred_region
              // Predicated region
              $region40: #{mha_forward.3} parent=27 // pred_check
                _
              $region41: #{mha_forward.3} parent=27 // pred_check_branch
                %222 = sbr.rel (0) target = $region43
              $region42: #{mha_forward.3} parent=27 // pred_region
                loop: start=0, step=1, limit=1
                $region44: #{mha_forward.3} parent=42 // loop_pre_header
                  _
                $region45: #{mha_forward.3} parent=42 // loop_header
                  %s224 = sphi 0, %s228
                  %p225 = scmp.ge.s32.totalorder %s224, 1
                  %s229 = sphi %s172, %s172
                  %s230 = sphi %s166, %s166
                $region46: #{mha_forward.3} parent=42 // loop_header_branch
                  %227 = sbr.rel (%p225) target = $region50
                $region47: #{mha_forward.3} parent=42 // loop_body
                  %v231 = vld [vmem:[%s229] sm:$0xff]
                  %232 = vst [vmem:[%s230] sm:$0xff] %v231
                  %v233 = vld [vmem:[%s229 + $0x10] sm:$0xff]
                  %234 = vst [vmem:[%s230 + $0x8] sm:$0xff] %v233
                  %v235 = vld [vmem:[%s229 + $0x20] sm:$0xff]
                  %236 = vst [vmem:[%s230 + $0x10] sm:$0xff] %v235
                  %v237 = vld [vmem:[%s229 + $0x30] sm:$0xff]
                  %238 = vst [vmem:[%s230 + $0x18] sm:$0xff] %v237
                  %v239 = vld [vmem:[%s229 + $0x40] sm:$0xff]
                  %240 = vst [vmem:[%s230 + $0x20] sm:$0xff] %v239
                  %v241 = vld [vmem:[%s229 + $0x50] sm:$0xff]
                  %242 = vst [vmem:[%s230 + $0x28] sm:$0xff] %v241
                  %v243 = vld [vmem:[%s229 + $0x60] sm:$0xff]
                  %244 = vst [vmem:[%s230 + $0x30] sm:$0xff] %v243
                  %v245 = vld [vmem:[%s229 + $0x70] sm:$0xff]
                  %246 = vst [vmem:[%s230 + $0x38] sm:$0xff] %v245
                  %v247 = vld [vmem:[%s229 + $0x80] sm:$0xff]
                  %248 = vst [vmem:[%s230 + $0x40] sm:$0xff] %v247
                  %v249 = vld [vmem:[%s229 + $0x90] sm:$0xff]
                  %250 = vst [vmem:[%s230 + $0x48] sm:$0xff] %v249
                  %v251 = vld [vmem:[%s229 + $0xa0] sm:$0xff]
                  %252 = vst [vmem:[%s230 + $0x50] sm:$0xff] %v251
                  %v253 = vld [vmem:[%s229 + $0xb0] sm:$0xff]
                  %254 = vst [vmem:[%s230 + $0x58] sm:$0xff] %v253
                  %v255 = vld [vmem:[%s229 + $0xc0] sm:$0xff]
                  %256 = vst [vmem:[%s230 + $0x60] sm:$0xff] %v255
                  %v257 = vld [vmem:[%s229 + $0xd0] sm:$0xff]
                  %258 = vst [vmem:[%s230 + $0x68] sm:$0xff] %v257
                  %v259 = vld [vmem:[%s229 + $0xe0] sm:$0xff]
                  %260 = vst [vmem:[%s230 + $0x70] sm:$0xff] %v259
                  %v261 = vld [vmem:[%s229 + $0xf0] sm:$0xff]
                  %262 = vst [vmem:[%s230 + $0x78] sm:$0xff] %v261
                $region48: #{mha_forward.3} parent=42 // loop_footer
                  %s228 = sadd.s32 1, %s224
                $region49: #{mha_forward.3} parent=42 // loop_footer_branch
                  %223 = sbr.rel target = $region45
                $region50: #{mha_forward.3} parent=42 // loop_exit
                  _
              $region43: #{mha_forward.3} parent=27 // pred_fallthru
                _
              // Predicated region
              $region51: #{mha_forward.3} parent=27 // pred_check
                _
              $region52: #{mha_forward.3} parent=27 // pred_check_branch
                %264 = sbr.rel target = $region54
              $region53: #{mha_forward.3} parent=27 // pred_region
                _
              $region54: #{mha_forward.3} parent=27 // pred_fallthru
                _
            $region28: #{mha_forward.3} parent=23 // pred_fallthru
              _
            // Predicated region
            $region29: #{mha_forward.3} parent=23 // pred_check
              _
            $region30: #{mha_forward.3} parent=23 // pred_check_branch
              %178 = sbr.rel target = $region32
            $region31: #{mha_forward.3} parent=23 // pred_region
              %s180 = ssub.s32 256, 1
              loop: start=0, step=1, limit=1
              $region33: #{mha_forward.3} parent=31 // loop_pre_header
                _
              $region34: #{mha_forward.3} parent=31 // loop_header
                %s182 = sphi 0, %s186
                %p183 = scmp.ge.s32.totalorder %s182, 1
                %s187 = sphi %s172, %s172
                %s188 = sphi %s166, %s166
              $region35: #{mha_forward.3} parent=31 // loop_header_branch
                %185 = sbr.rel (%p183) target = $region39
              $region36: #{mha_forward.3} parent=31 // loop_body
                %v189 = vld [vmem:[%s187] sm:%s180]
                %190 = vst [vmem:[%s188] sm:%s180] %v189
                %v191 = vld [vmem:[%s187 + $0x10] sm:%s180]
                %192 = vst [vmem:[%s188 + $0x8] sm:%s180] %v191
                %v193 = vld [vmem:[%s187 + $0x20] sm:%s180]
                %194 = vst [vmem:[%s188 + $0x10] sm:%s180] %v193
                %v195 = vld [vmem:[%s187 + $0x30] sm:%s180]
                %196 = vst [vmem:[%s188 + $0x18] sm:%s180] %v195
                %v197 = vld [vmem:[%s187 + $0x40] sm:%s180]
                %198 = vst [vmem:[%s188 + $0x20] sm:%s180] %v197
                %v199 = vld [vmem:[%s187 + $0x50] sm:%s180]
                %200 = vst [vmem:[%s188 + $0x28] sm:%s180] %v199
                %v201 = vld [vmem:[%s187 + $0x60] sm:%s180]
                %202 = vst [vmem:[%s188 + $0x30] sm:%s180] %v201
                %v203 = vld [vmem:[%s187 + $0x70] sm:%s180]
                %204 = vst [vmem:[%s188 + $0x38] sm:%s180] %v203
                %v205 = vld [vmem:[%s187 + $0x80] sm:%s180]
                %206 = vst [vmem:[%s188 + $0x40] sm:%s180] %v205
                %v207 = vld [vmem:[%s187 + $0x90] sm:%s180]
                %208 = vst [vmem:[%s188 + $0x48] sm:%s180] %v207
                %v209 = vld [vmem:[%s187 + $0xa0] sm:%s180]
                %210 = vst [vmem:[%s188 + $0x50] sm:%s180] %v209
                %v211 = vld [vmem:[%s187 + $0xb0] sm:%s180]
                %212 = vst [vmem:[%s188 + $0x58] sm:%s180] %v211
                %v213 = vld [vmem:[%s187 + $0xc0] sm:%s180]
                %214 = vst [vmem:[%s188 + $0x60] sm:%s180] %v213
                %v215 = vld [vmem:[%s187 + $0xd0] sm:%s180]
                %216 = vst [vmem:[%s188 + $0x68] sm:%s180] %v215
                %v217 = vld [vmem:[%s187 + $0xe0] sm:%s180]
                %218 = vst [vmem:[%s188 + $0x70] sm:%s180] %v217
                %v219 = vld [vmem:[%s187 + $0xf0] sm:%s180]
                %220 = vst [vmem:[%s188 + $0x78] sm:%s180] %v219
              $region37: #{mha_forward.3} parent=31 // loop_footer
                %s186 = sadd.s32 1, %s182
              $region38: #{mha_forward.3} parent=31 // loop_footer_branch
                %181 = sbr.rel target = $region34
              $region39: #{mha_forward.3} parent=31 // loop_exit
                _
            $region32: #{mha_forward.3} parent=23 // pred_fallthru
              _
          $region24: #{mha_forward.3} parent=19 // pred_fallthru
            _
          %265 = vnop
        $region20: #{mha_forward.3} parent=15 // pred_fallthru
          _
        // Predicated region
        $region55: #{mha_forward.3} parent=15 // pred_check
          %p266 = pneg %p81
        $region56: #{mha_forward.3} parent=15 // pred_check_branch
          %268 = sbr.rel (%p266) target = $region58
        $region57: #{mha_forward.3} parent=15 // pred_region
          %s269 = sand.u32 %s71, 1
          %s270 = scalar_lea.sflag [#allocation5], %s269
          %s271 = sand.u32 %s71, 1
          %s272 = smul.addr %s271, 256
          %s273 = scalar_lea.vmem [#allocation4], %s272
          %s274 = smul.u32 32, %s21
          %s275 = smul.u32 2, %s20
          %277 = vsyncadd %s270, 0
          %s278 = smul.addr %s274, 12
          %s279 = sadd.s32 %s275, %s278
          %s280 = smul.addr %s279, 4
          %s281 = scalar_lea.hbm %s1, %s280
          %s282 = sshll.u32 %s281, 4
          %s283 = int_to_ptr.hbm [resolvable:$true] %s282
          %s284 = sshll.u32 %s273, 4
          %s285 = int_to_ptr.vmem [resolvable:$true] %s284
          %290 = dma.hbm_to_vmem [thread:$0]  %s283, 4096, %s285, %s270, 768, 128, 8
        $region58: #{mha_forward.3} parent=15 // pred_fallthru
          _
        // Predicated region
        $region59: #{mha_forward.3} parent=15 // pred_check
          %p291 = pneg %p107
        $region60: #{mha_forward.3} parent=15 // pred_check_branch
          %293 = sbr.rel (%p291) target = $region62
        $region61: #{mha_forward.3} parent=15 // pred_region
          %s294 = smul.u32 2, %s20
          %p295 = scmp.lt.s32.totalorder %s294, 11
          %s296 = scalar_select %p295, %s294, 11
          %s297 = scalar_lea.vmem %s2, %s296
          %s298 = smul.u32 2, %s20
        $region62: #{mha_forward.3} parent=15 // pred_fallthru
          _
      $region16: #{mha_forward.3} parent=5 // pred_fallthru
        _
      %p299 = scmp.le.s32.totalorder 1, %s12
      %p300 = scmp.lt.s32.totalorder %s12, 25
      %p301 = pnand %p299, %p300
      %p302 = pneg %p301
      // Predicated region
      $region63: #{mha_forward.3} parent=5 // pred_check
        _
      $region64: #{mha_forward.3} parent=5 // pred_check_branch
        %304 = sbr.rel (%p301) target = $region66
      $region65: #{mha_forward.3} parent=5 // pred_region
        %s305 = ssub.s32 %s12, 1
        %s306 = sand.u32 %s46, 1
        %s307 = sand.u32 %s46, 1
        %s308 = smul.addr %s307, 128
        %s309 = scalar_lea.vmem [#allocation3], %s308
        // Predicated region
        $region67: #{mha_forward.3} parent=65 // pred_check
          %p310 = pneg %p59
        $region68: #{mha_forward.3} parent=65 // pred_check_branch
          %312 = sbr.rel (%p310) target = $region70
        $region69: #{mha_forward.3} parent=65 // pred_region
          _
        $region70: #{mha_forward.3} parent=65 // pred_fallthru
          _
        %s313 = sand.u32 %s74, 1
        %s314 = scalar_lea.sflag [#allocation5], %s313
        %s315 = sand.u32 %s74, 1
        %s316 = smul.addr %s315, 256
        %s317 = scalar_lea.vmem [#allocation4], %s316
        // Predicated region
        $region71: #{mha_forward.3} parent=65 // pred_check
          %p318 = pneg %p87
        $region72: #{mha_forward.3} parent=65 // pred_check_branch
          %320 = sbr.rel (%p318) target = $region74
        $region73: #{mha_forward.3} parent=65 // pred_region
          %322 = dma.done %s314, 4096
        $region74: #{mha_forward.3} parent=65 // pred_fallthru
          _
        %s323 = sand.u32 %s46, 1
        %s324 = sand.u32 %s46, 1
        %s325 = smul.addr %s324, 128
        %s326 = scalar_lea.vmem [#allocation3], %s325
        %p327 = pneg %p59
        %p328 = pneg %p56
        %s329 = sand.u32 %s74, 1
        %s330 = scalar_lea.sflag [#allocation5], %s329
        %s331 = sand.u32 %s74, 1
        %s332 = smul.addr %s331, 256
        %s333 = scalar_lea.vmem [#allocation4], %s332
        %p334 = pneg %p87
        %p335 = pneg %p84
        %s336 = smul.u32 2, %s23
        %p337 = scmp.lt.s32.totalorder %s336, 11
        %s338 = scalar_select %p337, %s336, 11
        %s339 = scalar_lea.vmem %s2, %s338
        %p340 = pneg %p113
        %p341 = pneg %p110
        %p342 = pneg %p141
        %p343 = pneg %p138
        %s344 = sand.u32 %s128, 1
        %s345 = sand.u32 %s128, 1
        %s346 = smul.addr %s345, 128
        %s347 = scalar_lea.vmem [#allocation6], %s346
        %s348 = smul.u32 16, %s22
        %s349 = smul.u32 2, %s24
        %s350 = smul.u32 32, %s24
        %s351 = smul.u32 2, %s23
        %s352 = smul.u32 2, %s23
        %p353 = scmp.lt.s32.totalorder %s352, 11
        %s354 = scalar_select %p353, %s352, 11
        %s355 = scalar_lea.vmem %s2, %s354
        %s356 = smul.u32 2, %s23
        %s357 = smul.u32 16, %s22
        %s358 = smul.u32 2, %s23
        %p359 = scmp.eq.s32.totalorder %s24, 0
        // Predicated region
        $region75: #{mha_forward.3} parent=65 // pred_check
          %p360 = pneg %p359
        $region76: #{mha_forward.3} parent=65 // pred_check_branch
          %362 = sbr.rel (%p360) target = $region78
        $region77: #{mha_forward.3} parent=65 // pred_region
          %363 = vst [vmem:[#allocation2] sm:$0xff] 0.0
          %364 = vst [vmem:[#allocation2 + $0x8] sm:$0xff] 0.0
          %365 = vst [vmem:[#allocation2 + $0x10] sm:$0xff] 0.0
          %366 = vst [vmem:[#allocation2 + $0x18] sm:$0xff] 0.0
          %367 = vst [vmem:[#allocation2 + $0x20] sm:$0xff] 0.0
          %368 = vst [vmem:[#allocation2 + $0x28] sm:$0xff] 0.0
          %369 = vst [vmem:[#allocation2 + $0x30] sm:$0xff] 0.0
          %370 = vst [vmem:[#allocation2 + $0x38] sm:$0xff] 0.0
          %371 = vst [vmem:[#allocation2 + $0x40] sm:$0xff] 0.0
          %372 = vst [vmem:[#allocation2 + $0x48] sm:$0xff] 0.0
          %373 = vst [vmem:[#allocation2 + $0x50] sm:$0xff] 0.0
          %374 = vst [vmem:[#allocation2 + $0x58] sm:$0xff] 0.0
          %375 = vst [vmem:[#allocation2 + $0x60] sm:$0xff] 0.0
          %376 = vst [vmem:[#allocation2 + $0x68] sm:$0xff] 0.0
          %377 = vst [vmem:[#allocation2 + $0x70] sm:$0xff] 0.0
          %378 = vst [vmem:[#allocation2 + $0x78] sm:$0xff] 0.0
          %379 = vst [vmem:[#allocation2 + $0x80] sm:$0xff] 0.0
          %380 = vst [vmem:[#allocation2 + $0x88] sm:$0xff] 0.0
          %381 = vst [vmem:[#allocation2 + $0x90] sm:$0xff] 0.0
          %382 = vst [vmem:[#allocation2 + $0x98] sm:$0xff] 0.0
          %383 = vst [vmem:[#allocation2 + $0xa0] sm:$0xff] 0.0
          %384 = vst [vmem:[#allocation2 + $0xa8] sm:$0xff] 0.0
          %385 = vst [vmem:[#allocation2 + $0xb0] sm:$0xff] 0.0
          %386 = vst [vmem:[#allocation2 + $0xb8] sm:$0xff] 0.0
          %387 = vst [vmem:[#allocation2 + $0xc0] sm:$0xff] 0.0
          %388 = vst [vmem:[#allocation2 + $0xc8] sm:$0xff] 0.0
          %389 = vst [vmem:[#allocation2 + $0xd0] sm:$0xff] 0.0
          %390 = vst [vmem:[#allocation2 + $0xd8] sm:$0xff] 0.0
          %391 = vst [vmem:[#allocation2 + $0xe0] sm:$0xff] 0.0
          %392 = vst [vmem:[#allocation2 + $0xe8] sm:$0xff] 0.0
          %393 = vst [vmem:[#allocation2 + $0xf0] sm:$0xff] 0.0
          %394 = vst [vmem:[#allocation2 + $0xf8] sm:$0xff] 0.0
        $region78: #{mha_forward.3} parent=65 // pred_fallthru
          _
        %v395 = vld [vmem:[#allocation2] sm:$0xff]
        %v396 = vld [vmem:[#allocation2 + $0x8] sm:$0xff]
        %v397 = vld [vmem:[#allocation2 + $0x10] sm:$0xff]
        %v398 = vld [vmem:[#allocation2 + $0x18] sm:$0xff]
        %v399 = vld [vmem:[#allocation2 + $0x20] sm:$0xff]
        %v400 = vld [vmem:[#allocation2 + $0x28] sm:$0xff]
        %v401 = vld [vmem:[#allocation2 + $0x30] sm:$0xff]
        %v402 = vld [vmem:[#allocation2 + $0x38] sm:$0xff]
        %v403 = vld [vmem:[#allocation2 + $0x40] sm:$0xff]
        %v404 = vld [vmem:[#allocation2 + $0x48] sm:$0xff]
        %v405 = vld [vmem:[#allocation2 + $0x50] sm:$0xff]
        %v406 = vld [vmem:[#allocation2 + $0x58] sm:$0xff]
        %v407 = vld [vmem:[#allocation2 + $0x60] sm:$0xff]
        %v408 = vld [vmem:[#allocation2 + $0x68] sm:$0xff]
        %v409 = vld [vmem:[#allocation2 + $0x70] sm:$0xff]
        %v410 = vld [vmem:[#allocation2 + $0x78] sm:$0xff]
        %v411 = vld [vmem:[#allocation2 + $0x80] sm:$0xff]
        %v412 = vld [vmem:[#allocation2 + $0x88] sm:$0xff]
        %v413 = vld [vmem:[#allocation2 + $0x90] sm:$0xff]
        %v414 = vld [vmem:[#allocation2 + $0x98] sm:$0xff]
        %v415 = vld [vmem:[#allocation2 + $0xa0] sm:$0xff]
        %v416 = vld [vmem:[#allocation2 + $0xa8] sm:$0xff]
        %v417 = vld [vmem:[#allocation2 + $0xb0] sm:$0xff]
        %v418 = vld [vmem:[#allocation2 + $0xb8] sm:$0xff]
        %v419 = vld [vmem:[#allocation2 + $0xc0] sm:$0xff]
        %v420 = vld [vmem:[#allocation2 + $0xc8] sm:$0xff]
        %v421 = vld [vmem:[#allocation2 + $0xd0] sm:$0xff]
        %v422 = vld [vmem:[#allocation2 + $0xd8] sm:$0xff]
        %v423 = vld [vmem:[#allocation2 + $0xe0] sm:$0xff]
        %v424 = vld [vmem:[#allocation2 + $0xe8] sm:$0xff]
        %v425 = vld [vmem:[#allocation2 + $0xf0] sm:$0xff]
        %v426 = vld [vmem:[#allocation2 + $0xf8] sm:$0xff]
        %v427 = vld [vmem:[%s309] sm:$0xff]
        %v428 = vld [vmem:[%s309 + $0x8] sm:$0xff]
        %v429 = vld [vmem:[%s309 + $0x10] sm:$0xff]
        %v430 = vld [vmem:[%s309 + $0x18] sm:$0xff]
        %v431 = vld [vmem:[%s309 + $0x20] sm:$0xff]
        %v432 = vld [vmem:[%s309 + $0x28] sm:$0xff]
        %v433 = vld [vmem:[%s309 + $0x30] sm:$0xff]
        %v434 = vld [vmem:[%s309 + $0x38] sm:$0xff]
        %v435 = vld [vmem:[%s309 + $0x40] sm:$0xff]
        %v436 = vld [vmem:[%s309 + $0x48] sm:$0xff]
        %v437 = vld [vmem:[%s309 + $0x50] sm:$0xff]
        %v438 = vld [vmem:[%s309 + $0x58] sm:$0xff]
        %v439 = vld [vmem:[%s309 + $0x60] sm:$0xff]
        %v440 = vld [vmem:[%s309 + $0x68] sm:$0xff]
        %v441 = vld [vmem:[%s309 + $0x70] sm:$0xff]
        %v442 = vld [vmem:[%s309 + $0x78] sm:$0xff]
        %v443 = vld [vmem:[%s317] sm:$0xff]
        %v444 = vld [vmem:[%s317 + $0x8] sm:$0xff]
        %v445 = vld [vmem:[%s317 + $0x10] sm:$0xff]
        %v446 = vld [vmem:[%s317 + $0x18] sm:$0xff]
        %v447 = vld [vmem:[%s317 + $0x20] sm:$0xff]
        %v448 = vld [vmem:[%s317 + $0x28] sm:$0xff]
        %v449 = vld [vmem:[%s317 + $0x30] sm:$0xff]
        %v450 = vld [vmem:[%s317 + $0x38] sm:$0xff]
        %v451 = vld [vmem:[%s317 + $0x40] sm:$0xff]
        %v452 = vld [vmem:[%s317 + $0x48] sm:$0xff]
        %v453 = vld [vmem:[%s317 + $0x50] sm:$0xff]
        %v454 = vld [vmem:[%s317 + $0x58] sm:$0xff]
        %v455 = vld [vmem:[%s317 + $0x60] sm:$0xff]
        %v456 = vld [vmem:[%s317 + $0x68] sm:$0xff]
        %v457 = vld [vmem:[%s317 + $0x70] sm:$0xff]
        %v458 = vld [vmem:[%s317 + $0x78] sm:$0xff]
        %v459 = vld [vmem:[%s317 + $0x80] sm:$0xff]
        %v460 = vld [vmem:[%s317 + $0x88] sm:$0xff]
        %v461 = vld [vmem:[%s317 + $0x90] sm:$0xff]
        %v462 = vld [vmem:[%s317 + $0x98] sm:$0xff]
        %v463 = vld [vmem:[%s317 + $0xa0] sm:$0xff]
        %v464 = vld [vmem:[%s317 + $0xa8] sm:$0xff]
        %v465 = vld [vmem:[%s317 + $0xb0] sm:$0xff]
        %v466 = vld [vmem:[%s317 + $0xb8] sm:$0xff]
        %v467 = vld [vmem:[%s317 + $0xc0] sm:$0xff]
        %v468 = vld [vmem:[%s317 + $0xc8] sm:$0xff]
        %v469 = vld [vmem:[%s317 + $0xd0] sm:$0xff]
        %v470 = vld [vmem:[%s317 + $0xd8] sm:$0xff]
        %v471 = vld [vmem:[%s317 + $0xe0] sm:$0xff]
        %v472 = vld [vmem:[%s317 + $0xe8] sm:$0xff]
        %v473 = vld [vmem:[%s317 + $0xf0] sm:$0xff]
        %v474 = vld [vmem:[%s317 + $0xf8] sm:$0xff]
        %v491 = vunpack.c.l.b16 %v427
        %v492 = vunpack.c.h.b16 %v427
        %v493 = vunpack.c.l.b16 %v428
        %v494 = vunpack.c.h.b16 %v428
        %v495 = vunpack.c.l.b16 %v429
        %v496 = vunpack.c.h.b16 %v429
        %v497 = vunpack.c.l.b16 %v430
        %v498 = vunpack.c.h.b16 %v430
        %v499 = vunpack.c.l.b16 %v431
        %v500 = vunpack.c.h.b16 %v431
        %v501 = vunpack.c.l.b16 %v432
        %v502 = vunpack.c.h.b16 %v432
        %v503 = vunpack.c.l.b16 %v433
        %v504 = vunpack.c.h.b16 %v433
        %v505 = vunpack.c.l.b16 %v434
        %v506 = vunpack.c.h.b16 %v434
        %v507 = vunpack.c.l.b16 %v435
        %v508 = vunpack.c.h.b16 %v435
        %v509 = vunpack.c.l.b16 %v436
        %v510 = vunpack.c.h.b16 %v436
        %v511 = vunpack.c.l.b16 %v437
        %v512 = vunpack.c.h.b16 %v437
        %v513 = vunpack.c.l.b16 %v438
        %v514 = vunpack.c.h.b16 %v438
        %v515 = vunpack.c.l.b16 %v439
        %v516 = vunpack.c.h.b16 %v439
        %v517 = vunpack.c.l.b16 %v440
        %v518 = vunpack.c.h.b16 %v440
        %v519 = vunpack.c.l.b16 %v441
        %v520 = vunpack.c.h.b16 %v441
        %v521 = vunpack.c.l.b16 %v442
        %v522 = vunpack.c.h.b16 %v442
        %v523 = vpack.c.b16 %v493, %v491
        %v524 = vpack.c.b16 %v494, %v492
        %v525 = vpack.c.b16 %v497, %v495
        %v526 = vpack.c.b16 %v498, %v496
        %v527 = vpack.c.b16 %v501, %v499
        %v528 = vpack.c.b16 %v502, %v500
        %v529 = vpack.c.b16 %v505, %v503
        %v530 = vpack.c.b16 %v506, %v504
        %v531 = vpack.c.b16 %v509, %v507
        %v532 = vpack.c.b16 %v510, %v508
        %v533 = vpack.c.b16 %v513, %v511
        %v534 = vpack.c.b16 %v514, %v512
        %v535 = vpack.c.b16 %v517, %v515
        %v536 = vpack.c.b16 %v518, %v516
        %v537 = vpack.c.b16 %v521, %v519
        %v538 = vpack.c.b16 %v522, %v520
        %v587 = vunpack.c.l.b16 %v443
        %v588 = vunpack.c.h.b16 %v443
        %v589 = vunpack.c.l.b16 %v444
        %v590 = vunpack.c.h.b16 %v444
        %v591 = vunpack.c.l.b16 %v445
        %v592 = vunpack.c.h.b16 %v445
        %v593 = vunpack.c.l.b16 %v446
        %v594 = vunpack.c.h.b16 %v446
        %v595 = vunpack.c.l.b16 %v447
        %v596 = vunpack.c.h.b16 %v447
        %v597 = vunpack.c.l.b16 %v448
        %v598 = vunpack.c.h.b16 %v448
        %v599 = vunpack.c.l.b16 %v449
        %v600 = vunpack.c.h.b16 %v449
        %v601 = vunpack.c.l.b16 %v450
        %v602 = vunpack.c.h.b16 %v450
        %v603 = vunpack.c.l.b16 %v451
        %v604 = vunpack.c.h.b16 %v451
        %v605 = vunpack.c.l.b16 %v452
        %v606 = vunpack.c.h.b16 %v452
        %v607 = vunpack.c.l.b16 %v453
        %v608 = vunpack.c.h.b16 %v453
        %v609 = vunpack.c.l.b16 %v454
        %v610 = vunpack.c.h.b16 %v454
        %v611 = vunpack.c.l.b16 %v455
        %v612 = vunpack.c.h.b16 %v455
        %v613 = vunpack.c.l.b16 %v456
        %v614 = vunpack.c.h.b16 %v456
        %v615 = vunpack.c.l.b16 %v457
        %v616 = vunpack.c.h.b16 %v457
        %v617 = vunpack.c.l.b16 %v458
        %v618 = vunpack.c.h.b16 %v458
        %v619 = vunpack.c.l.b16 %v459
        %v620 = vunpack.c.h.b16 %v459
        %v621 = vunpack.c.l.b16 %v460
        %v622 = vunpack.c.h.b16 %v460
        %v623 = vunpack.c.l.b16 %v461
        %v624 = vunpack.c.h.b16 %v461
        %v625 = vunpack.c.l.b16 %v462
        %v626 = vunpack.c.h.b16 %v462
        %v627 = vunpack.c.l.b16 %v463
        %v628 = vunpack.c.h.b16 %v463
        %v629 = vunpack.c.l.b16 %v464
        %v630 = vunpack.c.h.b16 %v464
        %v631 = vunpack.c.l.b16 %v465
        %v632 = vunpack.c.h.b16 %v465
        %v633 = vunpack.c.l.b16 %v466
        %v634 = vunpack.c.h.b16 %v466
        %v635 = vunpack.c.l.b16 %v467
        %v636 = vunpack.c.h.b16 %v467
        %v637 = vunpack.c.l.b16 %v468
        %v638 = vunpack.c.h.b16 %v468
        %v639 = vunpack.c.l.b16 %v469
        %v640 = vunpack.c.h.b16 %v469
        %v641 = vunpack.c.l.b16 %v470
        %v642 = vunpack.c.h.b16 %v470
        %v643 = vunpack.c.l.b16 %v471
        %v644 = vunpack.c.h.b16 %v471
        %v645 = vunpack.c.l.b16 %v472
        %v646 = vunpack.c.h.b16 %v472
        %v647 = vunpack.c.l.b16 %v473
        %v648 = vunpack.c.h.b16 %v473
        %v649 = vunpack.c.l.b16 %v474
        %v650 = vunpack.c.h.b16 %v474
        %v651 = vpack.c.b16 %v589, %v587
        %v652 = vpack.c.b16 %v590, %v588
        %v653 = vpack.c.b16 %v593, %v591
        %v654 = vpack.c.b16 %v594, %v592
        %v655 = vpack.c.b16 %v597, %v595
        %v656 = vpack.c.b16 %v598, %v596
        %v657 = vpack.c.b16 %v601, %v599
        %v658 = vpack.c.b16 %v602, %v600
        %v659 = vpack.c.b16 %v605, %v603
        %v660 = vpack.c.b16 %v606, %v604
        %v661 = vpack.c.b16 %v609, %v607
        %v662 = vpack.c.b16 %v610, %v608
        %v663 = vpack.c.b16 %v613, %v611
        %v664 = vpack.c.b16 %v614, %v612
        %v665 = vpack.c.b16 %v617, %v615
        %v666 = vpack.c.b16 %v618, %v616
        %v667 = vpack.c.b16 %v621, %v619
        %v668 = vpack.c.b16 %v622, %v620
        %v669 = vpack.c.b16 %v625, %v623
        %v670 = vpack.c.b16 %v626, %v624
        %v671 = vpack.c.b16 %v629, %v627
        %v672 = vpack.c.b16 %v630, %v628
        %v673 = vpack.c.b16 %v633, %v631
        %v674 = vpack.c.b16 %v634, %v632
        %v675 = vpack.c.b16 %v637, %v635
        %v676 = vpack.c.b16 %v638, %v636
        %v677 = vpack.c.b16 %v641, %v639
        %v678 = vpack.c.b16 %v642, %v640
        %v679 = vpack.c.b16 %v645, %v643
        %v680 = vpack.c.b16 %v646, %v644
        %v681 = vpack.c.b16 %v649, %v647
        %v682 = vpack.c.b16 %v650, %v648
        %715 = vmatpush.bf16.msra.mxu0 %v665
        %716 = vmatpush.bf16.msra.mxu0 %v663
        %717 = vmatpush.bf16.msra.mxu0 %v661
        %718 = vmatpush.bf16.msra.mxu0 %v659
        %719 = vmatpush.bf16.msra.mxu0 %v657
        %720 = vmatpush.bf16.msra.mxu0 %v655
        %721 = vmatpush.bf16.msra.mxu0 %v653
        %722 = vmatpush.bf16.msra.mxu0 %v651
        %723 = vmatmul.bf16.gmra.mxu0 %v523
        %v724 = vpop.f32.mrf.mxu0
        %v725 = vadd.f32 0.0, %v724
        %v726 = vpop.f32.mrf.mxu0
        %v727 = vadd.f32 0.0, %v726
        %728 = vmatmul.bf16.gmra.mxu0 %v525
        %v729 = vpop.f32.mrf.mxu0
        %v730 = vadd.f32 0.0, %v729
        %v731 = vpop.f32.mrf.mxu0
        %v732 = vadd.f32 0.0, %v731
        %733 = vmatmul.bf16.gmra.mxu0 %v527
        %v734 = vpop.f32.mrf.mxu0
        %v735 = vadd.f32 0.0, %v734
        %v736 = vpop.f32.mrf.mxu0
        %v737 = vadd.f32 0.0, %v736
        %738 = vmatmul.bf16.gmra.mxu0 %v529
        %v739 = vpop.f32.mrf.mxu0
        %v740 = vadd.f32 0.0, %v739
        %v741 = vpop.f32.mrf.mxu0
        %v742 = vadd.f32 0.0, %v741
        %743 = vmatmul.bf16.gmra.mxu0 %v531
        %v744 = vpop.f32.mrf.mxu0
        %v745 = vadd.f32 0.0, %v744
        %v746 = vpop.f32.mrf.mxu0
        %v747 = vadd.f32 0.0, %v746
        %748 = vmatmul.bf16.gmra.mxu0 %v533
        %v749 = vpop.f32.mrf.mxu0
        %v750 = vadd.f32 0.0, %v749
        %v751 = vpop.f32.mrf.mxu0
        %v752 = vadd.f32 0.0, %v751
        %753 = vmatmul.bf16.gmra.mxu0 %v535
        %v754 = vpop.f32.mrf.mxu0
        %v755 = vadd.f32 0.0, %v754
        %v756 = vpop.f32.mrf.mxu0
        %v757 = vadd.f32 0.0, %v756
        %758 = vmatmul.bf16.gmra.mxu0 %v537
        %v759 = vpop.f32.mrf.mxu0
        %v760 = vadd.f32 0.0, %v759
        %v761 = vpop.f32.mrf.mxu0
        %v762 = vadd.f32 0.0, %v761
        %763 = vdwg.mxu0
        %764 = vmatpush.bf16.msra.mxu0 %v681
        %765 = vmatpush.bf16.msra.mxu0 %v679
        %766 = vmatpush.bf16.msra.mxu0 %v677
        %767 = vmatpush.bf16.msra.mxu0 %v675
        %768 = vmatpush.bf16.msra.mxu0 %v673
        %769 = vmatpush.bf16.msra.mxu0 %v671
        %770 = vmatpush.bf16.msra.mxu0 %v669
        %771 = vmatpush.bf16.msra.mxu0 %v667
        %772 = vmatmul.bf16.gmra.mxu0 %v524
        %v773 = vpop.f32.mrf.mxu0
        %v774 = vadd.f32 %v725, %v773
        %v775 = vpop.f32.mrf.mxu0
        %v776 = vadd.f32 %v727, %v775
        %777 = vmatmul.bf16.gmra.mxu0 %v526
        %v778 = vpop.f32.mrf.mxu0
        %v779 = vadd.f32 %v730, %v778
        %v780 = vpop.f32.mrf.mxu0
        %v781 = vadd.f32 %v732, %v780
        %782 = vmatmul.bf16.gmra.mxu0 %v528
        %v783 = vpop.f32.mrf.mxu0
        %v784 = vadd.f32 %v735, %v783
        %v785 = vpop.f32.mrf.mxu0
        %v786 = vadd.f32 %v737, %v785
        %787 = vmatmul.bf16.gmra.mxu0 %v530
        %v788 = vpop.f32.mrf.mxu0
        %v789 = vadd.f32 %v740, %v788
        %v790 = vpop.f32.mrf.mxu0
        %v791 = vadd.f32 %v742, %v790
        %792 = vmatmul.bf16.gmra.mxu0 %v532
        %v793 = vpop.f32.mrf.mxu0
        %v794 = vadd.f32 %v745, %v793
        %v795 = vpop.f32.mrf.mxu0
        %v796 = vadd.f32 %v747, %v795
        %797 = vmatmul.bf16.gmra.mxu0 %v534
        %v798 = vpop.f32.mrf.mxu0
        %v799 = vadd.f32 %v750, %v798
        %v800 = vpop.f32.mrf.mxu0
        %v801 = vadd.f32 %v752, %v800
        %802 = vmatmul.bf16.gmra.mxu0 %v536
        %v803 = vpop.f32.mrf.mxu0
        %v804 = vadd.f32 %v755, %v803
        %v805 = vpop.f32.mrf.mxu0
        %v806 = vadd.f32 %v757, %v805
        %807 = vmatmul.bf16.gmra.mxu0 %v538
        %v808 = vpop.f32.mrf.mxu0
        %v809 = vadd.f32 %v760, %v808
        %v810 = vpop.f32.mrf.mxu0
        %v811 = vadd.f32 %v762, %v810
        %812 = vdwg.mxu0
        %813 = vmatpush.bf16.msra.mxu0 %v666
        %814 = vmatpush.bf16.msra.mxu0 %v664
        %815 = vmatpush.bf16.msra.mxu0 %v662
        %816 = vmatpush.bf16.msra.mxu0 %v660
        %817 = vmatpush.bf16.msra.mxu0 %v658
        %818 = vmatpush.bf16.msra.mxu0 %v656
        %819 = vmatpush.bf16.msra.mxu0 %v654
        %820 = vmatpush.bf16.msra.mxu0 %v652
        %821 = vmatmul.bf16.gmra.mxu0 %v523
        %v822 = vpop.f32.mrf.mxu0
        %v823 = vadd.f32 0.0, %v822
        %v824 = vpop.f32.mrf.mxu0
        %v825 = vadd.f32 0.0, %v824
        %826 = vmatmul.bf16.gmra.mxu0 %v525
        %v827 = vpop.f32.mrf.mxu0
        %v828 = vadd.f32 0.0, %v827
        %v829 = vpop.f32.mrf.mxu0
        %v830 = vadd.f32 0.0, %v829
        %831 = vmatmul.bf16.gmra.mxu0 %v527
        %v832 = vpop.f32.mrf.mxu0
        %v833 = vadd.f32 0.0, %v832
        %v834 = vpop.f32.mrf.mxu0
        %v835 = vadd.f32 0.0, %v834
        %836 = vmatmul.bf16.gmra.mxu0 %v529
        %v837 = vpop.f32.mrf.mxu0
        %v838 = vadd.f32 0.0, %v837
        %v839 = vpop.f32.mrf.mxu0
        %v840 = vadd.f32 0.0, %v839
        %841 = vmatmul.bf16.gmra.mxu0 %v531
        %v842 = vpop.f32.mrf.mxu0
        %v843 = vadd.f32 0.0, %v842
        %v844 = vpop.f32.mrf.mxu0
        %v845 = vadd.f32 0.0, %v844
        %846 = vmatmul.bf16.gmra.mxu0 %v533
        %v847 = vpop.f32.mrf.mxu0
        %v848 = vadd.f32 0.0, %v847
        %v849 = vpop.f32.mrf.mxu0
        %v850 = vadd.f32 0.0, %v849
        %851 = vmatmul.bf16.gmra.mxu0 %v535
        %v852 = vpop.f32.mrf.mxu0
        %v853 = vadd.f32 0.0, %v852
        %v854 = vpop.f32.mrf.mxu0
        %v855 = vadd.f32 0.0, %v854
        %856 = vmatmul.bf16.gmra.mxu0 %v537
        %v857 = vpop.f32.mrf.mxu0
        %v858 = vadd.f32 0.0, %v857
        %v859 = vpop.f32.mrf.mxu0
        %v860 = vadd.f32 0.0, %v859
        %861 = vdwg.mxu0
        %862 = vmatpush.bf16.msra.mxu0 %v682
        %863 = vmatpush.bf16.msra.mxu0 %v680
        %864 = vmatpush.bf16.msra.mxu0 %v678
        %865 = vmatpush.bf16.msra.mxu0 %v676
        %866 = vmatpush.bf16.msra.mxu0 %v674
        %867 = vmatpush.bf16.msra.mxu0 %v672
        %868 = vmatpush.bf16.msra.mxu0 %v670
        %869 = vmatpush.bf16.msra.mxu0 %v668
        %870 = vmatmul.bf16.gmra.mxu0 %v524
        %v871 = vpop.f32.mrf.mxu0
        %v872 = vadd.f32 %v823, %v871
        %v873 = vpop.f32.mrf.mxu0
        %v874 = vadd.f32 %v825, %v873
        %875 = vmatmul.bf16.gmra.mxu0 %v526
        %v876 = vpop.f32.mrf.mxu0
        %v877 = vadd.f32 %v828, %v876
        %v878 = vpop.f32.mrf.mxu0
        %v879 = vadd.f32 %v830, %v878
        %880 = vmatmul.bf16.gmra.mxu0 %v528
        %v881 = vpop.f32.mrf.mxu0
        %v882 = vadd.f32 %v833, %v881
        %v883 = vpop.f32.mrf.mxu0
        %v884 = vadd.f32 %v835, %v883
        %885 = vmatmul.bf16.gmra.mxu0 %v530
        %v886 = vpop.f32.mrf.mxu0
        %v887 = vadd.f32 %v838, %v886
        %v888 = vpop.f32.mrf.mxu0
        %v889 = vadd.f32 %v840, %v888
        %890 = vmatmul.bf16.gmra.mxu0 %v532
        %v891 = vpop.f32.mrf.mxu0
        %v892 = vadd.f32 %v843, %v891
        %v893 = vpop.f32.mrf.mxu0
        %v894 = vadd.f32 %v845, %v893
        %895 = vmatmul.bf16.gmra.mxu0 %v534
        %v896 = vpop.f32.mrf.mxu0
        %v897 = vadd.f32 %v848, %v896
        %v898 = vpop.f32.mrf.mxu0
        %v899 = vadd.f32 %v850, %v898
        %900 = vmatmul.bf16.gmra.mxu0 %v536
        %v901 = vpop.f32.mrf.mxu0
        %v902 = vadd.f32 %v853, %v901
        %v903 = vpop.f32.mrf.mxu0
        %v904 = vadd.f32 %v855, %v903
        %905 = vmatmul.bf16.gmra.mxu0 %v538
        %v906 = vpop.f32.mrf.mxu0
        %v907 = vadd.f32 %v858, %v906
        %v908 = vpop.f32.mrf.mxu0
        %v909 = vadd.f32 %v860, %v908
        %910 = vdwg.mxu0
        %v911 = vadd.f32 %v395, %v774
        %v912 = vadd.f32 %v396, %v872
        %v913 = vadd.f32 %v397, %v776
        %v914 = vadd.f32 %v398, %v874
        %v915 = vadd.f32 %v399, %v779
        %v916 = vadd.f32 %v400, %v877
        %v917 = vadd.f32 %v401, %v781
        %v918 = vadd.f32 %v402, %v879
        %v919 = vadd.f32 %v403, %v784
        %v920 = vadd.f32 %v404, %v882
        %v921 = vadd.f32 %v405, %v786
        %v922 = vadd.f32 %v406, %v884
        %v923 = vadd.f32 %v407, %v789
        %v924 = vadd.f32 %v408, %v887
        %v925 = vadd.f32 %v409, %v791
        %v926 = vadd.f32 %v410, %v889
        %v927 = vadd.f32 %v411, %v794
        %v928 = vadd.f32 %v412, %v892
        %v929 = vadd.f32 %v413, %v796
        %v930 = vadd.f32 %v414, %v894
        %v931 = vadd.f32 %v415, %v799
        %v932 = vadd.f32 %v416, %v897
        %v933 = vadd.f32 %v417, %v801
        %v934 = vadd.f32 %v418, %v899
        %v935 = vadd.f32 %v419, %v804
        %v936 = vadd.f32 %v420, %v902
        %v937 = vadd.f32 %v421, %v806
        %v938 = vadd.f32 %v422, %v904
        %v939 = vadd.f32 %v423, %v809
        %v940 = vadd.f32 %v424, %v907
        %v941 = vadd.f32 %v425, %v811
        %v942 = vadd.f32 %v426, %v909
        %943 = vst [vmem:[#allocation2] sm:$0xff] %v911
        %944 = vst [vmem:[#allocation2 + $0x8] sm:$0xff] %v912
        %945 = vst [vmem:[#allocation2 + $0x10] sm:$0xff] %v913
        %946 = vst [vmem:[#allocation2 + $0x18] sm:$0xff] %v914
        %947 = vst [vmem:[#allocation2 + $0x20] sm:$0xff] %v915
        %948 = vst [vmem:[#allocation2 + $0x28] sm:$0xff] %v916
        %949 = vst [vmem:[#allocation2 + $0x30] sm:$0xff] %v917
        %950 = vst [vmem:[#allocation2 + $0x38] sm:$0xff] %v918
        %951 = vst [vmem:[#allocation2 + $0x40] sm:$0xff] %v919
        %952 = vst [vmem:[#allocation2 + $0x48] sm:$0xff] %v920
        %953 = vst [vmem:[#allocation2 + $0x50] sm:$0xff] %v921
        %954 = vst [vmem:[#allocation2 + $0x58] sm:$0xff] %v922
        %955 = vst [vmem:[#allocation2 + $0x60] sm:$0xff] %v923
        %956 = vst [vmem:[#allocation2 + $0x68] sm:$0xff] %v924
        %957 = vst [vmem:[#allocation2 + $0x70] sm:$0xff] %v925
        %958 = vst [vmem:[#allocation2 + $0x78] sm:$0xff] %v926
        %959 = vst [vmem:[#allocation2 + $0x80] sm:$0xff] %v927
        %960 = vst [vmem:[#allocation2 + $0x88] sm:$0xff] %v928
        %961 = vst [vmem:[#allocation2 + $0x90] sm:$0xff] %v929
        %962 = vst [vmem:[#allocation2 + $0x98] sm:$0xff] %v930
        %963 = vst [vmem:[#allocation2 + $0xa0] sm:$0xff] %v931
        %964 = vst [vmem:[#allocation2 + $0xa8] sm:$0xff] %v932
        %965 = vst [vmem:[#allocation2 + $0xb0] sm:$0xff] %v933
        %966 = vst [vmem:[#allocation2 + $0xb8] sm:$0xff] %v934
        %967 = vst [vmem:[#allocation2 + $0xc0] sm:$0xff] %v935
        %968 = vst [vmem:[#allocation2 + $0xc8] sm:$0xff] %v936
        %969 = vst [vmem:[#allocation2 + $0xd0] sm:$0xff] %v937
        %970 = vst [vmem:[#allocation2 + $0xd8] sm:$0xff] %v938
        %971 = vst [vmem:[#allocation2 + $0xe0] sm:$0xff] %v939
        %972 = vst [vmem:[#allocation2 + $0xe8] sm:$0xff] %v940
        %973 = vst [vmem:[#allocation2 + $0xf0] sm:$0xff] %v941
        %974 = vst [vmem:[#allocation2 + $0xf8] sm:$0xff] %v942
        %p975 = scmp.eq.s32.totalorder %s24, 1
        // Predicated region
        $region79: #{mha_forward.3} parent=65 // pred_check
          %p976 = pneg %p975
        $region80: #{mha_forward.3} parent=65 // pred_check_branch
          %978 = sbr.rel (%p976) target = $region82
        $region81: #{mha_forward.3} parent=65 // pred_region
          %v979 = vld [vmem:[#allocation2] sm:$0xff]
          %v980 = vld [vmem:[#allocation2 + $0x8] sm:$0xff]
          %v981 = vld [vmem:[#allocation2 + $0x10] sm:$0xff]
          %v982 = vld [vmem:[#allocation2 + $0x18] sm:$0xff]
          %v983 = vld [vmem:[#allocation2 + $0x20] sm:$0xff]
          %v984 = vld [vmem:[#allocation2 + $0x28] sm:$0xff]
          %v985 = vld [vmem:[#allocation2 + $0x30] sm:$0xff]
          %v986 = vld [vmem:[#allocation2 + $0x38] sm:$0xff]
          %v987 = vld [vmem:[#allocation2 + $0x40] sm:$0xff]
          %v988 = vld [vmem:[#allocation2 + $0x48] sm:$0xff]
          %v989 = vld [vmem:[#allocation2 + $0x50] sm:$0xff]
          %v990 = vld [vmem:[#allocation2 + $0x58] sm:$0xff]
          %v991 = vld [vmem:[#allocation2 + $0x60] sm:$0xff]
          %v992 = vld [vmem:[#allocation2 + $0x68] sm:$0xff]
          %v993 = vld [vmem:[#allocation2 + $0x70] sm:$0xff]
          %v994 = vld [vmem:[#allocation2 + $0x78] sm:$0xff]
          %v995 = vld [vmem:[#allocation2 + $0x80] sm:$0xff]
          %v996 = vld [vmem:[#allocation2 + $0x88] sm:$0xff]
          %v997 = vld [vmem:[#allocation2 + $0x90] sm:$0xff]
          %v998 = vld [vmem:[#allocation2 + $0x98] sm:$0xff]
          %v999 = vld [vmem:[#allocation2 + $0xa0] sm:$0xff]
          %v1000 = vld [vmem:[#allocation2 + $0xa8] sm:$0xff]
          %v1001 = vld [vmem:[#allocation2 + $0xb0] sm:$0xff]
          %v1002 = vld [vmem:[#allocation2 + $0xb8] sm:$0xff]
          %v1003 = vld [vmem:[#allocation2 + $0xc0] sm:$0xff]
          %v1004 = vld [vmem:[#allocation2 + $0xc8] sm:$0xff]
          %v1005 = vld [vmem:[#allocation2 + $0xd0] sm:$0xff]
          %v1006 = vld [vmem:[#allocation2 + $0xd8] sm:$0xff]
          %v1007 = vld [vmem:[#allocation2 + $0xe0] sm:$0xff]
          %v1008 = vld [vmem:[#allocation2 + $0xe8] sm:$0xff]
          %v1009 = vld [vmem:[#allocation2 + $0xf0] sm:$0xff]
          %v1010 = vld [vmem:[#allocation2 + $0xf8] sm:$0xff]
          %v1011 = vld [vmem:[%s355] sm:$0x3]
          %v1013 = vperm.slane %v1011, 0
          %v1014 = vperm.slane %v1011, 1
          %v1017 = vadd.f32 %v979, %v1013
          %v1018 = vadd.f32 %v980, %v1014
          %v1019 = vadd.f32 %v981, %v1013
          %v1020 = vadd.f32 %v982, %v1014
          %v1021 = vadd.f32 %v983, %v1013
          %v1022 = vadd.f32 %v984, %v1014
          %v1023 = vadd.f32 %v985, %v1013
          %v1024 = vadd.f32 %v986, %v1014
          %v1025 = vadd.f32 %v987, %v1013
          %v1026 = vadd.f32 %v988, %v1014
          %v1027 = vadd.f32 %v989, %v1013
          %v1028 = vadd.f32 %v990, %v1014
          %v1029 = vadd.f32 %v991, %v1013
          %v1030 = vadd.f32 %v992, %v1014
          %v1031 = vadd.f32 %v993, %v1013
          %v1032 = vadd.f32 %v994, %v1014
          %v1033 = vadd.f32 %v995, %v1013
          %v1034 = vadd.f32 %v996, %v1014
          %v1035 = vadd.f32 %v997, %v1013
          %v1036 = vadd.f32 %v998, %v1014
          %v1037 = vadd.f32 %v999, %v1013
          %v1038 = vadd.f32 %v1000, %v1014
          %v1039 = vadd.f32 %v1001, %v1013
          %v1040 = vadd.f32 %v1002, %v1014
          %v1041 = vadd.f32 %v1003, %v1013
          %v1042 = vadd.f32 %v1004, %v1014
          %v1043 = vadd.f32 %v1005, %v1013
          %v1044 = vadd.f32 %v1006, %v1014
          %v1045 = vadd.f32 %v1007, %v1013
          %v1046 = vadd.f32 %v1008, %v1014
          %v1047 = vadd.f32 %v1009, %v1013
          %v1048 = vadd.f32 %v1010, %v1014
          %v1049 = vpack.c.bf16 %v1018, %v1017
          %v1050 = vpack.c.bf16 %v1020, %v1019
          %v1051 = vpack.c.bf16 %v1022, %v1021
          %v1052 = vpack.c.bf16 %v1024, %v1023
          %v1053 = vpack.c.bf16 %v1026, %v1025
          %v1054 = vpack.c.bf16 %v1028, %v1027
          %v1055 = vpack.c.bf16 %v1030, %v1029
          %v1056 = vpack.c.bf16 %v1032, %v1031
          %v1057 = vpack.c.bf16 %v1034, %v1033
          %v1058 = vpack.c.bf16 %v1036, %v1035
          %v1059 = vpack.c.bf16 %v1038, %v1037
          %v1060 = vpack.c.bf16 %v1040, %v1039
          %v1061 = vpack.c.bf16 %v1042, %v1041
          %v1062 = vpack.c.bf16 %v1044, %v1043
          %v1063 = vpack.c.bf16 %v1046, %v1045
          %v1064 = vpack.c.bf16 %v1048, %v1047
          %1065 = vst [vmem:[%s347] sm:$0xff] %v1049
          %1066 = vst [vmem:[%s347 + $0x8] sm:$0xff] %v1050
          %1067 = vst [vmem:[%s347 + $0x10] sm:$0xff] %v1051
          %1068 = vst [vmem:[%s347 + $0x18] sm:$0xff] %v1052
          %1069 = vst [vmem:[%s347 + $0x20] sm:$0xff] %v1053
          %1070 = vst [vmem:[%s347 + $0x28] sm:$0xff] %v1054
          %1071 = vst [vmem:[%s347 + $0x30] sm:$0xff] %v1055
          %1072 = vst [vmem:[%s347 + $0x38] sm:$0xff] %v1056
          %1073 = vst [vmem:[%s347 + $0x40] sm:$0xff] %v1057
          %1074 = vst [vmem:[%s347 + $0x48] sm:$0xff] %v1058
          %1075 = vst [vmem:[%s347 + $0x50] sm:$0xff] %v1059
          %1076 = vst [vmem:[%s347 + $0x58] sm:$0xff] %v1060
          %1077 = vst [vmem:[%s347 + $0x60] sm:$0xff] %v1061
          %1078 = vst [vmem:[%s347 + $0x68] sm:$0xff] %v1062
          %1079 = vst [vmem:[%s347 + $0x70] sm:$0xff] %v1063
          %1080 = vst [vmem:[%s347 + $0x78] sm:$0xff] %v1064
        $region82: #{mha_forward.3} parent=65 // pred_fallthru
          _
        %s1081 = sand.u32 %s128, 1
        %s1082 = sand.u32 %s128, 1
        %s1083 = smul.addr %s1082, 128
        %s1084 = scalar_lea.vmem [#allocation6], %s1083
        // Predicated region
        $region83: #{mha_forward.3} parent=65 // pred_check
          %p1085 = pneg %p138
        $region84: #{mha_forward.3} parent=65 // pred_check_branch
          %1087 = sbr.rel (%p1085) target = $region86
        $region85: #{mha_forward.3} parent=65 // pred_region
          %s1088 = smul.u32 16, %s22
          %s1089 = smul.u32 2, %s23
          %s1090 = smul.addr %s1088, 12
          %s1091 = sadd.s32 %s1089, %s1090
          %s1092 = smul.addr %s1091, 4
          %s1093 = scalar_lea.vmem %s3, %s1092
          // Predicated region
          $region87: #{mha_forward.3} parent=85 // pred_check
            _
          $region88: #{mha_forward.3} parent=85 // pred_check_branch
            %1095 = sbr.rel (0) target = $region90
          $region89: #{mha_forward.3} parent=85 // pred_region
            // Predicated region
            $region91: #{mha_forward.3} parent=89 // pred_check
              _
            $region92: #{mha_forward.3} parent=89 // pred_check_branch
              %1097 = sbr.rel (0) target = $region94
            $region93: #{mha_forward.3} parent=89 // pred_region
              // Predicated region
              $region106: #{mha_forward.3} parent=93 // pred_check
                _
              $region107: #{mha_forward.3} parent=93 // pred_check_branch
                %1143 = sbr.rel (0) target = $region109
              $region108: #{mha_forward.3} parent=93 // pred_region
                loop: start=0, step=1, limit=1
                $region110: #{mha_forward.3} parent=108 // loop_pre_header
                  _
                $region111: #{mha_forward.3} parent=108 // loop_header
                  %s1145 = sphi 0, %s1149
                  %p1146 = scmp.ge.s32.totalorder %s1145, 1
                  %s1150 = sphi %s1084, %s1084
                  %s1151 = sphi %s1093, %s1093
                $region112: #{mha_forward.3} parent=108 // loop_header_branch
                  %1148 = sbr.rel (%p1146) target = $region116
                $region113: #{mha_forward.3} parent=108 // loop_body
                  %v1152 = vld [vmem:[%s1150] sm:$0xff]
                  %1153 = vst [vmem:[%s1151] sm:$0xff] %v1152
                  %v1154 = vld [vmem:[%s1150 + $0x8] sm:$0xff]
                  %1155 = vst [vmem:[%s1151 + $0x30] sm:$0xff] %v1154
                  %v1156 = vld [vmem:[%s1150 + $0x10] sm:$0xff]
                  %1157 = vst [vmem:[%s1151 + $0x60] sm:$0xff] %v1156
                  %v1158 = vld [vmem:[%s1150 + $0x18] sm:$0xff]
                  %1159 = vst [vmem:[%s1151 + $0x90] sm:$0xff] %v1158
                  %v1160 = vld [vmem:[%s1150 + $0x20] sm:$0xff]
                  %1161 = vst [vmem:[%s1151 + $0xc0] sm:$0xff] %v1160
                  %v1162 = vld [vmem:[%s1150 + $0x28] sm:$0xff]
                  %1163 = vst [vmem:[%s1151 + $0xf0] sm:$0xff] %v1162
                  %v1164 = vld [vmem:[%s1150 + $0x30] sm:$0xff]
                  %1165 = vst [vmem:[%s1151 + $0x120] sm:$0xff] %v1164
                  %v1166 = vld [vmem:[%s1150 + $0x38] sm:$0xff]
                  %1167 = vst [vmem:[%s1151 + $0x150] sm:$0xff] %v1166
                  %v1168 = vld [vmem:[%s1150 + $0x40] sm:$0xff]
                  %1169 = vst [vmem:[%s1151 + $0x180] sm:$0xff] %v1168
                  %v1170 = vld [vmem:[%s1150 + $0x48] sm:$0xff]
                  %1171 = vst [vmem:[%s1151 + $0x1b0] sm:$0xff] %v1170
                  %v1172 = vld [vmem:[%s1150 + $0x50] sm:$0xff]
                  %1173 = vst [vmem:[%s1151 + $0x1e0] sm:$0xff] %v1172
                  %v1174 = vld [vmem:[%s1150 + $0x58] sm:$0xff]
                  %1175 = vst [vmem:[%s1151 + $0x210] sm:$0xff] %v1174
                  %v1176 = vld [vmem:[%s1150 + $0x60] sm:$0xff]
                  %1177 = vst [vmem:[%s1151 + $0x240] sm:$0xff] %v1176
                  %v1178 = vld [vmem:[%s1150 + $0x68] sm:$0xff]
                  %1179 = vst [vmem:[%s1151 + $0x270] sm:$0xff] %v1178
                  %v1180 = vld [vmem:[%s1150 + $0x70] sm:$0xff]
                  %1181 = vst [vmem:[%s1151 + $0x2a0] sm:$0xff] %v1180
                  %v1182 = vld [vmem:[%s1150 + $0x78] sm:$0xff]
                  %1183 = vst [vmem:[%s1151 + $0x2d0] sm:$0xff] %v1182
                $region114: #{mha_forward.3} parent=108 // loop_footer
                  %s1149 = sadd.s32 1, %s1145
                $region115: #{mha_forward.3} parent=108 // loop_footer_branch
                  %1144 = sbr.rel target = $region111
                $region116: #{mha_forward.3} parent=108 // loop_exit
                  _
              $region109: #{mha_forward.3} parent=93 // pred_fallthru
                _
              // Predicated region
              $region117: #{mha_forward.3} parent=93 // pred_check
                _
              $region118: #{mha_forward.3} parent=93 // pred_check_branch
                %1185 = sbr.rel target = $region120
              $region119: #{mha_forward.3} parent=93 // pred_region
                _
              $region120: #{mha_forward.3} parent=93 // pred_fallthru
                _
            $region94: #{mha_forward.3} parent=89 // pred_fallthru
              _
            // Predicated region
            $region95: #{mha_forward.3} parent=89 // pred_check
              _
            $region96: #{mha_forward.3} parent=89 // pred_check_branch
              %1099 = sbr.rel target = $region98
            $region97: #{mha_forward.3} parent=89 // pred_region
              %s1101 = ssub.s32 256, 1
              loop: start=0, step=1, limit=1
              $region99: #{mha_forward.3} parent=97 // loop_pre_header
                _
              $region100: #{mha_forward.3} parent=97 // loop_header
                %s1103 = sphi 0, %s1107
                %p1104 = scmp.ge.s32.totalorder %s1103, 1
                %s1108 = sphi %s1084, %s1084
                %s1109 = sphi %s1093, %s1093
              $region101: #{mha_forward.3} parent=97 // loop_header_branch
                %1106 = sbr.rel (%p1104) target = $region105
              $region102: #{mha_forward.3} parent=97 // loop_body
                %v1110 = vld [vmem:[%s1108] sm:%s1101]
                %1111 = vst [vmem:[%s1109] sm:%s1101] %v1110
                %v1112 = vld [vmem:[%s1108 + $0x8] sm:%s1101]
                %1113 = vst [vmem:[%s1109 + $0x30] sm:%s1101] %v1112
                %v1114 = vld [vmem:[%s1108 + $0x10] sm:%s1101]
                %1115 = vst [vmem:[%s1109 + $0x60] sm:%s1101] %v1114
                %v1116 = vld [vmem:[%s1108 + $0x18] sm:%s1101]
                %1117 = vst [vmem:[%s1109 + $0x90] sm:%s1101] %v1116
                %v1118 = vld [vmem:[%s1108 + $0x20] sm:%s1101]
                %1119 = vst [vmem:[%s1109 + $0xc0] sm:%s1101] %v1118
                %v1120 = vld [vmem:[%s1108 + $0x28] sm:%s1101]
                %1121 = vst [vmem:[%s1109 + $0xf0] sm:%s1101] %v1120
                %v1122 = vld [vmem:[%s1108 + $0x30] sm:%s1101]
                %1123 = vst [vmem:[%s1109 + $0x120] sm:%s1101] %v1122
                %v1124 = vld [vmem:[%s1108 + $0x38] sm:%s1101]
                %1125 = vst [vmem:[%s1109 + $0x150] sm:%s1101] %v1124
                %v1126 = vld [vmem:[%s1108 + $0x40] sm:%s1101]
                %1127 = vst [vmem:[%s1109 + $0x180] sm:%s1101] %v1126
                %v1128 = vld [vmem:[%s1108 + $0x48] sm:%s1101]
                %1129 = vst [vmem:[%s1109 + $0x1b0] sm:%s1101] %v1128
                %v1130 = vld [vmem:[%s1108 + $0x50] sm:%s1101]
                %1131 = vst [vmem:[%s1109 + $0x1e0] sm:%s1101] %v1130
                %v1132 = vld [vmem:[%s1108 + $0x58] sm:%s1101]
                %1133 = vst [vmem:[%s1109 + $0x210] sm:%s1101] %v1132
                %v1134 = vld [vmem:[%s1108 + $0x60] sm:%s1101]
                %1135 = vst [vmem:[%s1109 + $0x240] sm:%s1101] %v1134
                %v1136 = vld [vmem:[%s1108 + $0x68] sm:%s1101]
                %1137 = vst [vmem:[%s1109 + $0x270] sm:%s1101] %v1136
                %v1138 = vld [vmem:[%s1108 + $0x70] sm:%s1101]
                %1139 = vst [vmem:[%s1109 + $0x2a0] sm:%s1101] %v1138
                %v1140 = vld [vmem:[%s1108 + $0x78] sm:%s1101]
                %1141 = vst [vmem:[%s1109 + $0x2d0] sm:%s1101] %v1140
              $region103: #{mha_forward.3} parent=97 // loop_footer
                %s1107 = sadd.s32 1, %s1103
              $region104: #{mha_forward.3} parent=97 // loop_footer_branch
                %1102 = sbr.rel target = $region100
              $region105: #{mha_forward.3} parent=97 // loop_exit
                _
            $region98: #{mha_forward.3} parent=89 // pred_fallthru
              _
          $region90: #{mha_forward.3} parent=85 // pred_fallthru
            _
          %1186 = vnop
        $region86: #{mha_forward.3} parent=65 // pred_fallthru
          _
      $region66: #{mha_forward.3} parent=5 // pred_fallthru
        _
      %p1187 = scmp.le.s32.totalorder 2, %s12
      // Predicated region
      $region121: #{mha_forward.3} parent=5 // pred_check
        %p1188 = pneg %p1187
      $region122: #{mha_forward.3} parent=5 // pred_check_branch
        %1190 = sbr.rel (%p1188) target = $region124
      $region123: #{mha_forward.3} parent=5 // pred_region
        %s1191 = ssub.s32 %s12, 2
        // Predicated region
        $region125: #{mha_forward.3} parent=123 // pred_check
          %p1192 = pneg %p144
        $region126: #{mha_forward.3} parent=123 // pred_check_branch
          %1194 = sbr.rel (%p1192) target = $region128
        $region127: #{mha_forward.3} parent=123 // pred_region
          %s1195 = sand.u32 %s129, 1
          %s1196 = sand.u32 %s129, 1
          %s1197 = smul.addr %s1196, 128
          %s1198 = scalar_lea.vmem [#allocation6], %s1197
        $region128: #{mha_forward.3} parent=123 // pred_fallthru
          _
      $region124: #{mha_forward.3} parent=5 // pred_fallthru
        _
    $region6: #{mha_forward.3} parent=1 // loop_footer
      %s16 = sadd.s32 1, %s12
    $region7: #{mha_forward.3} parent=1 // loop_footer_branch
      %11 = sbr.rel target = $region3
    $region8: #{mha_forward.3} parent=1 // loop_exit
      _
    %1199 = vsyncpa [#allocation5], 1
    %s1200 = scalar_lea.sflag [#allocation5], 1
    %1201 = vsyncpa %s1200, 1

// kernel: mha_forward.5
$region0: #{mha_forward.5}
  #allocation0 [shape = 'u32[]', space=smem, size = 0x4, offset = 0x4, fixed_abs, tag = 'smem constant byte address 0x4 - core index']
  #allocation1 [shape = 'u32[72,128]{1,0:T(1,128)}', space=vmem, size = 0x9000, scoped, tag = 'internal scratch']
  #allocation2 [shape = 'f32[128,256]{1,0:T(8,128)}', space=vmem, size = 0x20000, scoped, tag = 'scratch operand']
  %s0 = inlined_call_operand.vmem [shape: bf16[256,512], index: 0, kind: input, shape index: {}]
  %s1 = inlined_call_operand.vmem [shape: bf16[512,512], index: 1, kind: input, shape index: {}]
  %s2 = inlined_call_operand.vmem [shape: f32[1,512], index: 2, kind: input, shape index: {}]
  %s3 = inlined_call_operand.hbm [shape: f32[256,512], index: 3, kind: output, shape index: {}]
  %s4 = sld [smem:[#allocation0]]
  $region129: #{mha_forward.5} parent=0
    _
  %s6 = ssub.s32 1, %s4
  %s7 = scalar_select 0, %s6, %s4
  $region1: #{mha_forward.5} parent=0
    #allocation3 [shape = 'u8[131072]{0}', space=vmem, size = 0x20000, scoped, tag = 'input window, operand 0']
    #allocation4 [shape = 'u8[262144]{0}', space=vmem, size = 0x40000, scoped, tag = 'input window, operand 1']
    #allocation5 [shape = 'u8[262144]{0}', space=vmem, size = 0x40000, scoped, tag = 'output window, operand 0']
    #allocation6 [shape = 's32[2]{0}', space=sflag, size = 0x8, scoped, tag = 'scoped memory for mha_forward.5']
    %8 = vsyncpa [#allocation6], 0
    %s9 = scalar_lea.sflag [#allocation6], 1
    %10 = vsyncpa %s9, 0
    loop: start=0, step=1, limit=10
    $region2: #{mha_forward.5} parent=1 // loop_pre_header
      _
    $region3: #{mha_forward.5} parent=1 // loop_header
      %s12 = sphi 0, %s16
      %p13 = scmp.ge.s32.totalorder %s12, 10
      %s19 = sphi 0, %s38
      %s20 = sphi 0, %s34
      %s21 = sphi 0, %s30
      %s22 = sphi 0, %s19
      %s23 = sphi 0, %s20
      %s24 = sphi 0, %s21
      %s25 = sphi 0, %s22
      %s26 = sphi 0, %s23
      %s27 = sphi 0, %s24
      %s43 = sphi 0, %s45
      %s46 = sphi 0, %s43
      %s47 = sphi 0, %s46
      %s63 = sphi 0, %s47
      %s71 = sphi 0, %s73
      %s74 = sphi 0, %s71
      %s75 = sphi 0, %s74
      %s91 = sphi 0, %s75
      %s97 = sphi 0, %s99
      %s100 = sphi 0, %s97
      %s101 = sphi 0, %s100
      %s117 = sphi 0, %s101
      %s125 = sphi 0, %s127
      %s128 = sphi 0, %s125
      %s129 = sphi 0, %s128
      %s145 = sphi 0, %s129
    $region4: #{mha_forward.5} parent=1 // loop_header_branch
      %15 = sbr.rel (%p13) target = $region8
    $region5: #{mha_forward.5} parent=1 // loop_body
      %s17 = ssub.s32 %s12, 1
      %s18 = ssub.s32 %s12, 2
      %s28 = sadd.s32 1, %s21
      %p29 = scmp.ge.s32.totalorder %s28, 2
      %s30 = scalar_select %p29, 0, %s28
      %s31 = sadd.s32 1, %s20
      %s32 = scalar_select %p29, %s31, %s20
      %p33 = scmp.ge.s32.totalorder %s32, 2
      %s34 = scalar_select %p33, 0, %s32
      %s35 = sadd.s32 1, %s19
      %s36 = scalar_select %p33, %s35, %s19
      %p37 = scmp.ge.s32.totalorder %s36, 2
      %s38 = scalar_select %p37, 0, %s36
      %s39 = ssub.s32 %s19, %s38
      %s40 = ssub.s32 %s21, %s30
      %s41 = sor.u32 %s39, %s40
      %p42 = scmp.eq.s32.totalorder %s41, 0
      %s44 = sadd.s32 %s43, 1
      %s45 = scalar_select %p42, %s43, %s44
      %p48 = pneg %p42
      %p49 = scmp.eq.s32.totalorder %s12, 7
      %p50 = por %p48, %p49
      %p51 = scmp.ne.s32.totalorder %s43, %s46
      %p52 = scmp.eq.s32.totalorder %s12, 0
      %p53 = por %p51, %p52
      %p54 = scmp.ne.s32.totalorder %s43, %s46
      %p55 = scmp.eq.s32.totalorder %s17, 7
      %p56 = por %p54, %p55
      %p57 = scmp.ne.s32.totalorder %s46, %s47
      %p58 = scmp.eq.s32.totalorder %s17, 0
      %p59 = por %p57, %p58
      %p60 = scmp.ne.s32.totalorder %s46, %s47
      %p61 = scmp.eq.s32.totalorder %s18, 7
      %p62 = por %p60, %p61
      %p64 = scmp.ne.s32.totalorder %s47, %s63
      %p65 = scmp.eq.s32.totalorder %s18, 0
      %p66 = por %p64, %p65
      %s67 = ssub.s32 %s21, %s30
      %s68 = ssub.s32 %s20, %s34
      %s69 = sor.u32 %s67, %s68
      %p70 = scmp.eq.s32.totalorder %s69, 0
      %s72 = sadd.s32 %s71, 1
      %s73 = scalar_select %p70, %s71, %s72
      %p76 = pneg %p70
      %p77 = scmp.eq.s32.totalorder %s12, 7
      %p78 = por %p76, %p77
      %p79 = scmp.ne.s32.totalorder %s71, %s74
      %p80 = scmp.eq.s32.totalorder %s12, 0
      %p81 = por %p79, %p80
      %p82 = scmp.ne.s32.totalorder %s71, %s74
      %p83 = scmp.eq.s32.totalorder %s17, 7
      %p84 = por %p82, %p83
      %p85 = scmp.ne.s32.totalorder %s74, %s75
      %p86 = scmp.eq.s32.totalorder %s17, 0
      %p87 = por %p85, %p86
      %p88 = scmp.ne.s32.totalorder %s74, %s75
      %p89 = scmp.eq.s32.totalorder %s18, 7
      %p90 = por %p88, %p89
      %p92 = scmp.ne.s32.totalorder %s75, %s91
      %p93 = scmp.eq.s32.totalorder %s18, 0
      %p94 = por %p92, %p93
      %s95 = ssub.s32 %s20, %s34
      %p96 = scmp.eq.s32.totalorder %s95, 0
      %s98 = sadd.s32 %s97, 1
      %s99 = scalar_select %p96, %s97, %s98
      %p102 = pneg %p96
      %p103 = scmp.eq.s32.totalorder %s12, 7
      %p104 = por %p102, %p103
      %p105 = scmp.ne.s32.totalorder %s97, %s100
      %p106 = scmp.eq.s32.totalorder %s12, 0
      %p107 = por %p105, %p106
      %p108 = scmp.ne.s32.totalorder %s97, %s100
      %p109 = scmp.eq.s32.totalorder %s17, 7
      %p110 = por %p108, %p109
      %p111 = scmp.ne.s32.totalorder %s100, %s101
      %p112 = scmp.eq.s32.totalorder %s17, 0
      %p113 = por %p111, %p112
      %p114 = scmp.ne.s32.totalorder %s100, %s101
      %p115 = scmp.eq.s32.totalorder %s18, 7
      %p116 = por %p114, %p115
      %p118 = scmp.ne.s32.totalorder %s101, %s117
      %p119 = scmp.eq.s32.totalorder %s18, 0
      %p120 = por %p118, %p119
      %s121 = ssub.s32 %s19, %s38
      %s122 = ssub.s32 %s20, %s34
      %s123 = sor.u32 %s121, %s122
      %p124 = scmp.eq.s32.totalorder %s123, 0
      %s126 = sadd.s32 %s125, 1
      %s127 = scalar_select %p124, %s125, %s126
      %p130 = pneg %p124
      %p131 = scmp.eq.s32.totalorder %s12, 7
      %p132 = por %p130, %p131
      %p133 = scmp.ne.s32.totalorder %s125, %s128
      %p134 = scmp.eq.s32.totalorder %s12, 0
      %p135 = por %p133, %p134
      %p136 = scmp.ne.s32.totalorder %s125, %s128
      %p137 = scmp.eq.s32.totalorder %s17, 7
      %p138 = por %p136, %p137
      %p139 = scmp.ne.s32.totalorder %s128, %s129
      %p140 = scmp.eq.s32.totalorder %s17, 0
      %p141 = por %p139, %p140
      %p142 = scmp.ne.s32.totalorder %s128, %s129
      %p143 = scmp.eq.s32.totalorder %s18, 7
      %p144 = por %p142, %p143
      %p146 = scmp.ne.s32.totalorder %s129, %s145
      %p147 = scmp.eq.s32.totalorder %s18, 0
      %p148 = por %p146, %p147
      %p149 = scmp.le.s32.totalorder 1, %s12
      %p150 = scmp.lt.s32.totalorder %s12, 9
      %p151 = pnand %p149, %p150
      %p152 = pneg %p151
      // Predicated region
      $region9: #{mha_forward.5} parent=5 // pred_check
        _
      $region10: #{mha_forward.5} parent=5 // pred_check_branch
        %154 = sbr.rel (%p151) target = $region12
      $region11: #{mha_forward.5} parent=5 // pred_region
        %s155 = ssub.s32 %s12, 1
      $region12: #{mha_forward.5} parent=5 // pred_fallthru
        _
      %p156 = scmp.lt.s32.totalorder %s12, 8
      // Predicated region
      $region13: #{mha_forward.5} parent=5 // pred_check
        %p157 = pneg %p156
      $region14: #{mha_forward.5} parent=5 // pred_check_branch
        %159 = sbr.rel (%p157) target = $region16
      $region15: #{mha_forward.5} parent=5 // pred_region
        // Predicated region
        $region17: #{mha_forward.5} parent=15 // pred_check
          %p160 = pneg %p53
        $region18: #{mha_forward.5} parent=15 // pred_check_branch
          %162 = sbr.rel (%p160) target = $region20
        $region19: #{mha_forward.5} parent=15 // pred_region
          %s163 = sand.u32 %s43, 1
          %s164 = sand.u32 %s43, 1
          %s165 = smul.addr %s164, 128
          %s166 = scalar_lea.vmem [#allocation3], %s165
          %s167 = smul.u32 16, %s19
          %s168 = smul.u32 2, %s21
          %s169 = smul.addr %s167, 4
          %s170 = sadd.s32 %s168, %s169
          %s171 = smul.addr %s170, 4
          %s172 = scalar_lea.vmem %s0, %s171
          // Predicated region
          $region21: #{mha_forward.5} parent=19 // pred_check
            _
          $region22: #{mha_forward.5} parent=19 // pred_check_branch
            %174 = sbr.rel (0) target = $region24
          $region23: #{mha_forward.5} parent=19 // pred_region
            // Predicated region
            $region25: #{mha_forward.5} parent=23 // pred_check
              _
            $region26: #{mha_forward.5} parent=23 // pred_check_branch
              %176 = sbr.rel (0) target = $region28
            $region27: #{mha_forward.5} parent=23 // pred_region
              // Predicated region
              $region40: #{mha_forward.5} parent=27 // pred_check
                _
              $region41: #{mha_forward.5} parent=27 // pred_check_branch
                %222 = sbr.rel (0) target = $region43
              $region42: #{mha_forward.5} parent=27 // pred_region
                loop: start=0, step=1, limit=1
                $region44: #{mha_forward.5} parent=42 // loop_pre_header
                  _
                $region45: #{mha_forward.5} parent=42 // loop_header
                  %s224 = sphi 0, %s228
                  %p225 = scmp.ge.s32.totalorder %s224, 1
                  %s229 = sphi %s172, %s172
                  %s230 = sphi %s166, %s166
                $region46: #{mha_forward.5} parent=42 // loop_header_branch
                  %227 = sbr.rel (%p225) target = $region50
                $region47: #{mha_forward.5} parent=42 // loop_body
                  %v231 = vld [vmem:[%s229] sm:$0xff]
                  %232 = vst [vmem:[%s230] sm:$0xff] %v231
                  %v233 = vld [vmem:[%s229 + $0x10] sm:$0xff]
                  %234 = vst [vmem:[%s230 + $0x8] sm:$0xff] %v233
                  %v235 = vld [vmem:[%s229 + $0x20] sm:$0xff]
                  %236 = vst [vmem:[%s230 + $0x10] sm:$0xff] %v235
                  %v237 = vld [vmem:[%s229 + $0x30] sm:$0xff]
                  %238 = vst [vmem:[%s230 + $0x18] sm:$0xff] %v237
                  %v239 = vld [vmem:[%s229 + $0x40] sm:$0xff]
                  %240 = vst [vmem:[%s230 + $0x20] sm:$0xff] %v239
                  %v241 = vld [vmem:[%s229 + $0x50] sm:$0xff]
                  %242 = vst [vmem:[%s230 + $0x28] sm:$0xff] %v241
                  %v243 = vld [vmem:[%s229 + $0x60] sm:$0xff]
                  %244 = vst [vmem:[%s230 + $0x30] sm:$0xff] %v243
                  %v245 = vld [vmem:[%s229 + $0x70] sm:$0xff]
                  %246 = vst [vmem:[%s230 + $0x38] sm:$0xff] %v245
                  %v247 = vld [vmem:[%s229 + $0x80] sm:$0xff]
                  %248 = vst [vmem:[%s230 + $0x40] sm:$0xff] %v247
                  %v249 = vld [vmem:[%s229 + $0x90] sm:$0xff]
                  %250 = vst [vmem:[%s230 + $0x48] sm:$0xff] %v249
                  %v251 = vld [vmem:[%s229 + $0xa0] sm:$0xff]
                  %252 = vst [vmem:[%s230 + $0x50] sm:$0xff] %v251
                  %v253 = vld [vmem:[%s229 + $0xb0] sm:$0xff]
                  %254 = vst [vmem:[%s230 + $0x58] sm:$0xff] %v253
                  %v255 = vld [vmem:[%s229 + $0xc0] sm:$0xff]
                  %256 = vst [vmem:[%s230 + $0x60] sm:$0xff] %v255
                  %v257 = vld [vmem:[%s229 + $0xd0] sm:$0xff]
                  %258 = vst [vmem:[%s230 + $0x68] sm:$0xff] %v257
                  %v259 = vld [vmem:[%s229 + $0xe0] sm:$0xff]
                  %260 = vst [vmem:[%s230 + $0x70] sm:$0xff] %v259
                  %v261 = vld [vmem:[%s229 + $0xf0] sm:$0xff]
                  %262 = vst [vmem:[%s230 + $0x78] sm:$0xff] %v261
                $region48: #{mha_forward.5} parent=42 // loop_footer
                  %s228 = sadd.s32 1, %s224
                $region49: #{mha_forward.5} parent=42 // loop_footer_branch
                  %223 = sbr.rel target = $region45
                $region50: #{mha_forward.5} parent=42 // loop_exit
                  _
              $region43: #{mha_forward.5} parent=27 // pred_fallthru
                _
              // Predicated region
              $region51: #{mha_forward.5} parent=27 // pred_check
                _
              $region52: #{mha_forward.5} parent=27 // pred_check_branch
                %264 = sbr.rel target = $region54
              $region53: #{mha_forward.5} parent=27 // pred_region
                _
              $region54: #{mha_forward.5} parent=27 // pred_fallthru
                _
            $region28: #{mha_forward.5} parent=23 // pred_fallthru
              _
            // Predicated region
            $region29: #{mha_forward.5} parent=23 // pred_check
              _
            $region30: #{mha_forward.5} parent=23 // pred_check_branch
              %178 = sbr.rel target = $region32
            $region31: #{mha_forward.5} parent=23 // pred_region
              %s180 = ssub.s32 256, 1
              loop: start=0, step=1, limit=1
              $region33: #{mha_forward.5} parent=31 // loop_pre_header
                _
              $region34: #{mha_forward.5} parent=31 // loop_header
                %s182 = sphi 0, %s186
                %p183 = scmp.ge.s32.totalorder %s182, 1
                %s187 = sphi %s172, %s172
                %s188 = sphi %s166, %s166
              $region35: #{mha_forward.5} parent=31 // loop_header_branch
                %185 = sbr.rel (%p183) target = $region39
              $region36: #{mha_forward.5} parent=31 // loop_body
                %v189 = vld [vmem:[%s187] sm:%s180]
                %190 = vst [vmem:[%s188] sm:%s180] %v189
                %v191 = vld [vmem:[%s187 + $0x10] sm:%s180]
                %192 = vst [vmem:[%s188 + $0x8] sm:%s180] %v191
                %v193 = vld [vmem:[%s187 + $0x20] sm:%s180]
                %194 = vst [vmem:[%s188 + $0x10] sm:%s180] %v193
                %v195 = vld [vmem:[%s187 + $0x30] sm:%s180]
                %196 = vst [vmem:[%s188 + $0x18] sm:%s180] %v195
                %v197 = vld [vmem:[%s187 + $0x40] sm:%s180]
                %198 = vst [vmem:[%s188 + $0x20] sm:%s180] %v197
                %v199 = vld [vmem:[%s187 + $0x50] sm:%s180]
                %200 = vst [vmem:[%s188 + $0x28] sm:%s180] %v199
                %v201 = vld [vmem:[%s187 + $0x60] sm:%s180]
                %202 = vst [vmem:[%s188 + $0x30] sm:%s180] %v201
                %v203 = vld [vmem:[%s187 + $0x70] sm:%s180]
                %204 = vst [vmem:[%s188 + $0x38] sm:%s180] %v203
                %v205 = vld [vmem:[%s187 + $0x80] sm:%s180]
                %206 = vst [vmem:[%s188 + $0x40] sm:%s180] %v205
                %v207 = vld [vmem:[%s187 + $0x90] sm:%s180]
                %208 = vst [vmem:[%s188 + $0x48] sm:%s180] %v207
                %v209 = vld [vmem:[%s187 + $0xa0] sm:%s180]
                %210 = vst [vmem:[%s188 + $0x50] sm:%s180] %v209
                %v211 = vld [vmem:[%s187 + $0xb0] sm:%s180]
                %212 = vst [vmem:[%s188 + $0x58] sm:%s180] %v211
                %v213 = vld [vmem:[%s187 + $0xc0] sm:%s180]
                %214 = vst [vmem:[%s188 + $0x60] sm:%s180] %v213
                %v215 = vld [vmem:[%s187 + $0xd0] sm:%s180]
                %216 = vst [vmem:[%s188 + $0x68] sm:%s180] %v215
                %v217 = vld [vmem:[%s187 + $0xe0] sm:%s180]
                %218 = vst [vmem:[%s188 + $0x70] sm:%s180] %v217
                %v219 = vld [vmem:[%s187 + $0xf0] sm:%s180]
                %220 = vst [vmem:[%s188 + $0x78] sm:%s180] %v219
              $region37: #{mha_forward.5} parent=31 // loop_footer
                %s186 = sadd.s32 1, %s182
              $region38: #{mha_forward.5} parent=31 // loop_footer_branch
                %181 = sbr.rel target = $region34
              $region39: #{mha_forward.5} parent=31 // loop_exit
                _
            $region32: #{mha_forward.5} parent=23 // pred_fallthru
              _
          $region24: #{mha_forward.5} parent=19 // pred_fallthru
            _
          %265 = vnop
        $region20: #{mha_forward.5} parent=15 // pred_fallthru
          _
        // Predicated region
        $region55: #{mha_forward.5} parent=15 // pred_check
          %p266 = pneg %p81
        $region56: #{mha_forward.5} parent=15 // pred_check_branch
          %268 = sbr.rel (%p266) target = $region58
        $region57: #{mha_forward.5} parent=15 // pred_region
          %s269 = sand.u32 %s71, 1
          %s270 = sand.u32 %s71, 1
          %s271 = smul.addr %s270, 256
          %s272 = scalar_lea.vmem [#allocation4], %s271
          %s273 = smul.u32 32, %s21
          %s274 = smul.u32 2, %s20
          %s275 = smul.addr %s273, 4
          %s276 = sadd.s32 %s274, %s275
          %s277 = smul.addr %s276, 4
          %s278 = scalar_lea.vmem %s1, %s277
          // Predicated region
          $region59: #{mha_forward.5} parent=57 // pred_check
            _
          $region60: #{mha_forward.5} parent=57 // pred_check_branch
            %280 = sbr.rel (0) target = $region62
          $region61: #{mha_forward.5} parent=57 // pred_region
            // Predicated region
            $region63: #{mha_forward.5} parent=61 // pred_check
              _
            $region64: #{mha_forward.5} parent=61 // pred_check_branch
              %282 = sbr.rel (0) target = $region66
            $region65: #{mha_forward.5} parent=61 // pred_region
              // Predicated region
              $region78: #{mha_forward.5} parent=65 // pred_check
                _
              $region79: #{mha_forward.5} parent=65 // pred_check_branch
                %360 = sbr.rel (0) target = $region81
              $region80: #{mha_forward.5} parent=65 // pred_region
                loop: start=0, step=1, limit=1
                $region82: #{mha_forward.5} parent=80 // loop_pre_header
                  _
                $region83: #{mha_forward.5} parent=80 // loop_header
                  %s362 = sphi 0, %s366
                  %p363 = scmp.ge.s32.totalorder %s362, 1
                  %s367 = sphi %s278, %s278
                  %s368 = sphi %s272, %s272
                $region84: #{mha_forward.5} parent=80 // loop_header_branch
                  %365 = sbr.rel (%p363) target = $region88
                $region85: #{mha_forward.5} parent=80 // loop_body
                  %v369 = vld [vmem:[%s367] sm:$0xff]
                  %370 = vst [vmem:[%s368] sm:$0xff] %v369
                  %v371 = vld [vmem:[%s367 + $0x10] sm:$0xff]
                  %372 = vst [vmem:[%s368 + $0x8] sm:$0xff] %v371
                  %v373 = vld [vmem:[%s367 + $0x20] sm:$0xff]
                  %374 = vst [vmem:[%s368 + $0x10] sm:$0xff] %v373
                  %v375 = vld [vmem:[%s367 + $0x30] sm:$0xff]
                  %376 = vst [vmem:[%s368 + $0x18] sm:$0xff] %v375
                  %v377 = vld [vmem:[%s367 + $0x40] sm:$0xff]
                  %378 = vst [vmem:[%s368 + $0x20] sm:$0xff] %v377
                  %v379 = vld [vmem:[%s367 + $0x50] sm:$0xff]
                  %380 = vst [vmem:[%s368 + $0x28] sm:$0xff] %v379
                  %v381 = vld [vmem:[%s367 + $0x60] sm:$0xff]
                  %382 = vst [vmem:[%s368 + $0x30] sm:$0xff] %v381
                  %v383 = vld [vmem:[%s367 + $0x70] sm:$0xff]
                  %384 = vst [vmem:[%s368 + $0x38] sm:$0xff] %v383
                  %v385 = vld [vmem:[%s367 + $0x80] sm:$0xff]
                  %386 = vst [vmem:[%s368 + $0x40] sm:$0xff] %v385
                  %v387 = vld [vmem:[%s367 + $0x90] sm:$0xff]
                  %388 = vst [vmem:[%s368 + $0x48] sm:$0xff] %v387
                  %v389 = vld [vmem:[%s367 + $0xa0] sm:$0xff]
                  %390 = vst [vmem:[%s368 + $0x50] sm:$0xff] %v389
                  %v391 = vld [vmem:[%s367 + $0xb0] sm:$0xff]
                  %392 = vst [vmem:[%s368 + $0x58] sm:$0xff] %v391
                  %v393 = vld [vmem:[%s367 + $0xc0] sm:$0xff]
                  %394 = vst [vmem:[%s368 + $0x60] sm:$0xff] %v393
                  %v395 = vld [vmem:[%s367 + $0xd0] sm:$0xff]
                  %396 = vst [vmem:[%s368 + $0x68] sm:$0xff] %v395
                  %v397 = vld [vmem:[%s367 + $0xe0] sm:$0xff]
                  %398 = vst [vmem:[%s368 + $0x70] sm:$0xff] %v397
                  %v399 = vld [vmem:[%s367 + $0xf0] sm:$0xff]
                  %400 = vst [vmem:[%s368 + $0x78] sm:$0xff] %v399
                  %v401 = vld [vmem:[%s367 + $0x100] sm:$0xff]
                  %402 = vst [vmem:[%s368 + $0x80] sm:$0xff] %v401
                  %v403 = vld [vmem:[%s367 + $0x110] sm:$0xff]
                  %404 = vst [vmem:[%s368 + $0x88] sm:$0xff] %v403
                  %v405 = vld [vmem:[%s367 + $0x120] sm:$0xff]
                  %406 = vst [vmem:[%s368 + $0x90] sm:$0xff] %v405
                  %v407 = vld [vmem:[%s367 + $0x130] sm:$0xff]
                  %408 = vst [vmem:[%s368 + $0x98] sm:$0xff] %v407
                  %v409 = vld [vmem:[%s367 + $0x140] sm:$0xff]
                  %410 = vst [vmem:[%s368 + $0xa0] sm:$0xff] %v409
                  %v411 = vld [vmem:[%s367 + $0x150] sm:$0xff]
                  %412 = vst [vmem:[%s368 + $0xa8] sm:$0xff] %v411
                  %v413 = vld [vmem:[%s367 + $0x160] sm:$0xff]
                  %414 = vst [vmem:[%s368 + $0xb0] sm:$0xff] %v413
                  %v415 = vld [vmem:[%s367 + $0x170] sm:$0xff]
                  %416 = vst [vmem:[%s368 + $0xb8] sm:$0xff] %v415
                  %v417 = vld [vmem:[%s367 + $0x180] sm:$0xff]
                  %418 = vst [vmem:[%s368 + $0xc0] sm:$0xff] %v417
                  %v419 = vld [vmem:[%s367 + $0x190] sm:$0xff]
                  %420 = vst [vmem:[%s368 + $0xc8] sm:$0xff] %v419
                  %v421 = vld [vmem:[%s367 + $0x1a0] sm:$0xff]
                  %422 = vst [vmem:[%s368 + $0xd0] sm:$0xff] %v421
                  %v423 = vld [vmem:[%s367 + $0x1b0] sm:$0xff]
                  %424 = vst [vmem:[%s368 + $0xd8] sm:$0xff] %v423
                  %v425 = vld [vmem:[%s367 + $0x1c0] sm:$0xff]
                  %426 = vst [vmem:[%s368 + $0xe0] sm:$0xff] %v425
                  %v427 = vld [vmem:[%s367 + $0x1d0] sm:$0xff]
                  %428 = vst [vmem:[%s368 + $0xe8] sm:$0xff] %v427
                  %v429 = vld [vmem:[%s367 + $0x1e0] sm:$0xff]
                  %430 = vst [vmem:[%s368 + $0xf0] sm:$0xff] %v429
                  %v431 = vld [vmem:[%s367 + $0x1f0] sm:$0xff]
                  %432 = vst [vmem:[%s368 + $0xf8] sm:$0xff] %v431
                $region86: #{mha_forward.5} parent=80 // loop_footer
                  %s366 = sadd.s32 1, %s362
                $region87: #{mha_forward.5} parent=80 // loop_footer_branch
                  %361 = sbr.rel target = $region83
                $region88: #{mha_forward.5} parent=80 // loop_exit
                  _
              $region81: #{mha_forward.5} parent=65 // pred_fallthru
                _
              // Predicated region
              $region89: #{mha_forward.5} parent=65 // pred_check
                _
              $region90: #{mha_forward.5} parent=65 // pred_check_branch
                %434 = sbr.rel target = $region92
              $region91: #{mha_forward.5} parent=65 // pred_region
                _
              $region92: #{mha_forward.5} parent=65 // pred_fallthru
                _
            $region66: #{mha_forward.5} parent=61 // pred_fallthru
              _
            // Predicated region
            $region67: #{mha_forward.5} parent=61 // pred_check
              _
            $region68: #{mha_forward.5} parent=61 // pred_check_branch
              %284 = sbr.rel target = $region70
            $region69: #{mha_forward.5} parent=61 // pred_region
              %s286 = ssub.s32 256, 1
              loop: start=0, step=1, limit=1
              $region71: #{mha_forward.5} parent=69 // loop_pre_header
                _
              $region72: #{mha_forward.5} parent=69 // loop_header
                %s288 = sphi 0, %s292
                %p289 = scmp.ge.s32.totalorder %s288, 1
                %s293 = sphi %s278, %s278
                %s294 = sphi %s272, %s272
              $region73: #{mha_forward.5} parent=69 // loop_header_branch
                %291 = sbr.rel (%p289) target = $region77
              $region74: #{mha_forward.5} parent=69 // loop_body
                %v295 = vld [vmem:[%s293] sm:%s286]
                %296 = vst [vmem:[%s294] sm:%s286] %v295
                %v297 = vld [vmem:[%s293 + $0x10] sm:%s286]
                %298 = vst [vmem:[%s294 + $0x8] sm:%s286] %v297
                %v299 = vld [vmem:[%s293 + $0x20] sm:%s286]
                %300 = vst [vmem:[%s294 + $0x10] sm:%s286] %v299
                %v301 = vld [vmem:[%s293 + $0x30] sm:%s286]
                %302 = vst [vmem:[%s294 + $0x18] sm:%s286] %v301
                %v303 = vld [vmem:[%s293 + $0x40] sm:%s286]
                %304 = vst [vmem:[%s294 + $0x20] sm:%s286] %v303
                %v305 = vld [vmem:[%s293 + $0x50] sm:%s286]
                %306 = vst [vmem:[%s294 + $0x28] sm:%s286] %v305
                %v307 = vld [vmem:[%s293 + $0x60] sm:%s286]
                %308 = vst [vmem:[%s294 + $0x30] sm:%s286] %v307
                %v309 = vld [vmem:[%s293 + $0x70] sm:%s286]
                %310 = vst [vmem:[%s294 + $0x38] sm:%s286] %v309
                %v311 = vld [vmem:[%s293 + $0x80] sm:%s286]
                %312 = vst [vmem:[%s294 + $0x40] sm:%s286] %v311
                %v313 = vld [vmem:[%s293 + $0x90] sm:%s286]
                %314 = vst [vmem:[%s294 + $0x48] sm:%s286] %v313
                %v315 = vld [vmem:[%s293 + $0xa0] sm:%s286]
                %316 = vst [vmem:[%s294 + $0x50] sm:%s286] %v315
                %v317 = vld [vmem:[%s293 + $0xb0] sm:%s286]
                %318 = vst [vmem:[%s294 + $0x58] sm:%s286] %v317
                %v319 = vld [vmem:[%s293 + $0xc0] sm:%s286]
                %320 = vst [vmem:[%s294 + $0x60] sm:%s286] %v319
                %v321 = vld [vmem:[%s293 + $0xd0] sm:%s286]
                %322 = vst [vmem:[%s294 + $0x68] sm:%s286] %v321
                %v323 = vld [vmem:[%s293 + $0xe0] sm:%s286]
                %324 = vst [vmem:[%s294 + $0x70] sm:%s286] %v323
                %v325 = vld [vmem:[%s293 + $0xf0] sm:%s286]
                %326 = vst [vmem:[%s294 + $0x78] sm:%s286] %v325
                %v327 = vld [vmem:[%s293 + $0x100] sm:%s286]
                %328 = vst [vmem:[%s294 + $0x80] sm:%s286] %v327
                %v329 = vld [vmem:[%s293 + $0x110] sm:%s286]
                %330 = vst [vmem:[%s294 + $0x88] sm:%s286] %v329
                %v331 = vld [vmem:[%s293 + $0x120] sm:%s286]
                %332 = vst [vmem:[%s294 + $0x90] sm:%s286] %v331
                %v333 = vld [vmem:[%s293 + $0x130] sm:%s286]
                %334 = vst [vmem:[%s294 + $0x98] sm:%s286] %v333
                %v335 = vld [vmem:[%s293 + $0x140] sm:%s286]
                %336 = vst [vmem:[%s294 + $0xa0] sm:%s286] %v335
                %v337 = vld [vmem:[%s293 + $0x150] sm:%s286]
                %338 = vst [vmem:[%s294 + $0xa8] sm:%s286] %v337
                %v339 = vld [vmem:[%s293 + $0x160] sm:%s286]
                %340 = vst [vmem:[%s294 + $0xb0] sm:%s286] %v339
                %v341 = vld [vmem:[%s293 + $0x170] sm:%s286]
                %342 = vst [vmem:[%s294 + $0xb8] sm:%s286] %v341
                %v343 = vld [vmem:[%s293 + $0x180] sm:%s286]
                %344 = vst [vmem:[%s294 + $0xc0] sm:%s286] %v343
                %v345 = vld [vmem:[%s293 + $0x190] sm:%s286]
                %346 = vst [vmem:[%s294 + $0xc8] sm:%s286] %v345
                %v347 = vld [vmem:[%s293 + $0x1a0] sm:%s286]
                %348 = vst [vmem:[%s294 + $0xd0] sm:%s286] %v347
                %v349 = vld [vmem:[%s293 + $0x1b0] sm:%s286]
                %350 = vst [vmem:[%s294 + $0xd8] sm:%s286] %v349
                %v351 = vld [vmem:[%s293 + $0x1c0] sm:%s286]
                %352 = vst [vmem:[%s294 + $0xe0] sm:%s286] %v351
                %v353 = vld [vmem:[%s293 + $0x1d0] sm:%s286]
                %354 = vst [vmem:[%s294 + $0xe8] sm:%s286] %v353
                %v355 = vld [vmem:[%s293 + $0x1e0] sm:%s286]
                %356 = vst [vmem:[%s294 + $0xf0] sm:%s286] %v355
                %v357 = vld [vmem:[%s293 + $0x1f0] sm:%s286]
                %358 = vst [vmem:[%s294 + $0xf8] sm:%s286] %v357
              $region75: #{mha_forward.5} parent=69 // loop_footer
                %s292 = sadd.s32 1, %s288
              $region76: #{mha_forward.5} parent=69 // loop_footer_branch
                %287 = sbr.rel target = $region72
              $region77: #{mha_forward.5} parent=69 // loop_exit
                _
            $region70: #{mha_forward.5} parent=61 // pred_fallthru
              _
          $region62: #{mha_forward.5} parent=57 // pred_fallthru
            _
          %435 = vnop
        $region58: #{mha_forward.5} parent=15 // pred_fallthru
          _
        // Predicated region
        $region93: #{mha_forward.5} parent=15 // pred_check
          %p436 = pneg %p107
        $region94: #{mha_forward.5} parent=15 // pred_check_branch
          %438 = sbr.rel (%p436) target = $region96
        $region95: #{mha_forward.5} parent=15 // pred_region
          %s439 = smul.u32 2, %s20
          %p440 = scmp.lt.s32.totalorder %s439, 3
          %s441 = scalar_select %p440, %s439, 3
          %s442 = scalar_lea.vmem %s2, %s441
          %s443 = smul.u32 2, %s20
        $region96: #{mha_forward.5} parent=15 // pred_fallthru
          _
      $region16: #{mha_forward.5} parent=5 // pred_fallthru
        _
      %p444 = scmp.le.s32.totalorder 1, %s12
      %p445 = scmp.lt.s32.totalorder %s12, 9
      %p446 = pnand %p444, %p445
      %p447 = pneg %p446
      // Predicated region
      $region97: #{mha_forward.5} parent=5 // pred_check
        _
      $region98: #{mha_forward.5} parent=5 // pred_check_branch
        %449 = sbr.rel (%p446) target = $region100
      $region99: #{mha_forward.5} parent=5 // pred_region
        %s450 = ssub.s32 %s12, 1
        %s451 = sand.u32 %s46, 1
        %s452 = sand.u32 %s46, 1
        %s453 = smul.addr %s452, 128
        %s454 = scalar_lea.vmem [#allocation3], %s453
        // Predicated region
        $region101: #{mha_forward.5} parent=99 // pred_check
          %p455 = pneg %p59
        $region102: #{mha_forward.5} parent=99 // pred_check_branch
          %457 = sbr.rel (%p455) target = $region104
        $region103: #{mha_forward.5} parent=99 // pred_region
          _
        $region104: #{mha_forward.5} parent=99 // pred_fallthru
          _
        %s458 = sand.u32 %s74, 1
        %s459 = sand.u32 %s74, 1
        %s460 = smul.addr %s459, 256
        %s461 = scalar_lea.vmem [#allocation4], %s460
        // Predicated region
        $region105: #{mha_forward.5} parent=99 // pred_check
          %p462 = pneg %p87
        $region106: #{mha_forward.5} parent=99 // pred_check_branch
          %464 = sbr.rel (%p462) target = $region108
        $region107: #{mha_forward.5} parent=99 // pred_region
          _
        $region108: #{mha_forward.5} parent=99 // pred_fallthru
          _
        %s465 = sand.u32 %s46, 1
        %s466 = sand.u32 %s46, 1
        %s467 = smul.addr %s466, 128
        %s468 = scalar_lea.vmem [#allocation3], %s467
        %p469 = pneg %p59
        %p470 = pneg %p56
        %s471 = sand.u32 %s74, 1
        %s472 = sand.u32 %s74, 1
        %s473 = smul.addr %s472, 256
        %s474 = scalar_lea.vmem [#allocation4], %s473
        %p475 = pneg %p87
        %p476 = pneg %p84
        %s477 = smul.u32 2, %s23
        %p478 = scmp.lt.s32.totalorder %s477, 3
        %s479 = scalar_select %p478, %s477, 3
        %s480 = scalar_lea.vmem %s2, %s479
        %p481 = pneg %p113
        %p482 = pneg %p110
        %p483 = pneg %p141
        %p484 = pneg %p138
        %s485 = sand.u32 %s128, 1
        %s486 = scalar_lea.sflag [#allocation6], %s485
        %s487 = sand.u32 %s128, 1
        %s488 = smul.addr %s487, 256
        %s489 = scalar_lea.vmem [#allocation5], %s488
        %s490 = smul.u32 16, %s22
        %s491 = smul.u32 2, %s24
        %s492 = smul.u32 32, %s24
        %s493 = smul.u32 2, %s23
        %s494 = smul.u32 2, %s23
        %p495 = scmp.lt.s32.totalorder %s494, 3
        %s496 = scalar_select %p495, %s494, 3
        %s497 = scalar_lea.vmem %s2, %s496
        %s498 = smul.u32 2, %s23
        %s499 = smul.u32 16, %s22
        %s500 = smul.u32 2, %s23
        %p501 = scmp.eq.s32.totalorder %s24, 0
        // Predicated region
        $region109: #{mha_forward.5} parent=99 // pred_check
          %p502 = pneg %p501
        $region110: #{mha_forward.5} parent=99 // pred_check_branch
          %504 = sbr.rel (%p502) target = $region112
        $region111: #{mha_forward.5} parent=99 // pred_region
          %505 = vst [vmem:[#allocation2] sm:$0xff] 0.0
          %506 = vst [vmem:[#allocation2 + $0x8] sm:$0xff] 0.0
          %507 = vst [vmem:[#allocation2 + $0x10] sm:$0xff] 0.0
          %508 = vst [vmem:[#allocation2 + $0x18] sm:$0xff] 0.0
          %509 = vst [vmem:[#allocation2 + $0x20] sm:$0xff] 0.0
          %510 = vst [vmem:[#allocation2 + $0x28] sm:$0xff] 0.0
          %511 = vst [vmem:[#allocation2 + $0x30] sm:$0xff] 0.0
          %512 = vst [vmem:[#allocation2 + $0x38] sm:$0xff] 0.0
          %513 = vst [vmem:[#allocation2 + $0x40] sm:$0xff] 0.0
          %514 = vst [vmem:[#allocation2 + $0x48] sm:$0xff] 0.0
          %515 = vst [vmem:[#allocation2 + $0x50] sm:$0xff] 0.0
          %516 = vst [vmem:[#allocation2 + $0x58] sm:$0xff] 0.0
          %517 = vst [vmem:[#allocation2 + $0x60] sm:$0xff] 0.0
          %518 = vst [vmem:[#allocation2 + $0x68] sm:$0xff] 0.0
          %519 = vst [vmem:[#allocation2 + $0x70] sm:$0xff] 0.0
          %520 = vst [vmem:[#allocation2 + $0x78] sm:$0xff] 0.0
          %521 = vst [vmem:[#allocation2 + $0x80] sm:$0xff] 0.0
          %522 = vst [vmem:[#allocation2 + $0x88] sm:$0xff] 0.0
          %523 = vst [vmem:[#allocation2 + $0x90] sm:$0xff] 0.0
          %524 = vst [vmem:[#allocation2 + $0x98] sm:$0xff] 0.0
          %525 = vst [vmem:[#allocation2 + $0xa0] sm:$0xff] 0.0
          %526 = vst [vmem:[#allocation2 + $0xa8] sm:$0xff] 0.0
          %527 = vst [vmem:[#allocation2 + $0xb0] sm:$0xff] 0.0
          %528 = vst [vmem:[#allocation2 + $0xb8] sm:$0xff] 0.0
          %529 = vst [vmem:[#allocation2 + $0xc0] sm:$0xff] 0.0
          %530 = vst [vmem:[#allocation2 + $0xc8] sm:$0xff] 0.0
          %531 = vst [vmem:[#allocation2 + $0xd0] sm:$0xff] 0.0
          %532 = vst [vmem:[#allocation2 + $0xd8] sm:$0xff] 0.0
          %533 = vst [vmem:[#allocation2 + $0xe0] sm:$0xff] 0.0
          %534 = vst [vmem:[#allocation2 + $0xe8] sm:$0xff] 0.0
          %535 = vst [vmem:[#allocation2 + $0xf0] sm:$0xff] 0.0
          %536 = vst [vmem:[#allocation2 + $0xf8] sm:$0xff] 0.0
        $region112: #{mha_forward.5} parent=99 // pred_fallthru
          _
        %v537 = vld [vmem:[#allocation2] sm:$0xff]
        %v538 = vld [vmem:[#allocation2 + $0x8] sm:$0xff]
        %v539 = vld [vmem:[#allocation2 + $0x10] sm:$0xff]
        %v540 = vld [vmem:[#allocation2 + $0x18] sm:$0xff]
        %v541 = vld [vmem:[#allocation2 + $0x20] sm:$0xff]
        %v542 = vld [vmem:[#allocation2 + $0x28] sm:$0xff]
        %v543 = vld [vmem:[#allocation2 + $0x30] sm:$0xff]
        %v544 = vld [vmem:[#allocation2 + $0x38] sm:$0xff]
        %v545 = vld [vmem:[#allocation2 + $0x40] sm:$0xff]
        %v546 = vld [vmem:[#allocation2 + $0x48] sm:$0xff]
        %v547 = vld [vmem:[#allocation2 + $0x50] sm:$0xff]
        %v548 = vld [vmem:[#allocation2 + $0x58] sm:$0xff]
        %v549 = vld [vmem:[#allocation2 + $0x60] sm:$0xff]
        %v550 = vld [vmem:[#allocation2 + $0x68] sm:$0xff]
        %v551 = vld [vmem:[#allocation2 + $0x70] sm:$0xff]
        %v552 = vld [vmem:[#allocation2 + $0x78] sm:$0xff]
        %v553 = vld [vmem:[#allocation2 + $0x80] sm:$0xff]
        %v554 = vld [vmem:[#allocation2 + $0x88] sm:$0xff]
        %v555 = vld [vmem:[#allocation2 + $0x90] sm:$0xff]
        %v556 = vld [vmem:[#allocation2 + $0x98] sm:$0xff]
        %v557 = vld [vmem:[#allocation2 + $0xa0] sm:$0xff]
        %v558 = vld [vmem:[#allocation2 + $0xa8] sm:$0xff]
        %v559 = vld [vmem:[#allocation2 + $0xb0] sm:$0xff]
        %v560 = vld [vmem:[#allocation2 + $0xb8] sm:$0xff]
        %v561 = vld [vmem:[#allocation2 + $0xc0] sm:$0xff]
        %v562 = vld [vmem:[#allocation2 + $0xc8] sm:$0xff]
        %v563 = vld [vmem:[#allocation2 + $0xd0] sm:$0xff]
        %v564 = vld [vmem:[#allocation2 + $0xd8] sm:$0xff]
        %v565 = vld [vmem:[#allocation2 + $0xe0] sm:$0xff]
        %v566 = vld [vmem:[#allocation2 + $0xe8] sm:$0xff]
        %v567 = vld [vmem:[#allocation2 + $0xf0] sm:$0xff]
        %v568 = vld [vmem:[#allocation2 + $0xf8] sm:$0xff]
        %v569 = vld [vmem:[%s454] sm:$0xff]
        %v570 = vld [vmem:[%s454 + $0x8] sm:$0xff]
        %v571 = vld [vmem:[%s454 + $0x10] sm:$0xff]
        %v572 = vld [vmem:[%s454 + $0x18] sm:$0xff]
        %v573 = vld [vmem:[%s454 + $0x20] sm:$0xff]
        %v574 = vld [vmem:[%s454 + $0x28] sm:$0xff]
        %v575 = vld [vmem:[%s454 + $0x30] sm:$0xff]
        %v576 = vld [vmem:[%s454 + $0x38] sm:$0xff]
        %v577 = vld [vmem:[%s454 + $0x40] sm:$0xff]
        %v578 = vld [vmem:[%s454 + $0x48] sm:$0xff]
        %v579 = vld [vmem:[%s454 + $0x50] sm:$0xff]
        %v580 = vld [vmem:[%s454 + $0x58] sm:$0xff]
        %v581 = vld [vmem:[%s454 + $0x60] sm:$0xff]
        %v582 = vld [vmem:[%s454 + $0x68] sm:$0xff]
        %v583 = vld [vmem:[%s454 + $0x70] sm:$0xff]
        %v584 = vld [vmem:[%s454 + $0x78] sm:$0xff]
        %v585 = vld [vmem:[%s461] sm:$0xff]
        %v586 = vld [vmem:[%s461 + $0x8] sm:$0xff]
        %v587 = vld [vmem:[%s461 + $0x10] sm:$0xff]
        %v588 = vld [vmem:[%s461 + $0x18] sm:$0xff]
        %v589 = vld [vmem:[%s461 + $0x20] sm:$0xff]
        %v590 = vld [vmem:[%s461 + $0x28] sm:$0xff]
        %v591 = vld [vmem:[%s461 + $0x30] sm:$0xff]
        %v592 = vld [vmem:[%s461 + $0x38] sm:$0xff]
        %v593 = vld [vmem:[%s461 + $0x40] sm:$0xff]
        %v594 = vld [vmem:[%s461 + $0x48] sm:$0xff]
        %v595 = vld [vmem:[%s461 + $0x50] sm:$0xff]
        %v596 = vld [vmem:[%s461 + $0x58] sm:$0xff]
        %v597 = vld [vmem:[%s461 + $0x60] sm:$0xff]
        %v598 = vld [vmem:[%s461 + $0x68] sm:$0xff]
        %v599 = vld [vmem:[%s461 + $0x70] sm:$0xff]
        %v600 = vld [vmem:[%s461 + $0x78] sm:$0xff]
        %v601 = vld [vmem:[%s461 + $0x80] sm:$0xff]
        %v602 = vld [vmem:[%s461 + $0x88] sm:$0xff]
        %v603 = vld [vmem:[%s461 + $0x90] sm:$0xff]
        %v604 = vld [vmem:[%s461 + $0x98] sm:$0xff]
        %v605 = vld [vmem:[%s461 + $0xa0] sm:$0xff]
        %v606 = vld [vmem:[%s461 + $0xa8] sm:$0xff]
        %v607 = vld [vmem:[%s461 + $0xb0] sm:$0xff]
        %v608 = vld [vmem:[%s461 + $0xb8] sm:$0xff]
        %v609 = vld [vmem:[%s461 + $0xc0] sm:$0xff]
        %v610 = vld [vmem:[%s461 + $0xc8] sm:$0xff]
        %v611 = vld [vmem:[%s461 + $0xd0] sm:$0xff]
        %v612 = vld [vmem:[%s461 + $0xd8] sm:$0xff]
        %v613 = vld [vmem:[%s461 + $0xe0] sm:$0xff]
        %v614 = vld [vmem:[%s461 + $0xe8] sm:$0xff]
        %v615 = vld [vmem:[%s461 + $0xf0] sm:$0xff]
        %v616 = vld [vmem:[%s461 + $0xf8] sm:$0xff]
        %v633 = vunpack.c.l.b16 %v569
        %v634 = vunpack.c.h.b16 %v569
        %v635 = vunpack.c.l.b16 %v570
        %v636 = vunpack.c.h.b16 %v570
        %v637 = vunpack.c.l.b16 %v571
        %v638 = vunpack.c.h.b16 %v571
        %v639 = vunpack.c.l.b16 %v572
        %v640 = vunpack.c.h.b16 %v572
        %v641 = vunpack.c.l.b16 %v573
        %v642 = vunpack.c.h.b16 %v573
        %v643 = vunpack.c.l.b16 %v574
        %v644 = vunpack.c.h.b16 %v574
        %v645 = vunpack.c.l.b16 %v575
        %v646 = vunpack.c.h.b16 %v575
        %v647 = vunpack.c.l.b16 %v576
        %v648 = vunpack.c.h.b16 %v576
        %v649 = vunpack.c.l.b16 %v577
        %v650 = vunpack.c.h.b16 %v577
        %v651 = vunpack.c.l.b16 %v578
        %v652 = vunpack.c.h.b16 %v578
        %v653 = vunpack.c.l.b16 %v579
        %v654 = vunpack.c.h.b16 %v579
        %v655 = vunpack.c.l.b16 %v580
        %v656 = vunpack.c.h.b16 %v580
        %v657 = vunpack.c.l.b16 %v581
        %v658 = vunpack.c.h.b16 %v581
        %v659 = vunpack.c.l.b16 %v582
        %v660 = vunpack.c.h.b16 %v582
        %v661 = vunpack.c.l.b16 %v583
        %v662 = vunpack.c.h.b16 %v583
        %v663 = vunpack.c.l.b16 %v584
        %v664 = vunpack.c.h.b16 %v584
        %v665 = vpack.c.b16 %v635, %v633
        %v666 = vpack.c.b16 %v636, %v634
        %v667 = vpack.c.b16 %v639, %v637
        %v668 = vpack.c.b16 %v640, %v638
        %v669 = vpack.c.b16 %v643, %v641
        %v670 = vpack.c.b16 %v644, %v642
        %v671 = vpack.c.b16 %v647, %v645
        %v672 = vpack.c.b16 %v648, %v646
        %v673 = vpack.c.b16 %v651, %v649
        %v674 = vpack.c.b16 %v652, %v650
        %v675 = vpack.c.b16 %v655, %v653
        %v676 = vpack.c.b16 %v656, %v654
        %v677 = vpack.c.b16 %v659, %v657
        %v678 = vpack.c.b16 %v660, %v658
        %v679 = vpack.c.b16 %v663, %v661
        %v680 = vpack.c.b16 %v664, %v662
        %v729 = vunpack.c.l.b16 %v585
        %v730 = vunpack.c.h.b16 %v585
        %v731 = vunpack.c.l.b16 %v586
        %v732 = vunpack.c.h.b16 %v586
        %v733 = vunpack.c.l.b16 %v587
        %v734 = vunpack.c.h.b16 %v587
        %v735 = vunpack.c.l.b16 %v588
        %v736 = vunpack.c.h.b16 %v588
        %v737 = vunpack.c.l.b16 %v589
        %v738 = vunpack.c.h.b16 %v589
        %v739 = vunpack.c.l.b16 %v590
        %v740 = vunpack.c.h.b16 %v590
        %v741 = vunpack.c.l.b16 %v591
        %v742 = vunpack.c.h.b16 %v591
        %v743 = vunpack.c.l.b16 %v592
        %v744 = vunpack.c.h.b16 %v592
        %v745 = vunpack.c.l.b16 %v593
        %v746 = vunpack.c.h.b16 %v593
        %v747 = vunpack.c.l.b16 %v594
        %v748 = vunpack.c.h.b16 %v594
        %v749 = vunpack.c.l.b16 %v595
        %v750 = vunpack.c.h.b16 %v595
        %v751 = vunpack.c.l.b16 %v596
        %v752 = vunpack.c.h.b16 %v596
        %v753 = vunpack.c.l.b16 %v597
        %v754 = vunpack.c.h.b16 %v597
        %v755 = vunpack.c.l.b16 %v598
        %v756 = vunpack.c.h.b16 %v598
        %v757 = vunpack.c.l.b16 %v599
        %v758 = vunpack.c.h.b16 %v599
        %v759 = vunpack.c.l.b16 %v600
        %v760 = vunpack.c.h.b16 %v600
        %v761 = vunpack.c.l.b16 %v601
        %v762 = vunpack.c.h.b16 %v601
        %v763 = vunpack.c.l.b16 %v602
        %v764 = vunpack.c.h.b16 %v602
        %v765 = vunpack.c.l.b16 %v603
        %v766 = vunpack.c.h.b16 %v603
        %v767 = vunpack.c.l.b16 %v604
        %v768 = vunpack.c.h.b16 %v604
        %v769 = vunpack.c.l.b16 %v605
        %v770 = vunpack.c.h.b16 %v605
        %v771 = vunpack.c.l.b16 %v606
        %v772 = vunpack.c.h.b16 %v606
        %v773 = vunpack.c.l.b16 %v607
        %v774 = vunpack.c.h.b16 %v607
        %v775 = vunpack.c.l.b16 %v608
        %v776 = vunpack.c.h.b16 %v608
        %v777 = vunpack.c.l.b16 %v609
        %v778 = vunpack.c.h.b16 %v609
        %v779 = vunpack.c.l.b16 %v610
        %v780 = vunpack.c.h.b16 %v610
        %v781 = vunpack.c.l.b16 %v611
        %v782 = vunpack.c.h.b16 %v611
        %v783 = vunpack.c.l.b16 %v612
        %v784 = vunpack.c.h.b16 %v612
        %v785 = vunpack.c.l.b16 %v613
        %v786 = vunpack.c.h.b16 %v613
        %v787 = vunpack.c.l.b16 %v614
        %v788 = vunpack.c.h.b16 %v614
        %v789 = vunpack.c.l.b16 %v615
        %v790 = vunpack.c.h.b16 %v615
        %v791 = vunpack.c.l.b16 %v616
        %v792 = vunpack.c.h.b16 %v616
        %v793 = vpack.c.b16 %v731, %v729
        %v794 = vpack.c.b16 %v732, %v730
        %v795 = vpack.c.b16 %v735, %v733
        %v796 = vpack.c.b16 %v736, %v734
        %v797 = vpack.c.b16 %v739, %v737
        %v798 = vpack.c.b16 %v740, %v738
        %v799 = vpack.c.b16 %v743, %v741
        %v800 = vpack.c.b16 %v744, %v742
        %v801 = vpack.c.b16 %v747, %v745
        %v802 = vpack.c.b16 %v748, %v746
        %v803 = vpack.c.b16 %v751, %v749
        %v804 = vpack.c.b16 %v752, %v750
        %v805 = vpack.c.b16 %v755, %v753
        %v806 = vpack.c.b16 %v756, %v754
        %v807 = vpack.c.b16 %v759, %v757
        %v808 = vpack.c.b16 %v760, %v758
        %v809 = vpack.c.b16 %v763, %v761
        %v810 = vpack.c.b16 %v764, %v762
        %v811 = vpack.c.b16 %v767, %v765
        %v812 = vpack.c.b16 %v768, %v766
        %v813 = vpack.c.b16 %v771, %v769
        %v814 = vpack.c.b16 %v772, %v770
        %v815 = vpack.c.b16 %v775, %v773
        %v816 = vpack.c.b16 %v776, %v774
        %v817 = vpack.c.b16 %v779, %v777
        %v818 = vpack.c.b16 %v780, %v778
        %v819 = vpack.c.b16 %v783, %v781
        %v820 = vpack.c.b16 %v784, %v782
        %v821 = vpack.c.b16 %v787, %v785
        %v822 = vpack.c.b16 %v788, %v786
        %v823 = vpack.c.b16 %v791, %v789
        %v824 = vpack.c.b16 %v792, %v790
        %857 = vmatpush.bf16.msra.mxu0 %v807
        %858 = vmatpush.bf16.msra.mxu0 %v805
        %859 = vmatpush.bf16.msra.mxu0 %v803
        %860 = vmatpush.bf16.msra.mxu0 %v801
        %861 = vmatpush.bf16.msra.mxu0 %v799
        %862 = vmatpush.bf16.msra.mxu0 %v797
        %863 = vmatpush.bf16.msra.mxu0 %v795
        %864 = vmatpush.bf16.msra.mxu0 %v793
        %865 = vmatmul.bf16.gmra.mxu0 %v665
        %v866 = vpop.f32.mrf.mxu0
        %v867 = vadd.f32 0.0, %v866
        %v868 = vpop.f32.mrf.mxu0
        %v869 = vadd.f32 0.0, %v868
        %870 = vmatmul.bf16.gmra.mxu0 %v667
        %v871 = vpop.f32.mrf.mxu0
        %v872 = vadd.f32 0.0, %v871
        %v873 = vpop.f32.mrf.mxu0
        %v874 = vadd.f32 0.0, %v873
        %875 = vmatmul.bf16.gmra.mxu0 %v669
        %v876 = vpop.f32.mrf.mxu0
        %v877 = vadd.f32 0.0, %v876
        %v878 = vpop.f32.mrf.mxu0
        %v879 = vadd.f32 0.0, %v878
        %880 = vmatmul.bf16.gmra.mxu0 %v671
        %v881 = vpop.f32.mrf.mxu0
        %v882 = vadd.f32 0.0, %v881
        %v883 = vpop.f32.mrf.mxu0
        %v884 = vadd.f32 0.0, %v883
        %885 = vmatmul.bf16.gmra.mxu0 %v673
        %v886 = vpop.f32.mrf.mxu0
        %v887 = vadd.f32 0.0, %v886
        %v888 = vpop.f32.mrf.mxu0
        %v889 = vadd.f32 0.0, %v888
        %890 = vmatmul.bf16.gmra.mxu0 %v675
        %v891 = vpop.f32.mrf.mxu0
        %v892 = vadd.f32 0.0, %v891
        %v893 = vpop.f32.mrf.mxu0
        %v894 = vadd.f32 0.0, %v893
        %895 = vmatmul.bf16.gmra.mxu0 %v677
        %v896 = vpop.f32.mrf.mxu0
        %v897 = vadd.f32 0.0, %v896
        %v898 = vpop.f32.mrf.mxu0
        %v899 = vadd.f32 0.0, %v898
        %900 = vmatmul.bf16.gmra.mxu0 %v679
        %v901 = vpop.f32.mrf.mxu0
        %v902 = vadd.f32 0.0, %v901
        %v903 = vpop.f32.mrf.mxu0
        %v904 = vadd.f32 0.0, %v903
        %905 = vdwg.mxu0
        %906 = vmatpush.bf16.msra.mxu0 %v823
        %907 = vmatpush.bf16.msra.mxu0 %v821
        %908 = vmatpush.bf16.msra.mxu0 %v819
        %909 = vmatpush.bf16.msra.mxu0 %v817
        %910 = vmatpush.bf16.msra.mxu0 %v815
        %911 = vmatpush.bf16.msra.mxu0 %v813
        %912 = vmatpush.bf16.msra.mxu0 %v811
        %913 = vmatpush.bf16.msra.mxu0 %v809
        %914 = vmatmul.bf16.gmra.mxu0 %v666
        %v915 = vpop.f32.mrf.mxu0
        %v916 = vadd.f32 %v867, %v915
        %v917 = vpop.f32.mrf.mxu0
        %v918 = vadd.f32 %v869, %v917
        %919 = vmatmul.bf16.gmra.mxu0 %v668
        %v920 = vpop.f32.mrf.mxu0
        %v921 = vadd.f32 %v872, %v920
        %v922 = vpop.f32.mrf.mxu0
        %v923 = vadd.f32 %v874, %v922
        %924 = vmatmul.bf16.gmra.mxu0 %v670
        %v925 = vpop.f32.mrf.mxu0
        %v926 = vadd.f32 %v877, %v925
        %v927 = vpop.f32.mrf.mxu0
        %v928 = vadd.f32 %v879, %v927
        %929 = vmatmul.bf16.gmra.mxu0 %v672
        %v930 = vpop.f32.mrf.mxu0
        %v931 = vadd.f32 %v882, %v930
        %v932 = vpop.f32.mrf.mxu0
        %v933 = vadd.f32 %v884, %v932
        %934 = vmatmul.bf16.gmra.mxu0 %v674
        %v935 = vpop.f32.mrf.mxu0
        %v936 = vadd.f32 %v887, %v935
        %v937 = vpop.f32.mrf.mxu0
        %v938 = vadd.f32 %v889, %v937
        %939 = vmatmul.bf16.gmra.mxu0 %v676
        %v940 = vpop.f32.mrf.mxu0
        %v941 = vadd.f32 %v892, %v940
        %v942 = vpop.f32.mrf.mxu0
        %v943 = vadd.f32 %v894, %v942
        %944 = vmatmul.bf16.gmra.mxu0 %v678
        %v945 = vpop.f32.mrf.mxu0
        %v946 = vadd.f32 %v897, %v945
        %v947 = vpop.f32.mrf.mxu0
        %v948 = vadd.f32 %v899, %v947
        %949 = vmatmul.bf16.gmra.mxu0 %v680
        %v950 = vpop.f32.mrf.mxu0
        %v951 = vadd.f32 %v902, %v950
        %v952 = vpop.f32.mrf.mxu0
        %v953 = vadd.f32 %v904, %v952
        %954 = vdwg.mxu0
        %955 = vmatpush.bf16.msra.mxu0 %v808
        %956 = vmatpush.bf16.msra.mxu0 %v806
        %957 = vmatpush.bf16.msra.mxu0 %v804
        %958 = vmatpush.bf16.msra.mxu0 %v802
        %959 = vmatpush.bf16.msra.mxu0 %v800
        %960 = vmatpush.bf16.msra.mxu0 %v798
        %961 = vmatpush.bf16.msra.mxu0 %v796
        %962 = vmatpush.bf16.msra.mxu0 %v794
        %963 = vmatmul.bf16.gmra.mxu0 %v665
        %v964 = vpop.f32.mrf.mxu0
        %v965 = vadd.f32 0.0, %v964
        %v966 = vpop.f32.mrf.mxu0
        %v967 = vadd.f32 0.0, %v966
        %968 = vmatmul.bf16.gmra.mxu0 %v667
        %v969 = vpop.f32.mrf.mxu0
        %v970 = vadd.f32 0.0, %v969
        %v971 = vpop.f32.mrf.mxu0
        %v972 = vadd.f32 0.0, %v971
        %973 = vmatmul.bf16.gmra.mxu0 %v669
        %v974 = vpop.f32.mrf.mxu0
        %v975 = vadd.f32 0.0, %v974
        %v976 = vpop.f32.mrf.mxu0
        %v977 = vadd.f32 0.0, %v976
        %978 = vmatmul.bf16.gmra.mxu0 %v671
        %v979 = vpop.f32.mrf.mxu0
        %v980 = vadd.f32 0.0, %v979
        %v981 = vpop.f32.mrf.mxu0
        %v982 = vadd.f32 0.0, %v981
        %983 = vmatmul.bf16.gmra.mxu0 %v673
        %v984 = vpop.f32.mrf.mxu0
        %v985 = vadd.f32 0.0, %v984
        %v986 = vpop.f32.mrf.mxu0
        %v987 = vadd.f32 0.0, %v986
        %988 = vmatmul.bf16.gmra.mxu0 %v675
        %v989 = vpop.f32.mrf.mxu0
        %v990 = vadd.f32 0.0, %v989
        %v991 = vpop.f32.mrf.mxu0
        %v992 = vadd.f32 0.0, %v991
        %993 = vmatmul.bf16.gmra.mxu0 %v677
        %v994 = vpop.f32.mrf.mxu0
        %v995 = vadd.f32 0.0, %v994
        %v996 = vpop.f32.mrf.mxu0
        %v997 = vadd.f32 0.0, %v996
        %998 = vmatmul.bf16.gmra.mxu0 %v679
        %v999 = vpop.f32.mrf.mxu0
        %v1000 = vadd.f32 0.0, %v999
        %v1001 = vpop.f32.mrf.mxu0
        %v1002 = vadd.f32 0.0, %v1001
        %1003 = vdwg.mxu0
        %1004 = vmatpush.bf16.msra.mxu0 %v824
        %1005 = vmatpush.bf16.msra.mxu0 %v822
        %1006 = vmatpush.bf16.msra.mxu0 %v820
        %1007 = vmatpush.bf16.msra.mxu0 %v818
        %1008 = vmatpush.bf16.msra.mxu0 %v816
        %1009 = vmatpush.bf16.msra.mxu0 %v814
        %1010 = vmatpush.bf16.msra.mxu0 %v812
        %1011 = vmatpush.bf16.msra.mxu0 %v810
        %1012 = vmatmul.bf16.gmra.mxu0 %v666
        %v1013 = vpop.f32.mrf.mxu0
        %v1014 = vadd.f32 %v965, %v1013
        %v1015 = vpop.f32.mrf.mxu0
        %v1016 = vadd.f32 %v967, %v1015
        %1017 = vmatmul.bf16.gmra.mxu0 %v668
        %v1018 = vpop.f32.mrf.mxu0
        %v1019 = vadd.f32 %v970, %v1018
        %v1020 = vpop.f32.mrf.mxu0
        %v1021 = vadd.f32 %v972, %v1020
        %1022 = vmatmul.bf16.gmra.mxu0 %v670
        %v1023 = vpop.f32.mrf.mxu0
        %v1024 = vadd.f32 %v975, %v1023
        %v1025 = vpop.f32.mrf.mxu0
        %v1026 = vadd.f32 %v977, %v1025
        %1027 = vmatmul.bf16.gmra.mxu0 %v672
        %v1028 = vpop.f32.mrf.mxu0
        %v1029 = vadd.f32 %v980, %v1028
        %v1030 = vpop.f32.mrf.mxu0
        %v1031 = vadd.f32 %v982, %v1030
        %1032 = vmatmul.bf16.gmra.mxu0 %v674
        %v1033 = vpop.f32.mrf.mxu0
        %v1034 = vadd.f32 %v985, %v1033
        %v1035 = vpop.f32.mrf.mxu0
        %v1036 = vadd.f32 %v987, %v1035
        %1037 = vmatmul.bf16.gmra.mxu0 %v676
        %v1038 = vpop.f32.mrf.mxu0
        %v1039 = vadd.f32 %v990, %v1038
        %v1040 = vpop.f32.mrf.mxu0
        %v1041 = vadd.f32 %v992, %v1040
        %1042 = vmatmul.bf16.gmra.mxu0 %v678
        %v1043 = vpop.f32.mrf.mxu0
        %v1044 = vadd.f32 %v995, %v1043
        %v1045 = vpop.f32.mrf.mxu0
        %v1046 = vadd.f32 %v997, %v1045
        %1047 = vmatmul.bf16.gmra.mxu0 %v680
        %v1048 = vpop.f32.mrf.mxu0
        %v1049 = vadd.f32 %v1000, %v1048
        %v1050 = vpop.f32.mrf.mxu0
        %v1051 = vadd.f32 %v1002, %v1050
        %1052 = vdwg.mxu0
        %v1053 = vadd.f32 %v537, %v916
        %v1054 = vadd.f32 %v538, %v1014
        %v1055 = vadd.f32 %v539, %v918
        %v1056 = vadd.f32 %v540, %v1016
        %v1057 = vadd.f32 %v541, %v921
        %v1058 = vadd.f32 %v542, %v1019
        %v1059 = vadd.f32 %v543, %v923
        %v1060 = vadd.f32 %v544, %v1021
        %v1061 = vadd.f32 %v545, %v926
        %v1062 = vadd.f32 %v546, %v1024
        %v1063 = vadd.f32 %v547, %v928
        %v1064 = vadd.f32 %v548, %v1026
        %v1065 = vadd.f32 %v549, %v931
        %v1066 = vadd.f32 %v550, %v1029
        %v1067 = vadd.f32 %v551, %v933
        %v1068 = vadd.f32 %v552, %v1031
        %v1069 = vadd.f32 %v553, %v936
        %v1070 = vadd.f32 %v554, %v1034
        %v1071 = vadd.f32 %v555, %v938
        %v1072 = vadd.f32 %v556, %v1036
        %v1073 = vadd.f32 %v557, %v941
        %v1074 = vadd.f32 %v558, %v1039
        %v1075 = vadd.f32 %v559, %v943
        %v1076 = vadd.f32 %v560, %v1041
        %v1077 = vadd.f32 %v561, %v946
        %v1078 = vadd.f32 %v562, %v1044
        %v1079 = vadd.f32 %v563, %v948
        %v1080 = vadd.f32 %v564, %v1046
        %v1081 = vadd.f32 %v565, %v951
        %v1082 = vadd.f32 %v566, %v1049
        %v1083 = vadd.f32 %v567, %v953
        %v1084 = vadd.f32 %v568, %v1051
        %1085 = vst [vmem:[#allocation2] sm:$0xff] %v1053
        %1086 = vst [vmem:[#allocation2 + $0x8] sm:$0xff] %v1054
        %1087 = vst [vmem:[#allocation2 + $0x10] sm:$0xff] %v1055
        %1088 = vst [vmem:[#allocation2 + $0x18] sm:$0xff] %v1056
        %1089 = vst [vmem:[#allocation2 + $0x20] sm:$0xff] %v1057
        %1090 = vst [vmem:[#allocation2 + $0x28] sm:$0xff] %v1058
        %1091 = vst [vmem:[#allocation2 + $0x30] sm:$0xff] %v1059
        %1092 = vst [vmem:[#allocation2 + $0x38] sm:$0xff] %v1060
        %1093 = vst [vmem:[#allocation2 + $0x40] sm:$0xff] %v1061
        %1094 = vst [vmem:[#allocation2 + $0x48] sm:$0xff] %v1062
        %1095 = vst [vmem:[#allocation2 + $0x50] sm:$0xff] %v1063
        %1096 = vst [vmem:[#allocation2 + $0x58] sm:$0xff] %v1064
        %1097 = vst [vmem:[#allocation2 + $0x60] sm:$0xff] %v1065
        %1098 = vst [vmem:[#allocation2 + $0x68] sm:$0xff] %v1066
        %1099 = vst [vmem:[#allocation2 + $0x70] sm:$0xff] %v1067
        %1100 = vst [vmem:[#allocation2 + $0x78] sm:$0xff] %v1068
        %1101 = vst [vmem:[#allocation2 + $0x80] sm:$0xff] %v1069
        %1102 = vst [vmem:[#allocation2 + $0x88] sm:$0xff] %v1070
        %1103 = vst [vmem:[#allocation2 + $0x90] sm:$0xff] %v1071
        %1104 = vst [vmem:[#allocation2 + $0x98] sm:$0xff] %v1072
        %1105 = vst [vmem:[#allocation2 + $0xa0] sm:$0xff] %v1073
        %1106 = vst [vmem:[#allocation2 + $0xa8] sm:$0xff] %v1074
        %1107 = vst [vmem:[#allocation2 + $0xb0] sm:$0xff] %v1075
        %1108 = vst [vmem:[#allocation2 + $0xb8] sm:$0xff] %v1076
        %1109 = vst [vmem:[#allocation2 + $0xc0] sm:$0xff] %v1077
        %1110 = vst [vmem:[#allocation2 + $0xc8] sm:$0xff] %v1078
        %1111 = vst [vmem:[#allocation2 + $0xd0] sm:$0xff] %v1079
        %1112 = vst [vmem:[#allocation2 + $0xd8] sm:$0xff] %v1080
        %1113 = vst [vmem:[#allocation2 + $0xe0] sm:$0xff] %v1081
        %1114 = vst [vmem:[#allocation2 + $0xe8] sm:$0xff] %v1082
        %1115 = vst [vmem:[#allocation2 + $0xf0] sm:$0xff] %v1083
        %1116 = vst [vmem:[#allocation2 + $0xf8] sm:$0xff] %v1084
        %p1117 = scmp.eq.s32.totalorder %s24, 1
        // Predicated region
        $region113: #{mha_forward.5} parent=99 // pred_check
          %p1118 = pneg %p1117
        $region114: #{mha_forward.5} parent=99 // pred_check_branch
          %1120 = sbr.rel (%p1118) target = $region116
        $region115: #{mha_forward.5} parent=99 // pred_region
          %v1121 = vld [vmem:[#allocation2] sm:$0xff]
          %v1122 = vld [vmem:[#allocation2 + $0x8] sm:$0xff]
          %v1123 = vld [vmem:[#allocation2 + $0x10] sm:$0xff]
          %v1124 = vld [vmem:[#allocation2 + $0x18] sm:$0xff]
          %v1125 = vld [vmem:[#allocation2 + $0x20] sm:$0xff]
          %v1126 = vld [vmem:[#allocation2 + $0x28] sm:$0xff]
          %v1127 = vld [vmem:[#allocation2 + $0x30] sm:$0xff]
          %v1128 = vld [vmem:[#allocation2 + $0x38] sm:$0xff]
          %v1129 = vld [vmem:[#allocation2 + $0x40] sm:$0xff]
          %v1130 = vld [vmem:[#allocation2 + $0x48] sm:$0xff]
          %v1131 = vld [vmem:[#allocation2 + $0x50] sm:$0xff]
          %v1132 = vld [vmem:[#allocation2 + $0x58] sm:$0xff]
          %v1133 = vld [vmem:[#allocation2 + $0x60] sm:$0xff]
          %v1134 = vld [vmem:[#allocation2 + $0x68] sm:$0xff]
          %v1135 = vld [vmem:[#allocation2 + $0x70] sm:$0xff]
          %v1136 = vld [vmem:[#allocation2 + $0x78] sm:$0xff]
          %v1137 = vld [vmem:[#allocation2 + $0x80] sm:$0xff]
          %v1138 = vld [vmem:[#allocation2 + $0x88] sm:$0xff]
          %v1139 = vld [vmem:[#allocation2 + $0x90] sm:$0xff]
          %v1140 = vld [vmem:[#allocation2 + $0x98] sm:$0xff]
          %v1141 = vld [vmem:[#allocation2 + $0xa0] sm:$0xff]
          %v1142 = vld [vmem:[#allocation2 + $0xa8] sm:$0xff]
          %v1143 = vld [vmem:[#allocation2 + $0xb0] sm:$0xff]
          %v1144 = vld [vmem:[#allocation2 + $0xb8] sm:$0xff]
          %v1145 = vld [vmem:[#allocation2 + $0xc0] sm:$0xff]
          %v1146 = vld [vmem:[#allocation2 + $0xc8] sm:$0xff]
          %v1147 = vld [vmem:[#allocation2 + $0xd0] sm:$0xff]
          %v1148 = vld [vmem:[#allocation2 + $0xd8] sm:$0xff]
          %v1149 = vld [vmem:[#allocation2 + $0xe0] sm:$0xff]
          %v1150 = vld [vmem:[#allocation2 + $0xe8] sm:$0xff]
          %v1151 = vld [vmem:[#allocation2 + $0xf0] sm:$0xff]
          %v1152 = vld [vmem:[#allocation2 + $0xf8] sm:$0xff]
          %v1153 = vld [vmem:[%s497] sm:$0x3]
          %v1155 = vperm.slane %v1153, 0
          %v1156 = vperm.slane %v1153, 1
          %v1159 = vadd.f32 %v1121, %v1155
          %v1160 = vadd.f32 %v1122, %v1156
          %v1161 = vadd.f32 %v1123, %v1155
          %v1162 = vadd.f32 %v1124, %v1156
          %v1163 = vadd.f32 %v1125, %v1155
          %v1164 = vadd.f32 %v1126, %v1156
          %v1165 = vadd.f32 %v1127, %v1155
          %v1166 = vadd.f32 %v1128, %v1156
          %v1167 = vadd.f32 %v1129, %v1155
          %v1168 = vadd.f32 %v1130, %v1156
          %v1169 = vadd.f32 %v1131, %v1155
          %v1170 = vadd.f32 %v1132, %v1156
          %v1171 = vadd.f32 %v1133, %v1155
          %v1172 = vadd.f32 %v1134, %v1156
          %v1173 = vadd.f32 %v1135, %v1155
          %v1174 = vadd.f32 %v1136, %v1156
          %v1175 = vadd.f32 %v1137, %v1155
          %v1176 = vadd.f32 %v1138, %v1156
          %v1177 = vadd.f32 %v1139, %v1155
          %v1178 = vadd.f32 %v1140, %v1156
          %v1179 = vadd.f32 %v1141, %v1155
          %v1180 = vadd.f32 %v1142, %v1156
          %v1181 = vadd.f32 %v1143, %v1155
          %v1182 = vadd.f32 %v1144, %v1156
          %v1183 = vadd.f32 %v1145, %v1155
          %v1184 = vadd.f32 %v1146, %v1156
          %v1185 = vadd.f32 %v1147, %v1155
          %v1186 = vadd.f32 %v1148, %v1156
          %v1187 = vadd.f32 %v1149, %v1155
          %v1188 = vadd.f32 %v1150, %v1156
          %v1189 = vadd.f32 %v1151, %v1155
          %v1190 = vadd.f32 %v1152, %v1156
          %1191 = vst [vmem:[%s489] sm:$0xff] %v1159
          %1192 = vst [vmem:[%s489 + $0x8] sm:$0xff] %v1160
          %1193 = vst [vmem:[%s489 + $0x10] sm:$0xff] %v1161
          %1194 = vst [vmem:[%s489 + $0x18] sm:$0xff] %v1162
          %1195 = vst [vmem:[%s489 + $0x20] sm:$0xff] %v1163
          %1196 = vst [vmem:[%s489 + $0x28] sm:$0xff] %v1164
          %1197 = vst [vmem:[%s489 + $0x30] sm:$0xff] %v1165
          %1198 = vst [vmem:[%s489 + $0x38] sm:$0xff] %v1166
          %1199 = vst [vmem:[%s489 + $0x40] sm:$0xff] %v1167
          %1200 = vst [vmem:[%s489 + $0x48] sm:$0xff] %v1168
          %1201 = vst [vmem:[%s489 + $0x50] sm:$0xff] %v1169
          %1202 = vst [vmem:[%s489 + $0x58] sm:$0xff] %v1170
          %1203 = vst [vmem:[%s489 + $0x60] sm:$0xff] %v1171
          %1204 = vst [vmem:[%s489 + $0x68] sm:$0xff] %v1172
          %1205 = vst [vmem:[%s489 + $0x70] sm:$0xff] %v1173
          %1206 = vst [vmem:[%s489 + $0x78] sm:$0xff] %v1174
          %1207 = vst [vmem:[%s489 + $0x80] sm:$0xff] %v1175
          %1208 = vst [vmem:[%s489 + $0x88] sm:$0xff] %v1176
          %1209 = vst [vmem:[%s489 + $0x90] sm:$0xff] %v1177
          %1210 = vst [vmem:[%s489 + $0x98] sm:$0xff] %v1178
          %1211 = vst [vmem:[%s489 + $0xa0] sm:$0xff] %v1179
          %1212 = vst [vmem:[%s489 + $0xa8] sm:$0xff] %v1180
          %1213 = vst [vmem:[%s489 + $0xb0] sm:$0xff] %v1181
          %1214 = vst [vmem:[%s489 + $0xb8] sm:$0xff] %v1182
          %1215 = vst [vmem:[%s489 + $0xc0] sm:$0xff] %v1183
          %1216 = vst [vmem:[%s489 + $0xc8] sm:$0xff] %v1184
          %1217 = vst [vmem:[%s489 + $0xd0] sm:$0xff] %v1185
          %1218 = vst [vmem:[%s489 + $0xd8] sm:$0xff] %v1186
          %1219 = vst [vmem:[%s489 + $0xe0] sm:$0xff] %v1187
          %1220 = vst [vmem:[%s489 + $0xe8] sm:$0xff] %v1188
          %1221 = vst [vmem:[%s489 + $0xf0] sm:$0xff] %v1189
          %1222 = vst [vmem:[%s489 + $0xf8] sm:$0xff] %v1190
        $region116: #{mha_forward.5} parent=99 // pred_fallthru
          _
        %s1223 = sand.u32 %s128, 1
        %s1224 = scalar_lea.sflag [#allocation6], %s1223
        %s1225 = sand.u32 %s128, 1
        %s1226 = smul.addr %s1225, 256
        %s1227 = scalar_lea.vmem [#allocation5], %s1226
        // Predicated region
        $region117: #{mha_forward.5} parent=99 // pred_check
          %p1228 = pneg %p138
        $region118: #{mha_forward.5} parent=99 // pred_check_branch
          %1230 = sbr.rel (%p1228) target = $region120
        $region119: #{mha_forward.5} parent=99 // pred_region
          %s1231 = smul.u32 16, %s22
          %s1232 = smul.u32 2, %s23
          %1234 = vsyncadd %s1224, 0
          %s1235 = smul.addr %s1231, 4
          %s1236 = sadd.s32 %s1232, %s1235
          %s1237 = smul.addr %s1236, 8
          %s1238 = scalar_lea.hbm %s3, %s1237
          %s1239 = sshll.u32 %s1227, 4
          %s1240 = int_to_ptr.vmem [resolvable:$true] %s1239
          %s1241 = sshll.u32 %s1238, 4
          %s1242 = int_to_ptr.hbm [resolvable:$true] %s1241
          %1247 = dma.vmem_to_hbm [thread:$0]  %s1240, 4096, %s1242, %s1224, 256, 512, 16
        $region120: #{mha_forward.5} parent=99 // pred_fallthru
          _
      $region100: #{mha_forward.5} parent=5 // pred_fallthru
        _
      %p1248 = scmp.le.s32.totalorder 2, %s12
      // Predicated region
      $region121: #{mha_forward.5} parent=5 // pred_check
        %p1249 = pneg %p1248
      $region122: #{mha_forward.5} parent=5 // pred_check_branch
        %1251 = sbr.rel (%p1249) target = $region124
      $region123: #{mha_forward.5} parent=5 // pred_region
        %s1252 = ssub.s32 %s12, 2
        // Predicated region
        $region125: #{mha_forward.5} parent=123 // pred_check
          %p1253 = pneg %p144
        $region126: #{mha_forward.5} parent=123 // pred_check_branch
          %1255 = sbr.rel (%p1253) target = $region128
        $region127: #{mha_forward.5} parent=123 // pred_region
          %s1256 = sand.u32 %s129, 1
          %s1257 = scalar_lea.sflag [#allocation6], %s1256
          %s1258 = sand.u32 %s129, 1
          %s1259 = smul.addr %s1258, 256
          %s1260 = scalar_lea.vmem [#allocation5], %s1259
          %1262 = dma.done %s1257, 4096
        $region128: #{mha_forward.5} parent=123 // pred_fallthru
          _
      $region124: #{mha_forward.5} parent=5 // pred_fallthru
        _
    $region6: #{mha_forward.5} parent=1 // loop_footer
      %s16 = sadd.s32 1, %s12
    $region7: #{mha_forward.5} parent=1 // loop_footer_branch
      %11 = sbr.rel target = $region3
    $region8: #{mha_forward.5} parent=1 // loop_exit
      _
    %1263 = vsyncpa [#allocation6], 1
    %s1264 = scalar_lea.sflag [#allocation6], 1
    %1265 = vsyncpa %s1264, 1

// kernel: mha_forward.4
$region0: #{mha_forward.4}
  #allocation0 [shape = 'u32[]', space=smem, size = 0x4, offset = 0x4, fixed_abs, tag = 'smem constant byte address 0x4 - core index']
  #allocation1 [shape = 'u32[72,128]{1,0:T(1,128)}', space=vmem, size = 0x9000, scoped, tag = 'internal scratch']
  #allocation2 [shape = 'f32[4,64,1]{2,1,0:T(8,128)}', space=vmem, size = 0x20000, scoped, tag = 'scratch operand']
  #allocation3 [shape = 'f32[4,64,1]{2,1,0:T(8,128)}', space=vmem, size = 0x20000, scoped, tag = 'scratch operand']
  #allocation4 [shape = 'f32[4,64,64]{2,1,0:T(8,128)}', space=vmem, size = 0x20000, scoped, tag = 'scratch operand']
  %s0 = inlined_call_operand.vmem [shape: bf16[2,128,1536], index: 0, kind: input, shape index: {}, may-alias: {0,1,2}]
  %s1 = inlined_call_operand.vmem [shape: bf16[2,128,1536], index: 1, kind: input, shape index: {}, may-alias: {0,1,2}]
  %s2 = inlined_call_operand.vmem [shape: bf16[2,128,1536], index: 2, kind: input, shape index: {}, may-alias: {0,1,2}]
  %s3 = inlined_call_operand.vmem [shape: bf16[2,128,512], index: 3, kind: output, shape index: {}]
  %s4 = sld [smem:[#allocation0]]
  $region201: #{mha_forward.4} parent=0
    _
  %s6 = ssub.s32 1, %s4
  %s7 = scalar_select 0, %s6, %s4
  $region1: #{mha_forward.4} parent=0
    #allocation5 [shape = 'u8[65536]{0}', space=vmem, size = 0x10000, scoped, tag = 'input window, operand 0']
    #allocation6 [shape = 'u8[65536]{0}', space=vmem, size = 0x10000, scoped, tag = 'input window, operand 1']
    #allocation7 [shape = 'u8[65536]{0}', space=vmem, size = 0x10000, scoped, tag = 'input window, operand 2']
    #allocation8 [shape = 'u8[65536]{0}', space=vmem, size = 0x10000, scoped, tag = 'output window, operand 0']
    loop: start=0, step=1, limit=18
    $region2: #{mha_forward.4} parent=1 // loop_pre_header
      _
    $region3: #{mha_forward.4} parent=1 // loop_header
      %s9 = sphi 0, %s13
      %p10 = scmp.ge.s32.totalorder %s9, 18
      %s16 = sphi 0, %s42
      %s17 = sphi 0, %s38
      %s18 = sphi 0, %s34
      %s19 = sphi 0, %s30
      %s20 = sphi 0, %s16
      %s21 = sphi 0, %s17
      %s22 = sphi 0, %s18
      %s23 = sphi 0, %s19
      %s24 = sphi 0, %s20
      %s25 = sphi 0, %s21
      %s26 = sphi 0, %s22
      %s27 = sphi 0, %s23
      %s49 = sphi 0, %s51
      %s52 = sphi 0, %s49
      %s53 = sphi 0, %s52
      %s69 = sphi 0, %s53
      %s81 = sphi 0, %s83
      %s84 = sphi 0, %s81
      %s85 = sphi 0, %s84
      %s101 = sphi 0, %s85
      %s113 = sphi 0, %s115
      %s116 = sphi 0, %s113
      %s117 = sphi 0, %s116
      %s133 = sphi 0, %s117
      %s143 = sphi 0, %s145
      %s146 = sphi 0, %s143
      %s147 = sphi 0, %s146
      %s163 = sphi 0, %s147
    $region4: #{mha_forward.4} parent=1 // loop_header_branch
      %12 = sbr.rel (%p10) target = $region8
    $region5: #{mha_forward.4} parent=1 // loop_body
      %s14 = ssub.s32 %s9, 1
      %s15 = ssub.s32 %s9, 2
      %s28 = sadd.s32 1, %s19
      %p29 = scmp.ge.s32.totalorder %s28, 2
      %s30 = scalar_select %p29, 0, %s28
      %s31 = sadd.s32 1, %s18
      %s32 = scalar_select %p29, %s31, %s18
      %p33 = scmp.ge.s32.totalorder %s32, 2
      %s34 = scalar_select %p33, 0, %s32
      %s35 = sadd.s32 1, %s17
      %s36 = scalar_select %p33, %s35, %s17
      %p37 = scmp.ge.s32.totalorder %s36, 2
      %s38 = scalar_select %p37, 0, %s36
      %s39 = sadd.s32 1, %s16
      %s40 = scalar_select %p37, %s39, %s16
      %p41 = scmp.ge.s32.totalorder %s40, 2
      %s42 = scalar_select %p41, 0, %s40
      %s43 = ssub.s32 %s16, %s42
      %s44 = ssub.s32 %s18, %s34
      %s45 = sor.u32 %s43, %s44
      %s46 = ssub.s32 %s17, %s38
      %s47 = sor.u32 %s45, %s46
      %p48 = scmp.eq.s32.totalorder %s47, 0
      %s50 = sadd.s32 %s49, 1
      %s51 = scalar_select %p48, %s49, %s50
      %p54 = pneg %p48
      %p55 = scmp.eq.s32.totalorder %s9, 15
      %p56 = por %p54, %p55
      %p57 = scmp.ne.s32.totalorder %s49, %s52
      %p58 = scmp.eq.s32.totalorder %s9, 0
      %p59 = por %p57, %p58
      %p60 = scmp.ne.s32.totalorder %s49, %s52
      %p61 = scmp.eq.s32.totalorder %s14, 15
      %p62 = por %p60, %p61
      %p63 = scmp.ne.s32.totalorder %s52, %s53
      %p64 = scmp.eq.s32.totalorder %s14, 0
      %p65 = por %p63, %p64
      %p66 = scmp.ne.s32.totalorder %s52, %s53
      %p67 = scmp.eq.s32.totalorder %s15, 15
      %p68 = por %p66, %p67
      %p70 = scmp.ne.s32.totalorder %s53, %s69
      %p71 = scmp.eq.s32.totalorder %s15, 0
      %p72 = por %p70, %p71
      %s73 = sadd.s32 %s17, 2
      %s74 = sadd.s32 %s38, 2
      %s75 = ssub.s32 %s16, %s42
      %s76 = ssub.s32 %s19, %s30
      %s77 = sor.u32 %s75, %s76
      %s78 = ssub.s32 %s73, %s74
      %s79 = sor.u32 %s77, %s78
      %p80 = scmp.eq.s32.totalorder %s79, 0
      %s82 = sadd.s32 %s81, 1
      %s83 = scalar_select %p80, %s81, %s82
      %p86 = pneg %p80
      %p87 = scmp.eq.s32.totalorder %s9, 15
      %p88 = por %p86, %p87
      %p89 = scmp.ne.s32.totalorder %s81, %s84
      %p90 = scmp.eq.s32.totalorder %s9, 0
      %p91 = por %p89, %p90
      %p92 = scmp.ne.s32.totalorder %s81, %s84
      %p93 = scmp.eq.s32.totalorder %s14, 15
      %p94 = por %p92, %p93
      %p95 = scmp.ne.s32.totalorder %s84, %s85
      %p96 = scmp.eq.s32.totalorder %s14, 0
      %p97 = por %p95, %p96
      %p98 = scmp.ne.s32.totalorder %s84, %s85
      %p99 = scmp.eq.s32.totalorder %s15, 15
      %p100 = por %p98, %p99
      %p102 = scmp.ne.s32.totalorder %s85, %s101
      %p103 = scmp.eq.s32.totalorder %s15, 0
      %p104 = por %p102, %p103
      %s105 = sadd.s32 %s17, 4
      %s106 = sadd.s32 %s38, 4
      %s107 = ssub.s32 %s16, %s42
      %s108 = ssub.s32 %s19, %s30
      %s109 = sor.u32 %s107, %s108
      %s110 = ssub.s32 %s105, %s106
      %s111 = sor.u32 %s109, %s110
      %p112 = scmp.eq.s32.totalorder %s111, 0
      %s114 = sadd.s32 %s113, 1
      %s115 = scalar_select %p112, %s113, %s114
      %p118 = pneg %p112
      %p119 = scmp.eq.s32.totalorder %s9, 15
      %p120 = por %p118, %p119
      %p121 = scmp.ne.s32.totalorder %s113, %s116
      %p122 = scmp.eq.s32.totalorder %s9, 0
      %p123 = por %p121, %p122
      %p124 = scmp.ne.s32.totalorder %s113, %s116
      %p125 = scmp.eq.s32.totalorder %s14, 15
      %p126 = por %p124, %p125
      %p127 = scmp.ne.s32.totalorder %s116, %s117
      %p128 = scmp.eq.s32.totalorder %s14, 0
      %p129 = por %p127, %p128
      %p130 = scmp.ne.s32.totalorder %s116, %s117
      %p131 = scmp.eq.s32.totalorder %s15, 15
      %p132 = por %p130, %p131
      %p134 = scmp.ne.s32.totalorder %s117, %s133
      %p135 = scmp.eq.s32.totalorder %s15, 0
      %p136 = por %p134, %p135
      %s137 = ssub.s32 %s16, %s42
      %s138 = ssub.s32 %s18, %s34
      %s139 = sor.u32 %s137, %s138
      %s140 = ssub.s32 %s17, %s38
      %s141 = sor.u32 %s139, %s140
      %p142 = scmp.eq.s32.totalorder %s141, 0
      %s144 = sadd.s32 %s143, 1
      %s145 = scalar_select %p142, %s143, %s144
      %p148 = pneg %p142
      %p149 = scmp.eq.s32.totalorder %s9, 15
      %p150 = por %p148, %p149
      %p151 = scmp.ne.s32.totalorder %s143, %s146
      %p152 = scmp.eq.s32.totalorder %s9, 0
      %p153 = por %p151, %p152
      %p154 = scmp.ne.s32.totalorder %s143, %s146
      %p155 = scmp.eq.s32.totalorder %s14, 15
      %p156 = por %p154, %p155
      %p157 = scmp.ne.s32.totalorder %s146, %s147
      %p158 = scmp.eq.s32.totalorder %s14, 0
      %p159 = por %p157, %p158
      %p160 = scmp.ne.s32.totalorder %s146, %s147
      %p161 = scmp.eq.s32.totalorder %s15, 15
      %p162 = por %p160, %p161
      %p164 = scmp.ne.s32.totalorder %s147, %s163
      %p165 = scmp.eq.s32.totalorder %s15, 0
      %p166 = por %p164, %p165
      %p167 = scmp.le.s32.totalorder 1, %s9
      %p168 = scmp.lt.s32.totalorder %s9, 17
      %p169 = pnand %p167, %p168
      %p170 = pneg %p169
      // Predicated region
      $region9: #{mha_forward.4} parent=5 // pred_check
        _
      $region10: #{mha_forward.4} parent=5 // pred_check_branch
        %172 = sbr.rel (%p169) target = $region12
      $region11: #{mha_forward.4} parent=5 // pred_region
        %s173 = ssub.s32 %s9, 1
      $region12: #{mha_forward.4} parent=5 // pred_fallthru
        _
      %p174 = scmp.lt.s32.totalorder %s9, 16
      // Predicated region
      $region13: #{mha_forward.4} parent=5 // pred_check
        %p175 = pneg %p174
      $region14: #{mha_forward.4} parent=5 // pred_check_branch
        %177 = sbr.rel (%p175) target = $region16
      $region15: #{mha_forward.4} parent=5 // pred_region
        // Predicated region
        $region17: #{mha_forward.4} parent=15 // pred_check
          %p178 = pneg %p59
        $region18: #{mha_forward.4} parent=15 // pred_check_branch
          %180 = sbr.rel (%p178) target = $region20
        $region19: #{mha_forward.4} parent=15 // pred_region
          %s181 = sand.u32 %s49, 1
          %s182 = sand.u32 %s49, 1
          %s183 = smul.addr %s182, 64
          %s184 = scalar_lea.vmem [#allocation5], %s183
          %s185 = smul.u32 8, %s18
          %s186 = smul.u32 2, %s17
          %s187 = smul.addr %s185, 12
          %s188 = sadd.s32 %s186, %s187
          %s189 = smul.addr %s16, 192
          %s190 = sadd.s32 %s188, %s189
          %s191 = smul.addr %s190, 4
          %s192 = scalar_lea.vmem %s0, %s191
          // Predicated region
          $region21: #{mha_forward.4} parent=19 // pred_check
            _
          $region22: #{mha_forward.4} parent=19 // pred_check_branch
            %194 = sbr.rel (0) target = $region24
          $region23: #{mha_forward.4} parent=19 // pred_region
            // Predicated region
            $region25: #{mha_forward.4} parent=23 // pred_check
              _
            $region26: #{mha_forward.4} parent=23 // pred_check_branch
              %196 = sbr.rel (0) target = $region28
            $region27: #{mha_forward.4} parent=23 // pred_region
              // Predicated region
              $region40: #{mha_forward.4} parent=27 // pred_check
                _
              $region41: #{mha_forward.4} parent=27 // pred_check_branch
                %226 = sbr.rel (0) target = $region43
              $region42: #{mha_forward.4} parent=27 // pred_region
                loop: start=0, step=1, limit=1
                $region44: #{mha_forward.4} parent=42 // loop_pre_header
                  _
                $region45: #{mha_forward.4} parent=42 // loop_header
                  %s228 = sphi 0, %s232
                  %p229 = scmp.ge.s32.totalorder %s228, 1
                  %s233 = sphi %s192, %s192
                  %s234 = sphi %s184, %s184
                $region46: #{mha_forward.4} parent=42 // loop_header_branch
                  %231 = sbr.rel (%p229) target = $region50
                $region47: #{mha_forward.4} parent=42 // loop_body
                  %v235 = vld [vmem:[%s233] sm:$0xff]
                  %236 = vst [vmem:[%s234] sm:$0xff] %v235
                  %v237 = vld [vmem:[%s233 + $0x30] sm:$0xff]
                  %238 = vst [vmem:[%s234 + $0x8] sm:$0xff] %v237
                  %v239 = vld [vmem:[%s233 + $0x60] sm:$0xff]
                  %240 = vst [vmem:[%s234 + $0x10] sm:$0xff] %v239
                  %v241 = vld [vmem:[%s233 + $0x90] sm:$0xff]
                  %242 = vst [vmem:[%s234 + $0x18] sm:$0xff] %v241
                  %v243 = vld [vmem:[%s233 + $0xc0] sm:$0xff]
                  %244 = vst [vmem:[%s234 + $0x20] sm:$0xff] %v243
                  %v245 = vld [vmem:[%s233 + $0xf0] sm:$0xff]
                  %246 = vst [vmem:[%s234 + $0x28] sm:$0xff] %v245
                  %v247 = vld [vmem:[%s233 + $0x120] sm:$0xff]
                  %248 = vst [vmem:[%s234 + $0x30] sm:$0xff] %v247
                  %v249 = vld [vmem:[%s233 + $0x150] sm:$0xff]
                  %250 = vst [vmem:[%s234 + $0x38] sm:$0xff] %v249
                $region48: #{mha_forward.4} parent=42 // loop_footer
                  %s232 = sadd.s32 1, %s228
                $region49: #{mha_forward.4} parent=42 // loop_footer_branch
                  %227 = sbr.rel target = $region45
                $region50: #{mha_forward.4} parent=42 // loop_exit
                  _
              $region43: #{mha_forward.4} parent=27 // pred_fallthru
                _
              // Predicated region
              $region51: #{mha_forward.4} parent=27 // pred_check
                _
              $region52: #{mha_forward.4} parent=27 // pred_check_branch
                %252 = sbr.rel target = $region54
              $region53: #{mha_forward.4} parent=27 // pred_region
                _
              $region54: #{mha_forward.4} parent=27 // pred_fallthru
                _
            $region28: #{mha_forward.4} parent=23 // pred_fallthru
              _
            // Predicated region
            $region29: #{mha_forward.4} parent=23 // pred_check
              _
            $region30: #{mha_forward.4} parent=23 // pred_check_branch
              %198 = sbr.rel target = $region32
            $region31: #{mha_forward.4} parent=23 // pred_region
              %s200 = ssub.s32 256, 1
              loop: start=0, step=1, limit=1
              $region33: #{mha_forward.4} parent=31 // loop_pre_header
                _
              $region34: #{mha_forward.4} parent=31 // loop_header
                %s202 = sphi 0, %s206
                %p203 = scmp.ge.s32.totalorder %s202, 1
                %s207 = sphi %s192, %s192
                %s208 = sphi %s184, %s184
              $region35: #{mha_forward.4} parent=31 // loop_header_branch
                %205 = sbr.rel (%p203) target = $region39
              $region36: #{mha_forward.4} parent=31 // loop_body
                %v209 = vld [vmem:[%s207] sm:%s200]
                %210 = vst [vmem:[%s208] sm:%s200] %v209
                %v211 = vld [vmem:[%s207 + $0x30] sm:%s200]
                %212 = vst [vmem:[%s208 + $0x8] sm:%s200] %v211
                %v213 = vld [vmem:[%s207 + $0x60] sm:%s200]
                %214 = vst [vmem:[%s208 + $0x10] sm:%s200] %v213
                %v215 = vld [vmem:[%s207 + $0x90] sm:%s200]
                %216 = vst [vmem:[%s208 + $0x18] sm:%s200] %v215
                %v217 = vld [vmem:[%s207 + $0xc0] sm:%s200]
                %218 = vst [vmem:[%s208 + $0x20] sm:%s200] %v217
                %v219 = vld [vmem:[%s207 + $0xf0] sm:%s200]
                %220 = vst [vmem:[%s208 + $0x28] sm:%s200] %v219
                %v221 = vld [vmem:[%s207 + $0x120] sm:%s200]
                %222 = vst [vmem:[%s208 + $0x30] sm:%s200] %v221
                %v223 = vld [vmem:[%s207 + $0x150] sm:%s200]
                %224 = vst [vmem:[%s208 + $0x38] sm:%s200] %v223
              $region37: #{mha_forward.4} parent=31 // loop_footer
                %s206 = sadd.s32 1, %s202
              $region38: #{mha_forward.4} parent=31 // loop_footer_branch
                %201 = sbr.rel target = $region34
              $region39: #{mha_forward.4} parent=31 // loop_exit
                _
            $region32: #{mha_forward.4} parent=23 // pred_fallthru
              _
          $region24: #{mha_forward.4} parent=19 // pred_fallthru
            _
          %253 = vnop
        $region20: #{mha_forward.4} parent=15 // pred_fallthru
          _
        // Predicated region
        $region55: #{mha_forward.4} parent=15 // pred_check
          %p254 = pneg %p91
        $region56: #{mha_forward.4} parent=15 // pred_check_branch
          %256 = sbr.rel (%p254) target = $region58
        $region57: #{mha_forward.4} parent=15 // pred_region
          %s257 = sand.u32 %s81, 1
          %s258 = sand.u32 %s81, 1
          %s259 = smul.addr %s258, 64
          %s260 = scalar_lea.vmem [#allocation6], %s259
          %s261 = sadd.s32 %s17, 2
          %s262 = smul.u32 8, %s19
          %s263 = smul.u32 2, %s261
          %s264 = smul.addr %s262, 12
          %s265 = sadd.s32 %s263, %s264
          %s266 = smul.addr %s16, 192
          %s267 = sadd.s32 %s265, %s266
          %s268 = smul.addr %s267, 4
          %s269 = scalar_lea.vmem %s1, %s268
          // Predicated region
          $region59: #{mha_forward.4} parent=57 // pred_check
            _
          $region60: #{mha_forward.4} parent=57 // pred_check_branch
            %271 = sbr.rel (0) target = $region62
          $region61: #{mha_forward.4} parent=57 // pred_region
            // Predicated region
            $region63: #{mha_forward.4} parent=61 // pred_check
              _
            $region64: #{mha_forward.4} parent=61 // pred_check_branch
              %273 = sbr.rel (0) target = $region66
            $region65: #{mha_forward.4} parent=61 // pred_region
              // Predicated region
              $region78: #{mha_forward.4} parent=65 // pred_check
                _
              $region79: #{mha_forward.4} parent=65 // pred_check_branch
                %303 = sbr.rel (0) target = $region81
              $region80: #{mha_forward.4} parent=65 // pred_region
                loop: start=0, step=1, limit=1
                $region82: #{mha_forward.4} parent=80 // loop_pre_header
                  _
                $region83: #{mha_forward.4} parent=80 // loop_header
                  %s305 = sphi 0, %s309
                  %p306 = scmp.ge.s32.totalorder %s305, 1
                  %s310 = sphi %s269, %s269
                  %s311 = sphi %s260, %s260
                $region84: #{mha_forward.4} parent=80 // loop_header_branch
                  %308 = sbr.rel (%p306) target = $region88
                $region85: #{mha_forward.4} parent=80 // loop_body
                  %v312 = vld [vmem:[%s310] sm:$0xff]
                  %313 = vst [vmem:[%s311] sm:$0xff] %v312
                  %v314 = vld [vmem:[%s310 + $0x30] sm:$0xff]
                  %315 = vst [vmem:[%s311 + $0x8] sm:$0xff] %v314
                  %v316 = vld [vmem:[%s310 + $0x60] sm:$0xff]
                  %317 = vst [vmem:[%s311 + $0x10] sm:$0xff] %v316
                  %v318 = vld [vmem:[%s310 + $0x90] sm:$0xff]
                  %319 = vst [vmem:[%s311 + $0x18] sm:$0xff] %v318
                  %v320 = vld [vmem:[%s310 + $0xc0] sm:$0xff]
                  %321 = vst [vmem:[%s311 + $0x20] sm:$0xff] %v320
                  %v322 = vld [vmem:[%s310 + $0xf0] sm:$0xff]
                  %323 = vst [vmem:[%s311 + $0x28] sm:$0xff] %v322
                  %v324 = vld [vmem:[%s310 + $0x120] sm:$0xff]
                  %325 = vst [vmem:[%s311 + $0x30] sm:$0xff] %v324
                  %v326 = vld [vmem:[%s310 + $0x150] sm:$0xff]
                  %327 = vst [vmem:[%s311 + $0x38] sm:$0xff] %v326
                $region86: #{mha_forward.4} parent=80 // loop_footer
                  %s309 = sadd.s32 1, %s305
                $region87: #{mha_forward.4} parent=80 // loop_footer_branch
                  %304 = sbr.rel target = $region83
                $region88: #{mha_forward.4} parent=80 // loop_exit
                  _
              $region81: #{mha_forward.4} parent=65 // pred_fallthru
                _
              // Predicated region
              $region89: #{mha_forward.4} parent=65 // pred_check
                _
              $region90: #{mha_forward.4} parent=65 // pred_check_branch
                %329 = sbr.rel target = $region92
              $region91: #{mha_forward.4} parent=65 // pred_region
                _
              $region92: #{mha_forward.4} parent=65 // pred_fallthru
                _
            $region66: #{mha_forward.4} parent=61 // pred_fallthru
              _
            // Predicated region
            $region67: #{mha_forward.4} parent=61 // pred_check
              _
            $region68: #{mha_forward.4} parent=61 // pred_check_branch
              %275 = sbr.rel target = $region70
            $region69: #{mha_forward.4} parent=61 // pred_region
              %s277 = ssub.s32 256, 1
              loop: start=0, step=1, limit=1
              $region71: #{mha_forward.4} parent=69 // loop_pre_header
                _
              $region72: #{mha_forward.4} parent=69 // loop_header
                %s279 = sphi 0, %s283
                %p280 = scmp.ge.s32.totalorder %s279, 1
                %s284 = sphi %s269, %s269
                %s285 = sphi %s260, %s260
              $region73: #{mha_forward.4} parent=69 // loop_header_branch
                %282 = sbr.rel (%p280) target = $region77
              $region74: #{mha_forward.4} parent=69 // loop_body
                %v286 = vld [vmem:[%s284] sm:%s277]
                %287 = vst [vmem:[%s285] sm:%s277] %v286
                %v288 = vld [vmem:[%s284 + $0x30] sm:%s277]
                %289 = vst [vmem:[%s285 + $0x8] sm:%s277] %v288
                %v290 = vld [vmem:[%s284 + $0x60] sm:%s277]
                %291 = vst [vmem:[%s285 + $0x10] sm:%s277] %v290
                %v292 = vld [vmem:[%s284 + $0x90] sm:%s277]
                %293 = vst [vmem:[%s285 + $0x18] sm:%s277] %v292
                %v294 = vld [vmem:[%s284 + $0xc0] sm:%s277]
                %295 = vst [vmem:[%s285 + $0x20] sm:%s277] %v294
                %v296 = vld [vmem:[%s284 + $0xf0] sm:%s277]
                %297 = vst [vmem:[%s285 + $0x28] sm:%s277] %v296
                %v298 = vld [vmem:[%s284 + $0x120] sm:%s277]
                %299 = vst [vmem:[%s285 + $0x30] sm:%s277] %v298
                %v300 = vld [vmem:[%s284 + $0x150] sm:%s277]
                %301 = vst [vmem:[%s285 + $0x38] sm:%s277] %v300
              $region75: #{mha_forward.4} parent=69 // loop_footer
                %s283 = sadd.s32 1, %s279
              $region76: #{mha_forward.4} parent=69 // loop_footer_branch
                %278 = sbr.rel target = $region72
              $region77: #{mha_forward.4} parent=69 // loop_exit
                _
            $region70: #{mha_forward.4} parent=61 // pred_fallthru
              _
          $region62: #{mha_forward.4} parent=57 // pred_fallthru
            _
          %330 = vnop
        $region58: #{mha_forward.4} parent=15 // pred_fallthru
          _
        // Predicated region
        $region93: #{mha_forward.4} parent=15 // pred_check
          %p331 = pneg %p123
        $region94: #{mha_forward.4} parent=15 // pred_check_branch
          %333 = sbr.rel (%p331) target = $region96
        $region95: #{mha_forward.4} parent=15 // pred_region
          %s334 = sand.u32 %s113, 1
          %s335 = sand.u32 %s113, 1
          %s336 = smul.addr %s335, 64
          %s337 = scalar_lea.vmem [#allocation7], %s336
          %s338 = sadd.s32 %s17, 4
          %s339 = smul.u32 8, %s19
          %s340 = smul.u32 2, %s338
          %s341 = smul.addr %s339, 12
          %s342 = sadd.s32 %s340, %s341
          %s343 = smul.addr %s16, 192
          %s344 = sadd.s32 %s342, %s343
          %s345 = smul.addr %s344, 4
          %s346 = scalar_lea.vmem %s2, %s345
          // Predicated region
          $region97: #{mha_forward.4} parent=95 // pred_check
            _
          $region98: #{mha_forward.4} parent=95 // pred_check_branch
            %348 = sbr.rel (0) target = $region100
          $region99: #{mha_forward.4} parent=95 // pred_region
            // Predicated region
            $region101: #{mha_forward.4} parent=99 // pred_check
              _
            $region102: #{mha_forward.4} parent=99 // pred_check_branch
              %350 = sbr.rel (0) target = $region104
            $region103: #{mha_forward.4} parent=99 // pred_region
              // Predicated region
              $region116: #{mha_forward.4} parent=103 // pred_check
                _
              $region117: #{mha_forward.4} parent=103 // pred_check_branch
                %380 = sbr.rel (0) target = $region119
              $region118: #{mha_forward.4} parent=103 // pred_region
                loop: start=0, step=1, limit=1
                $region120: #{mha_forward.4} parent=118 // loop_pre_header
                  _
                $region121: #{mha_forward.4} parent=118 // loop_header
                  %s382 = sphi 0, %s386
                  %p383 = scmp.ge.s32.totalorder %s382, 1
                  %s387 = sphi %s346, %s346
                  %s388 = sphi %s337, %s337
                $region122: #{mha_forward.4} parent=118 // loop_header_branch
                  %385 = sbr.rel (%p383) target = $region126
                $region123: #{mha_forward.4} parent=118 // loop_body
                  %v389 = vld [vmem:[%s387] sm:$0xff]
                  %390 = vst [vmem:[%s388] sm:$0xff] %v389
                  %v391 = vld [vmem:[%s387 + $0x30] sm:$0xff]
                  %392 = vst [vmem:[%s388 + $0x8] sm:$0xff] %v391
                  %v393 = vld [vmem:[%s387 + $0x60] sm:$0xff]
                  %394 = vst [vmem:[%s388 + $0x10] sm:$0xff] %v393
                  %v395 = vld [vmem:[%s387 + $0x90] sm:$0xff]
                  %396 = vst [vmem:[%s388 + $0x18] sm:$0xff] %v395
                  %v397 = vld [vmem:[%s387 + $0xc0] sm:$0xff]
                  %398 = vst [vmem:[%s388 + $0x20] sm:$0xff] %v397
                  %v399 = vld [vmem:[%s387 + $0xf0] sm:$0xff]
                  %400 = vst [vmem:[%s388 + $0x28] sm:$0xff] %v399
                  %v401 = vld [vmem:[%s387 + $0x120] sm:$0xff]
                  %402 = vst [vmem:[%s388 + $0x30] sm:$0xff] %v401
                  %v403 = vld [vmem:[%s387 + $0x150] sm:$0xff]
                  %404 = vst [vmem:[%s388 + $0x38] sm:$0xff] %v403
                $region124: #{mha_forward.4} parent=118 // loop_footer
                  %s386 = sadd.s32 1, %s382
                $region125: #{mha_forward.4} parent=118 // loop_footer_branch
                  %381 = sbr.rel target = $region121
                $region126: #{mha_forward.4} parent=118 // loop_exit
                  _
              $region119: #{mha_forward.4} parent=103 // pred_fallthru
                _
              // Predicated region
              $region127: #{mha_forward.4} parent=103 // pred_check
                _
              $region128: #{mha_forward.4} parent=103 // pred_check_branch
                %406 = sbr.rel target = $region130
              $region129: #{mha_forward.4} parent=103 // pred_region
                _
              $region130: #{mha_forward.4} parent=103 // pred_fallthru
                _
            $region104: #{mha_forward.4} parent=99 // pred_fallthru
              _
            // Predicated region
            $region105: #{mha_forward.4} parent=99 // pred_check
              _
            $region106: #{mha_forward.4} parent=99 // pred_check_branch
              %352 = sbr.rel target = $region108
            $region107: #{mha_forward.4} parent=99 // pred_region
              %s354 = ssub.s32 256, 1
              loop: start=0, step=1, limit=1
              $region109: #{mha_forward.4} parent=107 // loop_pre_header
                _
              $region110: #{mha_forward.4} parent=107 // loop_header
                %s356 = sphi 0, %s360
                %p357 = scmp.ge.s32.totalorder %s356, 1
                %s361 = sphi %s346, %s346
                %s362 = sphi %s337, %s337
              $region111: #{mha_forward.4} parent=107 // loop_header_branch
                %359 = sbr.rel (%p357) target = $region115
              $region112: #{mha_forward.4} parent=107 // loop_body
                %v363 = vld [vmem:[%s361] sm:%s354]
                %364 = vst [vmem:[%s362] sm:%s354] %v363
                %v365 = vld [vmem:[%s361 + $0x30] sm:%s354]
                %366 = vst [vmem:[%s362 + $0x8] sm:%s354] %v365
                %v367 = vld [vmem:[%s361 + $0x60] sm:%s354]
                %368 = vst [vmem:[%s362 + $0x10] sm:%s354] %v367
                %v369 = vld [vmem:[%s361 + $0x90] sm:%s354]
                %370 = vst [vmem:[%s362 + $0x18] sm:%s354] %v369
                %v371 = vld [vmem:[%s361 + $0xc0] sm:%s354]
                %372 = vst [vmem:[%s362 + $0x20] sm:%s354] %v371
                %v373 = vld [vmem:[%s361 + $0xf0] sm:%s354]
                %374 = vst [vmem:[%s362 + $0x28] sm:%s354] %v373
                %v375 = vld [vmem:[%s361 + $0x120] sm:%s354]
                %376 = vst [vmem:[%s362 + $0x30] sm:%s354] %v375
                %v377 = vld [vmem:[%s361 + $0x150] sm:%s354]
                %378 = vst [vmem:[%s362 + $0x38] sm:%s354] %v377
              $region113: #{mha_forward.4} parent=107 // loop_footer
                %s360 = sadd.s32 1, %s356
              $region114: #{mha_forward.4} parent=107 // loop_footer_branch
                %355 = sbr.rel target = $region110
              $region115: #{mha_forward.4} parent=107 // loop_exit
                _
            $region108: #{mha_forward.4} parent=99 // pred_fallthru
              _
          $region100: #{mha_forward.4} parent=95 // pred_fallthru
            _
          %407 = vnop
        $region96: #{mha_forward.4} parent=15 // pred_fallthru
          _
      $region16: #{mha_forward.4} parent=5 // pred_fallthru
        _
      %p408 = scmp.le.s32.totalorder 1, %s9
      %p409 = scmp.lt.s32.totalorder %s9, 17
      %p410 = pnand %p408, %p409
      %p411 = pneg %p410
      // Predicated region
      $region131: #{mha_forward.4} parent=5 // pred_check
        _
      $region132: #{mha_forward.4} parent=5 // pred_check_branch
        %413 = sbr.rel (%p410) target = $region134
      $region133: #{mha_forward.4} parent=5 // pred_region
        %s414 = ssub.s32 %s9, 1
        %s415 = sand.u32 %s52, 1
        %s416 = sand.u32 %s52, 1
        %s417 = smul.addr %s416, 64
        %s418 = scalar_lea.vmem [#allocation5], %s417
        // Predicated region
        $region135: #{mha_forward.4} parent=133 // pred_check
          %p419 = pneg %p65
        $region136: #{mha_forward.4} parent=133 // pred_check_branch
          %421 = sbr.rel (%p419) target = $region138
        $region137: #{mha_forward.4} parent=133 // pred_region
          _
        $region138: #{mha_forward.4} parent=133 // pred_fallthru
          _
        %s422 = sand.u32 %s84, 1
        %s423 = sand.u32 %s84, 1
        %s424 = smul.addr %s423, 64
        %s425 = scalar_lea.vmem [#allocation6], %s424
        // Predicated region
        $region139: #{mha_forward.4} parent=133 // pred_check
          %p426 = pneg %p97
        $region140: #{mha_forward.4} parent=133 // pred_check_branch
          %428 = sbr.rel (%p426) target = $region142
        $region141: #{mha_forward.4} parent=133 // pred_region
          _
        $region142: #{mha_forward.4} parent=133 // pred_fallthru
          _
        %s429 = sand.u32 %s116, 1
        %s430 = sand.u32 %s116, 1
        %s431 = smul.addr %s430, 64
        %s432 = scalar_lea.vmem [#allocation7], %s431
        // Predicated region
        $region143: #{mha_forward.4} parent=133 // pred_check
          %p433 = pneg %p129
        $region144: #{mha_forward.4} parent=133 // pred_check_branch
          %435 = sbr.rel (%p433) target = $region146
        $region145: #{mha_forward.4} parent=133 // pred_region
          _
        $region146: #{mha_forward.4} parent=133 // pred_fallthru
          _
        %s436 = sand.u32 %s52, 1
        %s437 = sand.u32 %s52, 1
        %s438 = smul.addr %s437, 64
        %s439 = scalar_lea.vmem [#allocation5], %s438
        %p440 = pneg %p65
        %p441 = pneg %p62
        %s442 = sand.u32 %s84, 1
        %s443 = sand.u32 %s84, 1
        %s444 = smul.addr %s443, 64
        %s445 = scalar_lea.vmem [#allocation6], %s444
        %p446 = pneg %p97
        %p447 = pneg %p94
        %s448 = sand.u32 %s116, 1
        %s449 = sand.u32 %s116, 1
        %s450 = smul.addr %s449, 64
        %s451 = scalar_lea.vmem [#allocation7], %s450
        %p452 = pneg %p129
        %p453 = pneg %p126
        %p454 = pneg %p159
        %p455 = pneg %p156
        %s456 = sand.u32 %s146, 1
        %s457 = sand.u32 %s146, 1
        %s458 = smul.addr %s457, 64
        %s459 = scalar_lea.vmem [#allocation8], %s458
        %s460 = smul.u32 8, %s22
        %s461 = smul.u32 2, %s21
        %s462 = sadd.s32 %s21, 2
        %s463 = smul.u32 8, %s23
        %s464 = smul.u32 2, %s462
        %s465 = sadd.s32 %s21, 4
        %s466 = smul.u32 8, %s23
        %s467 = smul.u32 2, %s465
        %s468 = smul.u32 8, %s22
        %s469 = smul.u32 2, %s21
        %p471 = scmp.eq.s32.totalorder %s23, 0
        // Predicated region
        $region147: #{mha_forward.4} parent=133 // pred_check
          %p472 = pneg %p471
        $region148: #{mha_forward.4} parent=133 // pred_check_branch
          %474 = sbr.rel (%p472) target = $region150
        $region149: #{mha_forward.4} parent=133 // pred_region
          %vm475 = vcmask 7168
          %476 = vst.msk [vmem:[#allocation2] sm:$0xff] %vm475, -inf
          %477 = vst.msk [vmem:[#allocation2 + $0x8] sm:$0xff] %vm475, -inf
          %478 = vst.msk [vmem:[#allocation2 + $0x10] sm:$0xff] %vm475, -inf
          %479 = vst.msk [vmem:[#allocation2 + $0x18] sm:$0xff] %vm475, -inf
          %480 = vst.msk [vmem:[#allocation2 + $0x20] sm:$0xff] %vm475, -inf
          %481 = vst.msk [vmem:[#allocation2 + $0x28] sm:$0xff] %vm475, -inf
          %482 = vst.msk [vmem:[#allocation2 + $0x30] sm:$0xff] %vm475, -inf
          %483 = vst.msk [vmem:[#allocation2 + $0x38] sm:$0xff] %vm475, -inf
          %484 = vst.msk [vmem:[#allocation2 + $0x40] sm:$0xff] %vm475, -inf
          %485 = vst.msk [vmem:[#allocation2 + $0x48] sm:$0xff] %vm475, -inf
          %486 = vst.msk [vmem:[#allocation2 + $0x50] sm:$0xff] %vm475, -inf
          %487 = vst.msk [vmem:[#allocation2 + $0x58] sm:$0xff] %vm475, -inf
          %488 = vst.msk [vmem:[#allocation2 + $0x60] sm:$0xff] %vm475, -inf
          %489 = vst.msk [vmem:[#allocation2 + $0x68] sm:$0xff] %vm475, -inf
          %490 = vst.msk [vmem:[#allocation2 + $0x70] sm:$0xff] %vm475, -inf
          %491 = vst.msk [vmem:[#allocation2 + $0x78] sm:$0xff] %vm475, -inf
          %492 = vst.msk [vmem:[#allocation2 + $0x80] sm:$0xff] %vm475, -inf
          %493 = vst.msk [vmem:[#allocation2 + $0x88] sm:$0xff] %vm475, -inf
          %494 = vst.msk [vmem:[#allocation2 + $0x90] sm:$0xff] %vm475, -inf
          %495 = vst.msk [vmem:[#allocation2 + $0x98] sm:$0xff] %vm475, -inf
          %496 = vst.msk [vmem:[#allocation2 + $0xa0] sm:$0xff] %vm475, -inf
          %497 = vst.msk [vmem:[#allocation2 + $0xa8] sm:$0xff] %vm475, -inf
          %498 = vst.msk [vmem:[#allocation2 + $0xb0] sm:$0xff] %vm475, -inf
          %499 = vst.msk [vmem:[#allocation2 + $0xb8] sm:$0xff] %vm475, -inf
          %500 = vst.msk [vmem:[#allocation2 + $0xc0] sm:$0xff] %vm475, -inf
          %501 = vst.msk [vmem:[#allocation2 + $0xc8] sm:$0xff] %vm475, -inf
          %502 = vst.msk [vmem:[#allocation2 + $0xd0] sm:$0xff] %vm475, -inf
          %503 = vst.msk [vmem:[#allocation2 + $0xd8] sm:$0xff] %vm475, -inf
          %504 = vst.msk [vmem:[#allocation2 + $0xe0] sm:$0xff] %vm475, -inf
          %505 = vst.msk [vmem:[#allocation2 + $0xe8] sm:$0xff] %vm475, -inf
          %506 = vst.msk [vmem:[#allocation2 + $0xf0] sm:$0xff] %vm475, -inf
          %507 = vst.msk [vmem:[#allocation2 + $0xf8] sm:$0xff] %vm475, -inf
          %508 = vst.msk [vmem:[#allocation3] sm:$0xff] %vm475, 0.0
          %509 = vst.msk [vmem:[#allocation3 + $0x8] sm:$0xff] %vm475, 0.0
          %510 = vst.msk [vmem:[#allocation3 + $0x10] sm:$0xff] %vm475, 0.0
          %511 = vst.msk [vmem:[#allocation3 + $0x18] sm:$0xff] %vm475, 0.0
          %512 = vst.msk [vmem:[#allocation3 + $0x20] sm:$0xff] %vm475, 0.0
          %513 = vst.msk [vmem:[#allocation3 + $0x28] sm:$0xff] %vm475, 0.0
          %514 = vst.msk [vmem:[#allocation3 + $0x30] sm:$0xff] %vm475, 0.0
          %515 = vst.msk [vmem:[#allocation3 + $0x38] sm:$0xff] %vm475, 0.0
          %516 = vst.msk [vmem:[#allocation3 + $0x40] sm:$0xff] %vm475, 0.0
          %517 = vst.msk [vmem:[#allocation3 + $0x48] sm:$0xff] %vm475, 0.0
          %518 = vst.msk [vmem:[#allocation3 + $0x50] sm:$0xff] %vm475, 0.0
          %519 = vst.msk [vmem:[#allocation3 + $0x58] sm:$0xff] %vm475, 0.0
          %520 = vst.msk [vmem:[#allocation3 + $0x60] sm:$0xff] %vm475, 0.0
          %521 = vst.msk [vmem:[#allocation3 + $0x68] sm:$0xff] %vm475, 0.0
          %522 = vst.msk [vmem:[#allocation3 + $0x70] sm:$0xff] %vm475, 0.0
          %523 = vst.msk [vmem:[#allocation3 + $0x78] sm:$0xff] %vm475, 0.0
          %524 = vst.msk [vmem:[#allocation3 + $0x80] sm:$0xff] %vm475, 0.0
          %525 = vst.msk [vmem:[#allocation3 + $0x88] sm:$0xff] %vm475, 0.0
          %526 = vst.msk [vmem:[#allocation3 + $0x90] sm:$0xff] %vm475, 0.0
          %527 = vst.msk [vmem:[#allocation3 + $0x98] sm:$0xff] %vm475, 0.0
          %528 = vst.msk [vmem:[#allocation3 + $0xa0] sm:$0xff] %vm475, 0.0
          %529 = vst.msk [vmem:[#allocation3 + $0xa8] sm:$0xff] %vm475, 0.0
          %530 = vst.msk [vmem:[#allocation3 + $0xb0] sm:$0xff] %vm475, 0.0
          %531 = vst.msk [vmem:[#allocation3 + $0xb8] sm:$0xff] %vm475, 0.0
          %532 = vst.msk [vmem:[#allocation3 + $0xc0] sm:$0xff] %vm475, 0.0
          %533 = vst.msk [vmem:[#allocation3 + $0xc8] sm:$0xff] %vm475, 0.0
          %534 = vst.msk [vmem:[#allocation3 + $0xd0] sm:$0xff] %vm475, 0.0
          %535 = vst.msk [vmem:[#allocation3 + $0xd8] sm:$0xff] %vm475, 0.0
          %536 = vst.msk [vmem:[#allocation3 + $0xe0] sm:$0xff] %vm475, 0.0
          %537 = vst.msk [vmem:[#allocation3 + $0xe8] sm:$0xff] %vm475, 0.0
          %538 = vst.msk [vmem:[#allocation3 + $0xf0] sm:$0xff] %vm475, 0.0
          %539 = vst.msk [vmem:[#allocation3 + $0xf8] sm:$0xff] %vm475, 0.0
          %vm540 = vcmask 523264
          %541 = vst.msk [vmem:[#allocation4] sm:$0xff] %vm540, 0.0
          %542 = vst.msk [vmem:[#allocation4 + $0x8] sm:$0xff] %vm540, 0.0
          %543 = vst.msk [vmem:[#allocation4 + $0x10] sm:$0xff] %vm540, 0.0
          %544 = vst.msk [vmem:[#allocation4 + $0x18] sm:$0xff] %vm540, 0.0
          %545 = vst.msk [vmem:[#allocation4 + $0x20] sm:$0xff] %vm540, 0.0
          %546 = vst.msk [vmem:[#allocation4 + $0x28] sm:$0xff] %vm540, 0.0
          %547 = vst.msk [vmem:[#allocation4 + $0x30] sm:$0xff] %vm540, 0.0
          %548 = vst.msk [vmem:[#allocation4 + $0x38] sm:$0xff] %vm540, 0.0
          %549 = vst.msk [vmem:[#allocation4 + $0x40] sm:$0xff] %vm540, 0.0
          %550 = vst.msk [vmem:[#allocation4 + $0x48] sm:$0xff] %vm540, 0.0
          %551 = vst.msk [vmem:[#allocation4 + $0x50] sm:$0xff] %vm540, 0.0
          %552 = vst.msk [vmem:[#allocation4 + $0x58] sm:$0xff] %vm540, 0.0
          %553 = vst.msk [vmem:[#allocation4 + $0x60] sm:$0xff] %vm540, 0.0
          %554 = vst.msk [vmem:[#allocation4 + $0x68] sm:$0xff] %vm540, 0.0
          %555 = vst.msk [vmem:[#allocation4 + $0x70] sm:$0xff] %vm540, 0.0
          %556 = vst.msk [vmem:[#allocation4 + $0x78] sm:$0xff] %vm540, 0.0
          %557 = vst.msk [vmem:[#allocation4 + $0x80] sm:$0xff] %vm540, 0.0
          %558 = vst.msk [vmem:[#allocation4 + $0x88] sm:$0xff] %vm540, 0.0
          %559 = vst.msk [vmem:[#allocation4 + $0x90] sm:$0xff] %vm540, 0.0
          %560 = vst.msk [vmem:[#allocation4 + $0x98] sm:$0xff] %vm540, 0.0
          %561 = vst.msk [vmem:[#allocation4 + $0xa0] sm:$0xff] %vm540, 0.0
          %562 = vst.msk [vmem:[#allocation4 + $0xa8] sm:$0xff] %vm540, 0.0
          %563 = vst.msk [vmem:[#allocation4 + $0xb0] sm:$0xff] %vm540, 0.0
          %564 = vst.msk [vmem:[#allocation4 + $0xb8] sm:$0xff] %vm540, 0.0
          %565 = vst.msk [vmem:[#allocation4 + $0xc0] sm:$0xff] %vm540, 0.0
          %566 = vst.msk [vmem:[#allocation4 + $0xc8] sm:$0xff] %vm540, 0.0
          %567 = vst.msk [vmem:[#allocation4 + $0xd0] sm:$0xff] %vm540, 0.0
          %568 = vst.msk [vmem:[#allocation4 + $0xd8] sm:$0xff] %vm540, 0.0
          %569 = vst.msk [vmem:[#allocation4 + $0xe0] sm:$0xff] %vm540, 0.0
          %570 = vst.msk [vmem:[#allocation4 + $0xe8] sm:$0xff] %vm540, 0.0
          %571 = vst.msk [vmem:[#allocation4 + $0xf0] sm:$0xff] %vm540, 0.0
          %572 = vst.msk [vmem:[#allocation4 + $0xf8] sm:$0xff] %vm540, 0.0
        $region150: #{mha_forward.4} parent=133 // pred_fallthru
          _
        %v573 = vld [vmem:[%s418] sm:$0xf]
        %v574 = vld [vmem:[%s418 + $0x8] sm:$0xf]
        %v575 = vld [vmem:[%s418 + $0x10] sm:$0xf]
        %v576 = vld [vmem:[%s418 + $0x18] sm:$0xf]
        %v577 = vld [vmem:[%s418 + $0x20] sm:$0xf]
        %v578 = vld [vmem:[%s418 + $0x28] sm:$0xf]
        %v579 = vld [vmem:[%s418 + $0x30] sm:$0xf]
        %v580 = vld [vmem:[%s418 + $0x38] sm:$0xf]
        %v581 = vunpack.c.l.bf16 %v573
        %v582 = vunpack.c.l.bf16 %v574
        %v583 = vunpack.c.l.bf16 %v575
        %v584 = vunpack.c.l.bf16 %v576
        %v585 = vunpack.c.l.bf16 %v577
        %v586 = vunpack.c.l.bf16 %v578
        %v587 = vunpack.c.l.bf16 %v579
        %v588 = vunpack.c.l.bf16 %v580
        %v589 = vmul.f32 %v581, 0.125
        %v590 = vmul.f32 %v582, 0.125
        %v591 = vmul.f32 %v583, 0.125
        %v592 = vmul.f32 %v584, 0.125
        %v593 = vmul.f32 %v585, 0.125
        %v594 = vmul.f32 %v586, 0.125
        %v595 = vmul.f32 %v587, 0.125
        %v596 = vmul.f32 %v588, 0.125
        %v597 = vpack.c.bf16 %v590, %v589
        %v598 = vpack.c.bf16 %v592, %v591
        %v599 = vpack.c.bf16 %v594, %v593
        %v600 = vpack.c.bf16 %v596, %v595
        %v601 = vld [vmem:[%s425] sm:$0xf]
        %v602 = vld [vmem:[%s425 + $0x8] sm:$0xf]
        %v603 = vld [vmem:[%s425 + $0x10] sm:$0xf]
        %v604 = vld [vmem:[%s425 + $0x18] sm:$0xf]
        %v605 = vld [vmem:[%s425 + $0x20] sm:$0xf]
        %v606 = vld [vmem:[%s425 + $0x28] sm:$0xf]
        %v607 = vld [vmem:[%s425 + $0x30] sm:$0xf]
        %v608 = vld [vmem:[%s425 + $0x38] sm:$0xf]
        %v609 = vld [vmem:[%s432] sm:$0xf]
        %v610 = vld [vmem:[%s432 + $0x8] sm:$0xf]
        %v611 = vld [vmem:[%s432 + $0x10] sm:$0xf]
        %v612 = vld [vmem:[%s432 + $0x18] sm:$0xf]
        %v613 = vld [vmem:[%s432 + $0x20] sm:$0xf]
        %v614 = vld [vmem:[%s432 + $0x28] sm:$0xf]
        %v615 = vld [vmem:[%s432 + $0x30] sm:$0xf]
        %v616 = vld [vmem:[%s432 + $0x38] sm:$0xf]
        %v625 = vunpack.c.l.b16 %v601
        %v626 = vunpack.c.l.b16 %v602
        %v627 = vunpack.c.l.b16 %v603
        %v628 = vunpack.c.l.b16 %v604
        %v629 = vunpack.c.l.b16 %v605
        %v630 = vunpack.c.l.b16 %v606
        %v631 = vunpack.c.l.b16 %v607
        %v632 = vunpack.c.l.b16 %v608
        %v633 = vpack.c.b16 %v626, %v625
        %v634 = vpack.c.b16 %v628, %v627
        %v635 = vpack.c.b16 %v630, %v629
        %v636 = vpack.c.b16 %v632, %v631
        %vm637 = vcmask 523264
        %v639 = vsel %vm637, %v597, 0
        %v642 = vsel %vm637, %v598, 0
        %v645 = vsel %vm637, %v599, 0
        %v648 = vsel %vm637, %v600, 0
        %v651 = vsel %vm637, %v633, 0
        %v654 = vsel %vm637, %v634, 0
        %v657 = vsel %vm637, %v635, 0
        %v660 = vsel %vm637, %v636, 0
        %662 = vmatpush.bf16.xpose.msra.mxu0 0
        %663 = vmatpush.bf16.xpose.msra.mxu0 0
        %664 = vmatpush.bf16.xpose.msra.mxu0 0
        %665 = vmatpush.bf16.xpose.msra.mxu0 0
        %666 = vmatpush.bf16.xpose.msra.mxu0 %v660
        %667 = vmatpush.bf16.xpose.msra.mxu0 %v657
        %668 = vmatpush.bf16.xpose.msra.mxu0 %v654
        %669 = vmatpush.bf16.xpose.msra.mxu0 %v651
        %670 = vmatmul.bf16.gmra.mxu0 %v639
        %v671 = vpop.f32.mrf.mxu0
        %v672 = vadd.f32 0.0, %v671
        %v673 = vpop.f32.mrf.mxu0
        %v674 = vadd.f32 0.0, %v673
        %675 = vmatmul.bf16.gmra.mxu0 %v642
        %v676 = vpop.f32.mrf.mxu0
        %v677 = vadd.f32 0.0, %v676
        %v678 = vpop.f32.mrf.mxu0
        %v679 = vadd.f32 0.0, %v678
        %680 = vmatmul.bf16.gmra.mxu0 %v645
        %v681 = vpop.f32.mrf.mxu0
        %v682 = vadd.f32 0.0, %v681
        %v683 = vpop.f32.mrf.mxu0
        %v684 = vadd.f32 0.0, %v683
        %685 = vmatmul.bf16.gmra.mxu0 %v648
        %v686 = vpop.f32.mrf.mxu0
        %v687 = vadd.f32 0.0, %v686
        %v688 = vpop.f32.mrf.mxu0
        %v689 = vadd.f32 0.0, %v688
        %690 = vdwg.mxu0
        %v691 = vld [vmem:[#allocation2] sm:$0xff]
        %v692 = vld [vmem:[#allocation2 + $0x8] sm:$0xff]
        %v693 = vld [vmem:[#allocation2 + $0x10] sm:$0xff]
        %v694 = vld [vmem:[#allocation2 + $0x18] sm:$0xff]
        %v695 = vld [vmem:[#allocation2 + $0x20] sm:$0xff]
        %v696 = vld [vmem:[#allocation2 + $0x28] sm:$0xff]
        %v697 = vld [vmem:[#allocation2 + $0x30] sm:$0xff]
        %v698 = vld [vmem:[#allocation2 + $0x38] sm:$0xff]
        %v699 = vsel %vm637, %v672, -inf
        %700 = vmax.xlane.f32.xlu0 %v699
        %v701 = vpop.xlane.xlu0 %700
        %v702 = vsel %vm637, %v674, -inf
        %703 = vmax.xlane.f32.xlu0 %v702
        %v704 = vpop.xlane.xlu0 %703
        %v705 = vsel %vm637, %v677, -inf
        %706 = vmax.xlane.f32.xlu0 %v705
        %v707 = vpop.xlane.xlu0 %706
        %v708 = vsel %vm637, %v679, -inf
        %709 = vmax.xlane.f32.xlu0 %v708
        %v710 = vpop.xlane.xlu0 %709
        %v711 = vsel %vm637, %v682, -inf
        %712 = vmax.xlane.f32.xlu0 %v711
        %v713 = vpop.xlane.xlu0 %712
        %v714 = vsel %vm637, %v684, -inf
        %715 = vmax.xlane.f32.xlu0 %v714
        %v716 = vpop.xlane.xlu0 %715
        %v717 = vsel %vm637, %v687, -inf
        %718 = vmax.xlane.f32.xlu0 %v717
        %v719 = vpop.xlane.xlu0 %718
        %v720 = vsel %vm637, %v689, -inf
        %721 = vmax.xlane.f32.xlu0 %v720
        %v722 = vpop.xlane.xlu0 %721
        %v723 = vmax.f32 %v691, %v701
        %v724 = vmax.f32 %v692, %v704
        %v725 = vmax.f32 %v693, %v707
        %v726 = vmax.f32 %v694, %v710
        %v727 = vmax.f32 %v695, %v713
        %v728 = vmax.f32 %v696, %v716
        %v729 = vmax.f32 %v697, %v719
        %v730 = vmax.f32 %v698, %v722
        %v731 = vsub.f32 %v691, %v723
        %v732 = vsub.f32 %v692, %v724
        %v733 = vsub.f32 %v693, %v725
        %v734 = vsub.f32 %v694, %v726
        %v735 = vsub.f32 %v695, %v727
        %v736 = vsub.f32 %v696, %v728
        %v737 = vsub.f32 %v697, %v729
        %v738 = vsub.f32 %v698, %v730
        %v739 = vmul.f32 %v731, 1.442695
        %v740 = vpow.pop %v739
        %v741 = vmul.f32 %v732, 1.442695
        %v742 = vpow.pop %v741
        %v743 = vmul.f32 %v733, 1.442695
        %v744 = vpow.pop %v743
        %v745 = vmul.f32 %v734, 1.442695
        %v746 = vpow.pop %v745
        %v747 = vmul.f32 %v735, 1.442695
        %v748 = vpow.pop %v747
        %v749 = vmul.f32 %v736, 1.442695
        %v750 = vpow.pop %v749
        %v751 = vmul.f32 %v737, 1.442695
        %v752 = vpow.pop %v751
        %v753 = vmul.f32 %v738, 1.442695
        %v754 = vpow.pop %v753
        %756 = vset.pattern.permute.xlu0 0
        %757 = vperm.xlu0 %756, %v723
        %v758 = vpop.permute.xlu0 %757
        %761 = vset.pattern.permute.xlu0 0
        %762 = vperm.xlu0 %761, %v724
        %v763 = vpop.permute.xlu0 %762
        %766 = vset.pattern.permute.xlu0 0
        %767 = vperm.xlu0 %766, %v725
        %v768 = vpop.permute.xlu0 %767
        %771 = vset.pattern.permute.xlu0 0
        %772 = vperm.xlu0 %771, %v726
        %v773 = vpop.permute.xlu0 %772
        %776 = vset.pattern.permute.xlu0 0
        %777 = vperm.xlu0 %776, %v727
        %v778 = vpop.permute.xlu0 %777
        %781 = vset.pattern.permute.xlu0 0
        %782 = vperm.xlu0 %781, %v728
        %v783 = vpop.permute.xlu0 %782
        %786 = vset.pattern.permute.xlu0 0
        %787 = vperm.xlu0 %786, %v729
        %v788 = vpop.permute.xlu0 %787
        %791 = vset.pattern.permute.xlu0 0
        %792 = vperm.xlu0 %791, %v730
        %v793 = vpop.permute.xlu0 %792
        %v795 = vsub.f32 %v672, %v758
        %v796 = vsub.f32 %v674, %v763
        %v797 = vsub.f32 %v677, %v768
        %v798 = vsub.f32 %v679, %v773
        %v799 = vsub.f32 %v682, %v778
        %v800 = vsub.f32 %v684, %v783
        %v801 = vsub.f32 %v687, %v788
        %v802 = vsub.f32 %v689, %v793
        %v803 = vmul.f32 %v795, 1.442695
        %v804 = vpow.pop %v803
        %v805 = vmul.f32 %v796, 1.442695
        %v806 = vpow.pop %v805
        %v807 = vmul.f32 %v797, 1.442695
        %v808 = vpow.pop %v807
        %v809 = vmul.f32 %v798, 1.442695
        %v810 = vpow.pop %v809
        %v811 = vmul.f32 %v799, 1.442695
        %v812 = vpow.pop %v811
        %v813 = vmul.f32 %v800, 1.442695
        %v814 = vpow.pop %v813
        %v815 = vmul.f32 %v801, 1.442695
        %v816 = vpow.pop %v815
        %v817 = vmul.f32 %v802, 1.442695
        %v818 = vpow.pop %v817
        %v819 = vld [vmem:[#allocation3] sm:$0xff]
        %v820 = vld [vmem:[#allocation3 + $0x8] sm:$0xff]
        %v821 = vld [vmem:[#allocation3 + $0x10] sm:$0xff]
        %v822 = vld [vmem:[#allocation3 + $0x18] sm:$0xff]
        %v823 = vld [vmem:[#allocation3 + $0x20] sm:$0xff]
        %v824 = vld [vmem:[#allocation3 + $0x28] sm:$0xff]
        %v825 = vld [vmem:[#allocation3 + $0x30] sm:$0xff]
        %v826 = vld [vmem:[#allocation3 + $0x38] sm:$0xff]
        %v827 = vmul.f32 %v740, %v819
        %v828 = vmul.f32 %v742, %v820
        %v829 = vmul.f32 %v744, %v821
        %v830 = vmul.f32 %v746, %v822
        %v831 = vmul.f32 %v748, %v823
        %v832 = vmul.f32 %v750, %v824
        %v833 = vmul.f32 %v752, %v825
        %v834 = vmul.f32 %v754, %v826
        %v835 = vsel %vm637, %v804, 0.0
        %836 = vadd.xlane.f32.xlu0 %v835
        %v837 = vpop.xlane.xlu0 %836
        %v838 = vsel %vm637, %v806, 0.0
        %839 = vadd.xlane.f32.xlu0 %v838
        %v840 = vpop.xlane.xlu0 %839
        %v841 = vsel %vm637, %v808, 0.0
        %842 = vadd.xlane.f32.xlu0 %v841
        %v843 = vpop.xlane.xlu0 %842
        %v844 = vsel %vm637, %v810, 0.0
        %845 = vadd.xlane.f32.xlu0 %v844
        %v846 = vpop.xlane.xlu0 %845
        %v847 = vsel %vm637, %v812, 0.0
        %848 = vadd.xlane.f32.xlu0 %v847
        %v849 = vpop.xlane.xlu0 %848
        %v850 = vsel %vm637, %v814, 0.0
        %851 = vadd.xlane.f32.xlu0 %v850
        %v852 = vpop.xlane.xlu0 %851
        %v853 = vsel %vm637, %v816, 0.0
        %854 = vadd.xlane.f32.xlu0 %v853
        %v855 = vpop.xlane.xlu0 %854
        %v856 = vsel %vm637, %v818, 0.0
        %857 = vadd.xlane.f32.xlu0 %v856
        %v858 = vpop.xlane.xlu0 %857
        %v859 = vadd.f32 %v827, %v837
        %v860 = vadd.f32 %v828, %v840
        %v861 = vadd.f32 %v829, %v843
        %v862 = vadd.f32 %v830, %v846
        %v863 = vadd.f32 %v831, %v849
        %v864 = vadd.f32 %v832, %v852
        %v865 = vadd.f32 %v833, %v855
        %v866 = vadd.f32 %v834, %v858
        %vm867 = vcmask 7168
        %868 = vst.msk [vmem:[#allocation3] sm:$0xff] %vm867, %v859
        %869 = vst.msk [vmem:[#allocation3 + $0x8] sm:$0xff] %vm867, %v860
        %870 = vst.msk [vmem:[#allocation3 + $0x10] sm:$0xff] %vm867, %v861
        %871 = vst.msk [vmem:[#allocation3 + $0x18] sm:$0xff] %vm867, %v862
        %872 = vst.msk [vmem:[#allocation3 + $0x20] sm:$0xff] %vm867, %v863
        %873 = vst.msk [vmem:[#allocation3 + $0x28] sm:$0xff] %vm867, %v864
        %874 = vst.msk [vmem:[#allocation3 + $0x30] sm:$0xff] %vm867, %v865
        %875 = vst.msk [vmem:[#allocation3 + $0x38] sm:$0xff] %vm867, %v866
        %v876 = vld [vmem:[#allocation4] sm:$0xff]
        %v877 = vld [vmem:[#allocation4 + $0x8] sm:$0xff]
        %v878 = vld [vmem:[#allocation4 + $0x10] sm:$0xff]
        %v879 = vld [vmem:[#allocation4 + $0x18] sm:$0xff]
        %v880 = vld [vmem:[#allocation4 + $0x20] sm:$0xff]
        %v881 = vld [vmem:[#allocation4 + $0x28] sm:$0xff]
        %v882 = vld [vmem:[#allocation4 + $0x30] sm:$0xff]
        %v883 = vld [vmem:[#allocation4 + $0x38] sm:$0xff]
        %885 = vset.pattern.permute.xlu0 0
        %886 = vperm.xlu0 %885, %v740
        %v887 = vpop.permute.xlu0 %886
        %890 = vset.pattern.permute.xlu0 0
        %891 = vperm.xlu0 %890, %v742
        %v892 = vpop.permute.xlu0 %891
        %895 = vset.pattern.permute.xlu0 0
        %896 = vperm.xlu0 %895, %v744
        %v897 = vpop.permute.xlu0 %896
        %900 = vset.pattern.permute.xlu0 0
        %901 = vperm.xlu0 %900, %v746
        %v902 = vpop.permute.xlu0 %901
        %905 = vset.pattern.permute.xlu0 0
        %906 = vperm.xlu0 %905, %v748
        %v907 = vpop.permute.xlu0 %906
        %910 = vset.pattern.permute.xlu0 0
        %911 = vperm.xlu0 %910, %v750
        %v912 = vpop.permute.xlu0 %911
        %915 = vset.pattern.permute.xlu0 0
        %916 = vperm.xlu0 %915, %v752
        %v917 = vpop.permute.xlu0 %916
        %920 = vset.pattern.permute.xlu0 0
        %921 = vperm.xlu0 %920, %v754
        %v922 = vpop.permute.xlu0 %921
        %v924 = vmul.f32 %v887, %v876
        %v925 = vmul.f32 %v892, %v877
        %v926 = vmul.f32 %v897, %v878
        %v927 = vmul.f32 %v902, %v879
        %v928 = vmul.f32 %v907, %v880
        %v929 = vmul.f32 %v912, %v881
        %v930 = vmul.f32 %v917, %v882
        %v931 = vmul.f32 %v922, %v883
        %v932 = vpack.c.bf16 %v806, %v804
        %v933 = vpack.c.bf16 %v810, %v808
        %v934 = vpack.c.bf16 %v814, %v812
        %v935 = vpack.c.bf16 %v818, %v816
        %v944 = vunpack.c.l.b16 %v609
        %v945 = vunpack.c.l.b16 %v610
        %v946 = vunpack.c.l.b16 %v611
        %v947 = vunpack.c.l.b16 %v612
        %v948 = vunpack.c.l.b16 %v613
        %v949 = vunpack.c.l.b16 %v614
        %v950 = vunpack.c.l.b16 %v615
        %v951 = vunpack.c.l.b16 %v616
        %v952 = vpack.c.b16 %v945, %v944
        %v953 = vpack.c.b16 %v947, %v946
        %v954 = vpack.c.b16 %v949, %v948
        %v955 = vpack.c.b16 %v951, %v950
        %v961 = vsel %vm637, %v932, 0
        %v964 = vsel %vm637, %v933, 0
        %v967 = vsel %vm637, %v934, 0
        %v970 = vsel %vm637, %v935, 0
        %972 = vmatpush.bf16.msra.mxu0 0
        %973 = vmatpush.bf16.msra.mxu0 0
        %974 = vmatpush.bf16.msra.mxu0 0
        %975 = vmatpush.bf16.msra.mxu0 0
        %976 = vmatpush.bf16.msra.mxu0 %v955
        %977 = vmatpush.bf16.msra.mxu0 %v954
        %978 = vmatpush.bf16.msra.mxu0 %v953
        %979 = vmatpush.bf16.msra.mxu0 %v952
        %980 = vmatmul.bf16.gmra.mxu0 %v961
        %v981 = vpop.f32.mrf.mxu0
        %v982 = vadd.f32 0.0, %v981
        %v983 = vpop.f32.mrf.mxu0
        %v984 = vadd.f32 0.0, %v983
        %985 = vmatmul.bf16.gmra.mxu0 %v964
        %v986 = vpop.f32.mrf.mxu0
        %v987 = vadd.f32 0.0, %v986
        %v988 = vpop.f32.mrf.mxu0
        %v989 = vadd.f32 0.0, %v988
        %990 = vmatmul.bf16.gmra.mxu0 %v967
        %v991 = vpop.f32.mrf.mxu0
        %v992 = vadd.f32 0.0, %v991
        %v993 = vpop.f32.mrf.mxu0
        %v994 = vadd.f32 0.0, %v993
        %995 = vmatmul.bf16.gmra.mxu0 %v970
        %v996 = vpop.f32.mrf.mxu0
        %v997 = vadd.f32 0.0, %v996
        %v998 = vpop.f32.mrf.mxu0
        %v999 = vadd.f32 0.0, %v998
        %1000 = vdwg.mxu0
        %v1001 = vadd.f32 %v924, %v982
        %v1002 = vadd.f32 %v925, %v984
        %v1003 = vadd.f32 %v926, %v987
        %v1004 = vadd.f32 %v927, %v989
        %v1005 = vadd.f32 %v928, %v992
        %v1006 = vadd.f32 %v929, %v994
        %v1007 = vadd.f32 %v930, %v997
        %v1008 = vadd.f32 %v931, %v999
        %1009 = vst.msk [vmem:[#allocation4] sm:$0xff] %vm637, %v1001
        %1010 = vst.msk [vmem:[#allocation4 + $0x8] sm:$0xff] %vm637, %v1002
        %1011 = vst.msk [vmem:[#allocation4 + $0x10] sm:$0xff] %vm637, %v1003
        %1012 = vst.msk [vmem:[#allocation4 + $0x18] sm:$0xff] %vm637, %v1004
        %1013 = vst.msk [vmem:[#allocation4 + $0x20] sm:$0xff] %vm637, %v1005
        %1014 = vst.msk [vmem:[#allocation4 + $0x28] sm:$0xff] %vm637, %v1006
        %1015 = vst.msk [vmem:[#allocation4 + $0x30] sm:$0xff] %vm637, %v1007
        %1016 = vst.msk [vmem:[#allocation4 + $0x38] sm:$0xff] %vm637, %v1008
        %1017 = vst.msk [vmem:[#allocation2] sm:$0xff] %vm867, %v723
        %1018 = vst.msk [vmem:[#allocation2 + $0x8] sm:$0xff] %vm867, %v724
        %1019 = vst.msk [vmem:[#allocation2 + $0x10] sm:$0xff] %vm867, %v725
        %1020 = vst.msk [vmem:[#allocation2 + $0x18] sm:$0xff] %vm867, %v726
        %1021 = vst.msk [vmem:[#allocation2 + $0x20] sm:$0xff] %vm867, %v727
        %1022 = vst.msk [vmem:[#allocation2 + $0x28] sm:$0xff] %vm867, %v728
        %1023 = vst.msk [vmem:[#allocation2 + $0x30] sm:$0xff] %vm867, %v729
        %1024 = vst.msk [vmem:[#allocation2 + $0x38] sm:$0xff] %vm867, %v730
        %v1025 = vld [vmem:[%s418] sm:$0xf]
        %v1026 = vld [vmem:[%s418 + $0x8] sm:$0xf]
        %v1027 = vld [vmem:[%s418 + $0x10] sm:$0xf]
        %v1028 = vld [vmem:[%s418 + $0x18] sm:$0xf]
        %v1029 = vld [vmem:[%s418 + $0x20] sm:$0xf]
        %v1030 = vld [vmem:[%s418 + $0x28] sm:$0xf]
        %v1031 = vld [vmem:[%s418 + $0x30] sm:$0xf]
        %v1032 = vld [vmem:[%s418 + $0x38] sm:$0xf]
        %v1033 = vunpack.c.l.bf16 %v1025
        %v1034 = vunpack.c.l.bf16 %v1026
        %v1035 = vunpack.c.l.bf16 %v1027
        %v1036 = vunpack.c.l.bf16 %v1028
        %v1037 = vunpack.c.l.bf16 %v1029
        %v1038 = vunpack.c.l.bf16 %v1030
        %v1039 = vunpack.c.l.bf16 %v1031
        %v1040 = vunpack.c.l.bf16 %v1032
        %v1041 = vmul.f32 %v1033, 0.125
        %v1042 = vmul.f32 %v1034, 0.125
        %v1043 = vmul.f32 %v1035, 0.125
        %v1044 = vmul.f32 %v1036, 0.125
        %v1045 = vmul.f32 %v1037, 0.125
        %v1046 = vmul.f32 %v1038, 0.125
        %v1047 = vmul.f32 %v1039, 0.125
        %v1048 = vmul.f32 %v1040, 0.125
        %v1049 = vpack.c.bf16 %v1042, %v1041
        %v1050 = vpack.c.bf16 %v1044, %v1043
        %v1051 = vpack.c.bf16 %v1046, %v1045
        %v1052 = vpack.c.bf16 %v1048, %v1047
        %v1053 = vld [vmem:[%s425] sm:$0xf]
        %v1054 = vld [vmem:[%s425 + $0x8] sm:$0xf]
        %v1055 = vld [vmem:[%s425 + $0x10] sm:$0xf]
        %v1056 = vld [vmem:[%s425 + $0x18] sm:$0xf]
        %v1057 = vld [vmem:[%s425 + $0x20] sm:$0xf]
        %v1058 = vld [vmem:[%s425 + $0x28] sm:$0xf]
        %v1059 = vld [vmem:[%s425 + $0x30] sm:$0xf]
        %v1060 = vld [vmem:[%s425 + $0x38] sm:$0xf]
        %v1061 = vld [vmem:[%s432] sm:$0xf]
        %v1062 = vld [vmem:[%s432 + $0x8] sm:$0xf]
        %v1063 = vld [vmem:[%s432 + $0x10] sm:$0xf]
        %v1064 = vld [vmem:[%s432 + $0x18] sm:$0xf]
        %v1065 = vld [vmem:[%s432 + $0x20] sm:$0xf]
        %v1066 = vld [vmem:[%s432 + $0x28] sm:$0xf]
        %v1067 = vld [vmem:[%s432 + $0x30] sm:$0xf]
        %v1068 = vld [vmem:[%s432 + $0x38] sm:$0xf]
        %1073 = vrot.lane.b32.xlu0 %v1049, 64
        %v1074 = vpop.permute.xlu0 %1073
        %1075 = vrot.lane.b32.xlu0 %v1050, 64
        %v1076 = vpop.permute.xlu0 %1075
        %1077 = vrot.lane.b32.xlu0 %v1051, 64
        %v1078 = vpop.permute.xlu0 %1077
        %1079 = vrot.lane.b32.xlu0 %v1052, 64
        %v1080 = vpop.permute.xlu0 %1079
        %v1089 = vunpack.c.l.b16 %v1053
        %v1090 = vunpack.c.l.b16 %v1054
        %v1091 = vunpack.c.l.b16 %v1055
        %v1092 = vunpack.c.l.b16 %v1056
        %v1093 = vunpack.c.l.b16 %v1057
        %v1094 = vunpack.c.l.b16 %v1058
        %v1095 = vunpack.c.l.b16 %v1059
        %v1096 = vunpack.c.l.b16 %v1060
        %v1097 = vpack.c.b16 %v1090, %v1089
        %v1098 = vpack.c.b16 %v1092, %v1091
        %v1099 = vpack.c.b16 %v1094, %v1093
        %v1100 = vpack.c.b16 %v1096, %v1095
        %1101 = vrot.lane.b32.xlu0 %v1097, 64
        %v1102 = vpop.permute.xlu0 %1101
        %1103 = vrot.lane.b32.xlu0 %v1098, 64
        %v1104 = vpop.permute.xlu0 %1103
        %1105 = vrot.lane.b32.xlu0 %v1099, 64
        %v1106 = vpop.permute.xlu0 %1105
        %1107 = vrot.lane.b32.xlu0 %v1100, 64
        %v1108 = vpop.permute.xlu0 %1107
        %v1110 = vsel %vm637, %v1074, 0
        %v1113 = vsel %vm637, %v1076, 0
        %v1116 = vsel %vm637, %v1078, 0
        %v1119 = vsel %vm637, %v1080, 0
        %v1122 = vsel %vm637, %v1102, 0
        %v1125 = vsel %vm637, %v1104, 0
        %v1128 = vsel %vm637, %v1106, 0
        %v1131 = vsel %vm637, %v1108, 0
        %1133 = vmatpush.bf16.xpose.msra.mxu0 0
        %1134 = vmatpush.bf16.xpose.msra.mxu0 0
        %1135 = vmatpush.bf16.xpose.msra.mxu0 0
        %1136 = vmatpush.bf16.xpose.msra.mxu0 0
        %1137 = vmatpush.bf16.xpose.msra.mxu0 %v1131
        %1138 = vmatpush.bf16.xpose.msra.mxu0 %v1128
        %1139 = vmatpush.bf16.xpose.msra.mxu0 %v1125
        %1140 = vmatpush.bf16.xpose.msra.mxu0 %v1122
        %1141 = vmatmul.bf16.gmra.mxu0 %v1110
        %v1142 = vpop.f32.mrf.mxu0
        %v1143 = vadd.f32 0.0, %v1142
        %v1144 = vpop.f32.mrf.mxu0
        %v1145 = vadd.f32 0.0, %v1144
        %1146 = vmatmul.bf16.gmra.mxu0 %v1113
        %v1147 = vpop.f32.mrf.mxu0
        %v1148 = vadd.f32 0.0, %v1147
        %v1149 = vpop.f32.mrf.mxu0
        %v1150 = vadd.f32 0.0, %v1149
        %1151 = vmatmul.bf16.gmra.mxu0 %v1116
        %v1152 = vpop.f32.mrf.mxu0
        %v1153 = vadd.f32 0.0, %v1152
        %v1154 = vpop.f32.mrf.mxu0
        %v1155 = vadd.f32 0.0, %v1154
        %1156 = vmatmul.bf16.gmra.mxu0 %v1119
        %v1157 = vpop.f32.mrf.mxu0
        %v1158 = vadd.f32 0.0, %v1157
        %v1159 = vpop.f32.mrf.mxu0
        %v1160 = vadd.f32 0.0, %v1159
        %1161 = vdwg.mxu0
        %s1162 = scalar_lea.vmem [#allocation2], 64
        %v1163 = vld [vmem:[%s1162] sm:$0xff]
        %v1164 = vld [vmem:[%s1162 + $0x8] sm:$0xff]
        %v1165 = vld [vmem:[%s1162 + $0x10] sm:$0xff]
        %v1166 = vld [vmem:[%s1162 + $0x18] sm:$0xff]
        %v1167 = vld [vmem:[%s1162 + $0x20] sm:$0xff]
        %v1168 = vld [vmem:[%s1162 + $0x28] sm:$0xff]
        %v1169 = vld [vmem:[%s1162 + $0x30] sm:$0xff]
        %v1170 = vld [vmem:[%s1162 + $0x38] sm:$0xff]
        %v1171 = vsel %vm637, %v1143, -inf
        %1172 = vmax.xlane.f32.xlu0 %v1171
        %v1173 = vpop.xlane.xlu0 %1172
        %v1174 = vsel %vm637, %v1145, -inf
        %1175 = vmax.xlane.f32.xlu0 %v1174
        %v1176 = vpop.xlane.xlu0 %1175
        %v1177 = vsel %vm637, %v1148, -inf
        %1178 = vmax.xlane.f32.xlu0 %v1177
        %v1179 = vpop.xlane.xlu0 %1178
        %v1180 = vsel %vm637, %v1150, -inf
        %1181 = vmax.xlane.f32.xlu0 %v1180
        %v1182 = vpop.xlane.xlu0 %1181
        %v1183 = vsel %vm637, %v1153, -inf
        %1184 = vmax.xlane.f32.xlu0 %v1183
        %v1185 = vpop.xlane.xlu0 %1184
        %v1186 = vsel %vm637, %v1155, -inf
        %1187 = vmax.xlane.f32.xlu0 %v1186
        %v1188 = vpop.xlane.xlu0 %1187
        %v1189 = vsel %vm637, %v1158, -inf
        %1190 = vmax.xlane.f32.xlu0 %v1189
        %v1191 = vpop.xlane.xlu0 %1190
        %v1192 = vsel %vm637, %v1160, -inf
        %1193 = vmax.xlane.f32.xlu0 %v1192
        %v1194 = vpop.xlane.xlu0 %1193
        %v1195 = vmax.f32 %v1163, %v1173
        %v1196 = vmax.f32 %v1164, %v1176
        %v1197 = vmax.f32 %v1165, %v1179
        %v1198 = vmax.f32 %v1166, %v1182
        %v1199 = vmax.f32 %v1167, %v1185
        %v1200 = vmax.f32 %v1168, %v1188
        %v1201 = vmax.f32 %v1169, %v1191
        %v1202 = vmax.f32 %v1170, %v1194
        %v1203 = vsub.f32 %v1163, %v1195
        %v1204 = vsub.f32 %v1164, %v1196
        %v1205 = vsub.f32 %v1165, %v1197
        %v1206 = vsub.f32 %v1166, %v1198
        %v1207 = vsub.f32 %v1167, %v1199
        %v1208 = vsub.f32 %v1168, %v1200
        %v1209 = vsub.f32 %v1169, %v1201
        %v1210 = vsub.f32 %v1170, %v1202
        %v1211 = vmul.f32 %v1203, 1.442695
        %v1212 = vpow.pop %v1211
        %v1213 = vmul.f32 %v1204, 1.442695
        %v1214 = vpow.pop %v1213
        %v1215 = vmul.f32 %v1205, 1.442695
        %v1216 = vpow.pop %v1215
        %v1217 = vmul.f32 %v1206, 1.442695
        %v1218 = vpow.pop %v1217
        %v1219 = vmul.f32 %v1207, 1.442695
        %v1220 = vpow.pop %v1219
        %v1221 = vmul.f32 %v1208, 1.442695
        %v1222 = vpow.pop %v1221
        %v1223 = vmul.f32 %v1209, 1.442695
        %v1224 = vpow.pop %v1223
        %v1225 = vmul.f32 %v1210, 1.442695
        %v1226 = vpow.pop %v1225
        %1228 = vset.pattern.permute.xlu0 0
        %1229 = vperm.xlu0 %1228, %v1195
        %v1230 = vpop.permute.xlu0 %1229
        %1233 = vset.pattern.permute.xlu0 0
        %1234 = vperm.xlu0 %1233, %v1196
        %v1235 = vpop.permute.xlu0 %1234
        %1238 = vset.pattern.permute.xlu0 0
        %1239 = vperm.xlu0 %1238, %v1197
        %v1240 = vpop.permute.xlu0 %1239
        %1243 = vset.pattern.permute.xlu0 0
        %1244 = vperm.xlu0 %1243, %v1198
        %v1245 = vpop.permute.xlu0 %1244
        %1248 = vset.pattern.permute.xlu0 0
        %1249 = vperm.xlu0 %1248, %v1199
        %v1250 = vpop.permute.xlu0 %1249
        %1253 = vset.pattern.permute.xlu0 0
        %1254 = vperm.xlu0 %1253, %v1200
        %v1255 = vpop.permute.xlu0 %1254
        %1258 = vset.pattern.permute.xlu0 0
        %1259 = vperm.xlu0 %1258, %v1201
        %v1260 = vpop.permute.xlu0 %1259
        %1263 = vset.pattern.permute.xlu0 0
        %1264 = vperm.xlu0 %1263, %v1202
        %v1265 = vpop.permute.xlu0 %1264
        %v1267 = vsub.f32 %v1143, %v1230
        %v1268 = vsub.f32 %v1145, %v1235
        %v1269 = vsub.f32 %v1148, %v1240
        %v1270 = vsub.f32 %v1150, %v1245
        %v1271 = vsub.f32 %v1153, %v1250
        %v1272 = vsub.f32 %v1155, %v1255
        %v1273 = vsub.f32 %v1158, %v1260
        %v1274 = vsub.f32 %v1160, %v1265
        %v1275 = vmul.f32 %v1267, 1.442695
        %v1276 = vpow.pop %v1275
        %v1277 = vmul.f32 %v1268, 1.442695
        %v1278 = vpow.pop %v1277
        %v1279 = vmul.f32 %v1269, 1.442695
        %v1280 = vpow.pop %v1279
        %v1281 = vmul.f32 %v1270, 1.442695
        %v1282 = vpow.pop %v1281
        %v1283 = vmul.f32 %v1271, 1.442695
        %v1284 = vpow.pop %v1283
        %v1285 = vmul.f32 %v1272, 1.442695
        %v1286 = vpow.pop %v1285
        %v1287 = vmul.f32 %v1273, 1.442695
        %v1288 = vpow.pop %v1287
        %v1289 = vmul.f32 %v1274, 1.442695
        %v1290 = vpow.pop %v1289
        %s1291 = scalar_lea.vmem [#allocation3], 64
        %v1292 = vld [vmem:[%s1291] sm:$0xff]
        %v1293 = vld [vmem:[%s1291 + $0x8] sm:$0xff]
        %v1294 = vld [vmem:[%s1291 + $0x10] sm:$0xff]
        %v1295 = vld [vmem:[%s1291 + $0x18] sm:$0xff]
        %v1296 = vld [vmem:[%s1291 + $0x20] sm:$0xff]
        %v1297 = vld [vmem:[%s1291 + $0x28] sm:$0xff]
        %v1298 = vld [vmem:[%s1291 + $0x30] sm:$0xff]
        %v1299 = vld [vmem:[%s1291 + $0x38] sm:$0xff]
        %v1300 = vmul.f32 %v1212, %v1292
        %v1301 = vmul.f32 %v1214, %v1293
        %v1302 = vmul.f32 %v1216, %v1294
        %v1303 = vmul.f32 %v1218, %v1295
        %v1304 = vmul.f32 %v1220, %v1296
        %v1305 = vmul.f32 %v1222, %v1297
        %v1306 = vmul.f32 %v1224, %v1298
        %v1307 = vmul.f32 %v1226, %v1299
        %v1308 = vsel %vm637, %v1276, 0.0
        %1309 = vadd.xlane.f32.xlu0 %v1308
        %v1310 = vpop.xlane.xlu0 %1309
        %v1311 = vsel %vm637, %v1278, 0.0
        %1312 = vadd.xlane.f32.xlu0 %v1311
        %v1313 = vpop.xlane.xlu0 %1312
        %v1314 = vsel %vm637, %v1280, 0.0
        %1315 = vadd.xlane.f32.xlu0 %v1314
        %v1316 = vpop.xlane.xlu0 %1315
        %v1317 = vsel %vm637, %v1282, 0.0
        %1318 = vadd.xlane.f32.xlu0 %v1317
        %v1319 = vpop.xlane.xlu0 %1318
        %v1320 = vsel %vm637, %v1284, 0.0
        %1321 = vadd.xlane.f32.xlu0 %v1320
        %v1322 = vpop.xlane.xlu0 %1321
        %v1323 = vsel %vm637, %v1286, 0.0
        %1324 = vadd.xlane.f32.xlu0 %v1323
        %v1325 = vpop.xlane.xlu0 %1324
        %v1326 = vsel %vm637, %v1288, 0.0
        %1327 = vadd.xlane.f32.xlu0 %v1326
        %v1328 = vpop.xlane.xlu0 %1327
        %v1329 = vsel %vm637, %v1290, 0.0
        %1330 = vadd.xlane.f32.xlu0 %v1329
        %v1331 = vpop.xlane.xlu0 %1330
        %v1332 = vadd.f32 %v1300, %v1310
        %v1333 = vadd.f32 %v1301, %v1313
        %v1334 = vadd.f32 %v1302, %v1316
        %v1335 = vadd.f32 %v1303, %v1319
        %v1336 = vadd.f32 %v1304, %v1322
        %v1337 = vadd.f32 %v1305, %v1325
        %v1338 = vadd.f32 %v1306, %v1328
        %v1339 = vadd.f32 %v1307, %v1331
        %1340 = vst.msk [vmem:[%s1291] sm:$0xff] %vm867, %v1332
        %1341 = vst.msk [vmem:[%s1291 + $0x8] sm:$0xff] %vm867, %v1333
        %1342 = vst.msk [vmem:[%s1291 + $0x10] sm:$0xff] %vm867, %v1334
        %1343 = vst.msk [vmem:[%s1291 + $0x18] sm:$0xff] %vm867, %v1335
        %1344 = vst.msk [vmem:[%s1291 + $0x20] sm:$0xff] %vm867, %v1336
        %1345 = vst.msk [vmem:[%s1291 + $0x28] sm:$0xff] %vm867, %v1337
        %1346 = vst.msk [vmem:[%s1291 + $0x30] sm:$0xff] %vm867, %v1338
        %1347 = vst.msk [vmem:[%s1291 + $0x38] sm:$0xff] %vm867, %v1339
        %s1348 = scalar_lea.vmem [#allocation4], 64
        %v1349 = vld [vmem:[%s1348] sm:$0xff]
        %v1350 = vld [vmem:[%s1348 + $0x8] sm:$0xff]
        %v1351 = vld [vmem:[%s1348 + $0x10] sm:$0xff]
        %v1352 = vld [vmem:[%s1348 + $0x18] sm:$0xff]
        %v1353 = vld [vmem:[%s1348 + $0x20] sm:$0xff]
        %v1354 = vld [vmem:[%s1348 + $0x28] sm:$0xff]
        %v1355 = vld [vmem:[%s1348 + $0x30] sm:$0xff]
        %v1356 = vld [vmem:[%s1348 + $0x38] sm:$0xff]
        %1358 = vset.pattern.permute.xlu0 0
        %1359 = vperm.xlu0 %1358, %v1212
        %v1360 = vpop.permute.xlu0 %1359
        %1363 = vset.pattern.permute.xlu0 0
        %1364 = vperm.xlu0 %1363, %v1214
        %v1365 = vpop.permute.xlu0 %1364
        %1368 = vset.pattern.permute.xlu0 0
        %1369 = vperm.xlu0 %1368, %v1216
        %v1370 = vpop.permute.xlu0 %1369
        %1373 = vset.pattern.permute.xlu0 0
        %1374 = vperm.xlu0 %1373, %v1218
        %v1375 = vpop.permute.xlu0 %1374
        %1378 = vset.pattern.permute.xlu0 0
        %1379 = vperm.xlu0 %1378, %v1220
        %v1380 = vpop.permute.xlu0 %1379
        %1383 = vset.pattern.permute.xlu0 0
        %1384 = vperm.xlu0 %1383, %v1222
        %v1385 = vpop.permute.xlu0 %1384
        %1388 = vset.pattern.permute.xlu0 0
        %1389 = vperm.xlu0 %1388, %v1224
        %v1390 = vpop.permute.xlu0 %1389
        %1393 = vset.pattern.permute.xlu0 0
        %1394 = vperm.xlu0 %1393, %v1226
        %v1395 = vpop.permute.xlu0 %1394
        %v1397 = vmul.f32 %v1360, %v1349
        %v1398 = vmul.f32 %v1365, %v1350
        %v1399 = vmul.f32 %v1370, %v1351
        %v1400 = vmul.f32 %v1375, %v1352
        %v1401 = vmul.f32 %v1380, %v1353
        %v1402 = vmul.f32 %v1385, %v1354
        %v1403 = vmul.f32 %v1390, %v1355
        %v1404 = vmul.f32 %v1395, %v1356
        %v1405 = vpack.c.bf16 %v1278, %v1276
        %v1406 = vpack.c.bf16 %v1282, %v1280
        %v1407 = vpack.c.bf16 %v1286, %v1284
        %v1408 = vpack.c.bf16 %v1290, %v1288
        %v1417 = vunpack.c.l.b16 %v1061
        %v1418 = vunpack.c.l.b16 %v1062
        %v1419 = vunpack.c.l.b16 %v1063
        %v1420 = vunpack.c.l.b16 %v1064
        %v1421 = vunpack.c.l.b16 %v1065
        %v1422 = vunpack.c.l.b16 %v1066
        %v1423 = vunpack.c.l.b16 %v1067
        %v1424 = vunpack.c.l.b16 %v1068
        %v1425 = vpack.c.b16 %v1418, %v1417
        %v1426 = vpack.c.b16 %v1420, %v1419
        %v1427 = vpack.c.b16 %v1422, %v1421
        %v1428 = vpack.c.b16 %v1424, %v1423
        %1429 = vrot.lane.b32.xlu0 %v1425, 64
        %v1430 = vpop.permute.xlu0 %1429
        %1431 = vrot.lane.b32.xlu0 %v1426, 64
        %v1432 = vpop.permute.xlu0 %1431
        %1433 = vrot.lane.b32.xlu0 %v1427, 64
        %v1434 = vpop.permute.xlu0 %1433
        %1435 = vrot.lane.b32.xlu0 %v1428, 64
        %v1436 = vpop.permute.xlu0 %1435
        %v1442 = vsel %vm637, %v1405, 0
        %v1445 = vsel %vm637, %v1406, 0
        %v1448 = vsel %vm637, %v1407, 0
        %v1451 = vsel %vm637, %v1408, 0
        %1453 = vmatpush.bf16.msra.mxu0 0
        %1454 = vmatpush.bf16.msra.mxu0 0
        %1455 = vmatpush.bf16.msra.mxu0 0
        %1456 = vmatpush.bf16.msra.mxu0 0
        %1457 = vmatpush.bf16.msra.mxu0 %v1436
        %1458 = vmatpush.bf16.msra.mxu0 %v1434
        %1459 = vmatpush.bf16.msra.mxu0 %v1432
        %1460 = vmatpush.bf16.msra.mxu0 %v1430
        %1461 = vmatmul.bf16.gmra.mxu0 %v1442
        %v1462 = vpop.f32.mrf.mxu0
        %v1463 = vadd.f32 0.0, %v1462
        %v1464 = vpop.f32.mrf.mxu0
        %v1465 = vadd.f32 0.0, %v1464
        %1466 = vmatmul.bf16.gmra.mxu0 %v1445
        %v1467 = vpop.f32.mrf.mxu0
        %v1468 = vadd.f32 0.0, %v1467
        %v1469 = vpop.f32.mrf.mxu0
        %v1470 = vadd.f32 0.0, %v1469
        %1471 = vmatmul.bf16.gmra.mxu0 %v1448
        %v1472 = vpop.f32.mrf.mxu0
        %v1473 = vadd.f32 0.0, %v1472
        %v1474 = vpop.f32.mrf.mxu0
        %v1475 = vadd.f32 0.0, %v1474
        %1476 = vmatmul.bf16.gmra.mxu0 %v1451
        %v1477 = vpop.f32.mrf.mxu0
        %v1478 = vadd.f32 0.0, %v1477
        %v1479 = vpop.f32.mrf.mxu0
        %v1480 = vadd.f32 0.0, %v1479
        %1481 = vdwg.mxu0
        %v1482 = vadd.f32 %v1397, %v1463
        %v1483 = vadd.f32 %v1398, %v1465
        %v1484 = vadd.f32 %v1399, %v1468
        %v1485 = vadd.f32 %v1400, %v1470
        %v1486 = vadd.f32 %v1401, %v1473
        %v1487 = vadd.f32 %v1402, %v1475
        %v1488 = vadd.f32 %v1403, %v1478
        %v1489 = vadd.f32 %v1404, %v1480
        %1490 = vst.msk [vmem:[%s1348] sm:$0xff] %vm637, %v1482
        %1491 = vst.msk [vmem:[%s1348 + $0x8] sm:$0xff] %vm637, %v1483
        %1492 = vst.msk [vmem:[%s1348 + $0x10] sm:$0xff] %vm637, %v1484
        %1493 = vst.msk [vmem:[%s1348 + $0x18] sm:$0xff] %vm637, %v1485
        %1494 = vst.msk [vmem:[%s1348 + $0x20] sm:$0xff] %vm637, %v1486
        %1495 = vst.msk [vmem:[%s1348 + $0x28] sm:$0xff] %vm637, %v1487
        %1496 = vst.msk [vmem:[%s1348 + $0x30] sm:$0xff] %vm637, %v1488
        %1497 = vst.msk [vmem:[%s1348 + $0x38] sm:$0xff] %vm637, %v1489
        %1498 = vst.msk [vmem:[%s1162] sm:$0xff] %vm867, %v1195
        %1499 = vst.msk [vmem:[%s1162 + $0x8] sm:$0xff] %vm867, %v1196
        %1500 = vst.msk [vmem:[%s1162 + $0x10] sm:$0xff] %vm867, %v1197
        %1501 = vst.msk [vmem:[%s1162 + $0x18] sm:$0xff] %vm867, %v1198
        %1502 = vst.msk [vmem:[%s1162 + $0x20] sm:$0xff] %vm867, %v1199
        %1503 = vst.msk [vmem:[%s1162 + $0x28] sm:$0xff] %vm867, %v1200
        %1504 = vst.msk [vmem:[%s1162 + $0x30] sm:$0xff] %vm867, %v1201
        %1505 = vst.msk [vmem:[%s1162 + $0x38] sm:$0xff] %vm867, %v1202
        %v1506 = vld [vmem:[%s418 + $0x4] sm:$0xf]
        %v1507 = vld [vmem:[%s418 + $0xc] sm:$0xf]
        %v1508 = vld [vmem:[%s418 + $0x14] sm:$0xf]
        %v1509 = vld [vmem:[%s418 + $0x1c] sm:$0xf]
        %v1510 = vld [vmem:[%s418 + $0x24] sm:$0xf]
        %v1511 = vld [vmem:[%s418 + $0x2c] sm:$0xf]
        %v1512 = vld [vmem:[%s418 + $0x34] sm:$0xf]
        %v1513 = vld [vmem:[%s418 + $0x3c] sm:$0xf]
        %v1514 = vunpack.c.l.bf16 %v1506
        %v1515 = vunpack.c.l.bf16 %v1507
        %v1516 = vunpack.c.l.bf16 %v1508
        %v1517 = vunpack.c.l.bf16 %v1509
        %v1518 = vunpack.c.l.bf16 %v1510
        %v1519 = vunpack.c.l.bf16 %v1511
        %v1520 = vunpack.c.l.bf16 %v1512
        %v1521 = vunpack.c.l.bf16 %v1513
        %v1522 = vmul.f32 %v1514, 0.125
        %v1523 = vmul.f32 %v1515, 0.125
        %v1524 = vmul.f32 %v1516, 0.125
        %v1525 = vmul.f32 %v1517, 0.125
        %v1526 = vmul.f32 %v1518, 0.125
        %v1527 = vmul.f32 %v1519, 0.125
        %v1528 = vmul.f32 %v1520, 0.125
        %v1529 = vmul.f32 %v1521, 0.125
        %v1530 = vpack.c.bf16 %v1523, %v1522
        %v1531 = vpack.c.bf16 %v1525, %v1524
        %v1532 = vpack.c.bf16 %v1527, %v1526
        %v1533 = vpack.c.bf16 %v1529, %v1528
        %v1534 = vld [vmem:[%s425 + $0x4] sm:$0xf]
        %v1535 = vld [vmem:[%s425 + $0xc] sm:$0xf]
        %v1536 = vld [vmem:[%s425 + $0x14] sm:$0xf]
        %v1537 = vld [vmem:[%s425 + $0x1c] sm:$0xf]
        %v1538 = vld [vmem:[%s425 + $0x24] sm:$0xf]
        %v1539 = vld [vmem:[%s425 + $0x2c] sm:$0xf]
        %v1540 = vld [vmem:[%s425 + $0x34] sm:$0xf]
        %v1541 = vld [vmem:[%s425 + $0x3c] sm:$0xf]
        %v1542 = vld [vmem:[%s432 + $0x4] sm:$0xf]
        %v1543 = vld [vmem:[%s432 + $0xc] sm:$0xf]
        %v1544 = vld [vmem:[%s432 + $0x14] sm:$0xf]
        %v1545 = vld [vmem:[%s432 + $0x1c] sm:$0xf]
        %v1546 = vld [vmem:[%s432 + $0x24] sm:$0xf]
        %v1547 = vld [vmem:[%s432 + $0x2c] sm:$0xf]
        %v1548 = vld [vmem:[%s432 + $0x34] sm:$0xf]
        %v1549 = vld [vmem:[%s432 + $0x3c] sm:$0xf]
        %v1558 = vunpack.c.l.b16 %v1534
        %v1559 = vunpack.c.l.b16 %v1535
        %v1560 = vunpack.c.l.b16 %v1536
        %v1561 = vunpack.c.l.b16 %v1537
        %v1562 = vunpack.c.l.b16 %v1538
        %v1563 = vunpack.c.l.b16 %v1539
        %v1564 = vunpack.c.l.b16 %v1540
        %v1565 = vunpack.c.l.b16 %v1541
        %v1566 = vpack.c.b16 %v1559, %v1558
        %v1567 = vpack.c.b16 %v1561, %v1560
        %v1568 = vpack.c.b16 %v1563, %v1562
        %v1569 = vpack.c.b16 %v1565, %v1564
        %v1571 = vsel %vm637, %v1530, 0
        %v1574 = vsel %vm637, %v1531, 0
        %v1577 = vsel %vm637, %v1532, 0
        %v1580 = vsel %vm637, %v1533, 0
        %v1583 = vsel %vm637, %v1566, 0
        %v1586 = vsel %vm637, %v1567, 0
        %v1589 = vsel %vm637, %v1568, 0
        %v1592 = vsel %vm637, %v1569, 0
        %1594 = vmatpush.bf16.xpose.msra.mxu0 0
        %1595 = vmatpush.bf16.xpose.msra.mxu0 0
        %1596 = vmatpush.bf16.xpose.msra.mxu0 0
        %1597 = vmatpush.bf16.xpose.msra.mxu0 0
        %1598 = vmatpush.bf16.xpose.msra.mxu0 %v1592
        %1599 = vmatpush.bf16.xpose.msra.mxu0 %v1589
        %1600 = vmatpush.bf16.xpose.msra.mxu0 %v1586
        %1601 = vmatpush.bf16.xpose.msra.mxu0 %v1583
        %1602 = vmatmul.bf16.gmra.mxu0 %v1571
        %v1603 = vpop.f32.mrf.mxu0
        %v1604 = vadd.f32 0.0, %v1603
        %v1605 = vpop.f32.mrf.mxu0
        %v1606 = vadd.f32 0.0, %v1605
        %1607 = vmatmul.bf16.gmra.mxu0 %v1574
        %v1608 = vpop.f32.mrf.mxu0
        %v1609 = vadd.f32 0.0, %v1608
        %v1610 = vpop.f32.mrf.mxu0
        %v1611 = vadd.f32 0.0, %v1610
        %1612 = vmatmul.bf16.gmra.mxu0 %v1577
        %v1613 = vpop.f32.mrf.mxu0
        %v1614 = vadd.f32 0.0, %v1613
        %v1615 = vpop.f32.mrf.mxu0
        %v1616 = vadd.f32 0.0, %v1615
        %1617 = vmatmul.bf16.gmra.mxu0 %v1580
        %v1618 = vpop.f32.mrf.mxu0
        %v1619 = vadd.f32 0.0, %v1618
        %v1620 = vpop.f32.mrf.mxu0
        %v1621 = vadd.f32 0.0, %v1620
        %1622 = vdwg.mxu0
        %s1623 = scalar_lea.vmem [#allocation2], 128
        %v1624 = vld [vmem:[%s1623] sm:$0xff]
        %v1625 = vld [vmem:[%s1623 + $0x8] sm:$0xff]
        %v1626 = vld [vmem:[%s1623 + $0x10] sm:$0xff]
        %v1627 = vld [vmem:[%s1623 + $0x18] sm:$0xff]
        %v1628 = vld [vmem:[%s1623 + $0x20] sm:$0xff]
        %v1629 = vld [vmem:[%s1623 + $0x28] sm:$0xff]
        %v1630 = vld [vmem:[%s1623 + $0x30] sm:$0xff]
        %v1631 = vld [vmem:[%s1623 + $0x38] sm:$0xff]
        %v1632 = vsel %vm637, %v1604, -inf
        %1633 = vmax.xlane.f32.xlu0 %v1632
        %v1634 = vpop.xlane.xlu0 %1633
        %v1635 = vsel %vm637, %v1606, -inf
        %1636 = vmax.xlane.f32.xlu0 %v1635
        %v1637 = vpop.xlane.xlu0 %1636
        %v1638 = vsel %vm637, %v1609, -inf
        %1639 = vmax.xlane.f32.xlu0 %v1638
        %v1640 = vpop.xlane.xlu0 %1639
        %v1641 = vsel %vm637, %v1611, -inf
        %1642 = vmax.xlane.f32.xlu0 %v1641
        %v1643 = vpop.xlane.xlu0 %1642
        %v1644 = vsel %vm637, %v1614, -inf
        %1645 = vmax.xlane.f32.xlu0 %v1644
        %v1646 = vpop.xlane.xlu0 %1645
        %v1647 = vsel %vm637, %v1616, -inf
        %1648 = vmax.xlane.f32.xlu0 %v1647
        %v1649 = vpop.xlane.xlu0 %1648
        %v1650 = vsel %vm637, %v1619, -inf
        %1651 = vmax.xlane.f32.xlu0 %v1650
        %v1652 = vpop.xlane.xlu0 %1651
        %v1653 = vsel %vm637, %v1621, -inf
        %1654 = vmax.xlane.f32.xlu0 %v1653
        %v1655 = vpop.xlane.xlu0 %1654
        %v1656 = vmax.f32 %v1624, %v1634
        %v1657 = vmax.f32 %v1625, %v1637
        %v1658 = vmax.f32 %v1626, %v1640
        %v1659 = vmax.f32 %v1627, %v1643
        %v1660 = vmax.f32 %v1628, %v1646
        %v1661 = vmax.f32 %v1629, %v1649
        %v1662 = vmax.f32 %v1630, %v1652
        %v1663 = vmax.f32 %v1631, %v1655
        %v1664 = vsub.f32 %v1624, %v1656
        %v1665 = vsub.f32 %v1625, %v1657
        %v1666 = vsub.f32 %v1626, %v1658
        %v1667 = vsub.f32 %v1627, %v1659
        %v1668 = vsub.f32 %v1628, %v1660
        %v1669 = vsub.f32 %v1629, %v1661
        %v1670 = vsub.f32 %v1630, %v1662
        %v1671 = vsub.f32 %v1631, %v1663
        %v1672 = vmul.f32 %v1664, 1.442695
        %v1673 = vpow.pop %v1672
        %v1674 = vmul.f32 %v1665, 1.442695
        %v1675 = vpow.pop %v1674
        %v1676 = vmul.f32 %v1666, 1.442695
        %v1677 = vpow.pop %v1676
        %v1678 = vmul.f32 %v1667, 1.442695
        %v1679 = vpow.pop %v1678
        %v1680 = vmul.f32 %v1668, 1.442695
        %v1681 = vpow.pop %v1680
        %v1682 = vmul.f32 %v1669, 1.442695
        %v1683 = vpow.pop %v1682
        %v1684 = vmul.f32 %v1670, 1.442695
        %v1685 = vpow.pop %v1684
        %v1686 = vmul.f32 %v1671, 1.442695
        %v1687 = vpow.pop %v1686
        %1689 = vset.pattern.permute.xlu0 0
        %1690 = vperm.xlu0 %1689, %v1656
        %v1691 = vpop.permute.xlu0 %1690
        %1694 = vset.pattern.permute.xlu0 0
        %1695 = vperm.xlu0 %1694, %v1657
        %v1696 = vpop.permute.xlu0 %1695
        %1699 = vset.pattern.permute.xlu0 0
        %1700 = vperm.xlu0 %1699, %v1658
        %v1701 = vpop.permute.xlu0 %1700
        %1704 = vset.pattern.permute.xlu0 0
        %1705 = vperm.xlu0 %1704, %v1659
        %v1706 = vpop.permute.xlu0 %1705
        %1709 = vset.pattern.permute.xlu0 0
        %1710 = vperm.xlu0 %1709, %v1660
        %v1711 = vpop.permute.xlu0 %1710
        %1714 = vset.pattern.permute.xlu0 0
        %1715 = vperm.xlu0 %1714, %v1661
        %v1716 = vpop.permute.xlu0 %1715
        %1719 = vset.pattern.permute.xlu0 0
        %1720 = vperm.xlu0 %1719, %v1662
        %v1721 = vpop.permute.xlu0 %1720
        %1724 = vset.pattern.permute.xlu0 0
        %1725 = vperm.xlu0 %1724, %v1663
        %v1726 = vpop.permute.xlu0 %1725
        %v1728 = vsub.f32 %v1604, %v1691
        %v1729 = vsub.f32 %v1606, %v1696
        %v1730 = vsub.f32 %v1609, %v1701
        %v1731 = vsub.f32 %v1611, %v1706
        %v1732 = vsub.f32 %v1614, %v1711
        %v1733 = vsub.f32 %v1616, %v1716
        %v1734 = vsub.f32 %v1619, %v1721
        %v1735 = vsub.f32 %v1621, %v1726
        %v1736 = vmul.f32 %v1728, 1.442695
        %v1737 = vpow.pop %v1736
        %v1738 = vmul.f32 %v1729, 1.442695
        %v1739 = vpow.pop %v1738
        %v1740 = vmul.f32 %v1730, 1.442695
        %v1741 = vpow.pop %v1740
        %v1742 = vmul.f32 %v1731, 1.442695
        %v1743 = vpow.pop %v1742
        %v1744 = vmul.f32 %v1732, 1.442695
        %v1745 = vpow.pop %v1744
        %v1746 = vmul.f32 %v1733, 1.442695
        %v1747 = vpow.pop %v1746
        %v1748 = vmul.f32 %v1734, 1.442695
        %v1749 = vpow.pop %v1748
        %v1750 = vmul.f32 %v1735, 1.442695
        %v1751 = vpow.pop %v1750
        %s1752 = scalar_lea.vmem [#allocation3], 128
        %v1753 = vld [vmem:[%s1752] sm:$0xff]
        %v1754 = vld [vmem:[%s1752 + $0x8] sm:$0xff]
        %v1755 = vld [vmem:[%s1752 + $0x10] sm:$0xff]
        %v1756 = vld [vmem:[%s1752 + $0x18] sm:$0xff]
        %v1757 = vld [vmem:[%s1752 + $0x20] sm:$0xff]
        %v1758 = vld [vmem:[%s1752 + $0x28] sm:$0xff]
        %v1759 = vld [vmem:[%s1752 + $0x30] sm:$0xff]
        %v1760 = vld [vmem:[%s1752 + $0x38] sm:$0xff]
        %v1761 = vmul.f32 %v1673, %v1753
        %v1762 = vmul.f32 %v1675, %v1754
        %v1763 = vmul.f32 %v1677, %v1755
        %v1764 = vmul.f32 %v1679, %v1756
        %v1765 = vmul.f32 %v1681, %v1757
        %v1766 = vmul.f32 %v1683, %v1758
        %v1767 = vmul.f32 %v1685, %v1759
        %v1768 = vmul.f32 %v1687, %v1760
        %v1769 = vsel %vm637, %v1737, 0.0
        %1770 = vadd.xlane.f32.xlu0 %v1769
        %v1771 = vpop.xlane.xlu0 %1770
        %v1772 = vsel %vm637, %v1739, 0.0
        %1773 = vadd.xlane.f32.xlu0 %v1772
        %v1774 = vpop.xlane.xlu0 %1773
        %v1775 = vsel %vm637, %v1741, 0.0
        %1776 = vadd.xlane.f32.xlu0 %v1775
        %v1777 = vpop.xlane.xlu0 %1776
        %v1778 = vsel %vm637, %v1743, 0.0
        %1779 = vadd.xlane.f32.xlu0 %v1778
        %v1780 = vpop.xlane.xlu0 %1779
        %v1781 = vsel %vm637, %v1745, 0.0
        %1782 = vadd.xlane.f32.xlu0 %v1781
        %v1783 = vpop.xlane.xlu0 %1782
        %v1784 = vsel %vm637, %v1747, 0.0
        %1785 = vadd.xlane.f32.xlu0 %v1784
        %v1786 = vpop.xlane.xlu0 %1785
        %v1787 = vsel %vm637, %v1749, 0.0
        %1788 = vadd.xlane.f32.xlu0 %v1787
        %v1789 = vpop.xlane.xlu0 %1788
        %v1790 = vsel %vm637, %v1751, 0.0
        %1791 = vadd.xlane.f32.xlu0 %v1790
        %v1792 = vpop.xlane.xlu0 %1791
        %v1793 = vadd.f32 %v1761, %v1771
        %v1794 = vadd.f32 %v1762, %v1774
        %v1795 = vadd.f32 %v1763, %v1777
        %v1796 = vadd.f32 %v1764, %v1780
        %v1797 = vadd.f32 %v1765, %v1783
        %v1798 = vadd.f32 %v1766, %v1786
        %v1799 = vadd.f32 %v1767, %v1789
        %v1800 = vadd.f32 %v1768, %v1792
        %1801 = vst.msk [vmem:[%s1752] sm:$0xff] %vm867, %v1793
        %1802 = vst.msk [vmem:[%s1752 + $0x8] sm:$0xff] %vm867, %v1794
        %1803 = vst.msk [vmem:[%s1752 + $0x10] sm:$0xff] %vm867, %v1795
        %1804 = vst.msk [vmem:[%s1752 + $0x18] sm:$0xff] %vm867, %v1796
        %1805 = vst.msk [vmem:[%s1752 + $0x20] sm:$0xff] %vm867, %v1797
        %1806 = vst.msk [vmem:[%s1752 + $0x28] sm:$0xff] %vm867, %v1798
        %1807 = vst.msk [vmem:[%s1752 + $0x30] sm:$0xff] %vm867, %v1799
        %1808 = vst.msk [vmem:[%s1752 + $0x38] sm:$0xff] %vm867, %v1800
        %s1809 = scalar_lea.vmem [#allocation4], 128
        %v1810 = vld [vmem:[%s1809] sm:$0xff]
        %v1811 = vld [vmem:[%s1809 + $0x8] sm:$0xff]
        %v1812 = vld [vmem:[%s1809 + $0x10] sm:$0xff]
        %v1813 = vld [vmem:[%s1809 + $0x18] sm:$0xff]
        %v1814 = vld [vmem:[%s1809 + $0x20] sm:$0xff]
        %v1815 = vld [vmem:[%s1809 + $0x28] sm:$0xff]
        %v1816 = vld [vmem:[%s1809 + $0x30] sm:$0xff]
        %v1817 = vld [vmem:[%s1809 + $0x38] sm:$0xff]
        %1819 = vset.pattern.permute.xlu0 0
        %1820 = vperm.xlu0 %1819, %v1673
        %v1821 = vpop.permute.xlu0 %1820
        %1824 = vset.pattern.permute.xlu0 0
        %1825 = vperm.xlu0 %1824, %v1675
        %v1826 = vpop.permute.xlu0 %1825
        %1829 = vset.pattern.permute.xlu0 0
        %1830 = vperm.xlu0 %1829, %v1677
        %v1831 = vpop.permute.xlu0 %1830
        %1834 = vset.pattern.permute.xlu0 0
        %1835 = vperm.xlu0 %1834, %v1679
        %v1836 = vpop.permute.xlu0 %1835
        %1839 = vset.pattern.permute.xlu0 0
        %1840 = vperm.xlu0 %1839, %v1681
        %v1841 = vpop.permute.xlu0 %1840
        %1844 = vset.pattern.permute.xlu0 0
        %1845 = vperm.xlu0 %1844, %v1683
        %v1846 = vpop.permute.xlu0 %1845
        %1849 = vset.pattern.permute.xlu0 0
        %1850 = vperm.xlu0 %1849, %v1685
        %v1851 = vpop.permute.xlu0 %1850
        %1854 = vset.pattern.permute.xlu0 0
        %1855 = vperm.xlu0 %1854, %v1687
        %v1856 = vpop.permute.xlu0 %1855
        %v1858 = vmul.f32 %v1821, %v1810
        %v1859 = vmul.f32 %v1826, %v1811
        %v1860 = vmul.f32 %v1831, %v1812
        %v1861 = vmul.f32 %v1836, %v1813
        %v1862 = vmul.f32 %v1841, %v1814
        %v1863 = vmul.f32 %v1846, %v1815
        %v1864 = vmul.f32 %v1851, %v1816
        %v1865 = vmul.f32 %v1856, %v1817
        %v1866 = vpack.c.bf16 %v1739, %v1737
        %v1867 = vpack.c.bf16 %v1743, %v1741
        %v1868 = vpack.c.bf16 %v1747, %v1745
        %v1869 = vpack.c.bf16 %v1751, %v1749
        %v1878 = vunpack.c.l.b16 %v1542
        %v1879 = vunpack.c.l.b16 %v1543
        %v1880 = vunpack.c.l.b16 %v1544
        %v1881 = vunpack.c.l.b16 %v1545
        %v1882 = vunpack.c.l.b16 %v1546
        %v1883 = vunpack.c.l.b16 %v1547
        %v1884 = vunpack.c.l.b16 %v1548
        %v1885 = vunpack.c.l.b16 %v1549
        %v1886 = vpack.c.b16 %v1879, %v1878
        %v1887 = vpack.c.b16 %v1881, %v1880
        %v1888 = vpack.c.b16 %v1883, %v1882
        %v1889 = vpack.c.b16 %v1885, %v1884
        %v1895 = vsel %vm637, %v1866, 0
        %v1898 = vsel %vm637, %v1867, 0
        %v1901 = vsel %vm637, %v1868, 0
        %v1904 = vsel %vm637, %v1869, 0
        %1906 = vmatpush.bf16.msra.mxu0 0
        %1907 = vmatpush.bf16.msra.mxu0 0
        %1908 = vmatpush.bf16.msra.mxu0 0
        %1909 = vmatpush.bf16.msra.mxu0 0
        %1910 = vmatpush.bf16.msra.mxu0 %v1889
        %1911 = vmatpush.bf16.msra.mxu0 %v1888
        %1912 = vmatpush.bf16.msra.mxu0 %v1887
        %1913 = vmatpush.bf16.msra.mxu0 %v1886
        %1914 = vmatmul.bf16.gmra.mxu0 %v1895
        %v1915 = vpop.f32.mrf.mxu0
        %v1916 = vadd.f32 0.0, %v1915
        %v1917 = vpop.f32.mrf.mxu0
        %v1918 = vadd.f32 0.0, %v1917
        %1919 = vmatmul.bf16.gmra.mxu0 %v1898
        %v1920 = vpop.f32.mrf.mxu0
        %v1921 = vadd.f32 0.0, %v1920
        %v1922 = vpop.f32.mrf.mxu0
        %v1923 = vadd.f32 0.0, %v1922
        %1924 = vmatmul.bf16.gmra.mxu0 %v1901
        %v1925 = vpop.f32.mrf.mxu0
        %v1926 = vadd.f32 0.0, %v1925
        %v1927 = vpop.f32.mrf.mxu0
        %v1928 = vadd.f32 0.0, %v1927
        %1929 = vmatmul.bf16.gmra.mxu0 %v1904
        %v1930 = vpop.f32.mrf.mxu0
        %v1931 = vadd.f32 0.0, %v1930
        %v1932 = vpop.f32.mrf.mxu0
        %v1933 = vadd.f32 0.0, %v1932
        %1934 = vdwg.mxu0
        %v1935 = vadd.f32 %v1858, %v1916
        %v1936 = vadd.f32 %v1859, %v1918
        %v1937 = vadd.f32 %v1860, %v1921
        %v1938 = vadd.f32 %v1861, %v1923
        %v1939 = vadd.f32 %v1862, %v1926
        %v1940 = vadd.f32 %v1863, %v1928
        %v1941 = vadd.f32 %v1864, %v1931
        %v1942 = vadd.f32 %v1865, %v1933
        %1943 = vst.msk [vmem:[%s1809] sm:$0xff] %vm637, %v1935
        %1944 = vst.msk [vmem:[%s1809 + $0x8] sm:$0xff] %vm637, %v1936
        %1945 = vst.msk [vmem:[%s1809 + $0x10] sm:$0xff] %vm637, %v1937
        %1946 = vst.msk [vmem:[%s1809 + $0x18] sm:$0xff] %vm637, %v1938
        %1947 = vst.msk [vmem:[%s1809 + $0x20] sm:$0xff] %vm637, %v1939
        %1948 = vst.msk [vmem:[%s1809 + $0x28] sm:$0xff] %vm637, %v1940
        %1949 = vst.msk [vmem:[%s1809 + $0x30] sm:$0xff] %vm637, %v1941
        %1950 = vst.msk [vmem:[%s1809 + $0x38] sm:$0xff] %vm637, %v1942
        %1951 = vst.msk [vmem:[%s1623] sm:$0xff] %vm867, %v1656
        %1952 = vst.msk [vmem:[%s1623 + $0x8] sm:$0xff] %vm867, %v1657
        %1953 = vst.msk [vmem:[%s1623 + $0x10] sm:$0xff] %vm867, %v1658
        %1954 = vst.msk [vmem:[%s1623 + $0x18] sm:$0xff] %vm867, %v1659
        %1955 = vst.msk [vmem:[%s1623 + $0x20] sm:$0xff] %vm867, %v1660
        %1956 = vst.msk [vmem:[%s1623 + $0x28] sm:$0xff] %vm867, %v1661
        %1957 = vst.msk [vmem:[%s1623 + $0x30] sm:$0xff] %vm867, %v1662
        %1958 = vst.msk [vmem:[%s1623 + $0x38] sm:$0xff] %vm867, %v1663
        %v1959 = vld [vmem:[%s418 + $0x4] sm:$0xf]
        %v1960 = vld [vmem:[%s418 + $0xc] sm:$0xf]
        %v1961 = vld [vmem:[%s418 + $0x14] sm:$0xf]
        %v1962 = vld [vmem:[%s418 + $0x1c] sm:$0xf]
        %v1963 = vld [vmem:[%s418 + $0x24] sm:$0xf]
        %v1964 = vld [vmem:[%s418 + $0x2c] sm:$0xf]
        %v1965 = vld [vmem:[%s418 + $0x34] sm:$0xf]
        %v1966 = vld [vmem:[%s418 + $0x3c] sm:$0xf]
        %v1967 = vunpack.c.l.bf16 %v1959
        %v1968 = vunpack.c.l.bf16 %v1960
        %v1969 = vunpack.c.l.bf16 %v1961
        %v1970 = vunpack.c.l.bf16 %v1962
        %v1971 = vunpack.c.l.bf16 %v1963
        %v1972 = vunpack.c.l.bf16 %v1964
        %v1973 = vunpack.c.l.bf16 %v1965
        %v1974 = vunpack.c.l.bf16 %v1966
        %v1975 = vmul.f32 %v1967, 0.125
        %v1976 = vmul.f32 %v1968, 0.125
        %v1977 = vmul.f32 %v1969, 0.125
        %v1978 = vmul.f32 %v1970, 0.125
        %v1979 = vmul.f32 %v1971, 0.125
        %v1980 = vmul.f32 %v1972, 0.125
        %v1981 = vmul.f32 %v1973, 0.125
        %v1982 = vmul.f32 %v1974, 0.125
        %v1983 = vpack.c.bf16 %v1976, %v1975
        %v1984 = vpack.c.bf16 %v1978, %v1977
        %v1985 = vpack.c.bf16 %v1980, %v1979
        %v1986 = vpack.c.bf16 %v1982, %v1981
        %v1987 = vld [vmem:[%s425 + $0x4] sm:$0xf]
        %v1988 = vld [vmem:[%s425 + $0xc] sm:$0xf]
        %v1989 = vld [vmem:[%s425 + $0x14] sm:$0xf]
        %v1990 = vld [vmem:[%s425 + $0x1c] sm:$0xf]
        %v1991 = vld [vmem:[%s425 + $0x24] sm:$0xf]
        %v1992 = vld [vmem:[%s425 + $0x2c] sm:$0xf]
        %v1993 = vld [vmem:[%s425 + $0x34] sm:$0xf]
        %v1994 = vld [vmem:[%s425 + $0x3c] sm:$0xf]
        %v1995 = vld [vmem:[%s432 + $0x4] sm:$0xf]
        %v1996 = vld [vmem:[%s432 + $0xc] sm:$0xf]
        %v1997 = vld [vmem:[%s432 + $0x14] sm:$0xf]
        %v1998 = vld [vmem:[%s432 + $0x1c] sm:$0xf]
        %v1999 = vld [vmem:[%s432 + $0x24] sm:$0xf]
        %v2000 = vld [vmem:[%s432 + $0x2c] sm:$0xf]
        %v2001 = vld [vmem:[%s432 + $0x34] sm:$0xf]
        %v2002 = vld [vmem:[%s432 + $0x3c] sm:$0xf]
        %2007 = vrot.lane.b32.xlu0 %v1983, 64
        %v2008 = vpop.permute.xlu0 %2007
        %2009 = vrot.lane.b32.xlu0 %v1984, 64
        %v2010 = vpop.permute.xlu0 %2009
        %2011 = vrot.lane.b32.xlu0 %v1985, 64
        %v2012 = vpop.permute.xlu0 %2011
        %2013 = vrot.lane.b32.xlu0 %v1986, 64
        %v2014 = vpop.permute.xlu0 %2013
        %v2023 = vunpack.c.l.b16 %v1987
        %v2024 = vunpack.c.l.b16 %v1988
        %v2025 = vunpack.c.l.b16 %v1989
        %v2026 = vunpack.c.l.b16 %v1990
        %v2027 = vunpack.c.l.b16 %v1991
        %v2028 = vunpack.c.l.b16 %v1992
        %v2029 = vunpack.c.l.b16 %v1993
        %v2030 = vunpack.c.l.b16 %v1994
        %v2031 = vpack.c.b16 %v2024, %v2023
        %v2032 = vpack.c.b16 %v2026, %v2025
        %v2033 = vpack.c.b16 %v2028, %v2027
        %v2034 = vpack.c.b16 %v2030, %v2029
        %2035 = vrot.lane.b32.xlu0 %v2031, 64
        %v2036 = vpop.permute.xlu0 %2035
        %2037 = vrot.lane.b32.xlu0 %v2032, 64
        %v2038 = vpop.permute.xlu0 %2037
        %2039 = vrot.lane.b32.xlu0 %v2033, 64
        %v2040 = vpop.permute.xlu0 %2039
        %2041 = vrot.lane.b32.xlu0 %v2034, 64
        %v2042 = vpop.permute.xlu0 %2041
        %v2044 = vsel %vm637, %v2008, 0
        %v2047 = vsel %vm637, %v2010, 0
        %v2050 = vsel %vm637, %v2012, 0
        %v2053 = vsel %vm637, %v2014, 0
        %v2056 = vsel %vm637, %v2036, 0
        %v2059 = vsel %vm637, %v2038, 0
        %v2062 = vsel %vm637, %v2040, 0
        %v2065 = vsel %vm637, %v2042, 0
        %2067 = vmatpush.bf16.xpose.msra.mxu0 0
        %2068 = vmatpush.bf16.xpose.msra.mxu0 0
        %2069 = vmatpush.bf16.xpose.msra.mxu0 0
        %2070 = vmatpush.bf16.xpose.msra.mxu0 0
        %2071 = vmatpush.bf16.xpose.msra.mxu0 %v2065
        %2072 = vmatpush.bf16.xpose.msra.mxu0 %v2062
        %2073 = vmatpush.bf16.xpose.msra.mxu0 %v2059
        %2074 = vmatpush.bf16.xpose.msra.mxu0 %v2056
        %2075 = vmatmul.bf16.gmra.mxu0 %v2044
        %v2076 = vpop.f32.mrf.mxu0
        %v2077 = vadd.f32 0.0, %v2076
        %v2078 = vpop.f32.mrf.mxu0
        %v2079 = vadd.f32 0.0, %v2078
        %2080 = vmatmul.bf16.gmra.mxu0 %v2047
        %v2081 = vpop.f32.mrf.mxu0
        %v2082 = vadd.f32 0.0, %v2081
        %v2083 = vpop.f32.mrf.mxu0
        %v2084 = vadd.f32 0.0, %v2083
        %2085 = vmatmul.bf16.gmra.mxu0 %v2050
        %v2086 = vpop.f32.mrf.mxu0
        %v2087 = vadd.f32 0.0, %v2086
        %v2088 = vpop.f32.mrf.mxu0
        %v2089 = vadd.f32 0.0, %v2088
        %2090 = vmatmul.bf16.gmra.mxu0 %v2053
        %v2091 = vpop.f32.mrf.mxu0
        %v2092 = vadd.f32 0.0, %v2091
        %v2093 = vpop.f32.mrf.mxu0
        %v2094 = vadd.f32 0.0, %v2093
        %2095 = vdwg.mxu0
        %s2096 = scalar_lea.vmem [#allocation2], 192
        %v2097 = vld [vmem:[%s2096] sm:$0xff]
        %v2098 = vld [vmem:[%s2096 + $0x8] sm:$0xff]
        %v2099 = vld [vmem:[%s2096 + $0x10] sm:$0xff]
        %v2100 = vld [vmem:[%s2096 + $0x18] sm:$0xff]
        %v2101 = vld [vmem:[%s2096 + $0x20] sm:$0xff]
        %v2102 = vld [vmem:[%s2096 + $0x28] sm:$0xff]
        %v2103 = vld [vmem:[%s2096 + $0x30] sm:$0xff]
        %v2104 = vld [vmem:[%s2096 + $0x38] sm:$0xff]
        %v2105 = vsel %vm637, %v2077, -inf
        %2106 = vmax.xlane.f32.xlu0 %v2105
        %v2107 = vpop.xlane.xlu0 %2106
        %v2108 = vsel %vm637, %v2079, -inf
        %2109 = vmax.xlane.f32.xlu0 %v2108
        %v2110 = vpop.xlane.xlu0 %2109
        %v2111 = vsel %vm637, %v2082, -inf
        %2112 = vmax.xlane.f32.xlu0 %v2111
        %v2113 = vpop.xlane.xlu0 %2112
        %v2114 = vsel %vm637, %v2084, -inf
        %2115 = vmax.xlane.f32.xlu0 %v2114
        %v2116 = vpop.xlane.xlu0 %2115
        %v2117 = vsel %vm637, %v2087, -inf
        %2118 = vmax.xlane.f32.xlu0 %v2117
        %v2119 = vpop.xlane.xlu0 %2118
        %v2120 = vsel %vm637, %v2089, -inf
        %2121 = vmax.xlane.f32.xlu0 %v2120
        %v2122 = vpop.xlane.xlu0 %2121
        %v2123 = vsel %vm637, %v2092, -inf
        %2124 = vmax.xlane.f32.xlu0 %v2123
        %v2125 = vpop.xlane.xlu0 %2124
        %v2126 = vsel %vm637, %v2094, -inf
        %2127 = vmax.xlane.f32.xlu0 %v2126
        %v2128 = vpop.xlane.xlu0 %2127
        %v2129 = vmax.f32 %v2097, %v2107
        %v2130 = vmax.f32 %v2098, %v2110
        %v2131 = vmax.f32 %v2099, %v2113
        %v2132 = vmax.f32 %v2100, %v2116
        %v2133 = vmax.f32 %v2101, %v2119
        %v2134 = vmax.f32 %v2102, %v2122
        %v2135 = vmax.f32 %v2103, %v2125
        %v2136 = vmax.f32 %v2104, %v2128
        %v2137 = vsub.f32 %v2097, %v2129
        %v2138 = vsub.f32 %v2098, %v2130
        %v2139 = vsub.f32 %v2099, %v2131
        %v2140 = vsub.f32 %v2100, %v2132
        %v2141 = vsub.f32 %v2101, %v2133
        %v2142 = vsub.f32 %v2102, %v2134
        %v2143 = vsub.f32 %v2103, %v2135
        %v2144 = vsub.f32 %v2104, %v2136
        %v2145 = vmul.f32 %v2137, 1.442695
        %v2146 = vpow.pop %v2145
        %v2147 = vmul.f32 %v2138, 1.442695
        %v2148 = vpow.pop %v2147
        %v2149 = vmul.f32 %v2139, 1.442695
        %v2150 = vpow.pop %v2149
        %v2151 = vmul.f32 %v2140, 1.442695
        %v2152 = vpow.pop %v2151
        %v2153 = vmul.f32 %v2141, 1.442695
        %v2154 = vpow.pop %v2153
        %v2155 = vmul.f32 %v2142, 1.442695
        %v2156 = vpow.pop %v2155
        %v2157 = vmul.f32 %v2143, 1.442695
        %v2158 = vpow.pop %v2157
        %v2159 = vmul.f32 %v2144, 1.442695
        %v2160 = vpow.pop %v2159
        %2162 = vset.pattern.permute.xlu0 0
        %2163 = vperm.xlu0 %2162, %v2129
        %v2164 = vpop.permute.xlu0 %2163
        %2167 = vset.pattern.permute.xlu0 0
        %2168 = vperm.xlu0 %2167, %v2130
        %v2169 = vpop.permute.xlu0 %2168
        %2172 = vset.pattern.permute.xlu0 0
        %2173 = vperm.xlu0 %2172, %v2131
        %v2174 = vpop.permute.xlu0 %2173
        %2177 = vset.pattern.permute.xlu0 0
        %2178 = vperm.xlu0 %2177, %v2132
        %v2179 = vpop.permute.xlu0 %2178
        %2182 = vset.pattern.permute.xlu0 0
        %2183 = vperm.xlu0 %2182, %v2133
        %v2184 = vpop.permute.xlu0 %2183
        %2187 = vset.pattern.permute.xlu0 0
        %2188 = vperm.xlu0 %2187, %v2134
        %v2189 = vpop.permute.xlu0 %2188
        %2192 = vset.pattern.permute.xlu0 0
        %2193 = vperm.xlu0 %2192, %v2135
        %v2194 = vpop.permute.xlu0 %2193
        %2197 = vset.pattern.permute.xlu0 0
        %2198 = vperm.xlu0 %2197, %v2136
        %v2199 = vpop.permute.xlu0 %2198
        %v2201 = vsub.f32 %v2077, %v2164
        %v2202 = vsub.f32 %v2079, %v2169
        %v2203 = vsub.f32 %v2082, %v2174
        %v2204 = vsub.f32 %v2084, %v2179
        %v2205 = vsub.f32 %v2087, %v2184
        %v2206 = vsub.f32 %v2089, %v2189
        %v2207 = vsub.f32 %v2092, %v2194
        %v2208 = vsub.f32 %v2094, %v2199
        %v2209 = vmul.f32 %v2201, 1.442695
        %v2210 = vpow.pop %v2209
        %v2211 = vmul.f32 %v2202, 1.442695
        %v2212 = vpow.pop %v2211
        %v2213 = vmul.f32 %v2203, 1.442695
        %v2214 = vpow.pop %v2213
        %v2215 = vmul.f32 %v2204, 1.442695
        %v2216 = vpow.pop %v2215
        %v2217 = vmul.f32 %v2205, 1.442695
        %v2218 = vpow.pop %v2217
        %v2219 = vmul.f32 %v2206, 1.442695
        %v2220 = vpow.pop %v2219
        %v2221 = vmul.f32 %v2207, 1.442695
        %v2222 = vpow.pop %v2221
        %v2223 = vmul.f32 %v2208, 1.442695
        %v2224 = vpow.pop %v2223
        %s2225 = scalar_lea.vmem [#allocation3], 192
        %v2226 = vld [vmem:[%s2225] sm:$0xff]
        %v2227 = vld [vmem:[%s2225 + $0x8] sm:$0xff]
        %v2228 = vld [vmem:[%s2225 + $0x10] sm:$0xff]
        %v2229 = vld [vmem:[%s2225 + $0x18] sm:$0xff]
        %v2230 = vld [vmem:[%s2225 + $0x20] sm:$0xff]
        %v2231 = vld [vmem:[%s2225 + $0x28] sm:$0xff]
        %v2232 = vld [vmem:[%s2225 + $0x30] sm:$0xff]
        %v2233 = vld [vmem:[%s2225 + $0x38] sm:$0xff]
        %v2234 = vmul.f32 %v2146, %v2226
        %v2235 = vmul.f32 %v2148, %v2227
        %v2236 = vmul.f32 %v2150, %v2228
        %v2237 = vmul.f32 %v2152, %v2229
        %v2238 = vmul.f32 %v2154, %v2230
        %v2239 = vmul.f32 %v2156, %v2231
        %v2240 = vmul.f32 %v2158, %v2232
        %v2241 = vmul.f32 %v2160, %v2233
        %v2242 = vsel %vm637, %v2210, 0.0
        %2243 = vadd.xlane.f32.xlu0 %v2242
        %v2244 = vpop.xlane.xlu0 %2243
        %v2245 = vsel %vm637, %v2212, 0.0
        %2246 = vadd.xlane.f32.xlu0 %v2245
        %v2247 = vpop.xlane.xlu0 %2246
        %v2248 = vsel %vm637, %v2214, 0.0
        %2249 = vadd.xlane.f32.xlu0 %v2248
        %v2250 = vpop.xlane.xlu0 %2249
        %v2251 = vsel %vm637, %v2216, 0.0
        %2252 = vadd.xlane.f32.xlu0 %v2251
        %v2253 = vpop.xlane.xlu0 %2252
        %v2254 = vsel %vm637, %v2218, 0.0
        %2255 = vadd.xlane.f32.xlu0 %v2254
        %v2256 = vpop.xlane.xlu0 %2255
        %v2257 = vsel %vm637, %v2220, 0.0
        %2258 = vadd.xlane.f32.xlu0 %v2257
        %v2259 = vpop.xlane.xlu0 %2258
        %v2260 = vsel %vm637, %v2222, 0.0
        %2261 = vadd.xlane.f32.xlu0 %v2260
        %v2262 = vpop.xlane.xlu0 %2261
        %v2263 = vsel %vm637, %v2224, 0.0
        %2264 = vadd.xlane.f32.xlu0 %v2263
        %v2265 = vpop.xlane.xlu0 %2264
        %v2266 = vadd.f32 %v2234, %v2244
        %v2267 = vadd.f32 %v2235, %v2247
        %v2268 = vadd.f32 %v2236, %v2250
        %v2269 = vadd.f32 %v2237, %v2253
        %v2270 = vadd.f32 %v2238, %v2256
        %v2271 = vadd.f32 %v2239, %v2259
        %v2272 = vadd.f32 %v2240, %v2262
        %v2273 = vadd.f32 %v2241, %v2265
        %2274 = vst.msk [vmem:[%s2225] sm:$0xff] %vm867, %v2266
        %2275 = vst.msk [vmem:[%s2225 + $0x8] sm:$0xff] %vm867, %v2267
        %2276 = vst.msk [vmem:[%s2225 + $0x10] sm:$0xff] %vm867, %v2268
        %2277 = vst.msk [vmem:[%s2225 + $0x18] sm:$0xff] %vm867, %v2269
        %2278 = vst.msk [vmem:[%s2225 + $0x20] sm:$0xff] %vm867, %v2270
        %2279 = vst.msk [vmem:[%s2225 + $0x28] sm:$0xff] %vm867, %v2271
        %2280 = vst.msk [vmem:[%s2225 + $0x30] sm:$0xff] %vm867, %v2272
        %2281 = vst.msk [vmem:[%s2225 + $0x38] sm:$0xff] %vm867, %v2273
        %s2282 = scalar_lea.vmem [#allocation4], 192
        %v2283 = vld [vmem:[%s2282] sm:$0xff]
        %v2284 = vld [vmem:[%s2282 + $0x8] sm:$0xff]
        %v2285 = vld [vmem:[%s2282 + $0x10] sm:$0xff]
        %v2286 = vld [vmem:[%s2282 + $0x18] sm:$0xff]
        %v2287 = vld [vmem:[%s2282 + $0x20] sm:$0xff]
        %v2288 = vld [vmem:[%s2282 + $0x28] sm:$0xff]
        %v2289 = vld [vmem:[%s2282 + $0x30] sm:$0xff]
        %v2290 = vld [vmem:[%s2282 + $0x38] sm:$0xff]
        %2292 = vset.pattern.permute.xlu0 0
        %2293 = vperm.xlu0 %2292, %v2146
        %v2294 = vpop.permute.xlu0 %2293
        %2297 = vset.pattern.permute.xlu0 0
        %2298 = vperm.xlu0 %2297, %v2148
        %v2299 = vpop.permute.xlu0 %2298
        %2302 = vset.pattern.permute.xlu0 0
        %2303 = vperm.xlu0 %2302, %v2150
        %v2304 = vpop.permute.xlu0 %2303
        %2307 = vset.pattern.permute.xlu0 0
        %2308 = vperm.xlu0 %2307, %v2152
        %v2309 = vpop.permute.xlu0 %2308
        %2312 = vset.pattern.permute.xlu0 0
        %2313 = vperm.xlu0 %2312, %v2154
        %v2314 = vpop.permute.xlu0 %2313
        %2317 = vset.pattern.permute.xlu0 0
        %2318 = vperm.xlu0 %2317, %v2156
        %v2319 = vpop.permute.xlu0 %2318
        %2322 = vset.pattern.permute.xlu0 0
        %2323 = vperm.xlu0 %2322, %v2158
        %v2324 = vpop.permute.xlu0 %2323
        %2327 = vset.pattern.permute.xlu0 0
        %2328 = vperm.xlu0 %2327, %v2160
        %v2329 = vpop.permute.xlu0 %2328
        %v2331 = vmul.f32 %v2294, %v2283
        %v2332 = vmul.f32 %v2299, %v2284
        %v2333 = vmul.f32 %v2304, %v2285
        %v2334 = vmul.f32 %v2309, %v2286
        %v2335 = vmul.f32 %v2314, %v2287
        %v2336 = vmul.f32 %v2319, %v2288
        %v2337 = vmul.f32 %v2324, %v2289
        %v2338 = vmul.f32 %v2329, %v2290
        %v2339 = vpack.c.bf16 %v2212, %v2210
        %v2340 = vpack.c.bf16 %v2216, %v2214
        %v2341 = vpack.c.bf16 %v2220, %v2218
        %v2342 = vpack.c.bf16 %v2224, %v2222
        %v2351 = vunpack.c.l.b16 %v1995
        %v2352 = vunpack.c.l.b16 %v1996
        %v2353 = vunpack.c.l.b16 %v1997
        %v2354 = vunpack.c.l.b16 %v1998
        %v2355 = vunpack.c.l.b16 %v1999
        %v2356 = vunpack.c.l.b16 %v2000
        %v2357 = vunpack.c.l.b16 %v2001
        %v2358 = vunpack.c.l.b16 %v2002
        %v2359 = vpack.c.b16 %v2352, %v2351
        %v2360 = vpack.c.b16 %v2354, %v2353
        %v2361 = vpack.c.b16 %v2356, %v2355
        %v2362 = vpack.c.b16 %v2358, %v2357
        %2363 = vrot.lane.b32.xlu0 %v2359, 64
        %v2364 = vpop.permute.xlu0 %2363
        %2365 = vrot.lane.b32.xlu0 %v2360, 64
        %v2366 = vpop.permute.xlu0 %2365
        %2367 = vrot.lane.b32.xlu0 %v2361, 64
        %v2368 = vpop.permute.xlu0 %2367
        %2369 = vrot.lane.b32.xlu0 %v2362, 64
        %v2370 = vpop.permute.xlu0 %2369
        %v2376 = vsel %vm637, %v2339, 0
        %v2379 = vsel %vm637, %v2340, 0
        %v2382 = vsel %vm637, %v2341, 0
        %v2385 = vsel %vm637, %v2342, 0
        %2387 = vmatpush.bf16.msra.mxu0 0
        %2388 = vmatpush.bf16.msra.mxu0 0
        %2389 = vmatpush.bf16.msra.mxu0 0
        %2390 = vmatpush.bf16.msra.mxu0 0
        %2391 = vmatpush.bf16.msra.mxu0 %v2370
        %2392 = vmatpush.bf16.msra.mxu0 %v2368
        %2393 = vmatpush.bf16.msra.mxu0 %v2366
        %2394 = vmatpush.bf16.msra.mxu0 %v2364
        %2395 = vmatmul.bf16.gmra.mxu0 %v2376
        %v2396 = vpop.f32.mrf.mxu0
        %v2397 = vadd.f32 0.0, %v2396
        %v2398 = vpop.f32.mrf.mxu0
        %v2399 = vadd.f32 0.0, %v2398
        %2400 = vmatmul.bf16.gmra.mxu0 %v2379
        %v2401 = vpop.f32.mrf.mxu0
        %v2402 = vadd.f32 0.0, %v2401
        %v2403 = vpop.f32.mrf.mxu0
        %v2404 = vadd.f32 0.0, %v2403
        %2405 = vmatmul.bf16.gmra.mxu0 %v2382
        %v2406 = vpop.f32.mrf.mxu0
        %v2407 = vadd.f32 0.0, %v2406
        %v2408 = vpop.f32.mrf.mxu0
        %v2409 = vadd.f32 0.0, %v2408
        %2410 = vmatmul.bf16.gmra.mxu0 %v2385
        %v2411 = vpop.f32.mrf.mxu0
        %v2412 = vadd.f32 0.0, %v2411
        %v2413 = vpop.f32.mrf.mxu0
        %v2414 = vadd.f32 0.0, %v2413
        %2415 = vdwg.mxu0
        %v2416 = vadd.f32 %v2331, %v2397
        %v2417 = vadd.f32 %v2332, %v2399
        %v2418 = vadd.f32 %v2333, %v2402
        %v2419 = vadd.f32 %v2334, %v2404
        %v2420 = vadd.f32 %v2335, %v2407
        %v2421 = vadd.f32 %v2336, %v2409
        %v2422 = vadd.f32 %v2337, %v2412
        %v2423 = vadd.f32 %v2338, %v2414
        %2424 = vst.msk [vmem:[%s2282] sm:$0xff] %vm637, %v2416
        %2425 = vst.msk [vmem:[%s2282 + $0x8] sm:$0xff] %vm637, %v2417
        %2426 = vst.msk [vmem:[%s2282 + $0x10] sm:$0xff] %vm637, %v2418
        %2427 = vst.msk [vmem:[%s2282 + $0x18] sm:$0xff] %vm637, %v2419
        %2428 = vst.msk [vmem:[%s2282 + $0x20] sm:$0xff] %vm637, %v2420
        %2429 = vst.msk [vmem:[%s2282 + $0x28] sm:$0xff] %vm637, %v2421
        %2430 = vst.msk [vmem:[%s2282 + $0x30] sm:$0xff] %vm637, %v2422
        %2431 = vst.msk [vmem:[%s2282 + $0x38] sm:$0xff] %vm637, %v2423
        %2432 = vst.msk [vmem:[%s2096] sm:$0xff] %vm867, %v2129
        %2433 = vst.msk [vmem:[%s2096 + $0x8] sm:$0xff] %vm867, %v2130
        %2434 = vst.msk [vmem:[%s2096 + $0x10] sm:$0xff] %vm867, %v2131
        %2435 = vst.msk [vmem:[%s2096 + $0x18] sm:$0xff] %vm867, %v2132
        %2436 = vst.msk [vmem:[%s2096 + $0x20] sm:$0xff] %vm867, %v2133
        %2437 = vst.msk [vmem:[%s2096 + $0x28] sm:$0xff] %vm867, %v2134
        %2438 = vst.msk [vmem:[%s2096 + $0x30] sm:$0xff] %vm867, %v2135
        %2439 = vst.msk [vmem:[%s2096 + $0x38] sm:$0xff] %vm867, %v2136
        %p2440 = scmp.eq.s32.totalorder %s23, 1
        // Predicated region
        $region151: #{mha_forward.4} parent=133 // pred_check
          %p2441 = pneg %p2440
        $region152: #{mha_forward.4} parent=133 // pred_check_branch
          %2443 = sbr.rel (%p2441) target = $region154
        $region153: #{mha_forward.4} parent=133 // pred_region
          %v2444 = vld [vmem:[#allocation3] sm:$0xff]
          %v2445 = vld [vmem:[#allocation3 + $0x8] sm:$0xff]
          %v2446 = vld [vmem:[#allocation3 + $0x10] sm:$0xff]
          %v2447 = vld [vmem:[#allocation3 + $0x18] sm:$0xff]
          %v2448 = vld [vmem:[#allocation3 + $0x20] sm:$0xff]
          %v2449 = vld [vmem:[#allocation3 + $0x28] sm:$0xff]
          %v2450 = vld [vmem:[#allocation3 + $0x30] sm:$0xff]
          %v2451 = vld [vmem:[#allocation3 + $0x38] sm:$0xff]
          %v2452 = vrcp.pop %v2444
          %v2453 = vrcp.pop %v2445
          %v2454 = vrcp.pop %v2446
          %v2455 = vrcp.pop %v2447
          %v2456 = vrcp.pop %v2448
          %v2457 = vrcp.pop %v2449
          %v2458 = vrcp.pop %v2450
          %v2459 = vrcp.pop %v2451
          %v2460 = vld [vmem:[#allocation4] sm:$0xff]
          %v2461 = vld [vmem:[#allocation4 + $0x8] sm:$0xff]
          %v2462 = vld [vmem:[#allocation4 + $0x10] sm:$0xff]
          %v2463 = vld [vmem:[#allocation4 + $0x18] sm:$0xff]
          %v2464 = vld [vmem:[#allocation4 + $0x20] sm:$0xff]
          %v2465 = vld [vmem:[#allocation4 + $0x28] sm:$0xff]
          %v2466 = vld [vmem:[#allocation4 + $0x30] sm:$0xff]
          %v2467 = vld [vmem:[#allocation4 + $0x38] sm:$0xff]
          %2469 = vset.pattern.permute.xlu0 0
          %2470 = vperm.xlu0 %2469, %v2452
          %v2471 = vpop.permute.xlu0 %2470
          %2474 = vset.pattern.permute.xlu0 0
          %2475 = vperm.xlu0 %2474, %v2453
          %v2476 = vpop.permute.xlu0 %2475
          %2479 = vset.pattern.permute.xlu0 0
          %2480 = vperm.xlu0 %2479, %v2454
          %v2481 = vpop.permute.xlu0 %2480
          %2484 = vset.pattern.permute.xlu0 0
          %2485 = vperm.xlu0 %2484, %v2455
          %v2486 = vpop.permute.xlu0 %2485
          %2489 = vset.pattern.permute.xlu0 0
          %2490 = vperm.xlu0 %2489, %v2456
          %v2491 = vpop.permute.xlu0 %2490
          %2494 = vset.pattern.permute.xlu0 0
          %2495 = vperm.xlu0 %2494, %v2457
          %v2496 = vpop.permute.xlu0 %2495
          %2499 = vset.pattern.permute.xlu0 0
          %2500 = vperm.xlu0 %2499, %v2458
          %v2501 = vpop.permute.xlu0 %2500
          %2504 = vset.pattern.permute.xlu0 0
          %2505 = vperm.xlu0 %2504, %v2459
          %v2506 = vpop.permute.xlu0 %2505
          %v2508 = vmul.f32 %v2460, %v2471
          %v2509 = vmul.f32 %v2461, %v2476
          %v2510 = vmul.f32 %v2462, %v2481
          %v2511 = vmul.f32 %v2463, %v2486
          %v2512 = vmul.f32 %v2464, %v2491
          %v2513 = vmul.f32 %v2465, %v2496
          %v2514 = vmul.f32 %v2466, %v2501
          %v2515 = vmul.f32 %v2467, %v2506
          %v2516 = vpack.c.bf16 %v2508, %v2508
          %v2517 = vpack.c.bf16 %v2509, %v2509
          %v2518 = vpack.c.bf16 %v2510, %v2510
          %v2519 = vpack.c.bf16 %v2511, %v2511
          %v2520 = vpack.c.bf16 %v2512, %v2512
          %v2521 = vpack.c.bf16 %v2513, %v2513
          %v2522 = vpack.c.bf16 %v2514, %v2514
          %v2523 = vpack.c.bf16 %v2515, %v2515
          %vm2524 = vcmask 519168
          %2525 = vst.msk [vmem:[%s459] sm:$0xf] %vm2524, %v2516
          %2526 = vst.msk [vmem:[%s459 + $0x8] sm:$0xf] %vm2524, %v2517
          %2527 = vst.msk [vmem:[%s459 + $0x10] sm:$0xf] %vm2524, %v2518
          %2528 = vst.msk [vmem:[%s459 + $0x18] sm:$0xf] %vm2524, %v2519
          %2529 = vst.msk [vmem:[%s459 + $0x20] sm:$0xf] %vm2524, %v2520
          %2530 = vst.msk [vmem:[%s459 + $0x28] sm:$0xf] %vm2524, %v2521
          %2531 = vst.msk [vmem:[%s459 + $0x30] sm:$0xf] %vm2524, %v2522
          %2532 = vst.msk [vmem:[%s459 + $0x38] sm:$0xf] %vm2524, %v2523
          %v2533 = vld [vmem:[%s1291] sm:$0xff]
          %v2534 = vld [vmem:[%s1291 + $0x8] sm:$0xff]
          %v2535 = vld [vmem:[%s1291 + $0x10] sm:$0xff]
          %v2536 = vld [vmem:[%s1291 + $0x18] sm:$0xff]
          %v2537 = vld [vmem:[%s1291 + $0x20] sm:$0xff]
          %v2538 = vld [vmem:[%s1291 + $0x28] sm:$0xff]
          %v2539 = vld [vmem:[%s1291 + $0x30] sm:$0xff]
          %v2540 = vld [vmem:[%s1291 + $0x38] sm:$0xff]
          %v2541 = vrcp.pop %v2533
          %v2542 = vrcp.pop %v2534
          %v2543 = vrcp.pop %v2535
          %v2544 = vrcp.pop %v2536
          %v2545 = vrcp.pop %v2537
          %v2546 = vrcp.pop %v2538
          %v2547 = vrcp.pop %v2539
          %v2548 = vrcp.pop %v2540
          %v2549 = vld [vmem:[%s1348] sm:$0xff]
          %v2550 = vld [vmem:[%s1348 + $0x8] sm:$0xff]
          %v2551 = vld [vmem:[%s1348 + $0x10] sm:$0xff]
          %v2552 = vld [vmem:[%s1348 + $0x18] sm:$0xff]
          %v2553 = vld [vmem:[%s1348 + $0x20] sm:$0xff]
          %v2554 = vld [vmem:[%s1348 + $0x28] sm:$0xff]
          %v2555 = vld [vmem:[%s1348 + $0x30] sm:$0xff]
          %v2556 = vld [vmem:[%s1348 + $0x38] sm:$0xff]
          %2558 = vset.pattern.permute.xlu0 0
          %2559 = vperm.xlu0 %2558, %v2541
          %v2560 = vpop.permute.xlu0 %2559
          %2563 = vset.pattern.permute.xlu0 0
          %2564 = vperm.xlu0 %2563, %v2542
          %v2565 = vpop.permute.xlu0 %2564
          %2568 = vset.pattern.permute.xlu0 0
          %2569 = vperm.xlu0 %2568, %v2543
          %v2570 = vpop.permute.xlu0 %2569
          %2573 = vset.pattern.permute.xlu0 0
          %2574 = vperm.xlu0 %2573, %v2544
          %v2575 = vpop.permute.xlu0 %2574
          %2578 = vset.pattern.permute.xlu0 0
          %2579 = vperm.xlu0 %2578, %v2545
          %v2580 = vpop.permute.xlu0 %2579
          %2583 = vset.pattern.permute.xlu0 0
          %2584 = vperm.xlu0 %2583, %v2546
          %v2585 = vpop.permute.xlu0 %2584
          %2588 = vset.pattern.permute.xlu0 0
          %2589 = vperm.xlu0 %2588, %v2547
          %v2590 = vpop.permute.xlu0 %2589
          %2593 = vset.pattern.permute.xlu0 0
          %2594 = vperm.xlu0 %2593, %v2548
          %v2595 = vpop.permute.xlu0 %2594
          %v2597 = vmul.f32 %v2549, %v2560
          %v2598 = vmul.f32 %v2550, %v2565
          %v2599 = vmul.f32 %v2551, %v2570
          %v2600 = vmul.f32 %v2552, %v2575
          %v2601 = vmul.f32 %v2553, %v2580
          %v2602 = vmul.f32 %v2554, %v2585
          %v2603 = vmul.f32 %v2555, %v2590
          %v2604 = vmul.f32 %v2556, %v2595
          %v2605 = vpack.c.bf16 %v2597, %v2597
          %v2606 = vpack.c.bf16 %v2598, %v2598
          %v2607 = vpack.c.bf16 %v2599, %v2599
          %v2608 = vpack.c.bf16 %v2600, %v2600
          %v2609 = vpack.c.bf16 %v2601, %v2601
          %v2610 = vpack.c.bf16 %v2602, %v2602
          %v2611 = vpack.c.bf16 %v2603, %v2603
          %v2612 = vpack.c.bf16 %v2604, %v2604
          %2621 = vrot.lane.b32.xlu0 %v2605, 64
          %v2622 = vpop.permute.xlu0 %2621
          %2623 = vrot.lane.b32.xlu0 %v2606, 64
          %v2624 = vpop.permute.xlu0 %2623
          %2625 = vrot.lane.b32.xlu0 %v2607, 64
          %v2626 = vpop.permute.xlu0 %2625
          %2627 = vrot.lane.b32.xlu0 %v2608, 64
          %v2628 = vpop.permute.xlu0 %2627
          %2629 = vrot.lane.b32.xlu0 %v2609, 64
          %v2630 = vpop.permute.xlu0 %2629
          %2631 = vrot.lane.b32.xlu0 %v2610, 64
          %v2632 = vpop.permute.xlu0 %2631
          %2633 = vrot.lane.b32.xlu0 %v2611, 64
          %v2634 = vpop.permute.xlu0 %2633
          %2635 = vrot.lane.b32.xlu0 %v2612, 64
          %v2636 = vpop.permute.xlu0 %2635
          %vm2645 = vcmask 1043968
          %2646 = vst.msk [vmem:[%s459] sm:$0xf] %vm2645, %v2622
          %2647 = vst.msk [vmem:[%s459 + $0x8] sm:$0xf] %vm2645, %v2624
          %2648 = vst.msk [vmem:[%s459 + $0x10] sm:$0xf] %vm2645, %v2626
          %2649 = vst.msk [vmem:[%s459 + $0x18] sm:$0xf] %vm2645, %v2628
          %2650 = vst.msk [vmem:[%s459 + $0x20] sm:$0xf] %vm2645, %v2630
          %2651 = vst.msk [vmem:[%s459 + $0x28] sm:$0xf] %vm2645, %v2632
          %2652 = vst.msk [vmem:[%s459 + $0x30] sm:$0xf] %vm2645, %v2634
          %2653 = vst.msk [vmem:[%s459 + $0x38] sm:$0xf] %vm2645, %v2636
          %v2654 = vld [vmem:[%s1752] sm:$0xff]
          %v2655 = vld [vmem:[%s1752 + $0x8] sm:$0xff]
          %v2656 = vld [vmem:[%s1752 + $0x10] sm:$0xff]
          %v2657 = vld [vmem:[%s1752 + $0x18] sm:$0xff]
          %v2658 = vld [vmem:[%s1752 + $0x20] sm:$0xff]
          %v2659 = vld [vmem:[%s1752 + $0x28] sm:$0xff]
          %v2660 = vld [vmem:[%s1752 + $0x30] sm:$0xff]
          %v2661 = vld [vmem:[%s1752 + $0x38] sm:$0xff]
          %v2662 = vrcp.pop %v2654
          %v2663 = vrcp.pop %v2655
          %v2664 = vrcp.pop %v2656
          %v2665 = vrcp.pop %v2657
          %v2666 = vrcp.pop %v2658
          %v2667 = vrcp.pop %v2659
          %v2668 = vrcp.pop %v2660
          %v2669 = vrcp.pop %v2661
          %v2670 = vld [vmem:[%s1809] sm:$0xff]
          %v2671 = vld [vmem:[%s1809 + $0x8] sm:$0xff]
          %v2672 = vld [vmem:[%s1809 + $0x10] sm:$0xff]
          %v2673 = vld [vmem:[%s1809 + $0x18] sm:$0xff]
          %v2674 = vld [vmem:[%s1809 + $0x20] sm:$0xff]
          %v2675 = vld [vmem:[%s1809 + $0x28] sm:$0xff]
          %v2676 = vld [vmem:[%s1809 + $0x30] sm:$0xff]
          %v2677 = vld [vmem:[%s1809 + $0x38] sm:$0xff]
          %2679 = vset.pattern.permute.xlu0 0
          %2680 = vperm.xlu0 %2679, %v2662
          %v2681 = vpop.permute.xlu0 %2680
          %2684 = vset.pattern.permute.xlu0 0
          %2685 = vperm.xlu0 %2684, %v2663
          %v2686 = vpop.permute.xlu0 %2685
          %2689 = vset.pattern.permute.xlu0 0
          %2690 = vperm.xlu0 %2689, %v2664
          %v2691 = vpop.permute.xlu0 %2690
          %2694 = vset.pattern.permute.xlu0 0
          %2695 = vperm.xlu0 %2694, %v2665
          %v2696 = vpop.permute.xlu0 %2695
          %2699 = vset.pattern.permute.xlu0 0
          %2700 = vperm.xlu0 %2699, %v2666
          %v2701 = vpop.permute.xlu0 %2700
          %2704 = vset.pattern.permute.xlu0 0
          %2705 = vperm.xlu0 %2704, %v2667
          %v2706 = vpop.permute.xlu0 %2705
          %2709 = vset.pattern.permute.xlu0 0
          %2710 = vperm.xlu0 %2709, %v2668
          %v2711 = vpop.permute.xlu0 %2710
          %2714 = vset.pattern.permute.xlu0 0
          %2715 = vperm.xlu0 %2714, %v2669
          %v2716 = vpop.permute.xlu0 %2715
          %v2718 = vmul.f32 %v2670, %v2681
          %v2719 = vmul.f32 %v2671, %v2686
          %v2720 = vmul.f32 %v2672, %v2691
          %v2721 = vmul.f32 %v2673, %v2696
          %v2722 = vmul.f32 %v2674, %v2701
          %v2723 = vmul.f32 %v2675, %v2706
          %v2724 = vmul.f32 %v2676, %v2711
          %v2725 = vmul.f32 %v2677, %v2716
          %v2726 = vpack.c.bf16 %v2718, %v2718
          %v2727 = vpack.c.bf16 %v2719, %v2719
          %v2728 = vpack.c.bf16 %v2720, %v2720
          %v2729 = vpack.c.bf16 %v2721, %v2721
          %v2730 = vpack.c.bf16 %v2722, %v2722
          %v2731 = vpack.c.bf16 %v2723, %v2723
          %v2732 = vpack.c.bf16 %v2724, %v2724
          %v2733 = vpack.c.bf16 %v2725, %v2725
          %2734 = vst.msk [vmem:[%s459 + $0x4] sm:$0xf] %vm2524, %v2726
          %2735 = vst.msk [vmem:[%s459 + $0xc] sm:$0xf] %vm2524, %v2727
          %2736 = vst.msk [vmem:[%s459 + $0x14] sm:$0xf] %vm2524, %v2728
          %2737 = vst.msk [vmem:[%s459 + $0x1c] sm:$0xf] %vm2524, %v2729
          %2738 = vst.msk [vmem:[%s459 + $0x24] sm:$0xf] %vm2524, %v2730
          %2739 = vst.msk [vmem:[%s459 + $0x2c] sm:$0xf] %vm2524, %v2731
          %2740 = vst.msk [vmem:[%s459 + $0x34] sm:$0xf] %vm2524, %v2732
          %2741 = vst.msk [vmem:[%s459 + $0x3c] sm:$0xf] %vm2524, %v2733
          %v2742 = vld [vmem:[%s2225] sm:$0xff]
          %v2743 = vld [vmem:[%s2225 + $0x8] sm:$0xff]
          %v2744 = vld [vmem:[%s2225 + $0x10] sm:$0xff]
          %v2745 = vld [vmem:[%s2225 + $0x18] sm:$0xff]
          %v2746 = vld [vmem:[%s2225 + $0x20] sm:$0xff]
          %v2747 = vld [vmem:[%s2225 + $0x28] sm:$0xff]
          %v2748 = vld [vmem:[%s2225 + $0x30] sm:$0xff]
          %v2749 = vld [vmem:[%s2225 + $0x38] sm:$0xff]
          %v2750 = vrcp.pop %v2742
          %v2751 = vrcp.pop %v2743
          %v2752 = vrcp.pop %v2744
          %v2753 = vrcp.pop %v2745
          %v2754 = vrcp.pop %v2746
          %v2755 = vrcp.pop %v2747
          %v2756 = vrcp.pop %v2748
          %v2757 = vrcp.pop %v2749
          %v2758 = vld [vmem:[%s2282] sm:$0xff]
          %v2759 = vld [vmem:[%s2282 + $0x8] sm:$0xff]
          %v2760 = vld [vmem:[%s2282 + $0x10] sm:$0xff]
          %v2761 = vld [vmem:[%s2282 + $0x18] sm:$0xff]
          %v2762 = vld [vmem:[%s2282 + $0x20] sm:$0xff]
          %v2763 = vld [vmem:[%s2282 + $0x28] sm:$0xff]
          %v2764 = vld [vmem:[%s2282 + $0x30] sm:$0xff]
          %v2765 = vld [vmem:[%s2282 + $0x38] sm:$0xff]
          %2767 = vset.pattern.permute.xlu0 0
          %2768 = vperm.xlu0 %2767, %v2750
          %v2769 = vpop.permute.xlu0 %2768
          %2772 = vset.pattern.permute.xlu0 0
          %2773 = vperm.xlu0 %2772, %v2751
          %v2774 = vpop.permute.xlu0 %2773
          %2777 = vset.pattern.permute.xlu0 0
          %2778 = vperm.xlu0 %2777, %v2752
          %v2779 = vpop.permute.xlu0 %2778
          %2782 = vset.pattern.permute.xlu0 0
          %2783 = vperm.xlu0 %2782, %v2753
          %v2784 = vpop.permute.xlu0 %2783
          %2787 = vset.pattern.permute.xlu0 0
          %2788 = vperm.xlu0 %2787, %v2754
          %v2789 = vpop.permute.xlu0 %2788
          %2792 = vset.pattern.permute.xlu0 0
          %2793 = vperm.xlu0 %2792, %v2755
          %v2794 = vpop.permute.xlu0 %2793
          %2797 = vset.pattern.permute.xlu0 0
          %2798 = vperm.xlu0 %2797, %v2756
          %v2799 = vpop.permute.xlu0 %2798
          %2802 = vset.pattern.permute.xlu0 0
          %2803 = vperm.xlu0 %2802, %v2757
          %v2804 = vpop.permute.xlu0 %2803
          %v2806 = vmul.f32 %v2758, %v2769
          %v2807 = vmul.f32 %v2759, %v2774
          %v2808 = vmul.f32 %v2760, %v2779
          %v2809 = vmul.f32 %v2761, %v2784
          %v2810 = vmul.f32 %v2762, %v2789
          %v2811 = vmul.f32 %v2763, %v2794
          %v2812 = vmul.f32 %v2764, %v2799
          %v2813 = vmul.f32 %v2765, %v2804
          %v2814 = vpack.c.bf16 %v2806, %v2806
          %v2815 = vpack.c.bf16 %v2807, %v2807
          %v2816 = vpack.c.bf16 %v2808, %v2808
          %v2817 = vpack.c.bf16 %v2809, %v2809
          %v2818 = vpack.c.bf16 %v2810, %v2810
          %v2819 = vpack.c.bf16 %v2811, %v2811
          %v2820 = vpack.c.bf16 %v2812, %v2812
          %v2821 = vpack.c.bf16 %v2813, %v2813
          %2830 = vrot.lane.b32.xlu0 %v2814, 64
          %v2831 = vpop.permute.xlu0 %2830
          %2832 = vrot.lane.b32.xlu0 %v2815, 64
          %v2833 = vpop.permute.xlu0 %2832
          %2834 = vrot.lane.b32.xlu0 %v2816, 64
          %v2835 = vpop.permute.xlu0 %2834
          %2836 = vrot.lane.b32.xlu0 %v2817, 64
          %v2837 = vpop.permute.xlu0 %2836
          %2838 = vrot.lane.b32.xlu0 %v2818, 64
          %v2839 = vpop.permute.xlu0 %2838
          %2840 = vrot.lane.b32.xlu0 %v2819, 64
          %v2841 = vpop.permute.xlu0 %2840
          %2842 = vrot.lane.b32.xlu0 %v2820, 64
          %v2843 = vpop.permute.xlu0 %2842
          %2844 = vrot.lane.b32.xlu0 %v2821, 64
          %v2845 = vpop.permute.xlu0 %2844
          %2854 = vst.msk [vmem:[%s459 + $0x4] sm:$0xf] %vm2645, %v2831
          %2855 = vst.msk [vmem:[%s459 + $0xc] sm:$0xf] %vm2645, %v2833
          %2856 = vst.msk [vmem:[%s459 + $0x14] sm:$0xf] %vm2645, %v2835
          %2857 = vst.msk [vmem:[%s459 + $0x1c] sm:$0xf] %vm2645, %v2837
          %2858 = vst.msk [vmem:[%s459 + $0x24] sm:$0xf] %vm2645, %v2839
          %2859 = vst.msk [vmem:[%s459 + $0x2c] sm:$0xf] %vm2645, %v2841
          %2860 = vst.msk [vmem:[%s459 + $0x34] sm:$0xf] %vm2645, %v2843
          %2861 = vst.msk [vmem:[%s459 + $0x3c] sm:$0xf] %vm2645, %v2845
        $region154: #{mha_forward.4} parent=133 // pred_fallthru
          _
        %s2862 = sand.u32 %s146, 1
        %s2863 = sand.u32 %s146, 1
        %s2864 = smul.addr %s2863, 64
        %s2865 = scalar_lea.vmem [#allocation8], %s2864
        // Predicated region
        $region155: #{mha_forward.4} parent=133 // pred_check
          %p2866 = pneg %p156
        $region156: #{mha_forward.4} parent=133 // pred_check_branch
          %2868 = sbr.rel (%p2866) target = $region158
        $region157: #{mha_forward.4} parent=133 // pred_region
          %s2869 = smul.u32 8, %s22
          %s2870 = smul.u32 2, %s21
          %s2871 = smul.addr %s2869, 4
          %s2872 = sadd.s32 %s2870, %s2871
          %s2873 = smul.addr %s20, 64
          %s2874 = sadd.s32 %s2872, %s2873
          %s2875 = smul.addr %s2874, 4
          %s2876 = scalar_lea.vmem %s3, %s2875
          // Predicated region
          $region159: #{mha_forward.4} parent=157 // pred_check
            _
          $region160: #{mha_forward.4} parent=157 // pred_check_branch
            %2878 = sbr.rel (0) target = $region162
          $region161: #{mha_forward.4} parent=157 // pred_region
            // Predicated region
            $region163: #{mha_forward.4} parent=161 // pred_check
              _
            $region164: #{mha_forward.4} parent=161 // pred_check_branch
              %2880 = sbr.rel (0) target = $region166
            $region165: #{mha_forward.4} parent=161 // pred_region
              // Predicated region
              $region178: #{mha_forward.4} parent=165 // pred_check
                _
              $region179: #{mha_forward.4} parent=165 // pred_check_branch
                %2910 = sbr.rel (0) target = $region181
              $region180: #{mha_forward.4} parent=165 // pred_region
                loop: start=0, step=1, limit=1
                $region182: #{mha_forward.4} parent=180 // loop_pre_header
                  _
                $region183: #{mha_forward.4} parent=180 // loop_header
                  %s2912 = sphi 0, %s2916
                  %p2913 = scmp.ge.s32.totalorder %s2912, 1
                  %s2917 = sphi %s2865, %s2865
                  %s2918 = sphi %s2876, %s2876
                $region184: #{mha_forward.4} parent=180 // loop_header_branch
                  %2915 = sbr.rel (%p2913) target = $region188
                $region185: #{mha_forward.4} parent=180 // loop_body
                  %v2919 = vld [vmem:[%s2917] sm:$0xff]
                  %2920 = vst [vmem:[%s2918] sm:$0xff] %v2919
                  %v2921 = vld [vmem:[%s2917 + $0x8] sm:$0xff]
                  %2922 = vst [vmem:[%s2918 + $0x10] sm:$0xff] %v2921
                  %v2923 = vld [vmem:[%s2917 + $0x10] sm:$0xff]
                  %2924 = vst [vmem:[%s2918 + $0x20] sm:$0xff] %v2923
                  %v2925 = vld [vmem:[%s2917 + $0x18] sm:$0xff]
                  %2926 = vst [vmem:[%s2918 + $0x30] sm:$0xff] %v2925
                  %v2927 = vld [vmem:[%s2917 + $0x20] sm:$0xff]
                  %2928 = vst [vmem:[%s2918 + $0x40] sm:$0xff] %v2927
                  %v2929 = vld [vmem:[%s2917 + $0x28] sm:$0xff]
                  %2930 = vst [vmem:[%s2918 + $0x50] sm:$0xff] %v2929
                  %v2931 = vld [vmem:[%s2917 + $0x30] sm:$0xff]
                  %2932 = vst [vmem:[%s2918 + $0x60] sm:$0xff] %v2931
                  %v2933 = vld [vmem:[%s2917 + $0x38] sm:$0xff]
                  %2934 = vst [vmem:[%s2918 + $0x70] sm:$0xff] %v2933
                $region186: #{mha_forward.4} parent=180 // loop_footer
                  %s2916 = sadd.s32 1, %s2912
                $region187: #{mha_forward.4} parent=180 // loop_footer_branch
                  %2911 = sbr.rel target = $region183
                $region188: #{mha_forward.4} parent=180 // loop_exit
                  _
              $region181: #{mha_forward.4} parent=165 // pred_fallthru
                _
              // Predicated region
              $region189: #{mha_forward.4} parent=165 // pred_check
                _
              $region190: #{mha_forward.4} parent=165 // pred_check_branch
                %2936 = sbr.rel target = $region192
              $region191: #{mha_forward.4} parent=165 // pred_region
                _
              $region192: #{mha_forward.4} parent=165 // pred_fallthru
                _
            $region166: #{mha_forward.4} parent=161 // pred_fallthru
              _
            // Predicated region
            $region167: #{mha_forward.4} parent=161 // pred_check
              _
            $region168: #{mha_forward.4} parent=161 // pred_check_branch
              %2882 = sbr.rel target = $region170
            $region169: #{mha_forward.4} parent=161 // pred_region
              %s2884 = ssub.s32 256, 1
              loop: start=0, step=1, limit=1
              $region171: #{mha_forward.4} parent=169 // loop_pre_header
                _
              $region172: #{mha_forward.4} parent=169 // loop_header
                %s2886 = sphi 0, %s2890
                %p2887 = scmp.ge.s32.totalorder %s2886, 1
                %s2891 = sphi %s2865, %s2865
                %s2892 = sphi %s2876, %s2876
              $region173: #{mha_forward.4} parent=169 // loop_header_branch
                %2889 = sbr.rel (%p2887) target = $region177
              $region174: #{mha_forward.4} parent=169 // loop_body
                %v2893 = vld [vmem:[%s2891] sm:%s2884]
                %2894 = vst [vmem:[%s2892] sm:%s2884] %v2893
                %v2895 = vld [vmem:[%s2891 + $0x8] sm:%s2884]
                %2896 = vst [vmem:[%s2892 + $0x10] sm:%s2884] %v2895
                %v2897 = vld [vmem:[%s2891 + $0x10] sm:%s2884]
                %2898 = vst [vmem:[%s2892 + $0x20] sm:%s2884] %v2897
                %v2899 = vld [vmem:[%s2891 + $0x18] sm:%s2884]
                %2900 = vst [vmem:[%s2892 + $0x30] sm:%s2884] %v2899
                %v2901 = vld [vmem:[%s2891 + $0x20] sm:%s2884]
                %2902 = vst [vmem:[%s2892 + $0x40] sm:%s2884] %v2901
                %v2903 = vld [vmem:[%s2891 + $0x28] sm:%s2884]
                %2904 = vst [vmem:[%s2892 + $0x50] sm:%s2884] %v2903
                %v2905 = vld [vmem:[%s2891 + $0x30] sm:%s2884]
                %2906 = vst [vmem:[%s2892 + $0x60] sm:%s2884] %v2905
                %v2907 = vld [vmem:[%s2891 + $0x38] sm:%s2884]
                %2908 = vst [vmem:[%s2892 + $0x70] sm:%s2884] %v2907
              $region175: #{mha_forward.4} parent=169 // loop_footer
                %s2890 = sadd.s32 1, %s2886
              $region176: #{mha_forward.4} parent=169 // loop_footer_branch
                %2885 = sbr.rel target = $region172
              $region177: #{mha_forward.4} parent=169 // loop_exit
                _
            $region170: #{mha_forward.4} parent=161 // pred_fallthru
              _
          $region162: #{mha_forward.4} parent=157 // pred_fallthru
            _
          %2937 = vnop
        $region158: #{mha_forward.4} parent=133 // pred_fallthru
          _
      $region134: #{mha_forward.4} parent=5 // pred_fallthru
        _
      %p2938 = scmp.le.s32.totalorder 2, %s9
      // Predicated region
      $region193: #{mha_forward.4} parent=5 // pred_check
        %p2939 = pneg %p2938
      $region194: #{mha_forward.4} parent=5 // pred_check_branch
        %2941 = sbr.rel (%p2939) target = $region196
      $region195: #{mha_forward.4} parent=5 // pred_region
        %s2942 = ssub.s32 %s9, 2
        // Predicated region
        $region197: #{mha_forward.4} parent=195 // pred_check
          %p2943 = pneg %p162
        $region198: #{mha_forward.4} parent=195 // pred_check_branch
          %2945 = sbr.rel (%p2943) target = $region200
        $region199: #{mha_forward.4} parent=195 // pred_region
          %s2946 = sand.u32 %s147, 1
          %s2947 = sand.u32 %s147, 1
          %s2948 = smul.addr %s2947, 64
          %s2949 = scalar_lea.vmem [#allocation8], %s2948
        $region200: #{mha_forward.4} parent=195 // pred_fallthru
          _
      $region196: #{mha_forward.4} parent=5 // pred_fallthru
        _
    $region6: #{mha_forward.4} parent=1 // loop_footer
      %s13 = sadd.s32 1, %s9
    $region7: #{mha_forward.4} parent=1 // loop_footer_branch
      %8 = sbr.rel target = $region3
    $region8: #{mha_forward.4} parent=1 // loop_exit
      _

</llo_original>
